<compile_context>
chip_gen: v7x
topology: tpu7x:2x2x1
jax: 0.10.0
libtpu: 0.0.40
codegen_flags: <defaults>
</compile_context>

<pallas_src>
import math
import functools

import jax
import jax.numpy as jnp
from jax.experimental import pallas as pl
from jax.experimental.pallas import tpu as pltpu

BN_EPS = 1e-5
BN_SCALE = 1.0 / math.sqrt(1.0 + BN_EPS)
PAD = 4          # max halo needed (dil_conv_5x5: k=5, dilation=2 -> pad=4)


# ----------------------------------------------------------------------------
# Fused MixedOp kernel (one grid step == SAMP batch samples)
# ----------------------------------------------------------------------------
def _mixed_op_kernel(x_ref, smap_ref, ws_ref,
                     d3w, d5w, s31w, s51w, s32w, s52w,
                     w1_ref, w2_ref,
                     o_ref, buf_ref, *, C, H, W, P, F, SAMP):
    """All branches of MixedOp for SAMP samples, accumulated in registers.

    Layouts:
      x_ref/o_ref : (R, HWp), R = SAMP*C rows (sample-major), lanes = H*(W+2P)
                    with the real pixels of every image row at columns [P, P+W).
      buf_ref     : (R, L) flat halo buffer; padded image position (r, c) of a
                    row lives at flat index F + r*Wp + c (F lane-aligns the slab).
      smap_ref    : (3, HWp) rows: [avg_map, mask, neg_halo].
      ws_ref      : (2,) SMEM scalars: [w[max_pool]*BN, w[skip]].
      d*w/s*w     : (taps, R, HWp) pre-broadcast depthwise tap weights.
      w1/w2       : fused block pointwise-conv matrices (arch w + BN folded).
    """
    Wp = W + 2 * P
    HWp = H * Wp
    CO = F + P * Wp                     # lane-aligned start of the H x Wp image slab
    R = SAMP * C
    L = buf_ref.shape[1]
    NEG = -1e30                         # finite "-inf" (no 0*inf NaN hazard)

    avg_map = smap_ref[0:1, :]          # w[avg]*BN / count(h,w); 0 on halo cols
    mask = smap_ref[1:2, :]             # 1 on real cols, 0 on width-halo cols
    neg_halo = smap_ref[2:3, :]         # -1e30 on width-halo cols, 0 on real cols
    w_max = ws_ref[0]                   # SMEM scalar: w[max_pool] * BN
    w_skip = ws_ref[1]                  # SMEM scalar: w[skip_connect]

    def center_write(v):                # (R, HWp) slab -> center of halo buffer
        buf_ref[:, CO:CO + HWp] = v

    def window(dr, dc):                 # shifted (R, HWp) view of the halo buffer
        s = CO + dr * Wp + dc
        return buf_ref[:, s:s + HWp]

    def fill_halo_ring(val):            # only the ring; the center is overwritten
        buf_ref[:, 0:CO] = jnp.full((R, CO), val, jnp.float32)
        buf_ref[:, CO + HWp:L] = jnp.full((R, L - CO - HWp), val, jnp.float32)

    # ---- max_pool_3x3 + BN, and skip_connect (NoiseIdentity, eval) ----------
    fill_halo_ring(NEG)
    center_write(x_ref[...] + neg_halo)      # width-halo cols of x are 0 -> -1e30
    mp = None
    for dr in (-1, 0, 1):
        for dc in (-1, 0, 1):
            v = window(dr, dc)
            mp = v if mp is None else jnp.maximum(mp, v)
    # Halo columns of `acc` hold (finite) garbage; the host slices them off.
    acc = mp * w_max + x_ref[...] * w_skip

    # ---- avg_pool_3x3 (count_include_pad=False) + BN -------------------------
    fill_halo_ring(0.0)
    center_write(x_ref[...])
    sp = None
    for dr in (-1, 0, 1):
        for dc in (-1, 0, 1):
            v = window(dr, dc)
            sp = v if sp is None else sp + v
    acc = acc + sp * avg_map

    # ---- conv branches, stage 1: one shared ReLU(x) slab ---------------------
    # Offset-major tap loop: each distinct shifted window is loaded ONCE and
    # reused by every depthwise conv that needs it (41 loads instead of 68).
    center_write(jnp.maximum(x_ref[...], 0.0))
    stage1 = [(d3w, 3, 2, 2),    # dil_conv_3x3  dw
              (d5w, 5, 2, 4),    # dil_conv_5x5  dw
              (s31w, 3, 1, 1),   # sep_conv_3x3  dw1
              (s51w, 5, 1, 2)]   # sep_conv_5x5  dw1
    users = {}
    for b, (wref, k, dil, pad) in enumerate(stage1):
        for t in range(k * k):
            off = ((t // k) * dil - pad, (t % k) * dil - pad)
            users.setdefault(off, []).append((b, wref, t))
    dwacc = [None] * len(stage1)
    for (dr, dc), lst in users.items():
        win = window(dr, dc)
        for b, wref, t in lst:
            v = win * wref[t]            # pre-broadcast tap weight: plain vld + FMA
            dwacc[b] = v if dwacc[b] is None else dwacc[b] + v

    # One fused (3R,4R)x(4R,HWp) MXU matmul performs all four stage-1 1x1 convs.
    fused1 = jnp.dot(w1_ref[...], jnp.concatenate(dwacc, axis=0),
                     preferred_element_type=jnp.float32)
    acc = acc + fused1[0:R]              # dil_conv_3x3 + dil_conv_5x5 (w & BN folded)
    y3 = fused1[R:2 * R]                 # sep_conv_3x3 stage-1 output (BN folded)
    y5 = fused1[2 * R:3 * R]             # sep_conv_5x5 stage-1 output (BN folded)

    # ---- sep_conv stage 2 -----------------------------------------------------
    def dwconv(wref, k, dil, pad):
        r = None
        for t in range(k * k):
            v = window((t // k) * dil - pad, (t % k) * dil - pad) * wref[t]
            r = v if r is None else r + v
        return r

    center_write(jnp.maximum(y3, 0.0) * mask)     # mask zeroes width-halo garbage
    z3 = dwconv(s32w, 3, 1, 1)
    center_write(jnp.maximum(y5, 0.0) * mask)
    z5 = dwconv(s52w, 5, 1, 2)
    # Second fused matmul: both stage-2 1x1 convs (arch weights & BN folded).
    acc = acc + jnp.dot(w2_ref[...], jnp.concatenate([z3, z5], axis=0),
                        preferred_element_type=jnp.float32)

    o_ref[...] = acc


# ----------------------------------------------------------------------------
# Wrapper: fold weights/BN on host, one pallas_call over the batch
# ----------------------------------------------------------------------------
def mixed_op(x, weights, params):
    """MixedOp.forward(x, weights) -- eval mode, stride=1.  x: (N, C, H, W)."""
    N, C, H, W = x.shape
    P = PAD
    Wp = W + 2 * P
    HWp = H * Wp
    F = (-(P * Wp)) % 128               # lane-align the image slab inside the buffer
    if F < P:
        F += 128
    L = F + (H + 2 * P) * Wp + P        # flat halo-buffer length per row

    # Samples per grid step: as many as possible (amortizes shifted loads, weight
    # slabs and matmuls) while keeping >= 2 grid steps so both TensorCores get
    # work on megacore / v7x parts.
    SAMP = 1
    for s in range(min(max(N // 2, 1), 8), 0, -1):
        if N % s == 0:
            SAMP = s
            break
    R = SAMP * C                        # sublane rows per block (sample-major)
    G = N // SAMP

    w = weights.astype(jnp.float32)
    BN = BN_SCALE

    # -- fold arch weights + eval-BN scales into two fused pointwise matrices ----
    def bd(B):                          # per-sample block-diagonal replication
        return jnp.kron(jnp.eye(SAMP, dtype=jnp.float32), B.astype(jnp.float32))

    Z = jnp.zeros((R, R), jnp.float32)
    W1 = jnp.block([
        [bd(params["dil3"]["pw"] * (w[6] * BN)),
         bd(params["dil5"]["pw"] * (w[7] * BN)), Z, Z],
        [Z, Z, bd(params["sep3"]["pw1"] * BN), Z],
        [Z, Z, Z, bd(params["sep5"]["pw1"] * BN)],
    ])                                   # (3R, 4R): [acc; y3; y5] <- [d3;d5;s3;s5]
    W2 = jnp.block([
        [bd(params["sep3"]["pw2"] * (w[4] * BN)),
         bd(params["sep5"]["pw2"] * (w[5] * BN))],
    ])                                   # (R, 2R):  acc <- [z3; z5]

    # -- pre-broadcast depthwise tap weights to resident (taps, R, HWp) slabs ----
    def dw_slab(dw, k):
        wt = jnp.transpose(dw.reshape(C, k * k).astype(jnp.float32))   # (k*k, C)
        wt = jnp.tile(wt, (1, SAMP))                                   # (k*k, R)
        return jnp.broadcast_to(wt[:, :, None], (k * k, R, HWp))

    d3w = dw_slab(params["dil3"]["dw"], 3)
    d5w = dw_slab(params["dil5"]["dw"], 5)
    s31w = dw_slab(params["sep3"]["dw1"], 3)
    s51w = dw_slab(params["sep5"]["dw1"], 5)
    s32w = dw_slab(params["sep3"]["dw2"], 3)
    s52w = dw_slab(params["sep5"]["dw2"], 5)

    # -- per-position rows + SMEM scalars ----------------------------------------
    ones = jnp.ones((H, W), jnp.float32)
    onesp = jnp.pad(ones, ((1, 1), (1, 1)))
    cnt = sum(onesp[i:i + H, j:j + W] for i in range(3) for j in range(3))
    avg_map = jnp.pad((w[2] * BN) / cnt, ((0, 0), (P, P))).reshape(HWp)
    mask = jnp.pad(ones, ((0, 0), (P, P))).reshape(HWp)
    neg_halo = (1.0 - mask) * jnp.float32(-1e30)
    smap = jnp.stack([avg_map, mask, neg_halo], axis=0)            # (3, HWp)
    ws = jnp.stack([w[1] * BN, w[3]]).astype(jnp.float32)          # SMEM scalars

    # NOTE: lane-density assumptions (HWp % 128 == 0, C % 8 == 0 for f32) hold for
    # the C=8, W=16 config; other shapes remain correct but fall into masked stores.
    xw = jnp.pad(x, ((0, 0), (0, 0), (0, 0), (P, P))).reshape(N * C, HWp)

    kern = functools.partial(_mixed_op_kernel, C=C, H=H, W=W, P=P, F=F, SAMP=SAMP)

    def rep(shape):                      # replicated / resident full-array operand
        return pl.BlockSpec(shape, lambda g: (0,) * len(shape))

    # VMEM budget from the actual buffers (resident weight slabs + double-buffered
    # x/out blocks + halo scratch), with 2x headroom; fits v7x's 64 MiB physical.
    resident = 4 * (102 * R * HWp + int(W1.size) + int(W2.size) + int(smap.size) + R * L)
    streamed = 4 * (2 * 2 * R * HWp)
    vmem_limit = int(min(48 * 1024 * 1024,
                         max(16 * 1024 * 1024, 2 * (resident + streamed))))

    outw = pl.pallas_call(
        kern,
        out_shape=jax.ShapeDtypeStruct((N * C, HWp), jnp.float32),
        grid=(G,),
        in_specs=[pl.BlockSpec((R, HWp), lambda g: (g, 0)),          # x (SAMP samples)
                  rep((3, HWp)),                                      # per-position rows
                  pl.BlockSpec(memory_space=pltpu.MemorySpace.SMEM),  # branch scalars
                  rep((9, R, HWp)), rep((25, R, HWp)),                # dil3 / dil5 taps
                  rep((9, R, HWp)), rep((25, R, HWp)),                # sep3/5 stage-1 taps
                  rep((9, R, HWp)), rep((25, R, HWp)),                # sep3/5 stage-2 taps
                  rep(tuple(W1.shape)), rep(tuple(W2.shape))],        # fused 1x1 convs
        out_specs=pl.BlockSpec((R, HWp), lambda g: (g, 0)),
        scratch_shapes=[pltpu.VMEM((R, L), jnp.float32)],             # shared halo buffer
        compiler_params=pltpu.CompilerParams(
            dimension_semantics=("parallel",),
            vmem_limit_bytes=vmem_limit),
    )(xw, smap, ws, d3w, d5w, s31w, s51w, s32w, s52w, W1, W2)

    # Drop the width halo (reshape + slice at the boundary).
    return outw.reshape(N, C, H, Wp)[:, :, :, P:P + W]


# ----------------------------------------------------------------------------
# Deterministic parameter init (shapes from the module's __init__)
# ----------------------------------------------------------------------------
def init_params(key, C):
    ks = jax.random.split(key, 12)
    dw = lambda k_, s: 0.2 * jax.random.normal(k_, (C, s, s), jnp.float32)
    pw = lambda k_: 0.2 * jax.random.normal(k_, (C, C), jnp.float32)
    return {
        "sep3": {"dw1": dw(ks[0], 3), "pw1": pw(ks[1]),
                 "dw2": dw(ks[2], 3), "pw2": pw(ks[3])},
        "sep5": {"dw1": dw(ks[4], 5), "pw1": pw(ks[5]),
                 "dw2": dw(ks[6], 5), "pw2": pw(ks[7])},
        "dil3": {"dw": dw(ks[8], 3), "pw": pw(ks[9])},
        "dil5": {"dw": dw(ks[10], 5), "pw": pw(ks[11])},
    }


# ----------------------------------------------------------------------------
# Pure-JAX reference (correctness check only)
# ----------------------------------------------------------------------------
def _ref_relu_dwconv(x, w, k, pad, dil):
    N, C, H, W = x.shape
    xp = jnp.pad(jnp.maximum(x, 0.0), ((0, 0), (0, 0), (pad, pad), (pad, pad)))
    acc = jnp.zeros_like(x)
    for i in range(k):
        for j in range(k):
            acc = acc + (xp[:, :, i * dil:i * dil + H, j * dil:j * dil + W]
                         * w[:, i, j][None, :, None, None])
    return acc


def _ref_pwconv_bn(x, w):
    return jnp.einsum('oc,nchw->nohw', w, x,
                      precision=jax.lax.Precision.HIGHEST) * BN_SCALE


def _ref_maxpool_bn(x):
    N, C, H, W = x.shape
    xp = jnp.pad(x, ((0, 0), (0, 0), (1, 1), (1, 1)), constant_values=-jnp.inf)
    acc = jnp.full_like(x, -jnp.inf)
    for i in range(3):
        for j in range(3):
            acc = jnp.maximum(acc, xp[:, :, i:i + H, j:j + W])
    return acc * BN_SCALE


def _ref_avgpool_bn(x):
    N, C, H, W = x.shape
    xp = jnp.pad(x, ((0, 0), (0, 0), (1, 1), (1, 1)))
    onesp = jnp.pad(jnp.ones((1, 1, H, W), jnp.float32),
                    ((0, 0), (0, 0), (1, 1), (1, 1)))
    acc = sum(xp[:, :, i:i + H, j:j + W] for i in range(3) for j in range(3))
    cnt = sum(onesp[:, :, i:i + H, j:j + W] for i in range(3) for j in range(3))
    return acc / cnt * BN_SCALE


def _ref_sep(x, p, k, pad):
    y = _ref_relu_dwconv(x, p["dw1"], k, pad, 1)
    y = _ref_pwconv_bn(y, p["pw1"])
    y = _ref_relu_dwconv(y, p["dw2"], k, pad, 1)
    return _ref_pwconv_bn(y, p["pw2"])


def _ref_dil(x, p, k, pad, dil):
    return _ref_pwconv_bn(_ref_relu_dwconv(x, p["dw"], k, pad, dil), p["pw"])


def _ref_mixed(x, weights, params):
    br = [jnp.zeros_like(x),
          _ref_maxpool_bn(x),
          _ref_avgpool_bn(x),
          x,
          _ref_sep(x, params["sep3"], 3, 1),
          _ref_sep(x, params["sep5"], 5, 2),
          _ref_dil(x, params["dil3"], 3, 2, 2),
          _ref_dil(x, params["dil5"], 5, 4, 2)]
    return sum(w * b for w, b in zip(weights, br))


# ----------------------------------------------------------------------------
if __name__ == "__main__":
    key = jax.random.PRNGKey(0)
    kx, kw, kp = jax.random.split(key, 3)

    N, C, H, W = 4, 8, 16, 16                       # x: NCHW (2 samples/grid step)
    x = jax.random.normal(kx, (N, C, H, W), jnp.float32)
    alphas = jax.random.normal(kw, (8,), jnp.float32)
    weights = jax.nn.softmax(alphas)                # one arch weight per primitive
    params = init_params(kp, C)

    out = jax.jit(mixed_op)(x, weights, params)
    out = jax.block_until_ready(out)

    ref = _ref_mixed(x, weights, params)
    assert out.shape == x.shape and out.dtype == jnp.float32
    err = float(jnp.max(jnp.abs(out - ref)))
    if not jnp.allclose(out, ref, rtol=2e-3, atol=2e-3):
        raise AssertionError("mismatch vs pure-JAX reference: max abs diff = %g" % err)

    print("KERNEL_OK")
</pallas_src>

<mosaic_0001>
module attributes {stable_mosaic.version = 11 : i64} {
  func.func @_mixed_op_kernel(%arg0: i32, %arg1: memref<16x384xf32, #tpu.memory_space<vmem>>, %arg2: memref<3x384xf32, #tpu.memory_space<vmem>>, %arg3: memref<2xf32, #tpu.memory_space<smem>>, %arg4: memref<9x16x384xf32, #tpu.memory_space<vmem>>, %arg5: memref<25x16x384xf32, #tpu.memory_space<vmem>>, %arg6: memref<9x16x384xf32, #tpu.memory_space<vmem>>, %arg7: memref<25x16x384xf32, #tpu.memory_space<vmem>>, %arg8: memref<9x16x384xf32, #tpu.memory_space<vmem>>, %arg9: memref<25x16x384xf32, #tpu.memory_space<vmem>>, %arg10: memref<48x64xf32, #tpu.memory_space<vmem>>, %arg11: memref<16x32xf32, #tpu.memory_space<vmem>>, %arg12: memref<16x384xf32, #tpu.memory_space<vmem>>, %arg13: memref<16x612xf32, #tpu.memory_space<vmem>>) attributes {dimension_semantics = [#tpu.dimension_semantics<parallel>], iteration_bounds = array<i64: 2>, scalar_prefetch = 0 : i64, scratch_operands = 1 : i64, tpu.core_type = #tpu.core_type<tc>, window_params = [{transform_indices = @transform_0, window_bounds = array<i64: 16, 384>}, {pipeline_mode = #tpu.pipeline_mode<synchronous>, transform_indices = @transform_1, window_bounds = array<i64: 3, 384>}, {transform_indices = @transform_2, window_bounds = array<i64: 2>}, {pipeline_mode = #tpu.pipeline_mode<synchronous>, transform_indices = @transform_3, window_bounds = array<i64: 9, 16, 384>}, {pipeline_mode = #tpu.pipeline_mode<synchronous>, transform_indices = @transform_4, window_bounds = array<i64: 25, 16, 384>}, {pipeline_mode = #tpu.pipeline_mode<synchronous>, transform_indices = @transform_5, window_bounds = array<i64: 9, 16, 384>}, {pipeline_mode = #tpu.pipeline_mode<synchronous>, transform_indices = @transform_6, window_bounds = array<i64: 25, 16, 384>}, {pipeline_mode = #tpu.pipeline_mode<synchronous>, transform_indices = @transform_7, window_bounds = array<i64: 9, 16, 384>}, {pipeline_mode = #tpu.pipeline_mode<synchronous>, transform_indices = @transform_8, window_bounds = array<i64: 25, 16, 384>}, {pipeline_mode = #tpu.pipeline_mode<synchronous>, transform_indices = @transform_9, window_bounds = array<i64: 48, 64>}, {pipeline_mode = #tpu.pipeline_mode<synchronous>, transform_indices = @transform_10, window_bounds = array<i64: 16, 32>}, {transform_indices = @transform_11, window_bounds = array<i64: 16, 384>}]} {
    %c0 = arith.constant 0 : index
    %c0_0 = arith.constant 0 : index
    %0 = vector.load %arg2[%c0, %c0_0] : memref<3x384xf32, #tpu.memory_space<vmem>>, vector<1x384xf32>
    %c1 = arith.constant 1 : index
    %c0_1 = arith.constant 0 : index
    %1 = vector.load %arg2[%c1, %c0_1] : memref<3x384xf32, #tpu.memory_space<vmem>>, vector<1x384xf32>
    %c2 = arith.constant 2 : index
    %c0_2 = arith.constant 0 : index
    %2 = vector.load %arg2[%c2, %c0_2] : memref<3x384xf32, #tpu.memory_space<vmem>>, vector<1x384xf32>
    %c0_3 = arith.constant 0 : index
    %3 = memref.load %arg3[%c0_3] : memref<2xf32, #tpu.memory_space<smem>>
    %c1_4 = arith.constant 1 : index
    %4 = memref.load %arg3[%c1_4] : memref<2xf32, #tpu.memory_space<smem>>
    %cst = arith.constant -1.000000e+30 : f32
    %5 = vector.broadcast %cst : f32 to vector<16x128xf32>
    %c0_5 = arith.constant 0 : index
    %c0_6 = arith.constant 0 : index
    %6 = vector.load %arg13[%c0_5, %c0_6] : memref<16x612xf32, #tpu.memory_space<vmem>>, vector<16x128xf32>
    tpu.vector_store %arg13[%c0_5, %c0_6], %5 {strides = array<i32>} : memref<16x612xf32, #tpu.memory_space<vmem>>, vector<16x128xf32>,
    %cst_7 = arith.constant -1.000000e+30 : f32
    %7 = vector.broadcast %cst_7 : f32 to vector<16x100xf32>
    %c0_8 = arith.constant 0 : index
    %c512 = arith.constant 512 : index
    %8 = vector.load %arg13[%c0_8, %c512] : memref<16x612xf32, #tpu.memory_space<vmem>>, vector<16x100xf32>
    tpu.vector_store %arg13[%c0_8, %c512], %7 {strides = array<i32>} : memref<16x612xf32, #tpu.memory_space<vmem>>, vector<16x100xf32>,
    %c0_9 = arith.constant 0 : index
    %c0_10 = arith.constant 0 : index
    %9 = vector.load %arg1[%c0_9, %c0_10] : memref<16x384xf32, #tpu.memory_space<vmem>>, vector<16x384xf32>
    %10 = vector.broadcast %2 : vector<1x384xf32> to vector<16x384xf32>
    %11 = arith.addf %9, %10 : vector<16x384xf32>
    %c0_11 = arith.constant 0 : index
    %c128 = arith.constant 128 : index
    %12 = vector.load %arg13[%c0_11, %c128] : memref<16x612xf32, #tpu.memory_space<vmem>>, vector<16x384xf32>
    tpu.vector_store %arg13[%c0_11, %c128], %11 {strides = array<i32>} : memref<16x612xf32, #tpu.memory_space<vmem>>, vector<16x384xf32>,
    %c0_12 = arith.constant 0 : index
    %c103 = arith.constant 103 : index
    %13 = vector.load %arg13[%c0_12, %c103] : memref<16x612xf32, #tpu.memory_space<vmem>>, vector<16x384xf32>
    %c0_13 = arith.constant 0 : index
    %c104 = arith.constant 104 : index
    %14 = vector.load %arg13[%c0_13, %c104] : memref<16x612xf32, #tpu.memory_space<vmem>>, vector<16x384xf32>
    %15 = arith.maximumf %13, %14 : vector<16x384xf32>
    %c0_14 = arith.constant 0 : index
    %c105 = arith.constant 105 : index
    %16 = vector.load %arg13[%c0_14, %c105] : memref<16x612xf32, #tpu.memory_space<vmem>>, vector<16x384xf32>
    %17 = arith.maximumf %15, %16 : vector<16x384xf32>
    %c0_15 = arith.constant 0 : index
    %c127 = arith.constant 127 : index
    %18 = vector.load %arg13[%c0_15, %c127] : memref<16x612xf32, #tpu.memory_space<vmem>>, vector<16x384xf32>
    %19 = arith.maximumf %17, %18 : vector<16x384xf32>
    %c0_16 = arith.constant 0 : index
    %c128_17 = arith.constant 128 : index
    %20 = vector.load %arg13[%c0_16, %c128_17] : memref<16x612xf32, #tpu.memory_space<vmem>>, vector<16x384xf32>
    %21 = arith.maximumf %19, %20 : vector<16x384xf32>
    %c0_18 = arith.constant 0 : index
    %c129 = arith.constant 129 : index
    %22 = vector.load %arg13[%c0_18, %c129] : memref<16x612xf32, #tpu.memory_space<vmem>>, vector<16x384xf32>
    %23 = arith.maximumf %21, %22 : vector<16x384xf32>
    %c0_19 = arith.constant 0 : index
    %c151 = arith.constant 151 : index
    %24 = vector.load %arg13[%c0_19, %c151] : memref<16x612xf32, #tpu.memory_space<vmem>>, vector<16x384xf32>
    %25 = arith.maximumf %23, %24 : vector<16x384xf32>
    %c0_20 = arith.constant 0 : index
    %c152 = arith.constant 152 : index
    %26 = vector.load %arg13[%c0_20, %c152] : memref<16x612xf32, #tpu.memory_space<vmem>>, vector<16x384xf32>
    %27 = arith.maximumf %25, %26 : vector<16x384xf32>
    %c0_21 = arith.constant 0 : index
    %c153 = arith.constant 153 : index
    %28 = vector.load %arg13[%c0_21, %c153] : memref<16x612xf32, #tpu.memory_space<vmem>>, vector<16x384xf32>
    %29 = arith.maximumf %27, %28 : vector<16x384xf32>
    %30 = vector.broadcast %3 : f32 to vector<16x384xf32>
    %31 = arith.mulf %29, %30 : vector<16x384xf32>
    %c0_22 = arith.constant 0 : index
    %c0_23 = arith.constant 0 : index
    %32 = vector.load %arg1[%c0_22, %c0_23] : memref<16x384xf32, #tpu.memory_space<vmem>>, vector<16x384xf32>
    %33 = vector.broadcast %4 : f32 to vector<16x384xf32>
    %34 = arith.mulf %32, %33 : vector<16x384xf32>
    %35 = arith.addf %31, %34 : vector<16x384xf32>
    %cst_24 = arith.constant 0.000000e+00 : f32
    %36 = vector.broadcast %cst_24 : f32 to vector<16x128xf32>
    %c0_25 = arith.constant 0 : index
    %c0_26 = arith.constant 0 : index
    %37 = vector.load %arg13[%c0_25, %c0_26] : memref<16x612xf32, #tpu.memory_space<vmem>>, vector<16x128xf32>
    tpu.vector_store %arg13[%c0_25, %c0_26], %36 {strides = array<i32>} : memref<16x612xf32, #tpu.memory_space<vmem>>, vector<16x128xf32>,
    %cst_27 = arith.constant 0.000000e+00 : f32
    %38 = vector.broadcast %cst_27 : f32 to vector<16x100xf32>
    %c0_28 = arith.constant 0 : index
    %c512_29 = arith.constant 512 : index
    %39 = vector.load %arg13[%c0_28, %c512_29] : memref<16x612xf32, #tpu.memory_space<vmem>>, vector<16x100xf32>
    tpu.vector_store %arg13[%c0_28, %c512_29], %38 {strides = array<i32>} : memref<16x612xf32, #tpu.memory_space<vmem>>, vector<16x100xf32>,
    %c0_30 = arith.constant 0 : index
    %c0_31 = arith.constant 0 : index
    %40 = vector.load %arg1[%c0_30, %c0_31] : memref<16x384xf32, #tpu.memory_space<vmem>>, vector<16x384xf32>
    %c0_32 = arith.constant 0 : index
    %c128_33 = arith.constant 128 : index
    %41 = vector.load %arg13[%c0_32, %c128_33] : memref<16x612xf32, #tpu.memory_space<vmem>>, vector<16x384xf32>
    tpu.vector_store %arg13[%c0_32, %c128_33], %40 {strides = array<i32>} : memref<16x612xf32, #tpu.memory_space<vmem>>, vector<16x384xf32>,
    %c0_34 = arith.constant 0 : index
    %c103_35 = arith.constant 103 : index
    %42 = vector.load %arg13[%c0_34, %c103_35] : memref<16x612xf32, #tpu.memory_space<vmem>>, vector<16x384xf32>
    %c0_36 = arith.constant 0 : index
    %c104_37 = arith.constant 104 : index
    %43 = vector.load %arg13[%c0_36, %c104_37] : memref<16x612xf32, #tpu.memory_space<vmem>>, vector<16x384xf32>
    %44 = arith.addf %42, %43 : vector<16x384xf32>
    %c0_38 = arith.constant 0 : index
    %c105_39 = arith.constant 105 : index
    %45 = vector.load %arg13[%c0_38, %c105_39] : memref<16x612xf32, #tpu.memory_space<vmem>>, vector<16x384xf32>
    %46 = arith.addf %44, %45 : vector<16x384xf32>
    %c0_40 = arith.constant 0 : index
    %c127_41 = arith.constant 127 : index
    %47 = vector.load %arg13[%c0_40, %c127_41] : memref<16x612xf32, #tpu.memory_space<vmem>>, vector<16x384xf32>
    %48 = arith.addf %46, %47 : vector<16x384xf32>
    %c0_42 = arith.constant 0 : index
    %c128_43 = arith.constant 128 : index
    %49 = vector.load %arg13[%c0_42, %c128_43] : memref<16x612xf32, #tpu.memory_space<vmem>>, vector<16x384xf32>
    %50 = arith.addf %48, %49 : vector<16x384xf32>
    %c0_44 = arith.constant 0 : index
    %c129_45 = arith.constant 129 : index
    %51 = vector.load %arg13[%c0_44, %c129_45] : memref<16x612xf32, #tpu.memory_space<vmem>>, vector<16x384xf32>
    %52 = arith.addf %50, %51 : vector<16x384xf32>
    %c0_46 = arith.constant 0 : index
    %c151_47 = arith.constant 151 : index
    %53 = vector.load %arg13[%c0_46, %c151_47] : memref<16x612xf32, #tpu.memory_space<vmem>>, vector<16x384xf32>
    %54 = arith.addf %52, %53 : vector<16x384xf32>
    %c0_48 = arith.constant 0 : index
    %c152_49 = arith.constant 152 : index
    %55 = vector.load %arg13[%c0_48, %c152_49] : memref<16x612xf32, #tpu.memory_space<vmem>>, vector<16x384xf32>
    %56 = arith.addf %54, %55 : vector<16x384xf32>
    %c0_50 = arith.constant 0 : index
    %c153_51 = arith.constant 153 : index
    %57 = vector.load %arg13[%c0_50, %c153_51] : memref<16x612xf32, #tpu.memory_space<vmem>>, vector<16x384xf32>
    %58 = arith.addf %56, %57 : vector<16x384xf32>
    %59 = vector.broadcast %0 : vector<1x384xf32> to vector<16x384xf32>
    %60 = arith.mulf %58, %59 : vector<16x384xf32>
    %61 = arith.addf %35, %60 : vector<16x384xf32>
    %c0_52 = arith.constant 0 : index
    %c0_53 = arith.constant 0 : index
    %62 = vector.load %arg1[%c0_52, %c0_53] : memref<16x384xf32, #tpu.memory_space<vmem>>, vector<16x384xf32>
    %cst_54 = arith.constant 0.000000e+00 : f32
    %63 = vector.broadcast %cst_54 : f32 to vector<16x384xf32>
    %64 = arith.maximumf %62, %63 : vector<16x384xf32>
    %c0_55 = arith.constant 0 : index
    %c128_56 = arith.constant 128 : index
    %65 = vector.load %arg13[%c0_55, %c128_56] : memref<16x612xf32, #tpu.memory_space<vmem>>, vector<16x384xf32>
    tpu.vector_store %arg13[%c0_55, %c128_56], %64 {strides = array<i32>} : memref<16x612xf32, #tpu.memory_space<vmem>>, vector<16x384xf32>,
    %c0_57 = arith.constant 0 : index
    %c78 = arith.constant 78 : index
    %66 = vector.load %arg13[%c0_57, %c78] : memref<16x612xf32, #tpu.memory_space<vmem>>, vector<16x384xf32>
    %c0_58 = arith.constant 0 : index
    %c0_59 = arith.constant 0 : index
    %c0_60 = arith.constant 0 : index
    %67 = vector.load %arg4[%c0_58, %c0_59, %c0_60] : memref<9x16x384xf32, #tpu.memory_space<vmem>>, vector<1x16x384xf32>
    %68 = vector.shape_cast %67 : vector<1x16x384xf32> to vector<16x384xf32>
    %69 = arith.mulf %66, %68 : vector<16x384xf32>
    %c6 = arith.constant 6 : index
    %c0_61 = arith.constant 0 : index
    %c0_62 = arith.constant 0 : index
    %70 = vector.load %arg5[%c6, %c0_61, %c0_62] : memref<25x16x384xf32, #tpu.memory_space<vmem>>, vector<1x16x384xf32>
    %71 = vector.shape_cast %70 : vector<1x16x384xf32> to vector<16x384xf32>
    %72 = arith.mulf %66, %71 : vector<16x384xf32>
    %c0_63 = arith.constant 0 : index
    %c0_64 = arith.constant 0 : index
    %c0_65 = arith.constant 0 : index
    %73 = vector.load %arg7[%c0_63, %c0_64, %c0_65] : memref<25x16x384xf32, #tpu.memory_space<vmem>>, vector<1x16x384xf32>
    %74 = vector.shape_cast %73 : vector<1x16x384xf32> to vector<16x384xf32>
    %75 = arith.mulf %66, %74 : vector<16x384xf32>
    %c0_66 = arith.constant 0 : index
    %c80 = arith.constant 80 : index
    %76 = vector.load %arg13[%c0_66, %c80] : memref<16x612xf32, #tpu.memory_space<vmem>>, vector<16x384xf32>
    %c1_67 = arith.constant 1 : index
    %c0_68 = arith.constant 0 : index
    %c0_69 = arith.constant 0 : index
    %77 = vector.load %arg4[%c1_67, %c0_68, %c0_69] : memref<9x16x384xf32, #tpu.memory_space<vmem>>, vector<1x16x384xf32>
    %78 = vector.shape_cast %77 : vector<1x16x384xf32> to vector<16x384xf32>
    %79 = arith.mulf %76, %78 : vector<16x384xf32>
    %80 = arith.addf %69, %79 : vector<16x384xf32>
    %c7 = arith.constant 7 : index
    %c0_70 = arith.constant 0 : index
    %c0_71 = arith.constant 0 : index
    %81 = vector.load %arg5[%c7, %c0_70, %c0_71] : memref<25x16x384xf32, #tpu.memory_space<vmem>>, vector<1x16x384xf32>
    %82 = vector.shape_cast %81 : vector<1x16x384xf32> to vector<16x384xf32>
    %83 = arith.mulf %76, %82 : vector<16x384xf32>
    %84 = arith.addf %72, %83 : vector<16x384xf32>
    %c2_72 = arith.constant 2 : index
    %c0_73 = arith.constant 0 : index
    %c0_74 = arith.constant 0 : index
    %85 = vector.load %arg7[%c2_72, %c0_73, %c0_74] : memref<25x16x384xf32, #tpu.memory_space<vmem>>, vector<1x16x384xf32>
    %86 = vector.shape_cast %85 : vector<1x16x384xf32> to vector<16x384xf32>
    %87 = arith.mulf %76, %86 : vector<16x384xf32>
    %88 = arith.addf %75, %87 : vector<16x384xf32>
    %c0_75 = arith.constant 0 : index
    %c82 = arith.constant 82 : index
    %89 = vector.load %arg13[%c0_75, %c82] : memref<16x612xf32, #tpu.memory_space<vmem>>, vector<16x384xf32>
    %c2_76 = arith.constant 2 : index
    %c0_77 = arith.constant 0 : index
    %c0_78 = arith.constant 0 : index
    %90 = vector.load %arg4[%c2_76, %c0_77, %c0_78] : memref<9x16x384xf32, #tpu.memory_space<vmem>>, vector<1x16x384xf32>
    %91 = vector.shape_cast %90 : vector<1x16x384xf32> to vector<16x384xf32>
    %92 = arith.mulf %89, %91 : vector<16x384xf32>
    %93 = arith.addf %80, %92 : vector<16x384xf32>
    %c8 = arith.constant 8 : index
    %c0_79 = arith.constant 0 : index
    %c0_80 = arith.constant 0 : index
    %94 = vector.load %arg5[%c8, %c0_79, %c0_80] : memref<25x16x384xf32, #tpu.memory_space<vmem>>, vector<1x16x384xf32>
    %95 = vector.shape_cast %94 : vector<1x16x384xf32> to vector<16x384xf32>
    %96 = arith.mulf %89, %95 : vector<16x384xf32>
    %97 = arith.addf %84, %96 : vector<16x384xf32>
    %c4 = arith.constant 4 : index
    %c0_81 = arith.constant 0 : index
    %c0_82 = arith.constant 0 : index
    %98 = vector.load %arg7[%c4, %c0_81, %c0_82] : memref<25x16x384xf32, #tpu.memory_space<vmem>>, vector<1x16x384xf32>
    %99 = vector.shape_cast %98 : vector<1x16x384xf32> to vector<16x384xf32>
    %100 = arith.mulf %89, %99 : vector<16x384xf32>
    %101 = arith.addf %88, %100 : vector<16x384xf32>
    %c0_83 = arith.constant 0 : index
    %c126 = arith.constant 126 : index
    %102 = vector.load %arg13[%c0_83, %c126] : memref<16x612xf32, #tpu.memory_space<vmem>>, vector<16x384xf32>
    %c3 = arith.constant 3 : index
    %c0_84 = arith.constant 0 : index
    %c0_85 = arith.constant 0 : index
    %103 = vector.load %arg4[%c3, %c0_84, %c0_85] : memref<9x16x384xf32, #tpu.memory_space<vmem>>, vector<1x16x384xf32>
    %104 = vector.shape_cast %103 : vector<1x16x384xf32> to vector<16x384xf32>
    %105 = arith.mulf %102, %104 : vector<16x384xf32>
    %106 = arith.addf %93, %105 : vector<16x384xf32>
    %c11 = arith.constant 11 : index
    %c0_86 = arith.constant 0 : index
    %c0_87 = arith.constant 0 : index
    %107 = vector.load %arg5[%c11, %c0_86, %c0_87] : memref<25x16x384xf32, #tpu.memory_space<vmem>>, vector<1x16x384xf32>
    %108 = vector.shape_cast %107 : vector<1x16x384xf32> to vector<16x384xf32>
    %109 = arith.mulf %102, %108 : vector<16x384xf32>
    %110 = arith.addf %97, %109 : vector<16x384xf32>
    %c10 = arith.constant 10 : index
    %c0_88 = arith.constant 0 : index
    %c0_89 = arith.constant 0 : index
    %111 = vector.load %arg7[%c10, %c0_88, %c0_89] : memref<25x16x384xf32, #tpu.memory_space<vmem>>, vector<1x16x384xf32>
    %112 = vector.shape_cast %111 : vector<1x16x384xf32> to vector<16x384xf32>
    %113 = arith.mulf %102, %112 : vector<16x384xf32>
    %114 = arith.addf %101, %113 : vector<16x384xf32>
    %c0_90 = arith.constant 0 : index
    %c128_91 = arith.constant 128 : index
    %115 = vector.load %arg13[%c0_90, %c128_91] : memref<16x612xf32, #tpu.memory_space<vmem>>, vector<16x384xf32>
    %c4_92 = arith.constant 4 : index
    %c0_93 = arith.constant 0 : index
    %c0_94 = arith.constant 0 : index
    %116 = vector.load %arg4[%c4_92, %c0_93, %c0_94] : memref<9x16x384xf32, #tpu.memory_space<vmem>>, vector<1x16x384xf32>
    %117 = vector.shape_cast %116 : vector<1x16x384xf32> to vector<16x384xf32>
    %118 = arith.mulf %115, %117 : vector<16x384xf32>
    %119 = arith.addf %106, %118 : vector<16x384xf32>
    %c12 = arith.constant 12 : index
    %c0_95 = arith.constant 0 : index
    %c0_96 = arith.constant 0 : index
    %120 = vector.load %arg5[%c12, %c0_95, %c0_96] : memref<25x16x384xf32, #tpu.memory_space<vmem>>, vector<1x16x384xf32>
    %121 = vector.shape_cast %120 : vector<1x16x384xf32> to vector<16x384xf32>
    %122 = arith.mulf %115, %121 : vector<16x384xf32>
    %123 = arith.addf %110, %122 : vector<16x384xf32>
    %c4_97 = arith.constant 4 : index
    %c0_98 = arith.constant 0 : index
    %c0_99 = arith.constant 0 : index
    %124 = vector.load %arg6[%c4_97, %c0_98, %c0_99] : memref<9x16x384xf32, #tpu.memory_space<vmem>>, vector<1x16x384xf32>
    %125 = vector.shape_cast %124 : vector<1x16x384xf32> to vector<16x384xf32>
    %126 = arith.mulf %115, %125 : vector<16x384xf32>
    %c12_100 = arith.constant 12 : index
    %c0_101 = arith.constant 0 : index
    %c0_102 = arith.constant 0 : index
    %127 = vector.load %arg7[%c12_100, %c0_101, %c0_102] : memref<25x16x384xf32, #tpu.memory_space<vmem>>, vector<1x16x384xf32>
    %128 = vector.shape_cast %127 : vector<1x16x384xf32> to vector<16x384xf32>
    %129 = arith.mulf %115, %128 : vector<16x384xf32>
    %130 = arith.addf %114, %129 : vector<16x384xf32>
    %c0_103 = arith.constant 0 : index
    %c130 = arith.constant 130 : index
    %131 = vector.load %arg13[%c0_103, %c130] : memref<16x612xf32, #tpu.memory_space<vmem>>, vector<16x384xf32>
    %c5 = arith.constant 5 : index
    %c0_104 = arith.constant 0 : index
    %c0_105 = arith.constant 0 : index
    %132 = vector.load %arg4[%c5, %c0_104, %c0_105] : memref<9x16x384xf32, #tpu.memory_space<vmem>>, vector<1x16x384xf32>
    %133 = vector.shape_cast %132 : vector<1x16x384xf32> to vector<16x384xf32>
    %134 = arith.mulf %131, %133 : vector<16x384xf32>
    %135 = arith.addf %119, %134 : vector<16x384xf32>
    %c13 = arith.constant 13 : index
    %c0_106 = arith.constant 0 : index
    %c0_107 = arith.constant 0 : index
    %136 = vector.load %arg5[%c13, %c0_106, %c0_107] : memref<25x16x384xf32, #tpu.memory_space<vmem>>, vector<1x16x384xf32>
    %137 = vector.shape_cast %136 : vector<1x16x384xf32> to vector<16x384xf32>
    %138 = arith.mulf %131, %137 : vector<16x384xf32>
    %139 = arith.addf %123, %138 : vector<16x384xf32>
    %c14 = arith.constant 14 : index
    %c0_108 = arith.constant 0 : index
    %c0_109 = arith.constant 0 : index
    %140 = vector.load %arg7[%c14, %c0_108, %c0_109] : memref<25x16x384xf32, #tpu.memory_space<vmem>>, vector<1x16x384xf32>
    %141 = vector.shape_cast %140 : vector<1x16x384xf32> to vector<16x384xf32>
    %142 = arith.mulf %131, %141 : vector<16x384xf32>
    %143 = arith.addf %130, %142 : vector<16x384xf32>
    %c0_110 = arith.constant 0 : index
    %c174 = arith.constant 174 : index
    %144 = vector.load %arg13[%c0_110, %c174] : memref<16x612xf32, #tpu.memory_space<vmem>>, vector<16x384xf32>
    %c6_111 = arith.constant 6 : index
    %c0_112 = arith.constant 0 : index
    %c0_113 = arith.constant 0 : index
    %145 = vector.load %arg4[%c6_111, %c0_112, %c0_113] : memref<9x16x384xf32, #tpu.memory_space<vmem>>, vector<1x16x384xf32>
    %146 = vector.shape_cast %145 : vector<1x16x384xf32> to vector<16x384xf32>
    %147 = arith.mulf %144, %146 : vector<16x384xf32>
    %148 = arith.addf %135, %147 : vector<16x384xf32>
    %c16 = arith.constant 16 : index
    %c0_114 = arith.constant 0 : index
    %c0_115 = arith.constant 0 : index
    %149 = vector.load %arg5[%c16, %c0_114, %c0_115] : memref<25x16x384xf32, #tpu.memory_space<vmem>>, vector<1x16x384xf32>
    %150 = vector.shape_cast %149 : vector<1x16x384xf32> to vector<16x384xf32>
    %151 = arith.mulf %144, %150 : vector<16x384xf32>
    %152 = arith.addf %139, %151 : vector<16x384xf32>
    %c20 = arith.constant 20 : index
    %c0_116 = arith.constant 0 : index
    %c0_117 = arith.constant 0 : index
    %153 = vector.load %arg7[%c20, %c0_116, %c0_117] : memref<25x16x384xf32, #tpu.memory_space<vmem>>, vector<1x16x384xf32>
    %154 = vector.shape_cast %153 : vector<1x16x384xf32> to vector<16x384xf32>
    %155 = arith.mulf %144, %154 : vector<16x384xf32>
    %156 = arith.addf %143, %155 : vector<16x384xf32>
    %c0_118 = arith.constant 0 : index
    %c176 = arith.constant 176 : index
    %157 = vector.load %arg13[%c0_118, %c176] : memref<16x612xf32, #tpu.memory_space<vmem>>, vector<16x384xf32>
    %c7_119 = arith.constant 7 : index
    %c0_120 = arith.constant 0 : index
    %c0_121 = arith.constant 0 : index
    %158 = vector.load %arg4[%c7_119, %c0_120, %c0_121] : memref<9x16x384xf32, #tpu.memory_space<vmem>>, vector<1x16x384xf32>
    %159 = vector.shape_cast %158 : vector<1x16x384xf32> to vector<16x384xf32>
    %160 = arith.mulf %157, %159 : vector<16x384xf32>
    %161 = arith.addf %148, %160 : vector<16x384xf32>
    %c17 = arith.constant 17 : index
    %c0_122 = arith.constant 0 : index
    %c0_123 = arith.constant 0 : index
    %162 = vector.load %arg5[%c17, %c0_122, %c0_123] : memref<25x16x384xf32, #tpu.memory_space<vmem>>, vector<1x16x384xf32>
    %163 = vector.shape_cast %162 : vector<1x16x384xf32> to vector<16x384xf32>
    %164 = arith.mulf %157, %163 : vector<16x384xf32>
    %165 = arith.addf %152, %164 : vector<16x384xf32>
    %c22 = arith.constant 22 : index
    %c0_124 = arith.constant 0 : index
    %c0_125 = arith.constant 0 : index
    %166 = vector.load %arg7[%c22, %c0_124, %c0_125] : memref<25x16x384xf32, #tpu.memory_space<vmem>>, vector<1x16x384xf32>
    %167 = vector.shape_cast %166 : vector<1x16x384xf32> to vector<16x384xf32>
    %168 = arith.mulf %157, %167 : vector<16x384xf32>
    %169 = arith.addf %156, %168 : vector<16x384xf32>
    %c0_126 = arith.constant 0 : index
    %c178 = arith.constant 178 : index
    %170 = vector.load %arg13[%c0_126, %c178] : memref<16x612xf32, #tpu.memory_space<vmem>>, vector<16x384xf32>
    %c8_127 = arith.constant 8 : index
    %c0_128 = arith.constant 0 : index
    %c0_129 = arith.constant 0 : index
    %171 = vector.load %arg4[%c8_127, %c0_128, %c0_129] : memref<9x16x384xf32, #tpu.memory_space<vmem>>, vector<1x16x384xf32>
    %172 = vector.shape_cast %171 : vector<1x16x384xf32> to vector<16x384xf32>
    %173 = arith.mulf %170, %172 : vector<16x384xf32>
    %174 = arith.addf %161, %173 : vector<16x384xf32>
    %c18 = arith.constant 18 : index
    %c0_130 = arith.constant 0 : index
    %c0_131 = arith.constant 0 : index
    %175 = vector.load %arg5[%c18, %c0_130, %c0_131] : memref<25x16x384xf32, #tpu.memory_space<vmem>>, vector<1x16x384xf32>
    %176 = vector.shape_cast %175 : vector<1x16x384xf32> to vector<16x384xf32>
    %177 = arith.mulf %170, %176 : vector<16x384xf32>
    %178 = arith.addf %165, %177 : vector<16x384xf32>
    %c24 = arith.constant 24 : index
    %c0_132 = arith.constant 0 : index
    %c0_133 = arith.constant 0 : index
    %179 = vector.load %arg7[%c24, %c0_132, %c0_133] : memref<25x16x384xf32, #tpu.memory_space<vmem>>, vector<1x16x384xf32>
    %180 = vector.shape_cast %179 : vector<1x16x384xf32> to vector<16x384xf32>
    %181 = arith.mulf %170, %180 : vector<16x384xf32>
    %182 = arith.addf %169, %181 : vector<16x384xf32>
    %c0_134 = arith.constant 0 : index
    %c28 = arith.constant 28 : index
    %183 = vector.load %arg13[%c0_134, %c28] : memref<16x612xf32, #tpu.memory_space<vmem>>, vector<16x384xf32>
    %c0_135 = arith.constant 0 : index
    %c0_136 = arith.constant 0 : index
    %c0_137 = arith.constant 0 : index
    %184 = vector.load %arg5[%c0_135, %c0_136, %c0_137] : memref<25x16x384xf32, #tpu.memory_space<vmem>>, vector<1x16x384xf32>
    %185 = vector.shape_cast %184 : vector<1x16x384xf32> to vector<16x384xf32>
    %186 = arith.mulf %183, %185 : vector<16x384xf32>
    %187 = arith.addf %178, %186 : vector<16x384xf32>
    %c0_138 = arith.constant 0 : index
    %c30 = arith.constant 30 : index
    %188 = vector.load %arg13[%c0_138, %c30] : memref<16x612xf32, #tpu.memory_space<vmem>>, vector<16x384xf32>
    %c1_139 = arith.constant 1 : index
    %c0_140 = arith.constant 0 : index
    %c0_141 = arith.constant 0 : index
    %189 = vector.load %arg5[%c1_139, %c0_140, %c0_141] : memref<25x16x384xf32, #tpu.memory_space<vmem>>, vector<1x16x384xf32>
    %190 = vector.shape_cast %189 : vector<1x16x384xf32> to vector<16x384xf32>
    %191 = arith.mulf %188, %190 : vector<16x384xf32>
    %192 = arith.addf %187, %191 : vector<16x384xf32>
    %c0_142 = arith.constant 0 : index
    %c32 = arith.constant 32 : index
    %193 = vector.load %arg13[%c0_142, %c32] : memref<16x612xf32, #tpu.memory_space<vmem>>, vector<16x384xf32>
    %c2_143 = arith.constant 2 : index
    %c0_144 = arith.constant 0 : index
    %c0_145 = arith.constant 0 : index
    %194 = vector.load %arg5[%c2_143, %c0_144, %c0_145] : memref<25x16x384xf32, #tpu.memory_space<vmem>>, vector<1x16x384xf32>
    %195 = vector.shape_cast %194 : vector<1x16x384xf32> to vector<16x384xf32>
    %196 = arith.mulf %193, %195 : vector<16x384xf32>
    %197 = arith.addf %192, %196 : vector<16x384xf32>
    %c0_146 = arith.constant 0 : index
    %c34 = arith.constant 34 : index
    %198 = vector.load %arg13[%c0_146, %c34] : memref<16x612xf32, #tpu.memory_space<vmem>>, vector<16x384xf32>
    %c3_147 = arith.constant 3 : index
    %c0_148 = arith.constant 0 : index
    %c0_149 = arith.constant 0 : index
    %199 = vector.load %arg5[%c3_147, %c0_148, %c0_149] : memref<25x16x384xf32, #tpu.memory_space<vmem>>, vector<1x16x384xf32>
    %200 = vector.shape_cast %199 : vector<1x16x384xf32> to vector<16x384xf32>
    %201 = arith.mulf %198, %200 : vector<16x384xf32>
    %202 = arith.addf %197, %201 : vector<16x384xf32>
    %c0_150 = arith.constant 0 : index
    %c36 = arith.constant 36 : index
    %203 = vector.load %arg13[%c0_150, %c36] : memref<16x612xf32, #tpu.memory_space<vmem>>, vector<16x384xf32>
    %c4_151 = arith.constant 4 : index
    %c0_152 = arith.constant 0 : index
    %c0_153 = arith.constant 0 : index
    %204 = vector.load %arg5[%c4_151, %c0_152, %c0_153] : memref<25x16x384xf32, #tpu.memory_space<vmem>>, vector<1x16x384xf32>
    %205 = vector.shape_cast %204 : vector<1x16x384xf32> to vector<16x384xf32>
    %206 = arith.mulf %203, %205 : vector<16x384xf32>
    %207 = arith.addf %202, %206 : vector<16x384xf32>
    %c0_154 = arith.constant 0 : index
    %c76 = arith.constant 76 : index
    %208 = vector.load %arg13[%c0_154, %c76] : memref<16x612xf32, #tpu.memory_space<vmem>>, vector<16x384xf32>
    %c5_155 = arith.constant 5 : index
    %c0_156 = arith.constant 0 : index
    %c0_157 = arith.constant 0 : index
    %209 = vector.load %arg5[%c5_155, %c0_156, %c0_157] : memref<25x16x384xf32, #tpu.memory_space<vmem>>, vector<1x16x384xf32>
    %210 = vector.shape_cast %209 : vector<1x16x384xf32> to vector<16x384xf32>
    %211 = arith.mulf %208, %210 : vector<16x384xf32>
    %212 = arith.addf %207, %211 : vector<16x384xf32>
    %c0_158 = arith.constant 0 : index
    %c84 = arith.constant 84 : index
    %213 = vector.load %arg13[%c0_158, %c84] : memref<16x612xf32, #tpu.memory_space<vmem>>, vector<16x384xf32>
    %c9 = arith.constant 9 : index
    %c0_159 = arith.constant 0 : index
    %c0_160 = arith.constant 0 : index
    %214 = vector.load %arg5[%c9, %c0_159, %c0_160] : memref<25x16x384xf32, #tpu.memory_space<vmem>>, vector<1x16x384xf32>
    %215 = vector.shape_cast %214 : vector<1x16x384xf32> to vector<16x384xf32>
    %216 = arith.mulf %213, %215 : vector<16x384xf32>
    %217 = arith.addf %212, %216 : vector<16x384xf32>
    %c0_161 = arith.constant 0 : index
    %c124 = arith.constant 124 : index
    %218 = vector.load %arg13[%c0_161, %c124] : memref<16x612xf32, #tpu.memory_space<vmem>>, vector<16x384xf32>
    %c10_162 = arith.constant 10 : index
    %c0_163 = arith.constant 0 : index
    %c0_164 = arith.constant 0 : index
    %219 = vector.load %arg5[%c10_162, %c0_163, %c0_164] : memref<25x16x384xf32, #tpu.memory_space<vmem>>, vector<1x16x384xf32>
    %220 = vector.shape_cast %219 : vector<1x16x384xf32> to vector<16x384xf32>
    %221 = arith.mulf %218, %220 : vector<16x384xf32>
    %222 = arith.addf %217, %221 : vector<16x384xf32>
    %c0_165 = arith.constant 0 : index
    %c132 = arith.constant 132 : index
    %223 = vector.load %arg13[%c0_165, %c132] : memref<16x612xf32, #tpu.memory_space<vmem>>, vector<16x384xf32>
    %c14_166 = arith.constant 14 : index
    %c0_167 = arith.constant 0 : index
    %c0_168 = arith.constant 0 : index
    %224 = vector.load %arg5[%c14_166, %c0_167, %c0_168] : memref<25x16x384xf32, #tpu.memory_space<vmem>>, vector<1x16x384xf32>
    %225 = vector.shape_cast %224 : vector<1x16x384xf32> to vector<16x384xf32>
    %226 = arith.mulf %223, %225 : vector<16x384xf32>
    %227 = arith.addf %222, %226 : vector<16x384xf32>
    %c0_169 = arith.constant 0 : index
    %c172 = arith.constant 172 : index
    %228 = vector.load %arg13[%c0_169, %c172] : memref<16x612xf32, #tpu.memory_space<vmem>>, vector<16x384xf32>
    %c15 = arith.constant 15 : index
    %c0_170 = arith.constant 0 : index
    %c0_171 = arith.constant 0 : index
    %229 = vector.load %arg5[%c15, %c0_170, %c0_171] : memref<25x16x384xf32, #tpu.memory_space<vmem>>, vector<1x16x384xf32>
    %230 = vector.shape_cast %229 : vector<1x16x384xf32> to vector<16x384xf32>
    %231 = arith.mulf %228, %230 : vector<16x384xf32>
    %232 = arith.addf %227, %231 : vector<16x384xf32>
    %c0_172 = arith.constant 0 : index
    %c180 = arith.constant 180 : index
    %233 = vector.load %arg13[%c0_172, %c180] : memref<16x612xf32, #tpu.memory_space<vmem>>, vector<16x384xf32>
    %c19 = arith.constant 19 : index
    %c0_173 = arith.constant 0 : index
    %c0_174 = arith.constant 0 : index
    %234 = vector.load %arg5[%c19, %c0_173, %c0_174] : memref<25x16x384xf32, #tpu.memory_space<vmem>>, vector<1x16x384xf32>
    %235 = vector.shape_cast %234 : vector<1x16x384xf32> to vector<16x384xf32>
    %236 = arith.mulf %233, %235 : vector<16x384xf32>
    %237 = arith.addf %232, %236 : vector<16x384xf32>
    %c0_175 = arith.constant 0 : index
    %c220 = arith.constant 220 : index
    %238 = vector.load %arg13[%c0_175, %c220] : memref<16x612xf32, #tpu.memory_space<vmem>>, vector<16x384xf32>
    %c20_176 = arith.constant 20 : index
    %c0_177 = arith.constant 0 : index
    %c0_178 = arith.constant 0 : index
    %239 = vector.load %arg5[%c20_176, %c0_177, %c0_178] : memref<25x16x384xf32, #tpu.memory_space<vmem>>, vector<1x16x384xf32>
    %240 = vector.shape_cast %239 : vector<1x16x384xf32> to vector<16x384xf32>
    %241 = arith.mulf %238, %240 : vector<16x384xf32>
    %242 = arith.addf %237, %241 : vector<16x384xf32>
    %c0_179 = arith.constant 0 : index
    %c222 = arith.constant 222 : index
    %243 = vector.load %arg13[%c0_179, %c222] : memref<16x612xf32, #tpu.memory_space<vmem>>, vector<16x384xf32>
    %c21 = arith.constant 21 : index
    %c0_180 = arith.constant 0 : index
    %c0_181 = arith.constant 0 : index
    %244 = vector.load %arg5[%c21, %c0_180, %c0_181] : memref<25x16x384xf32, #tpu.memory_space<vmem>>, vector<1x16x384xf32>
    %245 = vector.shape_cast %244 : vector<1x16x384xf32> to vector<16x384xf32>
    %246 = arith.mulf %243, %245 : vector<16x384xf32>
    %247 = arith.addf %242, %246 : vector<16x384xf32>
    %c0_182 = arith.constant 0 : index
    %c224 = arith.constant 224 : index
    %248 = vector.load %arg13[%c0_182, %c224] : memref<16x612xf32, #tpu.memory_space<vmem>>, vector<16x384xf32>
    %c22_183 = arith.constant 22 : index
    %c0_184 = arith.constant 0 : index
    %c0_185 = arith.constant 0 : index
    %249 = vector.load %arg5[%c22_183, %c0_184, %c0_185] : memref<25x16x384xf32, #tpu.memory_space<vmem>>, vector<1x16x384xf32>
    %250 = vector.shape_cast %249 : vector<1x16x384xf32> to vector<16x384xf32>
    %251 = arith.mulf %248, %250 : vector<16x384xf32>
    %252 = arith.addf %247, %251 : vector<16x384xf32>
    %c0_186 = arith.constant 0 : index
    %c226 = arith.constant 226 : index
    %253 = vector.load %arg13[%c0_186, %c226] : memref<16x612xf32, #tpu.memory_space<vmem>>, vector<16x384xf32>
    %c23 = arith.constant 23 : index
    %c0_187 = arith.constant 0 : index
    %c0_188 = arith.constant 0 : index
    %254 = vector.load %arg5[%c23, %c0_187, %c0_188] : memref<25x16x384xf32, #tpu.memory_space<vmem>>, vector<1x16x384xf32>
    %255 = vector.shape_cast %254 : vector<1x16x384xf32> to vector<16x384xf32>
    %256 = arith.mulf %253, %255 : vector<16x384xf32>
    %257 = arith.addf %252, %256 : vector<16x384xf32>
    %c0_189 = arith.constant 0 : index
    %c228 = arith.constant 228 : index
    %258 = vector.load %arg13[%c0_189, %c228] : memref<16x612xf32, #tpu.memory_space<vmem>>, vector<16x384xf32>
    %c24_190 = arith.constant 24 : index
    %c0_191 = arith.constant 0 : index
    %c0_192 = arith.constant 0 : index
    %259 = vector.load %arg5[%c24_190, %c0_191, %c0_192] : memref<25x16x384xf32, #tpu.memory_space<vmem>>, vector<1x16x384xf32>
    %260 = vector.shape_cast %259 : vector<1x16x384xf32> to vector<16x384xf32>
    %261 = arith.mulf %258, %260 : vector<16x384xf32>
    %262 = arith.addf %257, %261 : vector<16x384xf32>
    %c0_193 = arith.constant 0 : index
    %c103_194 = arith.constant 103 : index
    %263 = vector.load %arg13[%c0_193, %c103_194] : memref<16x612xf32, #tpu.memory_space<vmem>>, vector<16x384xf32>
    %c0_195 = arith.constant 0 : index
    %c0_196 = arith.constant 0 : index
    %c0_197 = arith.constant 0 : index
    %264 = vector.load %arg6[%c0_195, %c0_196, %c0_197] : memref<9x16x384xf32, #tpu.memory_space<vmem>>, vector<1x16x384xf32>
    %265 = vector.shape_cast %264 : vector<1x16x384xf32> to vector<16x384xf32>
    %266 = arith.mulf %263, %265 : vector<16x384xf32>
    %267 = arith.addf %126, %266 : vector<16x384xf32>
    %c6_198 = arith.constant 6 : index
    %c0_199 = arith.constant 0 : index
    %c0_200 = arith.constant 0 : index
    %268 = vector.load %arg7[%c6_198, %c0_199, %c0_200] : memref<25x16x384xf32, #tpu.memory_space<vmem>>, vector<1x16x384xf32>
    %269 = vector.shape_cast %268 : vector<1x16x384xf32> to vector<16x384xf32>
    %270 = arith.mulf %263, %269 : vector<16x384xf32>
    %271 = arith.addf %182, %270 : vector<16x384xf32>
    %c0_201 = arith.constant 0 : index
    %c104_202 = arith.constant 104 : index
    %272 = vector.load %arg13[%c0_201, %c104_202] : memref<16x612xf32, #tpu.memory_space<vmem>>, vector<16x384xf32>
    %c1_203 = arith.constant 1 : index
    %c0_204 = arith.constant 0 : index
    %c0_205 = arith.constant 0 : index
    %273 = vector.load %arg6[%c1_203, %c0_204, %c0_205] : memref<9x16x384xf32, #tpu.memory_space<vmem>>, vector<1x16x384xf32>
    %274 = vector.shape_cast %273 : vector<1x16x384xf32> to vector<16x384xf32>
    %275 = arith.mulf %272, %274 : vector<16x384xf32>
    %276 = arith.addf %267, %275 : vector<16x384xf32>
    %c7_206 = arith.constant 7 : index
    %c0_207 = arith.constant 0 : index
    %c0_208 = arith.constant 0 : index
    %277 = vector.load %arg7[%c7_206, %c0_207, %c0_208] : memref<25x16x384xf32, #tpu.memory_space<vmem>>, vector<1x16x384xf32>
    %278 = vector.shape_cast %277 : vector<1x16x384xf32> to vector<16x384xf32>
    %279 = arith.mulf %272, %278 : vector<16x384xf32>
    %280 = arith.addf %271, %279 : vector<16x384xf32>
    %c0_209 = arith.constant 0 : index
    %c105_210 = arith.constant 105 : index
    %281 = vector.load %arg13[%c0_209, %c105_210] : memref<16x612xf32, #tpu.memory_space<vmem>>, vector<16x384xf32>
    %c2_211 = arith.constant 2 : index
    %c0_212 = arith.constant 0 : index
    %c0_213 = arith.constant 0 : index
    %282 = vector.load %arg6[%c2_211, %c0_212, %c0_213] : memref<9x16x384xf32, #tpu.memory_space<vmem>>, vector<1x16x384xf32>
    %283 = vector.shape_cast %282 : vector<1x16x384xf32> to vector<16x384xf32>
    %284 = arith.mulf %281, %283 : vector<16x384xf32>
    %285 = arith.addf %276, %284 : vector<16x384xf32>
    %c8_214 = arith.constant 8 : index
    %c0_215 = arith.constant 0 : index
    %c0_216 = arith.constant 0 : index
    %286 = vector.load %arg7[%c8_214, %c0_215, %c0_216] : memref<25x16x384xf32, #tpu.memory_space<vmem>>, vector<1x16x384xf32>
    %287 = vector.shape_cast %286 : vector<1x16x384xf32> to vector<16x384xf32>
    %288 = arith.mulf %281, %287 : vector<16x384xf32>
    %289 = arith.addf %280, %288 : vector<16x384xf32>
    %c0_217 = arith.constant 0 : index
    %c127_218 = arith.constant 127 : index
    %290 = vector.load %arg13[%c0_217, %c127_218] : memref<16x612xf32, #tpu.memory_space<vmem>>, vector<16x384xf32>
    %c3_219 = arith.constant 3 : index
    %c0_220 = arith.constant 0 : index
    %c0_221 = arith.constant 0 : index
    %291 = vector.load %arg6[%c3_219, %c0_220, %c0_221] : memref<9x16x384xf32, #tpu.memory_space<vmem>>, vector<1x16x384xf32>
    %292 = vector.shape_cast %291 : vector<1x16x384xf32> to vector<16x384xf32>
    %293 = arith.mulf %290, %292 : vector<16x384xf32>
    %294 = arith.addf %285, %293 : vector<16x384xf32>
    %c11_222 = arith.constant 11 : index
    %c0_223 = arith.constant 0 : index
    %c0_224 = arith.constant 0 : index
    %295 = vector.load %arg7[%c11_222, %c0_223, %c0_224] : memref<25x16x384xf32, #tpu.memory_space<vmem>>, vector<1x16x384xf32>
    %296 = vector.shape_cast %295 : vector<1x16x384xf32> to vector<16x384xf32>
    %297 = arith.mulf %290, %296 : vector<16x384xf32>
    %298 = arith.addf %289, %297 : vector<16x384xf32>
    %c0_225 = arith.constant 0 : index
    %c129_226 = arith.constant 129 : index
    %299 = vector.load %arg13[%c0_225, %c129_226] : memref<16x612xf32, #tpu.memory_space<vmem>>, vector<16x384xf32>
    %c5_227 = arith.constant 5 : index
    %c0_228 = arith.constant 0 : index
    %c0_229 = arith.constant 0 : index
    %300 = vector.load %arg6[%c5_227, %c0_228, %c0_229] : memref<9x16x384xf32, #tpu.memory_space<vmem>>, vector<1x16x384xf32>
    %301 = vector.shape_cast %300 : vector<1x16x384xf32> to vector<16x384xf32>
    %302 = arith.mulf %299, %301 : vector<16x384xf32>
    %303 = arith.addf %294, %302 : vector<16x384xf32>
    %c13_230 = arith.constant 13 : index
    %c0_231 = arith.constant 0 : index
    %c0_232 = arith.constant 0 : index
    %304 = vector.load %arg7[%c13_230, %c0_231, %c0_232] : memref<25x16x384xf32, #tpu.memory_space<vmem>>, vector<1x16x384xf32>
    %305 = vector.shape_cast %304 : vector<1x16x384xf32> to vector<16x384xf32>
    %306 = arith.mulf %299, %305 : vector<16x384xf32>
    %307 = arith.addf %298, %306 : vector<16x384xf32>
    %c0_233 = arith.constant 0 : index
    %c151_234 = arith.constant 151 : index
    %308 = vector.load %arg13[%c0_233, %c151_234] : memref<16x612xf32, #tpu.memory_space<vmem>>, vector<16x384xf32>
    %c6_235 = arith.constant 6 : index
    %c0_236 = arith.constant 0 : index
    %c0_237 = arith.constant 0 : index
    %309 = vector.load %arg6[%c6_235, %c0_236, %c0_237] : memref<9x16x384xf32, #tpu.memory_space<vmem>>, vector<1x16x384xf32>
    %310 = vector.shape_cast %309 : vector<1x16x384xf32> to vector<16x384xf32>
    %311 = arith.mulf %308, %310 : vector<16x384xf32>
    %312 = arith.addf %303, %311 : vector<16x384xf32>
    %c16_238 = arith.constant 16 : index
    %c0_239 = arith.constant 0 : index
    %c0_240 = arith.constant 0 : index
    %313 = vector.load %arg7[%c16_238, %c0_239, %c0_240] : memref<25x16x384xf32, #tpu.memory_space<vmem>>, vector<1x16x384xf32>
    %314 = vector.shape_cast %313 : vector<1x16x384xf32> to vector<16x384xf32>
    %315 = arith.mulf %308, %314 : vector<16x384xf32>
    %316 = arith.addf %307, %315 : vector<16x384xf32>
    %c0_241 = arith.constant 0 : index
    %c152_242 = arith.constant 152 : index
    %317 = vector.load %arg13[%c0_241, %c152_242] : memref<16x612xf32, #tpu.memory_space<vmem>>, vector<16x384xf32>
    %c7_243 = arith.constant 7 : index
    %c0_244 = arith.constant 0 : index
    %c0_245 = arith.constant 0 : index
    %318 = vector.load %arg6[%c7_243, %c0_244, %c0_245] : memref<9x16x384xf32, #tpu.memory_space<vmem>>, vector<1x16x384xf32>
    %319 = vector.shape_cast %318 : vector<1x16x384xf32> to vector<16x384xf32>
    %320 = arith.mulf %317, %319 : vector<16x384xf32>
    %321 = arith.addf %312, %320 : vector<16x384xf32>
    %c17_246 = arith.constant 17 : index
    %c0_247 = arith.constant 0 : index
    %c0_248 = arith.constant 0 : index
    %322 = vector.load %arg7[%c17_246, %c0_247, %c0_248] : memref<25x16x384xf32, #tpu.memory_space<vmem>>, vector<1x16x384xf32>
    %323 = vector.shape_cast %322 : vector<1x16x384xf32> to vector<16x384xf32>
    %324 = arith.mulf %317, %323 : vector<16x384xf32>
    %325 = arith.addf %316, %324 : vector<16x384xf32>
    %c0_249 = arith.constant 0 : index
    %c153_250 = arith.constant 153 : index
    %326 = vector.load %arg13[%c0_249, %c153_250] : memref<16x612xf32, #tpu.memory_space<vmem>>, vector<16x384xf32>
    %c8_251 = arith.constant 8 : index
    %c0_252 = arith.constant 0 : index
    %c0_253 = arith.constant 0 : index
    %327 = vector.load %arg6[%c8_251, %c0_252, %c0_253] : memref<9x16x384xf32, #tpu.memory_space<vmem>>, vector<1x16x384xf32>
    %328 = vector.shape_cast %327 : vector<1x16x384xf32> to vector<16x384xf32>
    %329 = arith.mulf %326, %328 : vector<16x384xf32>
    %330 = arith.addf %321, %329 : vector<16x384xf32>
    %c18_254 = arith.constant 18 : index
    %c0_255 = arith.constant 0 : index
    %c0_256 = arith.constant 0 : index
    %331 = vector.load %arg7[%c18_254, %c0_255, %c0_256] : memref<25x16x384xf32, #tpu.memory_space<vmem>>, vector<1x16x384xf32>
    %332 = vector.shape_cast %331 : vector<1x16x384xf32> to vector<16x384xf32>
    %333 = arith.mulf %326, %332 : vector<16x384xf32>
    %334 = arith.addf %325, %333 : vector<16x384xf32>
    %c0_257 = arith.constant 0 : index
    %c79 = arith.constant 79 : index
    %335 = vector.load %arg13[%c0_257, %c79] : memref<16x612xf32, #tpu.memory_space<vmem>>, vector<16x384xf32>
    %c1_258 = arith.constant 1 : index
    %c0_259 = arith.constant 0 : index
    %c0_260 = arith.constant 0 : index
    %336 = vector.load %arg7[%c1_258, %c0_259, %c0_260] : memref<25x16x384xf32, #tpu.memory_space<vmem>>, vector<1x16x384xf32>
    %337 = vector.shape_cast %336 : vector<1x16x384xf32> to vector<16x384xf32>
    %338 = arith.mulf %335, %337 : vector<16x384xf32>
    %339 = arith.addf %334, %338 : vector<16x384xf32>
    %c0_261 = arith.constant 0 : index
    %c81 = arith.constant 81 : index
    %340 = vector.load %arg13[%c0_261, %c81] : memref<16x612xf32, #tpu.memory_space<vmem>>, vector<16x384xf32>
    %c3_262 = arith.constant 3 : index
    %c0_263 = arith.constant 0 : index
    %c0_264 = arith.constant 0 : index
    %341 = vector.load %arg7[%c3_262, %c0_263, %c0_264] : memref<25x16x384xf32, #tpu.memory_space<vmem>>, vector<1x16x384xf32>
    %342 = vector.shape_cast %341 : vector<1x16x384xf32> to vector<16x384xf32>
    %343 = arith.mulf %340, %342 : vector<16x384xf32>
    %344 = arith.addf %339, %343 : vector<16x384xf32>
    %c0_265 = arith.constant 0 : index
    %c102 = arith.constant 102 : index
    %345 = vector.load %arg13[%c0_265, %c102] : memref<16x612xf32, #tpu.memory_space<vmem>>, vector<16x384xf32>
    %c5_266 = arith.constant 5 : index
    %c0_267 = arith.constant 0 : index
    %c0_268 = arith.constant 0 : index
    %346 = vector.load %arg7[%c5_266, %c0_267, %c0_268] : memref<25x16x384xf32, #tpu.memory_space<vmem>>, vector<1x16x384xf32>
    %347 = vector.shape_cast %346 : vector<1x16x384xf32> to vector<16x384xf32>
    %348 = arith.mulf %345, %347 : vector<16x384xf32>
    %349 = arith.addf %344, %348 : vector<16x384xf32>
    %c0_269 = arith.constant 0 : index
    %c106 = arith.constant 106 : index
    %350 = vector.load %arg13[%c0_269, %c106] : memref<16x612xf32, #tpu.memory_space<vmem>>, vector<16x384xf32>
    %c9_270 = arith.constant 9 : index
    %c0_271 = arith.constant 0 : index
    %c0_272 = arith.constant 0 : index
    %351 = vector.load %arg7[%c9_270, %c0_271, %c0_272] : memref<25x16x384xf32, #tpu.memory_space<vmem>>, vector<1x16x384xf32>
    %352 = vector.shape_cast %351 : vector<1x16x384xf32> to vector<16x384xf32>
    %353 = arith.mulf %350, %352 : vector<16x384xf32>
    %354 = arith.addf %349, %353 : vector<16x384xf32>
    %c0_273 = arith.constant 0 : index
    %c150 = arith.constant 150 : index
    %355 = vector.load %arg13[%c0_273, %c150] : memref<16x612xf32, #tpu.memory_space<vmem>>, vector<16x384xf32>
    %c15_274 = arith.constant 15 : index
    %c0_275 = arith.constant 0 : index
    %c0_276 = arith.constant 0 : index
    %356 = vector.load %arg7[%c15_274, %c0_275, %c0_276] : memref<25x16x384xf32, #tpu.memory_space<vmem>>, vector<1x16x384xf32>
    %357 = vector.shape_cast %356 : vector<1x16x384xf32> to vector<16x384xf32>
    %358 = arith.mulf %355, %357 : vector<16x384xf32>
    %359 = arith.addf %354, %358 : vector<16x384xf32>
    %c0_277 = arith.constant 0 : index
    %c154 = arith.constant 154 : index
    %360 = vector.load %arg13[%c0_277, %c154] : memref<16x612xf32, #tpu.memory_space<vmem>>, vector<16x384xf32>
    %c19_278 = arith.constant 19 : index
    %c0_279 = arith.constant 0 : index
    %c0_280 = arith.constant 0 : index
    %361 = vector.load %arg7[%c19_278, %c0_279, %c0_280] : memref<25x16x384xf32, #tpu.memory_space<vmem>>, vector<1x16x384xf32>
    %362 = vector.shape_cast %361 : vector<1x16x384xf32> to vector<16x384xf32>
    %363 = arith.mulf %360, %362 : vector<16x384xf32>
    %364 = arith.addf %359, %363 : vector<16x384xf32>
    %c0_281 = arith.constant 0 : index
    %c175 = arith.constant 175 : index
    %365 = vector.load %arg13[%c0_281, %c175] : memref<16x612xf32, #tpu.memory_space<vmem>>, vector<16x384xf32>
    %c21_282 = arith.constant 21 : index
    %c0_283 = arith.constant 0 : index
    %c0_284 = arith.constant 0 : index
    %366 = vector.load %arg7[%c21_282, %c0_283, %c0_284] : memref<25x16x384xf32, #tpu.memory_space<vmem>>, vector<1x16x384xf32>
    %367 = vector.shape_cast %366 : vector<1x16x384xf32> to vector<16x384xf32>
    %368 = arith.mulf %365, %367 : vector<16x384xf32>
    %369 = arith.addf %364, %368 : vector<16x384xf32>
    %c0_285 = arith.constant 0 : index
    %c177 = arith.constant 177 : index
    %370 = vector.load %arg13[%c0_285, %c177] : memref<16x612xf32, #tpu.memory_space<vmem>>, vector<16x384xf32>
    %c23_286 = arith.constant 23 : index
    %c0_287 = arith.constant 0 : index
    %c0_288 = arith.constant 0 : index
    %371 = vector.load %arg7[%c23_286, %c0_287, %c0_288] : memref<25x16x384xf32, #tpu.memory_space<vmem>>, vector<1x16x384xf32>
    %372 = vector.shape_cast %371 : vector<1x16x384xf32> to vector<16x384xf32>
    %373 = arith.mulf %370, %372 : vector<16x384xf32>
    %374 = arith.addf %369, %373 : vector<16x384xf32>
    %c0_289 = arith.constant 0 : index
    %c0_290 = arith.constant 0 : index
    %375 = vector.load %arg10[%c0_289, %c0_290] : memref<48x64xf32, #tpu.memory_space<vmem>>, vector<48x64xf32>
    %376 = tpu.concatenate %174, %262, %330, %374 in 0 : vector<16x384xf32>, vector<16x384xf32>, vector<16x384xf32>, vector<16x384xf32> -> vector<64x384xf32>
    %cst_291 = arith.constant dense<0.000000e+00> : vector<48x384xf32>
    %377 = tpu.matmul %375, %376, %cst_291 {dimension_numbers = #tpu.dot_dimension_numbers<[1], [0], [0], [1], [0, 0, 1, 1], [], []>} : vector<48x64xf32>, vector<64x384xf32>, vector<48x384xf32> -> vector<48x384xf32>
    %378 = vector.extract_strided_slice %377 {offsets = [0, 0], sizes = [16, 384], strides = [1, 1]} : vector<48x384xf32> to vector<16x384xf32>
    %379 = arith.addf %61, %378 : vector<16x384xf32>
    %380 = vector.extract_strided_slice %377 {offsets = [16, 0], sizes = [16, 384], strides = [1, 1]} : vector<48x384xf32> to vector<16x384xf32>
    %381 = vector.extract_strided_slice %377 {offsets = [32, 0], sizes = [16, 384], strides = [1, 1]} : vector<48x384xf32> to vector<16x384xf32>
    %cst_292 = arith.constant 0.000000e+00 : f32
    %382 = vector.broadcast %cst_292 : f32 to vector<16x384xf32>
    %383 = arith.maximumf %380, %382 : vector<16x384xf32>
    %384 = vector.broadcast %1 : vector<1x384xf32> to vector<16x384xf32>
    %385 = arith.mulf %383, %384 : vector<16x384xf32>
    %c0_293 = arith.constant 0 : index
    %c128_294 = arith.constant 128 : index
    %386 = vector.load %arg13[%c0_293, %c128_294] : memref<16x612xf32, #tpu.memory_space<vmem>>, vector<16x384xf32>
    tpu.vector_store %arg13[%c0_293, %c128_294], %385 {strides = array<i32>} : memref<16x612xf32, #tpu.memory_space<vmem>>, vector<16x384xf32>,
    %c0_295 = arith.constant 0 : index
    %c103_296 = arith.constant 103 : index
    %387 = vector.load %arg13[%c0_295, %c103_296] : memref<16x612xf32, #tpu.memory_space<vmem>>, vector<16x384xf32>
    %c0_297 = arith.constant 0 : index
    %c0_298 = arith.constant 0 : index
    %c0_299 = arith.constant 0 : index
    %388 = vector.load %arg8[%c0_297, %c0_298, %c0_299] : memref<9x16x384xf32, #tpu.memory_space<vmem>>, vector<1x16x384xf32>
    %389 = vector.shape_cast %388 : vector<1x16x384xf32> to vector<16x384xf32>
    %390 = arith.mulf %387, %389 : vector<16x384xf32>
    %c0_300 = arith.constant 0 : index
    %c104_301 = arith.constant 104 : index
    %391 = vector.load %arg13[%c0_300, %c104_301] : memref<16x612xf32, #tpu.memory_space<vmem>>, vector<16x384xf32>
    %c1_302 = arith.constant 1 : index
    %c0_303 = arith.constant 0 : index
    %c0_304 = arith.constant 0 : index
    %392 = vector.load %arg8[%c1_302, %c0_303, %c0_304] : memref<9x16x384xf32, #tpu.memory_space<vmem>>, vector<1x16x384xf32>
    %393 = vector.shape_cast %392 : vector<1x16x384xf32> to vector<16x384xf32>
    %394 = arith.mulf %391, %393 : vector<16x384xf32>
    %395 = arith.addf %390, %394 : vector<16x384xf32>
    %c0_305 = arith.constant 0 : index
    %c105_306 = arith.constant 105 : index
    %396 = vector.load %arg13[%c0_305, %c105_306] : memref<16x612xf32, #tpu.memory_space<vmem>>, vector<16x384xf32>
    %c2_307 = arith.constant 2 : index
    %c0_308 = arith.constant 0 : index
    %c0_309 = arith.constant 0 : index
    %397 = vector.load %arg8[%c2_307, %c0_308, %c0_309] : memref<9x16x384xf32, #tpu.memory_space<vmem>>, vector<1x16x384xf32>
    %398 = vector.shape_cast %397 : vector<1x16x384xf32> to vector<16x384xf32>
    %399 = arith.mulf %396, %398 : vector<16x384xf32>
    %400 = arith.addf %395, %399 : vector<16x384xf32>
    %c0_310 = arith.constant 0 : index
    %c127_311 = arith.constant 127 : index
    %401 = vector.load %arg13[%c0_310, %c127_311] : memref<16x612xf32, #tpu.memory_space<vmem>>, vector<16x384xf32>
    %c3_312 = arith.constant 3 : index
    %c0_313 = arith.constant 0 : index
    %c0_314 = arith.constant 0 : index
    %402 = vector.load %arg8[%c3_312, %c0_313, %c0_314] : memref<9x16x384xf32, #tpu.memory_space<vmem>>, vector<1x16x384xf32>
    %403 = vector.shape_cast %402 : vector<1x16x384xf32> to vector<16x384xf32>
    %404 = arith.mulf %401, %403 : vector<16x384xf32>
    %405 = arith.addf %400, %404 : vector<16x384xf32>
    %c0_315 = arith.constant 0 : index
    %c128_316 = arith.constant 128 : index
    %406 = vector.load %arg13[%c0_315, %c128_316] : memref<16x612xf32, #tpu.memory_space<vmem>>, vector<16x384xf32>
    %c4_317 = arith.constant 4 : index
    %c0_318 = arith.constant 0 : index
    %c0_319 = arith.constant 0 : index
    %407 = vector.load %arg8[%c4_317, %c0_318, %c0_319] : memref<9x16x384xf32, #tpu.memory_space<vmem>>, vector<1x16x384xf32>
    %408 = vector.shape_cast %407 : vector<1x16x384xf32> to vector<16x384xf32>
    %409 = arith.mulf %406, %408 : vector<16x384xf32>
    %410 = arith.addf %405, %409 : vector<16x384xf32>
    %c0_320 = arith.constant 0 : index
    %c129_321 = arith.constant 129 : index
    %411 = vector.load %arg13[%c0_320, %c129_321] : memref<16x612xf32, #tpu.memory_space<vmem>>, vector<16x384xf32>
    %c5_322 = arith.constant 5 : index
    %c0_323 = arith.constant 0 : index
    %c0_324 = arith.constant 0 : index
    %412 = vector.load %arg8[%c5_322, %c0_323, %c0_324] : memref<9x16x384xf32, #tpu.memory_space<vmem>>, vector<1x16x384xf32>
    %413 = vector.shape_cast %412 : vector<1x16x384xf32> to vector<16x384xf32>
    %414 = arith.mulf %411, %413 : vector<16x384xf32>
    %415 = arith.addf %410, %414 : vector<16x384xf32>
    %c0_325 = arith.constant 0 : index
    %c151_326 = arith.constant 151 : index
    %416 = vector.load %arg13[%c0_325, %c151_326] : memref<16x612xf32, #tpu.memory_space<vmem>>, vector<16x384xf32>
    %c6_327 = arith.constant 6 : index
    %c0_328 = arith.constant 0 : index
    %c0_329 = arith.constant 0 : index
    %417 = vector.load %arg8[%c6_327, %c0_328, %c0_329] : memref<9x16x384xf32, #tpu.memory_space<vmem>>, vector<1x16x384xf32>
    %418 = vector.shape_cast %417 : vector<1x16x384xf32> to vector<16x384xf32>
    %419 = arith.mulf %416, %418 : vector<16x384xf32>
    %420 = arith.addf %415, %419 : vector<16x384xf32>
    %c0_330 = arith.constant 0 : index
    %c152_331 = arith.constant 152 : index
    %421 = vector.load %arg13[%c0_330, %c152_331] : memref<16x612xf32, #tpu.memory_space<vmem>>, vector<16x384xf32>
    %c7_332 = arith.constant 7 : index
    %c0_333 = arith.constant 0 : index
    %c0_334 = arith.constant 0 : index
    %422 = vector.load %arg8[%c7_332, %c0_333, %c0_334] : memref<9x16x384xf32, #tpu.memory_space<vmem>>, vector<1x16x384xf32>
    %423 = vector.shape_cast %422 : vector<1x16x384xf32> to vector<16x384xf32>
    %424 = arith.mulf %421, %423 : vector<16x384xf32>
    %425 = arith.addf %420, %424 : vector<16x384xf32>
    %c0_335 = arith.constant 0 : index
    %c153_336 = arith.constant 153 : index
    %426 = vector.load %arg13[%c0_335, %c153_336] : memref<16x612xf32, #tpu.memory_space<vmem>>, vector<16x384xf32>
    %c8_337 = arith.constant 8 : index
    %c0_338 = arith.constant 0 : index
    %c0_339 = arith.constant 0 : index
    %427 = vector.load %arg8[%c8_337, %c0_338, %c0_339] : memref<9x16x384xf32, #tpu.memory_space<vmem>>, vector<1x16x384xf32>
    %428 = vector.shape_cast %427 : vector<1x16x384xf32> to vector<16x384xf32>
    %429 = arith.mulf %426, %428 : vector<16x384xf32>
    %430 = arith.addf %425, %429 : vector<16x384xf32>
    %cst_340 = arith.constant 0.000000e+00 : f32
    %431 = vector.broadcast %cst_340 : f32 to vector<16x384xf32>
    %432 = arith.maximumf %381, %431 : vector<16x384xf32>
    %433 = vector.broadcast %1 : vector<1x384xf32> to vector<16x384xf32>
    %434 = arith.mulf %432, %433 : vector<16x384xf32>
    %c0_341 = arith.constant 0 : index
    %c128_342 = arith.constant 128 : index
    %435 = vector.load %arg13[%c0_341, %c128_342] : memref<16x612xf32, #tpu.memory_space<vmem>>, vector<16x384xf32>
    tpu.vector_store %arg13[%c0_341, %c128_342], %434 {strides = array<i32>} : memref<16x612xf32, #tpu.memory_space<vmem>>, vector<16x384xf32>,
    %c0_343 = arith.constant 0 : index
    %c78_344 = arith.constant 78 : index
    %436 = vector.load %arg13[%c0_343, %c78_344] : memref<16x612xf32, #tpu.memory_space<vmem>>, vector<16x384xf32>
    %c0_345 = arith.constant 0 : index
    %c0_346 = arith.constant 0 : index
    %c0_347 = arith.constant 0 : index
    %437 = vector.load %arg9[%c0_345, %c0_346, %c0_347] : memref<25x16x384xf32, #tpu.memory_space<vmem>>, vector<1x16x384xf32>
    %438 = vector.shape_cast %437 : vector<1x16x384xf32> to vector<16x384xf32>
    %439 = arith.mulf %436, %438 : vector<16x384xf32>
    %c0_348 = arith.constant 0 : index
    %c79_349 = arith.constant 79 : index
    %440 = vector.load %arg13[%c0_348, %c79_349] : memref<16x612xf32, #tpu.memory_space<vmem>>, vector<16x384xf32>
    %c1_350 = arith.constant 1 : index
    %c0_351 = arith.constant 0 : index
    %c0_352 = arith.constant 0 : index
    %441 = vector.load %arg9[%c1_350, %c0_351, %c0_352] : memref<25x16x384xf32, #tpu.memory_space<vmem>>, vector<1x16x384xf32>
    %442 = vector.shape_cast %441 : vector<1x16x384xf32> to vector<16x384xf32>
    %443 = arith.mulf %440, %442 : vector<16x384xf32>
    %444 = arith.addf %439, %443 : vector<16x384xf32>
    %c0_353 = arith.constant 0 : index
    %c80_354 = arith.constant 80 : index
    %445 = vector.load %arg13[%c0_353, %c80_354] : memref<16x612xf32, #tpu.memory_space<vmem>>, vector<16x384xf32>
    %c2_355 = arith.constant 2 : index
    %c0_356 = arith.constant 0 : index
    %c0_357 = arith.constant 0 : index
    %446 = vector.load %arg9[%c2_355, %c0_356, %c0_357] : memref<25x16x384xf32, #tpu.memory_space<vmem>>, vector<1x16x384xf32>
    %447 = vector.shape_cast %446 : vector<1x16x384xf32> to vector<16x384xf32>
    %448 = arith.mulf %445, %447 : vector<16x384xf32>
    %449 = arith.addf %444, %448 : vector<16x384xf32>
    %c0_358 = arith.constant 0 : index
    %c81_359 = arith.constant 81 : index
    %450 = vector.load %arg13[%c0_358, %c81_359] : memref<16x612xf32, #tpu.memory_space<vmem>>, vector<16x384xf32>
    %c3_360 = arith.constant 3 : index
    %c0_361 = arith.constant 0 : index
    %c0_362 = arith.constant 0 : index
    %451 = vector.load %arg9[%c3_360, %c0_361, %c0_362] : memref<25x16x384xf32, #tpu.memory_space<vmem>>, vector<1x16x384xf32>
    %452 = vector.shape_cast %451 : vector<1x16x384xf32> to vector<16x384xf32>
    %453 = arith.mulf %450, %452 : vector<16x384xf32>
    %454 = arith.addf %449, %453 : vector<16x384xf32>
    %c0_363 = arith.constant 0 : index
    %c82_364 = arith.constant 82 : index
    %455 = vector.load %arg13[%c0_363, %c82_364] : memref<16x612xf32, #tpu.memory_space<vmem>>, vector<16x384xf32>
    %c4_365 = arith.constant 4 : index
    %c0_366 = arith.constant 0 : index
    %c0_367 = arith.constant 0 : index
    %456 = vector.load %arg9[%c4_365, %c0_366, %c0_367] : memref<25x16x384xf32, #tpu.memory_space<vmem>>, vector<1x16x384xf32>
    %457 = vector.shape_cast %456 : vector<1x16x384xf32> to vector<16x384xf32>
    %458 = arith.mulf %455, %457 : vector<16x384xf32>
    %459 = arith.addf %454, %458 : vector<16x384xf32>
    %c0_368 = arith.constant 0 : index
    %c102_369 = arith.constant 102 : index
    %460 = vector.load %arg13[%c0_368, %c102_369] : memref<16x612xf32, #tpu.memory_space<vmem>>, vector<16x384xf32>
    %c5_370 = arith.constant 5 : index
    %c0_371 = arith.constant 0 : index
    %c0_372 = arith.constant 0 : index
    %461 = vector.load %arg9[%c5_370, %c0_371, %c0_372] : memref<25x16x384xf32, #tpu.memory_space<vmem>>, vector<1x16x384xf32>
    %462 = vector.shape_cast %461 : vector<1x16x384xf32> to vector<16x384xf32>
    %463 = arith.mulf %460, %462 : vector<16x384xf32>
    %464 = arith.addf %459, %463 : vector<16x384xf32>
    %c0_373 = arith.constant 0 : index
    %c103_374 = arith.constant 103 : index
    %465 = vector.load %arg13[%c0_373, %c103_374] : memref<16x612xf32, #tpu.memory_space<vmem>>, vector<16x384xf32>
    %c6_375 = arith.constant 6 : index
    %c0_376 = arith.constant 0 : index
    %c0_377 = arith.constant 0 : index
    %466 = vector.load %arg9[%c6_375, %c0_376, %c0_377] : memref<25x16x384xf32, #tpu.memory_space<vmem>>, vector<1x16x384xf32>
    %467 = vector.shape_cast %466 : vector<1x16x384xf32> to vector<16x384xf32>
    %468 = arith.mulf %465, %467 : vector<16x384xf32>
    %469 = arith.addf %464, %468 : vector<16x384xf32>
    %c0_378 = arith.constant 0 : index
    %c104_379 = arith.constant 104 : index
    %470 = vector.load %arg13[%c0_378, %c104_379] : memref<16x612xf32, #tpu.memory_space<vmem>>, vector<16x384xf32>
    %c7_380 = arith.constant 7 : index
    %c0_381 = arith.constant 0 : index
    %c0_382 = arith.constant 0 : index
    %471 = vector.load %arg9[%c7_380, %c0_381, %c0_382] : memref<25x16x384xf32, #tpu.memory_space<vmem>>, vector<1x16x384xf32>
    %472 = vector.shape_cast %471 : vector<1x16x384xf32> to vector<16x384xf32>
    %473 = arith.mulf %470, %472 : vector<16x384xf32>
    %474 = arith.addf %469, %473 : vector<16x384xf32>
    %c0_383 = arith.constant 0 : index
    %c105_384 = arith.constant 105 : index
    %475 = vector.load %arg13[%c0_383, %c105_384] : memref<16x612xf32, #tpu.memory_space<vmem>>, vector<16x384xf32>
    %c8_385 = arith.constant 8 : index
    %c0_386 = arith.constant 0 : index
    %c0_387 = arith.constant 0 : index
    %476 = vector.load %arg9[%c8_385, %c0_386, %c0_387] : memref<25x16x384xf32, #tpu.memory_space<vmem>>, vector<1x16x384xf32>
    %477 = vector.shape_cast %476 : vector<1x16x384xf32> to vector<16x384xf32>
    %478 = arith.mulf %475, %477 : vector<16x384xf32>
    %479 = arith.addf %474, %478 : vector<16x384xf32>
    %c0_388 = arith.constant 0 : index
    %c106_389 = arith.constant 106 : index
    %480 = vector.load %arg13[%c0_388, %c106_389] : memref<16x612xf32, #tpu.memory_space<vmem>>, vector<16x384xf32>
    %c9_390 = arith.constant 9 : index
    %c0_391 = arith.constant 0 : index
    %c0_392 = arith.constant 0 : index
    %481 = vector.load %arg9[%c9_390, %c0_391, %c0_392] : memref<25x16x384xf32, #tpu.memory_space<vmem>>, vector<1x16x384xf32>
    %482 = vector.shape_cast %481 : vector<1x16x384xf32> to vector<16x384xf32>
    %483 = arith.mulf %480, %482 : vector<16x384xf32>
    %484 = arith.addf %479, %483 : vector<16x384xf32>
    %c0_393 = arith.constant 0 : index
    %c126_394 = arith.constant 126 : index
    %485 = vector.load %arg13[%c0_393, %c126_394] : memref<16x612xf32, #tpu.memory_space<vmem>>, vector<16x384xf32>
    %c10_395 = arith.constant 10 : index
    %c0_396 = arith.constant 0 : index
    %c0_397 = arith.constant 0 : index
    %486 = vector.load %arg9[%c10_395, %c0_396, %c0_397] : memref<25x16x384xf32, #tpu.memory_space<vmem>>, vector<1x16x384xf32>
    %487 = vector.shape_cast %486 : vector<1x16x384xf32> to vector<16x384xf32>
    %488 = arith.mulf %485, %487 : vector<16x384xf32>
    %489 = arith.addf %484, %488 : vector<16x384xf32>
    %c0_398 = arith.constant 0 : index
    %c127_399 = arith.constant 127 : index
    %490 = vector.load %arg13[%c0_398, %c127_399] : memref<16x612xf32, #tpu.memory_space<vmem>>, vector<16x384xf32>
    %c11_400 = arith.constant 11 : index
    %c0_401 = arith.constant 0 : index
    %c0_402 = arith.constant 0 : index
    %491 = vector.load %arg9[%c11_400, %c0_401, %c0_402] : memref<25x16x384xf32, #tpu.memory_space<vmem>>, vector<1x16x384xf32>
    %492 = vector.shape_cast %491 : vector<1x16x384xf32> to vector<16x384xf32>
    %493 = arith.mulf %490, %492 : vector<16x384xf32>
    %494 = arith.addf %489, %493 : vector<16x384xf32>
    %c0_403 = arith.constant 0 : index
    %c128_404 = arith.constant 128 : index
    %495 = vector.load %arg13[%c0_403, %c128_404] : memref<16x612xf32, #tpu.memory_space<vmem>>, vector<16x384xf32>
    %c12_405 = arith.constant 12 : index
    %c0_406 = arith.constant 0 : index
    %c0_407 = arith.constant 0 : index
    %496 = vector.load %arg9[%c12_405, %c0_406, %c0_407] : memref<25x16x384xf32, #tpu.memory_space<vmem>>, vector<1x16x384xf32>
    %497 = vector.shape_cast %496 : vector<1x16x384xf32> to vector<16x384xf32>
    %498 = arith.mulf %495, %497 : vector<16x384xf32>
    %499 = arith.addf %494, %498 : vector<16x384xf32>
    %c0_408 = arith.constant 0 : index
    %c129_409 = arith.constant 129 : index
    %500 = vector.load %arg13[%c0_408, %c129_409] : memref<16x612xf32, #tpu.memory_space<vmem>>, vector<16x384xf32>
    %c13_410 = arith.constant 13 : index
    %c0_411 = arith.constant 0 : index
    %c0_412 = arith.constant 0 : index
    %501 = vector.load %arg9[%c13_410, %c0_411, %c0_412] : memref<25x16x384xf32, #tpu.memory_space<vmem>>, vector<1x16x384xf32>
    %502 = vector.shape_cast %501 : vector<1x16x384xf32> to vector<16x384xf32>
    %503 = arith.mulf %500, %502 : vector<16x384xf32>
    %504 = arith.addf %499, %503 : vector<16x384xf32>
    %c0_413 = arith.constant 0 : index
    %c130_414 = arith.constant 130 : index
    %505 = vector.load %arg13[%c0_413, %c130_414] : memref<16x612xf32, #tpu.memory_space<vmem>>, vector<16x384xf32>
    %c14_415 = arith.constant 14 : index
    %c0_416 = arith.constant 0 : index
    %c0_417 = arith.constant 0 : index
    %506 = vector.load %arg9[%c14_415, %c0_416, %c0_417] : memref<25x16x384xf32, #tpu.memory_space<vmem>>, vector<1x16x384xf32>
    %507 = vector.shape_cast %506 : vector<1x16x384xf32> to vector<16x384xf32>
    %508 = arith.mulf %505, %507 : vector<16x384xf32>
    %509 = arith.addf %504, %508 : vector<16x384xf32>
    %c0_418 = arith.constant 0 : index
    %c150_419 = arith.constant 150 : index
    %510 = vector.load %arg13[%c0_418, %c150_419] : memref<16x612xf32, #tpu.memory_space<vmem>>, vector<16x384xf32>
    %c15_420 = arith.constant 15 : index
    %c0_421 = arith.constant 0 : index
    %c0_422 = arith.constant 0 : index
    %511 = vector.load %arg9[%c15_420, %c0_421, %c0_422] : memref<25x16x384xf32, #tpu.memory_space<vmem>>, vector<1x16x384xf32>
    %512 = vector.shape_cast %511 : vector<1x16x384xf32> to vector<16x384xf32>
    %513 = arith.mulf %510, %512 : vector<16x384xf32>
    %514 = arith.addf %509, %513 : vector<16x384xf32>
    %c0_423 = arith.constant 0 : index
    %c151_424 = arith.constant 151 : index
    %515 = vector.load %arg13[%c0_423, %c151_424] : memref<16x612xf32, #tpu.memory_space<vmem>>, vector<16x384xf32>
    %c16_425 = arith.constant 16 : index
    %c0_426 = arith.constant 0 : index
    %c0_427 = arith.constant 0 : index
    %516 = vector.load %arg9[%c16_425, %c0_426, %c0_427] : memref<25x16x384xf32, #tpu.memory_space<vmem>>, vector<1x16x384xf32>
    %517 = vector.shape_cast %516 : vector<1x16x384xf32> to vector<16x384xf32>
    %518 = arith.mulf %515, %517 : vector<16x384xf32>
    %519 = arith.addf %514, %518 : vector<16x384xf32>
    %c0_428 = arith.constant 0 : index
    %c152_429 = arith.constant 152 : index
    %520 = vector.load %arg13[%c0_428, %c152_429] : memref<16x612xf32, #tpu.memory_space<vmem>>, vector<16x384xf32>
    %c17_430 = arith.constant 17 : index
    %c0_431 = arith.constant 0 : index
    %c0_432 = arith.constant 0 : index
    %521 = vector.load %arg9[%c17_430, %c0_431, %c0_432] : memref<25x16x384xf32, #tpu.memory_space<vmem>>, vector<1x16x384xf32>
    %522 = vector.shape_cast %521 : vector<1x16x384xf32> to vector<16x384xf32>
    %523 = arith.mulf %520, %522 : vector<16x384xf32>
    %524 = arith.addf %519, %523 : vector<16x384xf32>
    %c0_433 = arith.constant 0 : index
    %c153_434 = arith.constant 153 : index
    %525 = vector.load %arg13[%c0_433, %c153_434] : memref<16x612xf32, #tpu.memory_space<vmem>>, vector<16x384xf32>
    %c18_435 = arith.constant 18 : index
    %c0_436 = arith.constant 0 : index
    %c0_437 = arith.constant 0 : index
    %526 = vector.load %arg9[%c18_435, %c0_436, %c0_437] : memref<25x16x384xf32, #tpu.memory_space<vmem>>, vector<1x16x384xf32>
    %527 = vector.shape_cast %526 : vector<1x16x384xf32> to vector<16x384xf32>
    %528 = arith.mulf %525, %527 : vector<16x384xf32>
    %529 = arith.addf %524, %528 : vector<16x384xf32>
    %c0_438 = arith.constant 0 : index
    %c154_439 = arith.constant 154 : index
    %530 = vector.load %arg13[%c0_438, %c154_439] : memref<16x612xf32, #tpu.memory_space<vmem>>, vector<16x384xf32>
    %c19_440 = arith.constant 19 : index
    %c0_441 = arith.constant 0 : index
    %c0_442 = arith.constant 0 : index
    %531 = vector.load %arg9[%c19_440, %c0_441, %c0_442] : memref<25x16x384xf32, #tpu.memory_space<vmem>>, vector<1x16x384xf32>
    %532 = vector.shape_cast %531 : vector<1x16x384xf32> to vector<16x384xf32>
    %533 = arith.mulf %530, %532 : vector<16x384xf32>
    %534 = arith.addf %529, %533 : vector<16x384xf32>
    %c0_443 = arith.constant 0 : index
    %c174_444 = arith.constant 174 : index
    %535 = vector.load %arg13[%c0_443, %c174_444] : memref<16x612xf32, #tpu.memory_space<vmem>>, vector<16x384xf32>
    %c20_445 = arith.constant 20 : index
    %c0_446 = arith.constant 0 : index
    %c0_447 = arith.constant 0 : index
    %536 = vector.load %arg9[%c20_445, %c0_446, %c0_447] : memref<25x16x384xf32, #tpu.memory_space<vmem>>, vector<1x16x384xf32>
    %537 = vector.shape_cast %536 : vector<1x16x384xf32> to vector<16x384xf32>
    %538 = arith.mulf %535, %537 : vector<16x384xf32>
    %539 = arith.addf %534, %538 : vector<16x384xf32>
    %c0_448 = arith.constant 0 : index
    %c175_449 = arith.constant 175 : index
    %540 = vector.load %arg13[%c0_448, %c175_449] : memref<16x612xf32, #tpu.memory_space<vmem>>, vector<16x384xf32>
    %c21_450 = arith.constant 21 : index
    %c0_451 = arith.constant 0 : index
    %c0_452 = arith.constant 0 : index
    %541 = vector.load %arg9[%c21_450, %c0_451, %c0_452] : memref<25x16x384xf32, #tpu.memory_space<vmem>>, vector<1x16x384xf32>
    %542 = vector.shape_cast %541 : vector<1x16x384xf32> to vector<16x384xf32>
    %543 = arith.mulf %540, %542 : vector<16x384xf32>
    %544 = arith.addf %539, %543 : vector<16x384xf32>
    %c0_453 = arith.constant 0 : index
    %c176_454 = arith.constant 176 : index
    %545 = vector.load %arg13[%c0_453, %c176_454] : memref<16x612xf32, #tpu.memory_space<vmem>>, vector<16x384xf32>
    %c22_455 = arith.constant 22 : index
    %c0_456 = arith.constant 0 : index
    %c0_457 = arith.constant 0 : index
    %546 = vector.load %arg9[%c22_455, %c0_456, %c0_457] : memref<25x16x384xf32, #tpu.memory_space<vmem>>, vector<1x16x384xf32>
    %547 = vector.shape_cast %546 : vector<1x16x384xf32> to vector<16x384xf32>
    %548 = arith.mulf %545, %547 : vector<16x384xf32>
    %549 = arith.addf %544, %548 : vector<16x384xf32>
    %c0_458 = arith.constant 0 : index
    %c177_459 = arith.constant 177 : index
    %550 = vector.load %arg13[%c0_458, %c177_459] : memref<16x612xf32, #tpu.memory_space<vmem>>, vector<16x384xf32>
    %c23_460 = arith.constant 23 : index
    %c0_461 = arith.constant 0 : index
    %c0_462 = arith.constant 0 : index
    %551 = vector.load %arg9[%c23_460, %c0_461, %c0_462] : memref<25x16x384xf32, #tpu.memory_space<vmem>>, vector<1x16x384xf32>
    %552 = vector.shape_cast %551 : vector<1x16x384xf32> to vector<16x384xf32>
    %553 = arith.mulf %550, %552 : vector<16x384xf32>
    %554 = arith.addf %549, %553 : vector<16x384xf32>
    %c0_463 = arith.constant 0 : index
    %c178_464 = arith.constant 178 : index
    %555 = vector.load %arg13[%c0_463, %c178_464] : memref<16x612xf32, #tpu.memory_space<vmem>>, vector<16x384xf32>
    %c24_465 = arith.constant 24 : index
    %c0_466 = arith.constant 0 : index
    %c0_467 = arith.constant 0 : index
    %556 = vector.load %arg9[%c24_465, %c0_466, %c0_467] : memref<25x16x384xf32, #tpu.memory_space<vmem>>, vector<1x16x384xf32>
    %557 = vector.shape_cast %556 : vector<1x16x384xf32> to vector<16x384xf32>
    %558 = arith.mulf %555, %557 : vector<16x384xf32>
    %559 = arith.addf %554, %558 : vector<16x384xf32>
    %c0_468 = arith.constant 0 : index
    %c0_469 = arith.constant 0 : index
    %560 = vector.load %arg11[%c0_468, %c0_469] : memref<16x32xf32, #tpu.memory_space<vmem>>, vector<16x32xf32>
    %561 = tpu.concatenate %430, %559 in 0 : vector<16x384xf32>, vector<16x384xf32> -> vector<32x384xf32>
    %cst_470 = arith.constant dense<0.000000e+00> : vector<16x384xf32>
    %562 = tpu.matmul %560, %561, %cst_470 {dimension_numbers = #tpu.dot_dimension_numbers<[1], [0], [0], [1], [0, 0, 1, 1], [], []>} : vector<16x32xf32>, vector<32x384xf32>, vector<16x384xf32> -> vector<16x384xf32>
    %563 = arith.addf %379, %562 : vector<16x384xf32>
    %c0_471 = arith.constant 0 : index
    %c0_472 = arith.constant 0 : index
    %564 = vector.load %arg12[%c0_471, %c0_472] : memref<16x384xf32, #tpu.memory_space<vmem>>, vector<16x384xf32>
    tpu.vector_store %arg12[%c0_471, %c0_472], %563 {strides = array<i32>} : memref<16x384xf32, #tpu.memory_space<vmem>>, vector<16x384xf32>,
    return
  }
  func.func @transform_0(%arg0: i32) -> (i32, i32) {
    %c0_i32 = arith.constant 0 : i32
    %c0_i32_0 = arith.constant 0 : i32
    return %arg0, %c0_i32 : i32, i32
  }
  func.func @transform_1(%arg0: i32) -> (i32, i32) {
    %c0_i32 = arith.constant 0 : i32
    %c0_i32_0 = arith.constant 0 : i32
    %c0_i32_1 = arith.constant 0 : i32
    return %c0_i32, %c0_i32_0 : i32, i32
  }
  func.func @transform_2(%arg0: i32) -> i32 {
    %c0_i32 = arith.constant 0 : i32
    %c0_i32_0 = arith.constant 0 : i32
    return %c0_i32 : i32
  }
  func.func @transform_3(%arg0: i32) -> (i32, i32, i32) {
    %c0_i32 = arith.constant 0 : i32
    %c0_i32_0 = arith.constant 0 : i32
    %c0_i32_1 = arith.constant 0 : i32
    %c0_i32_2 = arith.constant 0 : i32
    return %c0_i32, %c0_i32_0, %c0_i32_1 : i32, i32, i32
  }
  func.func @transform_4(%arg0: i32) -> (i32, i32, i32) {
    %c0_i32 = arith.constant 0 : i32
    %c0_i32_0 = arith.constant 0 : i32
    %c0_i32_1 = arith.constant 0 : i32
    %c0_i32_2 = arith.constant 0 : i32
    return %c0_i32, %c0_i32_0, %c0_i32_1 : i32, i32, i32
  }
  func.func @transform_5(%arg0: i32) -> (i32, i32, i32) {
    %c0_i32 = arith.constant 0 : i32
    %c0_i32_0 = arith.constant 0 : i32
    %c0_i32_1 = arith.constant 0 : i32
    %c0_i32_2 = arith.constant 0 : i32
    return %c0_i32, %c0_i32_0, %c0_i32_1 : i32, i32, i32
  }
  func.func @transform_6(%arg0: i32) -> (i32, i32, i32) {
    %c0_i32 = arith.constant 0 : i32
    %c0_i32_0 = arith.constant 0 : i32
    %c0_i32_1 = arith.constant 0 : i32
    %c0_i32_2 = arith.constant 0 : i32
    return %c0_i32, %c0_i32_0, %c0_i32_1 : i32, i32, i32
  }
  func.func @transform_7(%arg0: i32) -> (i32, i32, i32) {
    %c0_i32 = arith.constant 0 : i32
    %c0_i32_0 = arith.constant 0 : i32
    %c0_i32_1 = arith.constant 0 : i32
    %c0_i32_2 = arith.constant 0 : i32
    return %c0_i32, %c0_i32_0, %c0_i32_1 : i32, i32, i32
  }
  func.func @transform_8(%arg0: i32) -> (i32, i32, i32) {
    %c0_i32 = arith.constant 0 : i32
    %c0_i32_0 = arith.constant 0 : i32
    %c0_i32_1 = arith.constant 0 : i32
    %c0_i32_2 = arith.constant 0 : i32
    return %c0_i32, %c0_i32_0, %c0_i32_1 : i32, i32, i32
  }
  func.func @transform_9(%arg0: i32) -> (i32, i32) {
    %c0_i32 = arith.constant 0 : i32
    %c0_i32_0 = arith.constant 0 : i32
    %c0_i32_1 = arith.constant 0 : i32
    return %c0_i32, %c0_i32_0 : i32, i32
  }
  func.func @transform_10(%arg0: i32) -> (i32, i32) {
    %c0_i32 = arith.constant 0 : i32
    %c0_i32_0 = arith.constant 0 : i32
    %c0_i32_1 = arith.constant 0 : i32
    return %c0_i32, %c0_i32_0 : i32, i32
  }
  func.func @transform_11(%arg0: i32) -> (i32, i32) {
    %c0_i32 = arith.constant 0 : i32
    %c0_i32_0 = arith.constant 0 : i32
    return %arg0, %c0_i32 : i32, i32
  }
}

</mosaic_0001>

<llo_original>
// kernel: mixed_op.1
$region0: #{mixed_op.1}
  #allocation0 [shape = 'u32[]', space=smem, size = 0x4, offset = 0x4, fixed_abs, tag = 'smem constant byte address 0x4 - core index']
  #allocation1 [shape = 'u32[144,128]{1,0:T(1,128)}', space=vmem, size = 0x12000, scoped, tag = 'internal scratch']
  #allocation2 [shape = 'f32[16,612]{1,0:T(8,128)}', space=vmem, size = 0xa000, scoped, tag = 'scratch operand']
  %s0 = inlined_call_operand.vmem [shape: f32[32,384], index: 0, kind: input, shape index: {}]
  %s1 = inlined_call_operand.vmem [shape: f32[3,384], index: 1, kind: input, shape index: {}]
  %s2 = inlined_call_operand.vmem [shape: f32[2], index: 2, kind: input, shape index: {}]
  %s3 = inlined_call_operand.vmem [shape: f32[9,16,384], index: 3, kind: input, shape index: {}]
  %s4 = inlined_call_operand.vmem [shape: f32[25,16,384], index: 4, kind: input, shape index: {}]
  %s5 = inlined_call_operand.vmem [shape: f32[9,16,384], index: 5, kind: input, shape index: {}]
  %s6 = inlined_call_operand.vmem [shape: f32[25,16,384], index: 6, kind: input, shape index: {}]
  %s7 = inlined_call_operand.vmem [shape: f32[9,16,384], index: 7, kind: input, shape index: {}]
  %s8 = inlined_call_operand.vmem [shape: f32[25,16,384], index: 8, kind: input, shape index: {}]
  %s9 = inlined_call_operand.vmem [shape: f32[48,64], index: 9, kind: input, shape index: {}]
  %s10 = inlined_call_operand.vmem [shape: f32[16,32], index: 10, kind: input, shape index: {}]
  %s11 = inlined_call_operand.vmem [shape: f32[32,384], index: 11, kind: output, shape index: {}]
  %s12 = sld [smem:[#allocation0]]
  $region81: #{mixed_op.1} parent=0
    _
  %s14 = ssub.s32 1, %s12
  %s15 = scalar_select 0, %s14, %s12
  $region1: #{mixed_op.1} parent=0
    #allocation3 [shape = 'u8[512]{0}', space=smem, size = 0x200, scoped, tag = 'input window, operand 2, single buffered']
    #allocation4 [shape = 's32[2]{0}', space=sflag, size = 0x8, scoped, tag = 'scoped memory for mixed_op.1']
    %16 = vsyncpa [#allocation4], 0
    loop: start=0, step=1, limit=4
    $region2: #{mixed_op.1} parent=1 // loop_pre_header
      _
    $region3: #{mixed_op.1} parent=1 // loop_header
      %s18 = sphi 0, %s22
      %p19 = scmp.ge.s32.totalorder %s18, 4
      %s28 = sphi 0, %s30
      %s31 = sphi 0, %s28
      %s32 = sphi 0, %s31
      %s48 = sphi 0, %s32
      %s52 = sphi 0, %s52
      %s54 = sphi 0, %s52
      %s55 = sphi 0, %s54
      %s69 = sphi 0, %s55
      %s73 = sphi 0, %s73
      %s75 = sphi 0, %s73
      %s76 = sphi 0, %s75
      %s90 = sphi 0, %s76
      %s94 = sphi 0, %s94
      %s96 = sphi 0, %s94
      %s97 = sphi 0, %s96
      %s111 = sphi 0, %s97
      %s115 = sphi 0, %s115
      %s117 = sphi 0, %s115
      %s118 = sphi 0, %s117
      %s132 = sphi 0, %s118
      %s136 = sphi 0, %s136
      %s138 = sphi 0, %s136
      %s139 = sphi 0, %s138
      %s153 = sphi 0, %s139
      %s157 = sphi 0, %s157
      %s159 = sphi 0, %s157
      %s160 = sphi 0, %s159
      %s174 = sphi 0, %s160
      %s178 = sphi 0, %s178
      %s180 = sphi 0, %s178
      %s181 = sphi 0, %s180
      %s195 = sphi 0, %s181
      %s199 = sphi 0, %s199
      %s201 = sphi 0, %s199
      %s202 = sphi 0, %s201
      %s216 = sphi 0, %s202
      %s220 = sphi 0, %s220
      %s222 = sphi 0, %s220
      %s223 = sphi 0, %s222
      %s237 = sphi 0, %s223
      %s241 = sphi 0, %s241
      %s243 = sphi 0, %s241
      %s244 = sphi 0, %s243
      %s258 = sphi 0, %s244
      %s264 = sphi 0, %s266
      %s267 = sphi 0, %s264
      %s268 = sphi 0, %s267
      %s284 = sphi 0, %s268
    $region4: #{mixed_op.1} parent=1 // loop_header_branch
      %21 = sbr.rel (%p19) target = $region8
    $region5: #{mixed_op.1} parent=1 // loop_body
      %s23 = ssub.s32 %s18, 1
      %s24 = ssub.s32 %s18, 2
      %s25 = sadd.s32 %s18, 1
      %s26 = ssub.s32 %s18, %s25
      %p27 = scmp.eq.s32.totalorder %s26, 0
      %s29 = sadd.s32 %s28, 1
      %s30 = scalar_select %p27, %s28, %s29
      %p33 = pneg %p27
      %p34 = scmp.eq.s32.totalorder %s18, 1
      %p35 = por %p33, %p34
      %p36 = scmp.ne.s32.totalorder %s28, %s31
      %p37 = scmp.eq.s32.totalorder %s18, 0
      %p38 = por %p36, %p37
      %p39 = scmp.ne.s32.totalorder %s28, %s31
      %p40 = scmp.eq.s32.totalorder %s23, 1
      %p41 = por %p39, %p40
      %p42 = scmp.ne.s32.totalorder %s31, %s32
      %p43 = scmp.eq.s32.totalorder %s23, 0
      %p44 = por %p42, %p43
      %p45 = scmp.ne.s32.totalorder %s31, %s32
      %p46 = scmp.eq.s32.totalorder %s24, 1
      %p47 = por %p45, %p46
      %p49 = scmp.ne.s32.totalorder %s32, %s48
      %p50 = scmp.eq.s32.totalorder %s24, 0
      %p51 = por %p49, %p50
      %s53 = sadd.s32 %s52, 1
      %p56 = scmp.eq.s32.totalorder %s18, 1
      %p57 = scmp.ne.s32.totalorder %s52, %s54
      %p58 = scmp.eq.s32.totalorder %s18, 0
      %p59 = por %p57, %p58
      %p60 = scmp.ne.s32.totalorder %s52, %s54
      %p61 = scmp.eq.s32.totalorder %s23, 1
      %p62 = por %p60, %p61
      %p63 = scmp.ne.s32.totalorder %s54, %s55
      %p64 = scmp.eq.s32.totalorder %s23, 0
      %p65 = por %p63, %p64
      %p66 = scmp.ne.s32.totalorder %s54, %s55
      %p67 = scmp.eq.s32.totalorder %s24, 1
      %p68 = por %p66, %p67
      %p70 = scmp.ne.s32.totalorder %s55, %s69
      %p71 = scmp.eq.s32.totalorder %s24, 0
      %p72 = por %p70, %p71
      %s74 = sadd.s32 %s73, 1
      %p77 = scmp.eq.s32.totalorder %s18, 1
      %p78 = scmp.ne.s32.totalorder %s73, %s75
      %p79 = scmp.eq.s32.totalorder %s18, 0
      %p80 = por %p78, %p79
      %p81 = scmp.ne.s32.totalorder %s73, %s75
      %p82 = scmp.eq.s32.totalorder %s23, 1
      %p83 = por %p81, %p82
      %p84 = scmp.ne.s32.totalorder %s75, %s76
      %p85 = scmp.eq.s32.totalorder %s23, 0
      %p86 = por %p84, %p85
      %p87 = scmp.ne.s32.totalorder %s75, %s76
      %p88 = scmp.eq.s32.totalorder %s24, 1
      %p89 = por %p87, %p88
      %p91 = scmp.ne.s32.totalorder %s76, %s90
      %p92 = scmp.eq.s32.totalorder %s24, 0
      %p93 = por %p91, %p92
      %s95 = sadd.s32 %s94, 1
      %p98 = scmp.eq.s32.totalorder %s18, 1
      %p99 = scmp.ne.s32.totalorder %s94, %s96
      %p100 = scmp.eq.s32.totalorder %s18, 0
      %p101 = por %p99, %p100
      %p102 = scmp.ne.s32.totalorder %s94, %s96
      %p103 = scmp.eq.s32.totalorder %s23, 1
      %p104 = por %p102, %p103
      %p105 = scmp.ne.s32.totalorder %s96, %s97
      %p106 = scmp.eq.s32.totalorder %s23, 0
      %p107 = por %p105, %p106
      %p108 = scmp.ne.s32.totalorder %s96, %s97
      %p109 = scmp.eq.s32.totalorder %s24, 1
      %p110 = por %p108, %p109
      %p112 = scmp.ne.s32.totalorder %s97, %s111
      %p113 = scmp.eq.s32.totalorder %s24, 0
      %p114 = por %p112, %p113
      %s116 = sadd.s32 %s115, 1
      %p119 = scmp.eq.s32.totalorder %s18, 1
      %p120 = scmp.ne.s32.totalorder %s115, %s117
      %p121 = scmp.eq.s32.totalorder %s18, 0
      %p122 = por %p120, %p121
      %p123 = scmp.ne.s32.totalorder %s115, %s117
      %p124 = scmp.eq.s32.totalorder %s23, 1
      %p125 = por %p123, %p124
      %p126 = scmp.ne.s32.totalorder %s117, %s118
      %p127 = scmp.eq.s32.totalorder %s23, 0
      %p128 = por %p126, %p127
      %p129 = scmp.ne.s32.totalorder %s117, %s118
      %p130 = scmp.eq.s32.totalorder %s24, 1
      %p131 = por %p129, %p130
      %p133 = scmp.ne.s32.totalorder %s118, %s132
      %p134 = scmp.eq.s32.totalorder %s24, 0
      %p135 = por %p133, %p134
      %s137 = sadd.s32 %s136, 1
      %p140 = scmp.eq.s32.totalorder %s18, 1
      %p141 = scmp.ne.s32.totalorder %s136, %s138
      %p142 = scmp.eq.s32.totalorder %s18, 0
      %p143 = por %p141, %p142
      %p144 = scmp.ne.s32.totalorder %s136, %s138
      %p145 = scmp.eq.s32.totalorder %s23, 1
      %p146 = por %p144, %p145
      %p147 = scmp.ne.s32.totalorder %s138, %s139
      %p148 = scmp.eq.s32.totalorder %s23, 0
      %p149 = por %p147, %p148
      %p150 = scmp.ne.s32.totalorder %s138, %s139
      %p151 = scmp.eq.s32.totalorder %s24, 1
      %p152 = por %p150, %p151
      %p154 = scmp.ne.s32.totalorder %s139, %s153
      %p155 = scmp.eq.s32.totalorder %s24, 0
      %p156 = por %p154, %p155
      %s158 = sadd.s32 %s157, 1
      %p161 = scmp.eq.s32.totalorder %s18, 1
      %p162 = scmp.ne.s32.totalorder %s157, %s159
      %p163 = scmp.eq.s32.totalorder %s18, 0
      %p164 = por %p162, %p163
      %p165 = scmp.ne.s32.totalorder %s157, %s159
      %p166 = scmp.eq.s32.totalorder %s23, 1
      %p167 = por %p165, %p166
      %p168 = scmp.ne.s32.totalorder %s159, %s160
      %p169 = scmp.eq.s32.totalorder %s23, 0
      %p170 = por %p168, %p169
      %p171 = scmp.ne.s32.totalorder %s159, %s160
      %p172 = scmp.eq.s32.totalorder %s24, 1
      %p173 = por %p171, %p172
      %p175 = scmp.ne.s32.totalorder %s160, %s174
      %p176 = scmp.eq.s32.totalorder %s24, 0
      %p177 = por %p175, %p176
      %s179 = sadd.s32 %s178, 1
      %p182 = scmp.eq.s32.totalorder %s18, 1
      %p183 = scmp.ne.s32.totalorder %s178, %s180
      %p184 = scmp.eq.s32.totalorder %s18, 0
      %p185 = por %p183, %p184
      %p186 = scmp.ne.s32.totalorder %s178, %s180
      %p187 = scmp.eq.s32.totalorder %s23, 1
      %p188 = por %p186, %p187
      %p189 = scmp.ne.s32.totalorder %s180, %s181
      %p190 = scmp.eq.s32.totalorder %s23, 0
      %p191 = por %p189, %p190
      %p192 = scmp.ne.s32.totalorder %s180, %s181
      %p193 = scmp.eq.s32.totalorder %s24, 1
      %p194 = por %p192, %p193
      %p196 = scmp.ne.s32.totalorder %s181, %s195
      %p197 = scmp.eq.s32.totalorder %s24, 0
      %p198 = por %p196, %p197
      %s200 = sadd.s32 %s199, 1
      %p203 = scmp.eq.s32.totalorder %s18, 1
      %p204 = scmp.ne.s32.totalorder %s199, %s201
      %p205 = scmp.eq.s32.totalorder %s18, 0
      %p206 = por %p204, %p205
      %p207 = scmp.ne.s32.totalorder %s199, %s201
      %p208 = scmp.eq.s32.totalorder %s23, 1
      %p209 = por %p207, %p208
      %p210 = scmp.ne.s32.totalorder %s201, %s202
      %p211 = scmp.eq.s32.totalorder %s23, 0
      %p212 = por %p210, %p211
      %p213 = scmp.ne.s32.totalorder %s201, %s202
      %p214 = scmp.eq.s32.totalorder %s24, 1
      %p215 = por %p213, %p214
      %p217 = scmp.ne.s32.totalorder %s202, %s216
      %p218 = scmp.eq.s32.totalorder %s24, 0
      %p219 = por %p217, %p218
      %s221 = sadd.s32 %s220, 1
      %p224 = scmp.eq.s32.totalorder %s18, 1
      %p225 = scmp.ne.s32.totalorder %s220, %s222
      %p226 = scmp.eq.s32.totalorder %s18, 0
      %p227 = por %p225, %p226
      %p228 = scmp.ne.s32.totalorder %s220, %s222
      %p229 = scmp.eq.s32.totalorder %s23, 1
      %p230 = por %p228, %p229
      %p231 = scmp.ne.s32.totalorder %s222, %s223
      %p232 = scmp.eq.s32.totalorder %s23, 0
      %p233 = por %p231, %p232
      %p234 = scmp.ne.s32.totalorder %s222, %s223
      %p235 = scmp.eq.s32.totalorder %s24, 1
      %p236 = por %p234, %p235
      %p238 = scmp.ne.s32.totalorder %s223, %s237
      %p239 = scmp.eq.s32.totalorder %s24, 0
      %p240 = por %p238, %p239
      %s242 = sadd.s32 %s241, 1
      %p245 = scmp.eq.s32.totalorder %s18, 1
      %p246 = scmp.ne.s32.totalorder %s241, %s243
      %p247 = scmp.eq.s32.totalorder %s18, 0
      %p248 = por %p246, %p247
      %p249 = scmp.ne.s32.totalorder %s241, %s243
      %p250 = scmp.eq.s32.totalorder %s23, 1
      %p251 = por %p249, %p250
      %p252 = scmp.ne.s32.totalorder %s243, %s244
      %p253 = scmp.eq.s32.totalorder %s23, 0
      %p254 = por %p252, %p253
      %p255 = scmp.ne.s32.totalorder %s243, %s244
      %p256 = scmp.eq.s32.totalorder %s24, 1
      %p257 = por %p255, %p256
      %p259 = scmp.ne.s32.totalorder %s244, %s258
      %p260 = scmp.eq.s32.totalorder %s24, 0
      %p261 = por %p259, %p260
      %s262 = ssub.s32 %s18, %s25
      %p263 = scmp.eq.s32.totalorder %s262, 0
      %s265 = sadd.s32 %s264, 1
      %s266 = scalar_select %p263, %s264, %s265
      %p269 = pneg %p263
      %p270 = scmp.eq.s32.totalorder %s18, 1
      %p271 = por %p269, %p270
      %p272 = scmp.ne.s32.totalorder %s264, %s267
      %p273 = scmp.eq.s32.totalorder %s18, 0
      %p274 = por %p272, %p273
      %p275 = scmp.ne.s32.totalorder %s264, %s267
      %p276 = scmp.eq.s32.totalorder %s23, 1
      %p277 = por %p275, %p276
      %p278 = scmp.ne.s32.totalorder %s267, %s268
      %p279 = scmp.eq.s32.totalorder %s23, 0
      %p280 = por %p278, %p279
      %p281 = scmp.ne.s32.totalorder %s267, %s268
      %p282 = scmp.eq.s32.totalorder %s24, 1
      %p283 = por %p281, %p282
      %p285 = scmp.ne.s32.totalorder %s268, %s284
      %p286 = scmp.eq.s32.totalorder %s24, 0
      %p287 = por %p285, %p286
      %p288 = scmp.le.s32.totalorder 1, %s18
      %p289 = scmp.lt.s32.totalorder %s18, 3
      %p290 = pnand %p288, %p289
      %p291 = pneg %p290
      // Predicated region
      $region9: #{mixed_op.1} parent=5 // pred_check
        _
      $region10: #{mixed_op.1} parent=5 // pred_check_branch
        %293 = sbr.rel (%p290) target = $region12
      $region11: #{mixed_op.1} parent=5 // pred_region
        %s294 = ssub.s32 %s18, 1
        // Predicated region
        $region13: #{mixed_op.1} parent=11 // pred_check
          %p295 = pneg %p65
        $region14: #{mixed_op.1} parent=11 // pred_check_branch
          %297 = sbr.rel (%p295) target = $region16
        $region15: #{mixed_op.1} parent=11 // pred_region
          _
        $region16: #{mixed_op.1} parent=11 // pred_fallthru
          _
        // Predicated region
        $region17: #{mixed_op.1} parent=11 // pred_check
          %p298 = pneg %p86
        $region18: #{mixed_op.1} parent=11 // pred_check_branch
          %300 = sbr.rel (%p298) target = $region20
        $region19: #{mixed_op.1} parent=11 // pred_region
          %s302 = ssub.s32 16, 16
          %303 = vsyncadd [#allocation4], %s302
          %s305 = sshll.u32 %s2, 4
          %s306 = int_to_ptr.vmem [resolvable:$true] %s305
          %308 = dma.vmem_to_smem %s306, 16, [#allocation3], [#allocation4]
        $region20: #{mixed_op.1} parent=11 // pred_fallthru
          _
        // Predicated region
        $region21: #{mixed_op.1} parent=11 // pred_check
          %p309 = pneg %p107
        $region22: #{mixed_op.1} parent=11 // pred_check_branch
          %311 = sbr.rel (%p309) target = $region24
        $region23: #{mixed_op.1} parent=11 // pred_region
          _
        $region24: #{mixed_op.1} parent=11 // pred_fallthru
          _
        // Predicated region
        $region25: #{mixed_op.1} parent=11 // pred_check
          %p312 = pneg %p128
        $region26: #{mixed_op.1} parent=11 // pred_check_branch
          %314 = sbr.rel (%p312) target = $region28
        $region27: #{mixed_op.1} parent=11 // pred_region
          _
        $region28: #{mixed_op.1} parent=11 // pred_fallthru
          _
        // Predicated region
        $region29: #{mixed_op.1} parent=11 // pred_check
          %p315 = pneg %p149
        $region30: #{mixed_op.1} parent=11 // pred_check_branch
          %317 = sbr.rel (%p315) target = $region32
        $region31: #{mixed_op.1} parent=11 // pred_region
          _
        $region32: #{mixed_op.1} parent=11 // pred_fallthru
          _
        // Predicated region
        $region33: #{mixed_op.1} parent=11 // pred_check
          %p318 = pneg %p170
        $region34: #{mixed_op.1} parent=11 // pred_check_branch
          %320 = sbr.rel (%p318) target = $region36
        $region35: #{mixed_op.1} parent=11 // pred_region
          _
        $region36: #{mixed_op.1} parent=11 // pred_fallthru
          _
        // Predicated region
        $region37: #{mixed_op.1} parent=11 // pred_check
          %p321 = pneg %p191
        $region38: #{mixed_op.1} parent=11 // pred_check_branch
          %323 = sbr.rel (%p321) target = $region40
        $region39: #{mixed_op.1} parent=11 // pred_region
          _
        $region40: #{mixed_op.1} parent=11 // pred_fallthru
          _
        // Predicated region
        $region41: #{mixed_op.1} parent=11 // pred_check
          %p324 = pneg %p212
        $region42: #{mixed_op.1} parent=11 // pred_check_branch
          %326 = sbr.rel (%p324) target = $region44
        $region43: #{mixed_op.1} parent=11 // pred_region
          _
        $region44: #{mixed_op.1} parent=11 // pred_fallthru
          _
        // Predicated region
        $region45: #{mixed_op.1} parent=11 // pred_check
          %p327 = pneg %p233
        $region46: #{mixed_op.1} parent=11 // pred_check_branch
          %329 = sbr.rel (%p327) target = $region48
        $region47: #{mixed_op.1} parent=11 // pred_region
          _
        $region48: #{mixed_op.1} parent=11 // pred_fallthru
          _
        // Predicated region
        $region49: #{mixed_op.1} parent=11 // pred_check
          %p330 = pneg %p254
        $region50: #{mixed_op.1} parent=11 // pred_check_branch
          %332 = sbr.rel (%p330) target = $region52
        $region51: #{mixed_op.1} parent=11 // pred_region
          _
        $region52: #{mixed_op.1} parent=11 // pred_fallthru
          _
      $region12: #{mixed_op.1} parent=5 // pred_fallthru
        _
      %p333 = scmp.lt.s32.totalorder %s18, 2
      // Predicated region
      $region53: #{mixed_op.1} parent=5 // pred_check
        %p334 = pneg %p333
      $region54: #{mixed_op.1} parent=5 // pred_check_branch
        %336 = sbr.rel (%p334) target = $region56
      $region55: #{mixed_op.1} parent=5 // pred_region
        // Predicated region
        $region57: #{mixed_op.1} parent=55 // pred_check
          %p337 = pneg %p38
        $region58: #{mixed_op.1} parent=55 // pred_check_branch
          %339 = sbr.rel (%p337) target = $region60
        $region59: #{mixed_op.1} parent=55 // pred_region
          %s340 = smul.u32 2, %s18
          %p341 = scmp.lt.s32.totalorder %s340, 3
          %s342 = scalar_select %p341, %s340, 3
          %s343 = smul.addr %s342, 3
          %s344 = smul.addr %s343, 8
          %s345 = scalar_lea.vmem %s0, %s344
          %s346 = smul.u32 2, %s18
        $region60: #{mixed_op.1} parent=55 // pred_fallthru
          _
      $region56: #{mixed_op.1} parent=5 // pred_fallthru
        _
      %p347 = scmp.le.s32.totalorder 1, %s18
      %p348 = scmp.lt.s32.totalorder %s18, 3
      %p349 = pnand %p347, %p348
      %p350 = pneg %p349
      // Predicated region
      $region61: #{mixed_op.1} parent=5 // pred_check
        _
      $region62: #{mixed_op.1} parent=5 // pred_check_branch
        %352 = sbr.rel (%p349) target = $region64
      $region63: #{mixed_op.1} parent=5 // pred_region
        %s353 = ssub.s32 %s18, 1
        // Predicated region
        $region65: #{mixed_op.1} parent=63 // pred_check
          %p354 = pneg %p86
        $region66: #{mixed_op.1} parent=63 // pred_check_branch
          %356 = sbr.rel (%p354) target = $region68
        $region67: #{mixed_op.1} parent=63 // pred_region
          %357 = dma.done [#allocation4], 16
        $region68: #{mixed_op.1} parent=63 // pred_fallthru
          _
        %358 = sfence
        %s359 = smul.u32 2, %s23
        %p360 = scmp.lt.s32.totalorder %s359, 3
        %s361 = scalar_select %p360, %s359, 3
        %s362 = smul.addr %s361, 3
        %s363 = smul.addr %s362, 8
        %s364 = scalar_lea.vmem %s0, %s363
        %p365 = pneg %p44
        %p366 = pneg %p41
        %p367 = pneg %p65
        %p368 = pneg %p62
        %p369 = pneg %p86
        %p370 = pneg %p83
        %p371 = pneg %p107
        %p372 = pneg %p104
        %p373 = pneg %p128
        %p374 = pneg %p125
        %p375 = pneg %p149
        %p376 = pneg %p146
        %p377 = pneg %p170
        %p378 = pneg %p167
        %p379 = pneg %p191
        %p380 = pneg %p188
        %p381 = pneg %p212
        %p382 = pneg %p209
        %p383 = pneg %p233
        %p384 = pneg %p230
        %p385 = pneg %p254
        %p386 = pneg %p251
        %p387 = pneg %p280
        %p388 = pneg %p277
        %s389 = smul.u32 2, %s23
        %p390 = scmp.lt.s32.totalorder %s389, 3
        %s391 = scalar_select %p390, %s389, 3
        %s392 = smul.addr %s391, 3
        %s393 = smul.addr %s392, 8
        %s394 = scalar_lea.vmem %s11, %s393
        %s395 = smul.u32 2, %s23
        %p396 = scmp.lt.s32.totalorder %s395, 3
        %s397 = scalar_select %p396, %s395, 3
        %s398 = smul.addr %s397, 3
        %s399 = smul.addr %s398, 8
        %s400 = scalar_lea.vmem %s0, %s399
        %s401 = smul.u32 2, %s23
        %s402 = smul.u32 2, %s23
        %p403 = scmp.lt.s32.totalorder %s402, 3
        %s404 = scalar_select %p403, %s402, 3
        %s405 = smul.addr %s404, 3
        %s406 = smul.addr %s405, 8
        %s407 = scalar_lea.vmem %s11, %s406
        %s408 = smul.u32 2, %s23
        %v409 = vld [vmem:[%s1] ss:$4 sm:$0x7]
        %s410 = scalar_lea.vmem %s1, 1
        %v411 = vld [vmem:[%s410] ss:$4 sm:$0x7]
        %s412 = scalar_lea.vmem %s1, 2
        %v413 = vld [vmem:[%s412] ss:$4 sm:$0x7]
        %s414 = sld [smem:[#allocation3]]
        %s415 = sld [smem:[#allocation3 + $0x1]]
        %416 = vst [vmem:[#allocation2] sm:$0xff] -1e+30
        %417 = vst [vmem:[#allocation2 + $0x28] sm:$0xff] -1e+30
        %vm418 = vcmask 818176
        %419 = vst.msk [vmem:[#allocation2 + $0x20] sm:$0xff] %vm418, -1e+30
        %420 = vst.msk [vmem:[#allocation2 + $0x48] sm:$0xff] %vm418, -1e+30
        %v421 = vld [vmem:[%s400] sm:$0xff]
        %v422 = vld [vmem:[%s400 + $0x8] sm:$0xff]
        %v423 = vld [vmem:[%s400 + $0x10] sm:$0xff]
        %v424 = vld [vmem:[%s400 + $0x18] sm:$0xff]
        %v425 = vld [vmem:[%s400 + $0x20] sm:$0xff]
        %v426 = vld [vmem:[%s400 + $0x28] sm:$0xff]
        %v428 = vlaneseq
        %v429 = vshrl.u32 %v428, 7
        %v430 = vsub.s32 0, %v429
        %v431 = vrot.slane %v413, %v430
        %v432 = vlaneseq
        %v433 = vshrl.u32 %v432, 7
        %v434 = vsub.s32 1, %v433
        %v435 = vrot.slane %v413, %v434
        %v436 = vlaneseq
        %v437 = vshrl.u32 %v436, 7
        %v438 = vsub.s32 2, %v437
        %v439 = vrot.slane %v413, %v438
        %v443 = vadd.f32 %v421, %v431
        %v444 = vadd.f32 %v422, %v435
        %v445 = vadd.f32 %v423, %v439
        %v446 = vadd.f32 %v424, %v431
        %v447 = vadd.f32 %v425, %v435
        %v448 = vadd.f32 %v426, %v439
        %449 = vst [vmem:[#allocation2 + $0x8] sm:$0xff] %v443
        %450 = vst [vmem:[#allocation2 + $0x10] sm:$0xff] %v444
        %451 = vst [vmem:[#allocation2 + $0x18] sm:$0xff] %v445
        %452 = vst [vmem:[#allocation2 + $0x30] sm:$0xff] %v446
        %453 = vst [vmem:[#allocation2 + $0x38] sm:$0xff] %v447
        %454 = vst [vmem:[#allocation2 + $0x40] sm:$0xff] %v448
        %v455 = vld [vmem:[#allocation2] sm:$0xff]
        %v456 = vld [vmem:[#allocation2 + $0x8] sm:$0xff]
        %v457 = vld [vmem:[#allocation2 + $0x10] sm:$0xff]
        %v458 = vld [vmem:[#allocation2 + $0x18] sm:$0xff]
        %v459 = vld [vmem:[#allocation2 + $0x28] sm:$0xff]
        %v460 = vld [vmem:[#allocation2 + $0x30] sm:$0xff]
        %v461 = vld [vmem:[#allocation2 + $0x38] sm:$0xff]
        %v462 = vld [vmem:[#allocation2 + $0x40] sm:$0xff]
        %471 = vrot.lane.b32.xlu0 %v455, 127
        %v472 = vpop.permute.xlu0 %471
        %473 = vrot.lane.b32.xlu0 %v456, 127
        %v474 = vpop.permute.xlu0 %473
        %475 = vrot.lane.b32.xlu0 %v457, 127
        %v476 = vpop.permute.xlu0 %475
        %477 = vrot.lane.b32.xlu0 %v458, 127
        %v478 = vpop.permute.xlu0 %477
        %479 = vrot.lane.b32.xlu0 %v459, 127
        %v480 = vpop.permute.xlu0 %479
        %481 = vrot.lane.b32.xlu0 %v460, 127
        %v482 = vpop.permute.xlu0 %481
        %483 = vrot.lane.b32.xlu0 %v461, 127
        %v484 = vpop.permute.xlu0 %483
        %485 = vrot.lane.b32.xlu0 %v462, 127
        %v486 = vpop.permute.xlu0 %485
        %vm487 = vcmask 1039360
        %v488 = vsel %vm487, %v472, %v474
        %v489 = vsel %vm487, %v474, %v476
        %v490 = vsel %vm487, %v476, %v478
        %v491 = vsel %vm487, %v480, %v482
        %v492 = vsel %vm487, %v482, %v484
        %v493 = vsel %vm487, %v484, %v486
        %v502 = vmax.f32 %v455, %v488
        %v503 = vmax.f32 %v456, %v489
        %v504 = vmax.f32 %v457, %v490
        %v505 = vmax.f32 %v458, %v478
        %v506 = vmax.f32 %v459, %v491
        %v507 = vmax.f32 %v460, %v492
        %v508 = vmax.f32 %v461, %v493
        %v509 = vmax.f32 %v462, %v486
        %510 = vrot.lane.b32.xlu0 %v455, 126
        %v511 = vpop.permute.xlu0 %510
        %512 = vrot.lane.b32.xlu0 %v456, 126
        %v513 = vpop.permute.xlu0 %512
        %514 = vrot.lane.b32.xlu0 %v457, 126
        %v515 = vpop.permute.xlu0 %514
        %516 = vrot.lane.b32.xlu0 %v458, 126
        %v517 = vpop.permute.xlu0 %516
        %518 = vrot.lane.b32.xlu0 %v459, 126
        %v519 = vpop.permute.xlu0 %518
        %520 = vrot.lane.b32.xlu0 %v460, 126
        %v521 = vpop.permute.xlu0 %520
        %522 = vrot.lane.b32.xlu0 %v461, 126
        %v523 = vpop.permute.xlu0 %522
        %524 = vrot.lane.b32.xlu0 %v462, 126
        %v525 = vpop.permute.xlu0 %524
        %vm526 = vcmask 1031168
        %v527 = vsel %vm526, %v511, %v513
        %v528 = vsel %vm526, %v513, %v515
        %v529 = vsel %vm526, %v515, %v517
        %v530 = vsel %vm526, %v519, %v521
        %v531 = vsel %vm526, %v521, %v523
        %v532 = vsel %vm526, %v523, %v525
        %v541 = vmax.f32 %v502, %v527
        %v542 = vmax.f32 %v503, %v528
        %v543 = vmax.f32 %v504, %v529
        %v544 = vmax.f32 %v505, %v517
        %v545 = vmax.f32 %v506, %v530
        %v546 = vmax.f32 %v507, %v531
        %v547 = vmax.f32 %v508, %v532
        %v548 = vmax.f32 %v509, %v525
        %549 = vrot.lane.b32.xlu0 %v455, 104
        %v550 = vpop.permute.xlu0 %549
        %551 = vrot.lane.b32.xlu0 %v456, 104
        %v552 = vpop.permute.xlu0 %551
        %553 = vrot.lane.b32.xlu0 %v457, 104
        %v554 = vpop.permute.xlu0 %553
        %555 = vrot.lane.b32.xlu0 %v458, 104
        %v556 = vpop.permute.xlu0 %555
        %557 = vrot.lane.b32.xlu0 %v459, 104
        %v558 = vpop.permute.xlu0 %557
        %559 = vrot.lane.b32.xlu0 %v460, 104
        %v560 = vpop.permute.xlu0 %559
        %561 = vrot.lane.b32.xlu0 %v461, 104
        %v562 = vpop.permute.xlu0 %561
        %563 = vrot.lane.b32.xlu0 %v462, 104
        %v564 = vpop.permute.xlu0 %563
        %vm565 = vcmask 850944
        %v566 = vsel %vm565, %v550, %v552
        %v567 = vsel %vm565, %v552, %v554
        %v568 = vsel %vm565, %v554, %v556
        %v569 = vsel %vm565, %v558, %v560
        %v570 = vsel %vm565, %v560, %v562
        %v571 = vsel %vm565, %v562, %v564
        %v580 = vmax.f32 %v541, %v566
        %v581 = vmax.f32 %v542, %v567
        %v582 = vmax.f32 %v543, %v568
        %v583 = vmax.f32 %v544, %v556
        %v584 = vmax.f32 %v545, %v569
        %v585 = vmax.f32 %v546, %v570
        %v586 = vmax.f32 %v547, %v571
        %v587 = vmax.f32 %v548, %v564
        %588 = vrot.lane.b32.xlu0 %v456, 103
        %v589 = vpop.permute.xlu0 %588
        %590 = vrot.lane.b32.xlu0 %v457, 103
        %v591 = vpop.permute.xlu0 %590
        %592 = vrot.lane.b32.xlu0 %v458, 103
        %v593 = vpop.permute.xlu0 %592
        %594 = vrot.lane.b32.xlu0 %v460, 103
        %v595 = vpop.permute.xlu0 %594
        %596 = vrot.lane.b32.xlu0 %v461, 103
        %v597 = vpop.permute.xlu0 %596
        %598 = vrot.lane.b32.xlu0 %v462, 103
        %v599 = vpop.permute.xlu0 %598
        %vm600 = vcmask 842752
        %v601 = vsel %vm600, %v589, %v591
        %v602 = vsel %vm600, %v591, %v593
        %v603 = vsel %vm600, %v595, %v597
        %v604 = vsel %vm600, %v597, %v599
        %v613 = vmax.f32 %v580, %v589
        %v614 = vmax.f32 %v581, %v601
        %v615 = vmax.f32 %v582, %v602
        %v616 = vmax.f32 %v583, %v593
        %v617 = vmax.f32 %v584, %v595
        %v618 = vmax.f32 %v585, %v603
        %v619 = vmax.f32 %v586, %v604
        %v620 = vmax.f32 %v587, %v599
        %v621 = vld [vmem:[#allocation2 + $0x20] sm:$0xff]
        %v622 = vld [vmem:[#allocation2 + $0x48] sm:$0xff]
        %625 = vrot.lane.b32.xlu0 %v456, 102
        %v626 = vpop.permute.xlu0 %625
        %627 = vrot.lane.b32.xlu0 %v457, 102
        %v628 = vpop.permute.xlu0 %627
        %629 = vrot.lane.b32.xlu0 %v458, 102
        %v630 = vpop.permute.xlu0 %629
        %631 = vrot.lane.b32.xlu0 %v621, 102
        %v632 = vpop.permute.xlu0 %631
        %633 = vrot.lane.b32.xlu0 %v460, 102
        %v634 = vpop.permute.xlu0 %633
        %635 = vrot.lane.b32.xlu0 %v461, 102
        %v636 = vpop.permute.xlu0 %635
        %637 = vrot.lane.b32.xlu0 %v462, 102
        %v638 = vpop.permute.xlu0 %637
        %639 = vrot.lane.b32.xlu0 %v622, 102
        %v640 = vpop.permute.xlu0 %639
        %vm641 = vcmask 834560
        %v642 = vsel %vm641, %v626, %v628
        %v643 = vsel %vm641, %v628, %v630
        %v644 = vsel %vm641, %v630, %v632
        %v645 = vsel %vm641, %v634, %v636
        %v646 = vsel %vm641, %v636, %v638
        %v647 = vsel %vm641, %v638, %v640
        %v656 = vmax.f32 %v613, %v626
        %v657 = vmax.f32 %v614, %v642
        %v658 = vmax.f32 %v615, %v643
        %v659 = vmax.f32 %v616, %v644
        %v660 = vmax.f32 %v617, %v634
        %v661 = vmax.f32 %v618, %v645
        %v662 = vmax.f32 %v619, %v646
        %v663 = vmax.f32 %v620, %v647
        %664 = vrot.lane.b32.xlu0 %v456, 80
        %v665 = vpop.permute.xlu0 %664
        %666 = vrot.lane.b32.xlu0 %v457, 80
        %v667 = vpop.permute.xlu0 %666
        %668 = vrot.lane.b32.xlu0 %v458, 80
        %v669 = vpop.permute.xlu0 %668
        %670 = vrot.lane.b32.xlu0 %v621, 80
        %v671 = vpop.permute.xlu0 %670
        %672 = vrot.lane.b32.xlu0 %v460, 80
        %v673 = vpop.permute.xlu0 %672
        %674 = vrot.lane.b32.xlu0 %v461, 80
        %v675 = vpop.permute.xlu0 %674
        %676 = vrot.lane.b32.xlu0 %v462, 80
        %v677 = vpop.permute.xlu0 %676
        %678 = vrot.lane.b32.xlu0 %v622, 80
        %v679 = vpop.permute.xlu0 %678
        %vm680 = vcmask 654336
        %v681 = vsel %vm680, %v665, %v667
        %v682 = vsel %vm680, %v667, %v669
        %v683 = vsel %vm680, %v669, %v671
        %v684 = vsel %vm680, %v673, %v675
        %v685 = vsel %vm680, %v675, %v677
        %v686 = vsel %vm680, %v677, %v679
        %v695 = vmax.f32 %v656, %v665
        %v696 = vmax.f32 %v657, %v681
        %v697 = vmax.f32 %v658, %v682
        %v698 = vmax.f32 %v659, %v683
        %v699 = vmax.f32 %v660, %v673
        %v700 = vmax.f32 %v661, %v684
        %v701 = vmax.f32 %v662, %v685
        %v702 = vmax.f32 %v663, %v686
        %703 = vrot.lane.b32.xlu0 %v456, 79
        %v704 = vpop.permute.xlu0 %703
        %705 = vrot.lane.b32.xlu0 %v457, 79
        %v706 = vpop.permute.xlu0 %705
        %707 = vrot.lane.b32.xlu0 %v458, 79
        %v708 = vpop.permute.xlu0 %707
        %709 = vrot.lane.b32.xlu0 %v621, 79
        %v710 = vpop.permute.xlu0 %709
        %711 = vrot.lane.b32.xlu0 %v460, 79
        %v712 = vpop.permute.xlu0 %711
        %713 = vrot.lane.b32.xlu0 %v461, 79
        %v714 = vpop.permute.xlu0 %713
        %715 = vrot.lane.b32.xlu0 %v462, 79
        %v716 = vpop.permute.xlu0 %715
        %717 = vrot.lane.b32.xlu0 %v622, 79
        %v718 = vpop.permute.xlu0 %717
        %vm719 = vcmask 646144
        %v720 = vsel %vm719, %v704, %v706
        %v721 = vsel %vm719, %v706, %v708
        %v722 = vsel %vm719, %v708, %v710
        %v723 = vsel %vm719, %v712, %v714
        %v724 = vsel %vm719, %v714, %v716
        %v725 = vsel %vm719, %v716, %v718
        %v734 = vmax.f32 %v695, %v704
        %v735 = vmax.f32 %v696, %v720
        %v736 = vmax.f32 %v697, %v721
        %v737 = vmax.f32 %v698, %v722
        %v738 = vmax.f32 %v699, %v712
        %v739 = vmax.f32 %v700, %v723
        %v740 = vmax.f32 %v701, %v724
        %v741 = vmax.f32 %v702, %v725
        %742 = vrot.lane.b32.xlu0 %v456, 78
        %v743 = vpop.permute.xlu0 %742
        %744 = vrot.lane.b32.xlu0 %v457, 78
        %v745 = vpop.permute.xlu0 %744
        %746 = vrot.lane.b32.xlu0 %v458, 78
        %v747 = vpop.permute.xlu0 %746
        %748 = vrot.lane.b32.xlu0 %v621, 78
        %v749 = vpop.permute.xlu0 %748
        %750 = vrot.lane.b32.xlu0 %v460, 78
        %v751 = vpop.permute.xlu0 %750
        %752 = vrot.lane.b32.xlu0 %v461, 78
        %v753 = vpop.permute.xlu0 %752
        %754 = vrot.lane.b32.xlu0 %v462, 78
        %v755 = vpop.permute.xlu0 %754
        %756 = vrot.lane.b32.xlu0 %v622, 78
        %v757 = vpop.permute.xlu0 %756
        %vm758 = vcmask 637952
        %v759 = vsel %vm758, %v743, %v745
        %v760 = vsel %vm758, %v745, %v747
        %v761 = vsel %vm758, %v747, %v749
        %v762 = vsel %vm758, %v751, %v753
        %v763 = vsel %vm758, %v753, %v755
        %v764 = vsel %vm758, %v755, %v757
        %v773 = vmax.f32 %v734, %v743
        %v774 = vmax.f32 %v735, %v759
        %v775 = vmax.f32 %v736, %v760
        %v776 = vmax.f32 %v737, %v761
        %v777 = vmax.f32 %v738, %v751
        %v778 = vmax.f32 %v739, %v762
        %v779 = vmax.f32 %v740, %v763
        %v780 = vmax.f32 %v741, %v764
        %v781 = vstv %s414
        %v782 = vmul.f32 %v773, %v781
        %v783 = vmul.f32 %v774, %v781
        %v784 = vmul.f32 %v775, %v781
        %v785 = vmul.f32 %v776, %v781
        %v786 = vmul.f32 %v777, %v781
        %v787 = vmul.f32 %v778, %v781
        %v788 = vmul.f32 %v779, %v781
        %v789 = vmul.f32 %v780, %v781
        %v790 = vld [vmem:[%s400] sm:$0xff]
        %v791 = vld [vmem:[%s400 + $0x8] sm:$0xff]
        %v792 = vld [vmem:[%s400 + $0x10] sm:$0xff]
        %v793 = vld [vmem:[%s400 + $0x18] sm:$0xff]
        %v794 = vld [vmem:[%s400 + $0x20] sm:$0xff]
        %v795 = vld [vmem:[%s400 + $0x28] sm:$0xff]
        %v796 = vstv %s415
        %v797 = vmul.f32 %v790, %v796
        %v798 = vmul.f32 %v791, %v796
        %v799 = vmul.f32 %v792, %v796
        %v800 = vmul.f32 %v793, %v796
        %v801 = vmul.f32 %v794, %v796
        %v802 = vmul.f32 %v795, %v796
        %809 = vrot.lane.b32.xlu0 %v797, 103
        %v810 = vpop.permute.xlu0 %809
        %811 = vrot.lane.b32.xlu0 %v798, 103
        %v812 = vpop.permute.xlu0 %811
        %813 = vrot.lane.b32.xlu0 %v799, 103
        %v814 = vpop.permute.xlu0 %813
        %815 = vrot.lane.b32.xlu0 %v800, 103
        %v816 = vpop.permute.xlu0 %815
        %817 = vrot.lane.b32.xlu0 %v801, 103
        %v818 = vpop.permute.xlu0 %817
        %819 = vrot.lane.b32.xlu0 %v802, 103
        %v820 = vpop.permute.xlu0 %819
        %v821 = vsel %vm600, %v810, %v812
        %v822 = vsel %vm600, %v812, %v814
        %v823 = vsel %vm600, %v816, %v818
        %v824 = vsel %vm600, %v818, %v820
        %v833 = vadd.f32 %v782, %v810
        %v834 = vadd.f32 %v783, %v821
        %v835 = vadd.f32 %v784, %v822
        %v836 = vadd.f32 %v785, %v814
        %v837 = vadd.f32 %v786, %v816
        %v838 = vadd.f32 %v787, %v823
        %v839 = vadd.f32 %v788, %v824
        %v840 = vadd.f32 %v789, %v820
        %841 = vst [vmem:[#allocation2] sm:$0xff] 0.0
        %842 = vst [vmem:[#allocation2 + $0x28] sm:$0xff] 0.0
        %843 = vst.msk [vmem:[#allocation2 + $0x20] sm:$0xff] %vm418, 0.0
        %844 = vst.msk [vmem:[#allocation2 + $0x48] sm:$0xff] %vm418, 0.0
        %v845 = vld [vmem:[%s400] sm:$0xff]
        %v846 = vld [vmem:[%s400 + $0x8] sm:$0xff]
        %v847 = vld [vmem:[%s400 + $0x10] sm:$0xff]
        %v848 = vld [vmem:[%s400 + $0x18] sm:$0xff]
        %v849 = vld [vmem:[%s400 + $0x20] sm:$0xff]
        %v850 = vld [vmem:[%s400 + $0x28] sm:$0xff]
        %851 = vst [vmem:[#allocation2 + $0x8] sm:$0xff] %v845
        %852 = vst [vmem:[#allocation2 + $0x10] sm:$0xff] %v846
        %853 = vst [vmem:[#allocation2 + $0x18] sm:$0xff] %v847
        %854 = vst [vmem:[#allocation2 + $0x30] sm:$0xff] %v848
        %855 = vst [vmem:[#allocation2 + $0x38] sm:$0xff] %v849
        %856 = vst [vmem:[#allocation2 + $0x40] sm:$0xff] %v850
        %v857 = vld [vmem:[#allocation2] sm:$0xff]
        %v858 = vld [vmem:[#allocation2 + $0x8] sm:$0xff]
        %v859 = vld [vmem:[#allocation2 + $0x10] sm:$0xff]
        %v860 = vld [vmem:[#allocation2 + $0x18] sm:$0xff]
        %v861 = vld [vmem:[#allocation2 + $0x28] sm:$0xff]
        %v862 = vld [vmem:[#allocation2 + $0x30] sm:$0xff]
        %v863 = vld [vmem:[#allocation2 + $0x38] sm:$0xff]
        %v864 = vld [vmem:[#allocation2 + $0x40] sm:$0xff]
        %873 = vrot.lane.b32.xlu0 %v857, 127
        %v874 = vpop.permute.xlu0 %873
        %875 = vrot.lane.b32.xlu0 %v858, 127
        %v876 = vpop.permute.xlu0 %875
        %877 = vrot.lane.b32.xlu0 %v859, 127
        %v878 = vpop.permute.xlu0 %877
        %879 = vrot.lane.b32.xlu0 %v860, 127
        %v880 = vpop.permute.xlu0 %879
        %881 = vrot.lane.b32.xlu0 %v861, 127
        %v882 = vpop.permute.xlu0 %881
        %883 = vrot.lane.b32.xlu0 %v862, 127
        %v884 = vpop.permute.xlu0 %883
        %885 = vrot.lane.b32.xlu0 %v863, 127
        %v886 = vpop.permute.xlu0 %885
        %887 = vrot.lane.b32.xlu0 %v864, 127
        %v888 = vpop.permute.xlu0 %887
        %v889 = vsel %vm487, %v874, %v876
        %v890 = vsel %vm487, %v876, %v878
        %v891 = vsel %vm487, %v878, %v880
        %v892 = vsel %vm487, %v882, %v884
        %v893 = vsel %vm487, %v884, %v886
        %v894 = vsel %vm487, %v886, %v888
        %v903 = vadd.f32 %v857, %v889
        %v904 = vadd.f32 %v858, %v890
        %v905 = vadd.f32 %v859, %v891
        %v906 = vadd.f32 %v860, %v880
        %v907 = vadd.f32 %v861, %v892
        %v908 = vadd.f32 %v862, %v893
        %v909 = vadd.f32 %v863, %v894
        %v910 = vadd.f32 %v864, %v888
        %911 = vrot.lane.b32.xlu0 %v857, 126
        %v912 = vpop.permute.xlu0 %911
        %913 = vrot.lane.b32.xlu0 %v858, 126
        %v914 = vpop.permute.xlu0 %913
        %915 = vrot.lane.b32.xlu0 %v859, 126
        %v916 = vpop.permute.xlu0 %915
        %917 = vrot.lane.b32.xlu0 %v860, 126
        %v918 = vpop.permute.xlu0 %917
        %919 = vrot.lane.b32.xlu0 %v861, 126
        %v920 = vpop.permute.xlu0 %919
        %921 = vrot.lane.b32.xlu0 %v862, 126
        %v922 = vpop.permute.xlu0 %921
        %923 = vrot.lane.b32.xlu0 %v863, 126
        %v924 = vpop.permute.xlu0 %923
        %925 = vrot.lane.b32.xlu0 %v864, 126
        %v926 = vpop.permute.xlu0 %925
        %v927 = vsel %vm526, %v912, %v914
        %v928 = vsel %vm526, %v914, %v916
        %v929 = vsel %vm526, %v916, %v918
        %v930 = vsel %vm526, %v920, %v922
        %v931 = vsel %vm526, %v922, %v924
        %v932 = vsel %vm526, %v924, %v926
        %v941 = vadd.f32 %v903, %v927
        %v942 = vadd.f32 %v904, %v928
        %v943 = vadd.f32 %v905, %v929
        %v944 = vadd.f32 %v906, %v918
        %v945 = vadd.f32 %v907, %v930
        %v946 = vadd.f32 %v908, %v931
        %v947 = vadd.f32 %v909, %v932
        %v948 = vadd.f32 %v910, %v926
        %949 = vrot.lane.b32.xlu0 %v857, 104
        %v950 = vpop.permute.xlu0 %949
        %951 = vrot.lane.b32.xlu0 %v858, 104
        %v952 = vpop.permute.xlu0 %951
        %953 = vrot.lane.b32.xlu0 %v859, 104
        %v954 = vpop.permute.xlu0 %953
        %955 = vrot.lane.b32.xlu0 %v860, 104
        %v956 = vpop.permute.xlu0 %955
        %957 = vrot.lane.b32.xlu0 %v861, 104
        %v958 = vpop.permute.xlu0 %957
        %959 = vrot.lane.b32.xlu0 %v862, 104
        %v960 = vpop.permute.xlu0 %959
        %961 = vrot.lane.b32.xlu0 %v863, 104
        %v962 = vpop.permute.xlu0 %961
        %963 = vrot.lane.b32.xlu0 %v864, 104
        %v964 = vpop.permute.xlu0 %963
        %v965 = vsel %vm565, %v950, %v952
        %v966 = vsel %vm565, %v952, %v954
        %v967 = vsel %vm565, %v954, %v956
        %v968 = vsel %vm565, %v958, %v960
        %v969 = vsel %vm565, %v960, %v962
        %v970 = vsel %vm565, %v962, %v964
        %v979 = vadd.f32 %v941, %v965
        %v980 = vadd.f32 %v942, %v966
        %v981 = vadd.f32 %v943, %v967
        %v982 = vadd.f32 %v944, %v956
        %v983 = vadd.f32 %v945, %v968
        %v984 = vadd.f32 %v946, %v969
        %v985 = vadd.f32 %v947, %v970
        %v986 = vadd.f32 %v948, %v964
        %987 = vrot.lane.b32.xlu0 %v858, 103
        %v988 = vpop.permute.xlu0 %987
        %989 = vrot.lane.b32.xlu0 %v859, 103
        %v990 = vpop.permute.xlu0 %989
        %991 = vrot.lane.b32.xlu0 %v860, 103
        %v992 = vpop.permute.xlu0 %991
        %993 = vrot.lane.b32.xlu0 %v862, 103
        %v994 = vpop.permute.xlu0 %993
        %995 = vrot.lane.b32.xlu0 %v863, 103
        %v996 = vpop.permute.xlu0 %995
        %997 = vrot.lane.b32.xlu0 %v864, 103
        %v998 = vpop.permute.xlu0 %997
        %v999 = vsel %vm600, %v988, %v990
        %v1000 = vsel %vm600, %v990, %v992
        %v1001 = vsel %vm600, %v994, %v996
        %v1002 = vsel %vm600, %v996, %v998
        %v1011 = vadd.f32 %v979, %v988
        %v1012 = vadd.f32 %v980, %v999
        %v1013 = vadd.f32 %v981, %v1000
        %v1014 = vadd.f32 %v982, %v992
        %v1015 = vadd.f32 %v983, %v994
        %v1016 = vadd.f32 %v984, %v1001
        %v1017 = vadd.f32 %v985, %v1002
        %v1018 = vadd.f32 %v986, %v998
        %v1019 = vld [vmem:[#allocation2 + $0x20] sm:$0xff]
        %v1020 = vld [vmem:[#allocation2 + $0x48] sm:$0xff]
        %1023 = vrot.lane.b32.xlu0 %v858, 102
        %v1024 = vpop.permute.xlu0 %1023
        %1025 = vrot.lane.b32.xlu0 %v859, 102
        %v1026 = vpop.permute.xlu0 %1025
        %1027 = vrot.lane.b32.xlu0 %v860, 102
        %v1028 = vpop.permute.xlu0 %1027
        %1029 = vrot.lane.b32.xlu0 %v1019, 102
        %v1030 = vpop.permute.xlu0 %1029
        %1031 = vrot.lane.b32.xlu0 %v862, 102
        %v1032 = vpop.permute.xlu0 %1031
        %1033 = vrot.lane.b32.xlu0 %v863, 102
        %v1034 = vpop.permute.xlu0 %1033
        %1035 = vrot.lane.b32.xlu0 %v864, 102
        %v1036 = vpop.permute.xlu0 %1035
        %1037 = vrot.lane.b32.xlu0 %v1020, 102
        %v1038 = vpop.permute.xlu0 %1037
        %v1039 = vsel %vm641, %v1024, %v1026
        %v1040 = vsel %vm641, %v1026, %v1028
        %v1041 = vsel %vm641, %v1028, %v1030
        %v1042 = vsel %vm641, %v1032, %v1034
        %v1043 = vsel %vm641, %v1034, %v1036
        %v1044 = vsel %vm641, %v1036, %v1038
        %v1053 = vadd.f32 %v1011, %v1024
        %v1054 = vadd.f32 %v1012, %v1039
        %v1055 = vadd.f32 %v1013, %v1040
        %v1056 = vadd.f32 %v1014, %v1041
        %v1057 = vadd.f32 %v1015, %v1032
        %v1058 = vadd.f32 %v1016, %v1042
        %v1059 = vadd.f32 %v1017, %v1043
        %v1060 = vadd.f32 %v1018, %v1044
        %1061 = vrot.lane.b32.xlu0 %v858, 80
        %v1062 = vpop.permute.xlu0 %1061
        %1063 = vrot.lane.b32.xlu0 %v859, 80
        %v1064 = vpop.permute.xlu0 %1063
        %1065 = vrot.lane.b32.xlu0 %v860, 80
        %v1066 = vpop.permute.xlu0 %1065
        %1067 = vrot.lane.b32.xlu0 %v1019, 80
        %v1068 = vpop.permute.xlu0 %1067
        %1069 = vrot.lane.b32.xlu0 %v862, 80
        %v1070 = vpop.permute.xlu0 %1069
        %1071 = vrot.lane.b32.xlu0 %v863, 80
        %v1072 = vpop.permute.xlu0 %1071
        %1073 = vrot.lane.b32.xlu0 %v864, 80
        %v1074 = vpop.permute.xlu0 %1073
        %1075 = vrot.lane.b32.xlu0 %v1020, 80
        %v1076 = vpop.permute.xlu0 %1075
        %v1077 = vsel %vm680, %v1062, %v1064
        %v1078 = vsel %vm680, %v1064, %v1066
        %v1079 = vsel %vm680, %v1066, %v1068
        %v1080 = vsel %vm680, %v1070, %v1072
        %v1081 = vsel %vm680, %v1072, %v1074
        %v1082 = vsel %vm680, %v1074, %v1076
        %v1091 = vadd.f32 %v1053, %v1062
        %v1092 = vadd.f32 %v1054, %v1077
        %v1093 = vadd.f32 %v1055, %v1078
        %v1094 = vadd.f32 %v1056, %v1079
        %v1095 = vadd.f32 %v1057, %v1070
        %v1096 = vadd.f32 %v1058, %v1080
        %v1097 = vadd.f32 %v1059, %v1081
        %v1098 = vadd.f32 %v1060, %v1082
        %1099 = vrot.lane.b32.xlu0 %v858, 79
        %v1100 = vpop.permute.xlu0 %1099
        %1101 = vrot.lane.b32.xlu0 %v859, 79
        %v1102 = vpop.permute.xlu0 %1101
        %1103 = vrot.lane.b32.xlu0 %v860, 79
        %v1104 = vpop.permute.xlu0 %1103
        %1105 = vrot.lane.b32.xlu0 %v1019, 79
        %v1106 = vpop.permute.xlu0 %1105
        %1107 = vrot.lane.b32.xlu0 %v862, 79
        %v1108 = vpop.permute.xlu0 %1107
        %1109 = vrot.lane.b32.xlu0 %v863, 79
        %v1110 = vpop.permute.xlu0 %1109
        %1111 = vrot.lane.b32.xlu0 %v864, 79
        %v1112 = vpop.permute.xlu0 %1111
        %1113 = vrot.lane.b32.xlu0 %v1020, 79
        %v1114 = vpop.permute.xlu0 %1113
        %v1115 = vsel %vm719, %v1100, %v1102
        %v1116 = vsel %vm719, %v1102, %v1104
        %v1117 = vsel %vm719, %v1104, %v1106
        %v1118 = vsel %vm719, %v1108, %v1110
        %v1119 = vsel %vm719, %v1110, %v1112
        %v1120 = vsel %vm719, %v1112, %v1114
        %v1129 = vadd.f32 %v1091, %v1100
        %v1130 = vadd.f32 %v1092, %v1115
        %v1131 = vadd.f32 %v1093, %v1116
        %v1132 = vadd.f32 %v1094, %v1117
        %v1133 = vadd.f32 %v1095, %v1108
        %v1134 = vadd.f32 %v1096, %v1118
        %v1135 = vadd.f32 %v1097, %v1119
        %v1136 = vadd.f32 %v1098, %v1120
        %1137 = vrot.lane.b32.xlu0 %v858, 78
        %v1138 = vpop.permute.xlu0 %1137
        %1139 = vrot.lane.b32.xlu0 %v859, 78
        %v1140 = vpop.permute.xlu0 %1139
        %1141 = vrot.lane.b32.xlu0 %v860, 78
        %v1142 = vpop.permute.xlu0 %1141
        %1143 = vrot.lane.b32.xlu0 %v1019, 78
        %v1144 = vpop.permute.xlu0 %1143
        %1145 = vrot.lane.b32.xlu0 %v862, 78
        %v1146 = vpop.permute.xlu0 %1145
        %1147 = vrot.lane.b32.xlu0 %v863, 78
        %v1148 = vpop.permute.xlu0 %1147
        %1149 = vrot.lane.b32.xlu0 %v864, 78
        %v1150 = vpop.permute.xlu0 %1149
        %1151 = vrot.lane.b32.xlu0 %v1020, 78
        %v1152 = vpop.permute.xlu0 %1151
        %v1153 = vsel %vm758, %v1138, %v1140
        %v1154 = vsel %vm758, %v1140, %v1142
        %v1155 = vsel %vm758, %v1142, %v1144
        %v1156 = vsel %vm758, %v1146, %v1148
        %v1157 = vsel %vm758, %v1148, %v1150
        %v1158 = vsel %vm758, %v1150, %v1152
        %v1167 = vadd.f32 %v1129, %v1138
        %v1168 = vadd.f32 %v1130, %v1153
        %v1169 = vadd.f32 %v1131, %v1154
        %v1170 = vadd.f32 %v1132, %v1155
        %v1171 = vadd.f32 %v1133, %v1146
        %v1172 = vadd.f32 %v1134, %v1156
        %v1173 = vadd.f32 %v1135, %v1157
        %v1174 = vadd.f32 %v1136, %v1158
        %v1176 = vlaneseq
        %v1177 = vshrl.u32 %v1176, 7
        %v1178 = vsub.s32 0, %v1177
        %v1179 = vrot.slane %v409, %v1178
        %v1180 = vlaneseq
        %v1181 = vshrl.u32 %v1180, 7
        %v1182 = vsub.s32 1, %v1181
        %v1183 = vrot.slane %v409, %v1182
        %v1184 = vlaneseq
        %v1185 = vshrl.u32 %v1184, 7
        %v1186 = vsub.s32 2, %v1185
        %v1187 = vrot.slane %v409, %v1186
        %1188 = vrot.lane.b32.xlu0 %v1179, 103
        %v1189 = vpop.permute.xlu0 %1188
        %1190 = vrot.lane.b32.xlu0 %v1183, 103
        %v1191 = vpop.permute.xlu0 %1190
        %1192 = vrot.lane.b32.xlu0 %v1187, 103
        %v1193 = vpop.permute.xlu0 %1192
        %v1194 = vsel %vm600, %v1189, %v1191
        %v1195 = vsel %vm600, %v1191, %v1193
        %v1200 = vmul.f32 %v1167, %v1189
        %v1201 = vmul.f32 %v1168, %v1194
        %v1202 = vmul.f32 %v1169, %v1195
        %v1203 = vmul.f32 %v1170, %v1193
        %v1204 = vmul.f32 %v1171, %v1189
        %v1205 = vmul.f32 %v1172, %v1194
        %v1206 = vmul.f32 %v1173, %v1195
        %v1207 = vmul.f32 %v1174, %v1193
        %v1208 = vadd.f32 %v833, %v1200
        %v1209 = vadd.f32 %v834, %v1201
        %v1210 = vadd.f32 %v835, %v1202
        %v1211 = vadd.f32 %v836, %v1203
        %v1212 = vadd.f32 %v837, %v1204
        %v1213 = vadd.f32 %v838, %v1205
        %v1214 = vadd.f32 %v839, %v1206
        %v1215 = vadd.f32 %v840, %v1207
        %v1216 = vld [vmem:[%s400] sm:$0xff]
        %v1217 = vld [vmem:[%s400 + $0x8] sm:$0xff]
        %v1218 = vld [vmem:[%s400 + $0x10] sm:$0xff]
        %v1219 = vld [vmem:[%s400 + $0x18] sm:$0xff]
        %v1220 = vld [vmem:[%s400 + $0x20] sm:$0xff]
        %v1221 = vld [vmem:[%s400 + $0x28] sm:$0xff]
        %v1222 = vmax.f32 %v1216, 0.0
        %v1223 = vmax.f32 %v1217, 0.0
        %v1224 = vmax.f32 %v1218, 0.0
        %v1225 = vmax.f32 %v1219, 0.0
        %v1226 = vmax.f32 %v1220, 0.0
        %v1227 = vmax.f32 %v1221, 0.0
        %1228 = vst [vmem:[#allocation2 + $0x8] sm:$0xff] %v1222
        %1229 = vst [vmem:[#allocation2 + $0x10] sm:$0xff] %v1223
        %1230 = vst [vmem:[#allocation2 + $0x18] sm:$0xff] %v1224
        %1231 = vst [vmem:[#allocation2 + $0x30] sm:$0xff] %v1225
        %1232 = vst [vmem:[#allocation2 + $0x38] sm:$0xff] %v1226
        %1233 = vst [vmem:[#allocation2 + $0x40] sm:$0xff] %v1227
        %v1234 = vld [vmem:[#allocation2] sm:$0xff]
        %v1235 = vld [vmem:[#allocation2 + $0x8] sm:$0xff]
        %v1236 = vld [vmem:[#allocation2 + $0x10] sm:$0xff]
        %v1237 = vld [vmem:[#allocation2 + $0x18] sm:$0xff]
        %v1238 = vld [vmem:[#allocation2 + $0x28] sm:$0xff]
        %v1239 = vld [vmem:[#allocation2 + $0x30] sm:$0xff]
        %v1240 = vld [vmem:[#allocation2 + $0x38] sm:$0xff]
        %v1241 = vld [vmem:[#allocation2 + $0x40] sm:$0xff]
        %v1242 = vld [vmem:[%s3] sm:$0xff]
        %v1243 = vld [vmem:[%s3 + $0x8] sm:$0xff]
        %v1244 = vld [vmem:[%s3 + $0x10] sm:$0xff]
        %v1245 = vld [vmem:[%s3 + $0x18] sm:$0xff]
        %v1246 = vld [vmem:[%s3 + $0x20] sm:$0xff]
        %v1247 = vld [vmem:[%s3 + $0x28] sm:$0xff]
        %1254 = vrot.lane.b32.xlu0 %v1242, 78
        %v1255 = vpop.permute.xlu0 %1254
        %1256 = vrot.lane.b32.xlu0 %v1243, 78
        %v1257 = vpop.permute.xlu0 %1256
        %1258 = vrot.lane.b32.xlu0 %v1244, 78
        %v1259 = vpop.permute.xlu0 %1258
        %1260 = vrot.lane.b32.xlu0 %v1245, 78
        %v1261 = vpop.permute.xlu0 %1260
        %1262 = vrot.lane.b32.xlu0 %v1246, 78
        %v1263 = vpop.permute.xlu0 %1262
        %1264 = vrot.lane.b32.xlu0 %v1247, 78
        %v1265 = vpop.permute.xlu0 %1264
        %v1266 = vsel %vm758, %v1255, %v1257
        %v1267 = vsel %vm758, %v1257, %v1259
        %v1268 = vsel %vm758, %v1261, %v1263
        %v1269 = vsel %vm758, %v1263, %v1265
        %v1278 = vmul.f32 %v1234, %v1255
        %v1279 = vmul.f32 %v1235, %v1266
        %v1280 = vmul.f32 %v1236, %v1267
        %v1281 = vmul.f32 %v1237, %v1259
        %v1282 = vmul.f32 %v1238, %v1261
        %v1283 = vmul.f32 %v1239, %v1268
        %v1284 = vmul.f32 %v1240, %v1269
        %v1285 = vmul.f32 %v1241, %v1265
        %s1286 = scalar_lea.vmem %s4, 288
        %v1287 = vld [vmem:[%s1286] sm:$0xff]
        %v1288 = vld [vmem:[%s1286 + $0x8] sm:$0xff]
        %v1289 = vld [vmem:[%s1286 + $0x10] sm:$0xff]
        %v1290 = vld [vmem:[%s1286 + $0x18] sm:$0xff]
        %v1291 = vld [vmem:[%s1286 + $0x20] sm:$0xff]
        %v1292 = vld [vmem:[%s1286 + $0x28] sm:$0xff]
        %1299 = vrot.lane.b32.xlu0 %v1287, 78
        %v1300 = vpop.permute.xlu0 %1299
        %1301 = vrot.lane.b32.xlu0 %v1288, 78
        %v1302 = vpop.permute.xlu0 %1301
        %1303 = vrot.lane.b32.xlu0 %v1289, 78
        %v1304 = vpop.permute.xlu0 %1303
        %1305 = vrot.lane.b32.xlu0 %v1290, 78
        %v1306 = vpop.permute.xlu0 %1305
        %1307 = vrot.lane.b32.xlu0 %v1291, 78
        %v1308 = vpop.permute.xlu0 %1307
        %1309 = vrot.lane.b32.xlu0 %v1292, 78
        %v1310 = vpop.permute.xlu0 %1309
        %v1311 = vsel %vm758, %v1300, %v1302
        %v1312 = vsel %vm758, %v1302, %v1304
        %v1313 = vsel %vm758, %v1306, %v1308
        %v1314 = vsel %vm758, %v1308, %v1310
        %v1323 = vmul.f32 %v1234, %v1300
        %v1324 = vmul.f32 %v1235, %v1311
        %v1325 = vmul.f32 %v1236, %v1312
        %v1326 = vmul.f32 %v1237, %v1304
        %v1327 = vmul.f32 %v1238, %v1306
        %v1328 = vmul.f32 %v1239, %v1313
        %v1329 = vmul.f32 %v1240, %v1314
        %v1330 = vmul.f32 %v1241, %v1310
        %v1331 = vld [vmem:[%s6] sm:$0xff]
        %v1332 = vld [vmem:[%s6 + $0x8] sm:$0xff]
        %v1333 = vld [vmem:[%s6 + $0x10] sm:$0xff]
        %v1334 = vld [vmem:[%s6 + $0x18] sm:$0xff]
        %v1335 = vld [vmem:[%s6 + $0x20] sm:$0xff]
        %v1336 = vld [vmem:[%s6 + $0x28] sm:$0xff]
        %1343 = vrot.lane.b32.xlu0 %v1331, 78
        %v1344 = vpop.permute.xlu0 %1343
        %1345 = vrot.lane.b32.xlu0 %v1332, 78
        %v1346 = vpop.permute.xlu0 %1345
        %1347 = vrot.lane.b32.xlu0 %v1333, 78
        %v1348 = vpop.permute.xlu0 %1347
        %1349 = vrot.lane.b32.xlu0 %v1334, 78
        %v1350 = vpop.permute.xlu0 %1349
        %1351 = vrot.lane.b32.xlu0 %v1335, 78
        %v1352 = vpop.permute.xlu0 %1351
        %1353 = vrot.lane.b32.xlu0 %v1336, 78
        %v1354 = vpop.permute.xlu0 %1353
        %v1355 = vsel %vm758, %v1344, %v1346
        %v1356 = vsel %vm758, %v1346, %v1348
        %v1357 = vsel %vm758, %v1350, %v1352
        %v1358 = vsel %vm758, %v1352, %v1354
        %v1367 = vmul.f32 %v1234, %v1344
        %v1368 = vmul.f32 %v1235, %v1355
        %v1369 = vmul.f32 %v1236, %v1356
        %v1370 = vmul.f32 %v1237, %v1348
        %v1371 = vmul.f32 %v1238, %v1350
        %v1372 = vmul.f32 %v1239, %v1357
        %v1373 = vmul.f32 %v1240, %v1358
        %v1374 = vmul.f32 %v1241, %v1354
        %s1375 = scalar_lea.vmem %s3, 48
        %v1376 = vld [vmem:[%s1375] sm:$0xff]
        %v1377 = vld [vmem:[%s1375 + $0x8] sm:$0xff]
        %v1378 = vld [vmem:[%s1375 + $0x10] sm:$0xff]
        %v1379 = vld [vmem:[%s1375 + $0x18] sm:$0xff]
        %v1380 = vld [vmem:[%s1375 + $0x20] sm:$0xff]
        %v1381 = vld [vmem:[%s1375 + $0x28] sm:$0xff]
        %1388 = vrot.lane.b32.xlu0 %v1376, 80
        %v1389 = vpop.permute.xlu0 %1388
        %1390 = vrot.lane.b32.xlu0 %v1377, 80
        %v1391 = vpop.permute.xlu0 %1390
        %1392 = vrot.lane.b32.xlu0 %v1378, 80
        %v1393 = vpop.permute.xlu0 %1392
        %1394 = vrot.lane.b32.xlu0 %v1379, 80
        %v1395 = vpop.permute.xlu0 %1394
        %1396 = vrot.lane.b32.xlu0 %v1380, 80
        %v1397 = vpop.permute.xlu0 %1396
        %1398 = vrot.lane.b32.xlu0 %v1381, 80
        %v1399 = vpop.permute.xlu0 %1398
        %v1400 = vsel %vm680, %v1389, %v1391
        %v1401 = vsel %vm680, %v1391, %v1393
        %v1402 = vsel %vm680, %v1395, %v1397
        %v1403 = vsel %vm680, %v1397, %v1399
        %v1412 = vmul.f32 %v1234, %v1389
        %v1413 = vmul.f32 %v1235, %v1400
        %v1414 = vmul.f32 %v1236, %v1401
        %v1415 = vmul.f32 %v1237, %v1393
        %v1416 = vmul.f32 %v1238, %v1395
        %v1417 = vmul.f32 %v1239, %v1402
        %v1418 = vmul.f32 %v1240, %v1403
        %v1419 = vmul.f32 %v1241, %v1399
        %1428 = vrot.lane.b32.xlu0 %v1412, 126
        %v1429 = vpop.permute.xlu0 %1428
        %1430 = vrot.lane.b32.xlu0 %v1413, 126
        %v1431 = vpop.permute.xlu0 %1430
        %1432 = vrot.lane.b32.xlu0 %v1414, 126
        %v1433 = vpop.permute.xlu0 %1432
        %1434 = vrot.lane.b32.xlu0 %v1415, 126
        %v1435 = vpop.permute.xlu0 %1434
        %1436 = vrot.lane.b32.xlu0 %v1416, 126
        %v1437 = vpop.permute.xlu0 %1436
        %1438 = vrot.lane.b32.xlu0 %v1417, 126
        %v1439 = vpop.permute.xlu0 %1438
        %1440 = vrot.lane.b32.xlu0 %v1418, 126
        %v1441 = vpop.permute.xlu0 %1440
        %1442 = vrot.lane.b32.xlu0 %v1419, 126
        %v1443 = vpop.permute.xlu0 %1442
        %v1444 = vsel %vm526, %v1429, %v1431
        %v1445 = vsel %vm526, %v1431, %v1433
        %v1446 = vsel %vm526, %v1433, %v1435
        %v1447 = vsel %vm526, %v1437, %v1439
        %v1448 = vsel %vm526, %v1439, %v1441
        %v1449 = vsel %vm526, %v1441, %v1443
        %v1458 = vadd.f32 %v1278, %v1444
        %v1459 = vadd.f32 %v1279, %v1445
        %v1460 = vadd.f32 %v1280, %v1446
        %v1461 = vadd.f32 %v1281, %v1435
        %v1462 = vadd.f32 %v1282, %v1447
        %v1463 = vadd.f32 %v1283, %v1448
        %v1464 = vadd.f32 %v1284, %v1449
        %v1465 = vadd.f32 %v1285, %v1443
        %s1466 = scalar_lea.vmem %s4, 336
        %v1467 = vld [vmem:[%s1466] sm:$0xff]
        %v1468 = vld [vmem:[%s1466 + $0x8] sm:$0xff]
        %v1469 = vld [vmem:[%s1466 + $0x10] sm:$0xff]
        %v1470 = vld [vmem:[%s1466 + $0x18] sm:$0xff]
        %v1471 = vld [vmem:[%s1466 + $0x20] sm:$0xff]
        %v1472 = vld [vmem:[%s1466 + $0x28] sm:$0xff]
        %1479 = vrot.lane.b32.xlu0 %v1467, 80
        %v1480 = vpop.permute.xlu0 %1479
        %1481 = vrot.lane.b32.xlu0 %v1468, 80
        %v1482 = vpop.permute.xlu0 %1481
        %1483 = vrot.lane.b32.xlu0 %v1469, 80
        %v1484 = vpop.permute.xlu0 %1483
        %1485 = vrot.lane.b32.xlu0 %v1470, 80
        %v1486 = vpop.permute.xlu0 %1485
        %1487 = vrot.lane.b32.xlu0 %v1471, 80
        %v1488 = vpop.permute.xlu0 %1487
        %1489 = vrot.lane.b32.xlu0 %v1472, 80
        %v1490 = vpop.permute.xlu0 %1489
        %v1491 = vsel %vm680, %v1480, %v1482
        %v1492 = vsel %vm680, %v1482, %v1484
        %v1493 = vsel %vm680, %v1486, %v1488
        %v1494 = vsel %vm680, %v1488, %v1490
        %v1503 = vmul.f32 %v1234, %v1480
        %v1504 = vmul.f32 %v1235, %v1491
        %v1505 = vmul.f32 %v1236, %v1492
        %v1506 = vmul.f32 %v1237, %v1484
        %v1507 = vmul.f32 %v1238, %v1486
        %v1508 = vmul.f32 %v1239, %v1493
        %v1509 = vmul.f32 %v1240, %v1494
        %v1510 = vmul.f32 %v1241, %v1490
        %1519 = vrot.lane.b32.xlu0 %v1503, 126
        %v1520 = vpop.permute.xlu0 %1519
        %1521 = vrot.lane.b32.xlu0 %v1504, 126
        %v1522 = vpop.permute.xlu0 %1521
        %1523 = vrot.lane.b32.xlu0 %v1505, 126
        %v1524 = vpop.permute.xlu0 %1523
        %1525 = vrot.lane.b32.xlu0 %v1506, 126
        %v1526 = vpop.permute.xlu0 %1525
        %1527 = vrot.lane.b32.xlu0 %v1507, 126
        %v1528 = vpop.permute.xlu0 %1527
        %1529 = vrot.lane.b32.xlu0 %v1508, 126
        %v1530 = vpop.permute.xlu0 %1529
        %1531 = vrot.lane.b32.xlu0 %v1509, 126
        %v1532 = vpop.permute.xlu0 %1531
        %1533 = vrot.lane.b32.xlu0 %v1510, 126
        %v1534 = vpop.permute.xlu0 %1533
        %v1535 = vsel %vm526, %v1520, %v1522
        %v1536 = vsel %vm526, %v1522, %v1524
        %v1537 = vsel %vm526, %v1524, %v1526
        %v1538 = vsel %vm526, %v1528, %v1530
        %v1539 = vsel %vm526, %v1530, %v1532
        %v1540 = vsel %vm526, %v1532, %v1534
        %v1549 = vadd.f32 %v1323, %v1535
        %v1550 = vadd.f32 %v1324, %v1536
        %v1551 = vadd.f32 %v1325, %v1537
        %v1552 = vadd.f32 %v1326, %v1526
        %v1553 = vadd.f32 %v1327, %v1538
        %v1554 = vadd.f32 %v1328, %v1539
        %v1555 = vadd.f32 %v1329, %v1540
        %v1556 = vadd.f32 %v1330, %v1534
        %s1557 = scalar_lea.vmem %s6, 96
        %v1558 = vld [vmem:[%s1557] sm:$0xff]
        %v1559 = vld [vmem:[%s1557 + $0x8] sm:$0xff]
        %v1560 = vld [vmem:[%s1557 + $0x10] sm:$0xff]
        %v1561 = vld [vmem:[%s1557 + $0x18] sm:$0xff]
        %v1562 = vld [vmem:[%s1557 + $0x20] sm:$0xff]
        %v1563 = vld [vmem:[%s1557 + $0x28] sm:$0xff]
        %1570 = vrot.lane.b32.xlu0 %v1558, 80
        %v1571 = vpop.permute.xlu0 %1570
        %1572 = vrot.lane.b32.xlu0 %v1559, 80
        %v1573 = vpop.permute.xlu0 %1572
        %1574 = vrot.lane.b32.xlu0 %v1560, 80
        %v1575 = vpop.permute.xlu0 %1574
        %1576 = vrot.lane.b32.xlu0 %v1561, 80
        %v1577 = vpop.permute.xlu0 %1576
        %1578 = vrot.lane.b32.xlu0 %v1562, 80
        %v1579 = vpop.permute.xlu0 %1578
        %1580 = vrot.lane.b32.xlu0 %v1563, 80
        %v1581 = vpop.permute.xlu0 %1580
        %v1582 = vsel %vm680, %v1571, %v1573
        %v1583 = vsel %vm680, %v1573, %v1575
        %v1584 = vsel %vm680, %v1577, %v1579
        %v1585 = vsel %vm680, %v1579, %v1581
        %v1594 = vmul.f32 %v1234, %v1571
        %v1595 = vmul.f32 %v1235, %v1582
        %v1596 = vmul.f32 %v1236, %v1583
        %v1597 = vmul.f32 %v1237, %v1575
        %v1598 = vmul.f32 %v1238, %v1577
        %v1599 = vmul.f32 %v1239, %v1584
        %v1600 = vmul.f32 %v1240, %v1585
        %v1601 = vmul.f32 %v1241, %v1581
        %1610 = vrot.lane.b32.xlu0 %v1594, 126
        %v1611 = vpop.permute.xlu0 %1610
        %1612 = vrot.lane.b32.xlu0 %v1595, 126
        %v1613 = vpop.permute.xlu0 %1612
        %1614 = vrot.lane.b32.xlu0 %v1596, 126
        %v1615 = vpop.permute.xlu0 %1614
        %1616 = vrot.lane.b32.xlu0 %v1597, 126
        %v1617 = vpop.permute.xlu0 %1616
        %1618 = vrot.lane.b32.xlu0 %v1598, 126
        %v1619 = vpop.permute.xlu0 %1618
        %1620 = vrot.lane.b32.xlu0 %v1599, 126
        %v1621 = vpop.permute.xlu0 %1620
        %1622 = vrot.lane.b32.xlu0 %v1600, 126
        %v1623 = vpop.permute.xlu0 %1622
        %1624 = vrot.lane.b32.xlu0 %v1601, 126
        %v1625 = vpop.permute.xlu0 %1624
        %v1626 = vsel %vm526, %v1611, %v1613
        %v1627 = vsel %vm526, %v1613, %v1615
        %v1628 = vsel %vm526, %v1615, %v1617
        %v1629 = vsel %vm526, %v1619, %v1621
        %v1630 = vsel %vm526, %v1621, %v1623
        %v1631 = vsel %vm526, %v1623, %v1625
        %v1640 = vadd.f32 %v1367, %v1626
        %v1641 = vadd.f32 %v1368, %v1627
        %v1642 = vadd.f32 %v1369, %v1628
        %v1643 = vadd.f32 %v1370, %v1617
        %v1644 = vadd.f32 %v1371, %v1629
        %v1645 = vadd.f32 %v1372, %v1630
        %v1646 = vadd.f32 %v1373, %v1631
        %v1647 = vadd.f32 %v1374, %v1625
        %s1648 = scalar_lea.vmem %s3, 96
        %v1649 = vld [vmem:[%s1648] sm:$0xff]
        %v1650 = vld [vmem:[%s1648 + $0x8] sm:$0xff]
        %v1651 = vld [vmem:[%s1648 + $0x10] sm:$0xff]
        %v1652 = vld [vmem:[%s1648 + $0x18] sm:$0xff]
        %v1653 = vld [vmem:[%s1648 + $0x20] sm:$0xff]
        %v1654 = vld [vmem:[%s1648 + $0x28] sm:$0xff]
        %1661 = vrot.lane.b32.xlu0 %v1649, 82
        %v1662 = vpop.permute.xlu0 %1661
        %1663 = vrot.lane.b32.xlu0 %v1650, 82
        %v1664 = vpop.permute.xlu0 %1663
        %1665 = vrot.lane.b32.xlu0 %v1651, 82
        %v1666 = vpop.permute.xlu0 %1665
        %1667 = vrot.lane.b32.xlu0 %v1652, 82
        %v1668 = vpop.permute.xlu0 %1667
        %1669 = vrot.lane.b32.xlu0 %v1653, 82
        %v1670 = vpop.permute.xlu0 %1669
        %1671 = vrot.lane.b32.xlu0 %v1654, 82
        %v1672 = vpop.permute.xlu0 %1671
        %vm1673 = vcmask 670720
        %v1674 = vsel %vm1673, %v1662, %v1664
        %v1675 = vsel %vm1673, %v1664, %v1666
        %v1676 = vsel %vm1673, %v1668, %v1670
        %v1677 = vsel %vm1673, %v1670, %v1672
        %v1686 = vmul.f32 %v1234, %v1662
        %v1687 = vmul.f32 %v1235, %v1674
        %v1688 = vmul.f32 %v1236, %v1675
        %v1689 = vmul.f32 %v1237, %v1666
        %v1690 = vmul.f32 %v1238, %v1668
        %v1691 = vmul.f32 %v1239, %v1676
        %v1692 = vmul.f32 %v1240, %v1677
        %v1693 = vmul.f32 %v1241, %v1672
        %1702 = vrot.lane.b32.xlu0 %v1686, 124
        %v1703 = vpop.permute.xlu0 %1702
        %1704 = vrot.lane.b32.xlu0 %v1687, 124
        %v1705 = vpop.permute.xlu0 %1704
        %1706 = vrot.lane.b32.xlu0 %v1688, 124
        %v1707 = vpop.permute.xlu0 %1706
        %1708 = vrot.lane.b32.xlu0 %v1689, 124
        %v1709 = vpop.permute.xlu0 %1708
        %1710 = vrot.lane.b32.xlu0 %v1690, 124
        %v1711 = vpop.permute.xlu0 %1710
        %1712 = vrot.lane.b32.xlu0 %v1691, 124
        %v1713 = vpop.permute.xlu0 %1712
        %1714 = vrot.lane.b32.xlu0 %v1692, 124
        %v1715 = vpop.permute.xlu0 %1714
        %1716 = vrot.lane.b32.xlu0 %v1693, 124
        %v1717 = vpop.permute.xlu0 %1716
        %vm1718 = vcmask 1014784
        %v1719 = vsel %vm1718, %v1703, %v1705
        %v1720 = vsel %vm1718, %v1705, %v1707
        %v1721 = vsel %vm1718, %v1707, %v1709
        %v1722 = vsel %vm1718, %v1711, %v1713
        %v1723 = vsel %vm1718, %v1713, %v1715
        %v1724 = vsel %vm1718, %v1715, %v1717
        %v1733 = vadd.f32 %v1458, %v1719
        %v1734 = vadd.f32 %v1459, %v1720
        %v1735 = vadd.f32 %v1460, %v1721
        %v1736 = vadd.f32 %v1461, %v1709
        %v1737 = vadd.f32 %v1462, %v1722
        %v1738 = vadd.f32 %v1463, %v1723
        %v1739 = vadd.f32 %v1464, %v1724
        %v1740 = vadd.f32 %v1465, %v1717
        %s1741 = scalar_lea.vmem %s4, 384
        %v1742 = vld [vmem:[%s1741] sm:$0xff]
        %v1743 = vld [vmem:[%s1741 + $0x8] sm:$0xff]
        %v1744 = vld [vmem:[%s1741 + $0x10] sm:$0xff]
        %v1745 = vld [vmem:[%s1741 + $0x18] sm:$0xff]
        %v1746 = vld [vmem:[%s1741 + $0x20] sm:$0xff]
        %v1747 = vld [vmem:[%s1741 + $0x28] sm:$0xff]
        %1754 = vrot.lane.b32.xlu0 %v1742, 82
        %v1755 = vpop.permute.xlu0 %1754
        %1756 = vrot.lane.b32.xlu0 %v1743, 82
        %v1757 = vpop.permute.xlu0 %1756
        %1758 = vrot.lane.b32.xlu0 %v1744, 82
        %v1759 = vpop.permute.xlu0 %1758
        %1760 = vrot.lane.b32.xlu0 %v1745, 82
        %v1761 = vpop.permute.xlu0 %1760
        %1762 = vrot.lane.b32.xlu0 %v1746, 82
        %v1763 = vpop.permute.xlu0 %1762
        %1764 = vrot.lane.b32.xlu0 %v1747, 82
        %v1765 = vpop.permute.xlu0 %1764
        %v1766 = vsel %vm1673, %v1755, %v1757
        %v1767 = vsel %vm1673, %v1757, %v1759
        %v1768 = vsel %vm1673, %v1761, %v1763
        %v1769 = vsel %vm1673, %v1763, %v1765
        %v1778 = vmul.f32 %v1234, %v1755
        %v1779 = vmul.f32 %v1235, %v1766
        %v1780 = vmul.f32 %v1236, %v1767
        %v1781 = vmul.f32 %v1237, %v1759
        %v1782 = vmul.f32 %v1238, %v1761
        %v1783 = vmul.f32 %v1239, %v1768
        %v1784 = vmul.f32 %v1240, %v1769
        %v1785 = vmul.f32 %v1241, %v1765
        %1794 = vrot.lane.b32.xlu0 %v1778, 124
        %v1795 = vpop.permute.xlu0 %1794
        %1796 = vrot.lane.b32.xlu0 %v1779, 124
        %v1797 = vpop.permute.xlu0 %1796
        %1798 = vrot.lane.b32.xlu0 %v1780, 124
        %v1799 = vpop.permute.xlu0 %1798
        %1800 = vrot.lane.b32.xlu0 %v1781, 124
        %v1801 = vpop.permute.xlu0 %1800
        %1802 = vrot.lane.b32.xlu0 %v1782, 124
        %v1803 = vpop.permute.xlu0 %1802
        %1804 = vrot.lane.b32.xlu0 %v1783, 124
        %v1805 = vpop.permute.xlu0 %1804
        %1806 = vrot.lane.b32.xlu0 %v1784, 124
        %v1807 = vpop.permute.xlu0 %1806
        %1808 = vrot.lane.b32.xlu0 %v1785, 124
        %v1809 = vpop.permute.xlu0 %1808
        %v1810 = vsel %vm1718, %v1795, %v1797
        %v1811 = vsel %vm1718, %v1797, %v1799
        %v1812 = vsel %vm1718, %v1799, %v1801
        %v1813 = vsel %vm1718, %v1803, %v1805
        %v1814 = vsel %vm1718, %v1805, %v1807
        %v1815 = vsel %vm1718, %v1807, %v1809
        %v1824 = vadd.f32 %v1549, %v1810
        %v1825 = vadd.f32 %v1550, %v1811
        %v1826 = vadd.f32 %v1551, %v1812
        %v1827 = vadd.f32 %v1552, %v1801
        %v1828 = vadd.f32 %v1553, %v1813
        %v1829 = vadd.f32 %v1554, %v1814
        %v1830 = vadd.f32 %v1555, %v1815
        %v1831 = vadd.f32 %v1556, %v1809
        %s1832 = scalar_lea.vmem %s6, 192
        %v1833 = vld [vmem:[%s1832] sm:$0xff]
        %v1834 = vld [vmem:[%s1832 + $0x8] sm:$0xff]
        %v1835 = vld [vmem:[%s1832 + $0x10] sm:$0xff]
        %v1836 = vld [vmem:[%s1832 + $0x18] sm:$0xff]
        %v1837 = vld [vmem:[%s1832 + $0x20] sm:$0xff]
        %v1838 = vld [vmem:[%s1832 + $0x28] sm:$0xff]
        %1845 = vrot.lane.b32.xlu0 %v1833, 82
        %v1846 = vpop.permute.xlu0 %1845
        %1847 = vrot.lane.b32.xlu0 %v1834, 82
        %v1848 = vpop.permute.xlu0 %1847
        %1849 = vrot.lane.b32.xlu0 %v1835, 82
        %v1850 = vpop.permute.xlu0 %1849
        %1851 = vrot.lane.b32.xlu0 %v1836, 82
        %v1852 = vpop.permute.xlu0 %1851
        %1853 = vrot.lane.b32.xlu0 %v1837, 82
        %v1854 = vpop.permute.xlu0 %1853
        %1855 = vrot.lane.b32.xlu0 %v1838, 82
        %v1856 = vpop.permute.xlu0 %1855
        %v1857 = vsel %vm1673, %v1846, %v1848
        %v1858 = vsel %vm1673, %v1848, %v1850
        %v1859 = vsel %vm1673, %v1852, %v1854
        %v1860 = vsel %vm1673, %v1854, %v1856
        %v1869 = vmul.f32 %v1234, %v1846
        %v1870 = vmul.f32 %v1235, %v1857
        %v1871 = vmul.f32 %v1236, %v1858
        %v1872 = vmul.f32 %v1237, %v1850
        %v1873 = vmul.f32 %v1238, %v1852
        %v1874 = vmul.f32 %v1239, %v1859
        %v1875 = vmul.f32 %v1240, %v1860
        %v1876 = vmul.f32 %v1241, %v1856
        %1885 = vrot.lane.b32.xlu0 %v1869, 124
        %v1886 = vpop.permute.xlu0 %1885
        %1887 = vrot.lane.b32.xlu0 %v1870, 124
        %v1888 = vpop.permute.xlu0 %1887
        %1889 = vrot.lane.b32.xlu0 %v1871, 124
        %v1890 = vpop.permute.xlu0 %1889
        %1891 = vrot.lane.b32.xlu0 %v1872, 124
        %v1892 = vpop.permute.xlu0 %1891
        %1893 = vrot.lane.b32.xlu0 %v1873, 124
        %v1894 = vpop.permute.xlu0 %1893
        %1895 = vrot.lane.b32.xlu0 %v1874, 124
        %v1896 = vpop.permute.xlu0 %1895
        %1897 = vrot.lane.b32.xlu0 %v1875, 124
        %v1898 = vpop.permute.xlu0 %1897
        %1899 = vrot.lane.b32.xlu0 %v1876, 124
        %v1900 = vpop.permute.xlu0 %1899
        %v1901 = vsel %vm1718, %v1886, %v1888
        %v1902 = vsel %vm1718, %v1888, %v1890
        %v1903 = vsel %vm1718, %v1890, %v1892
        %v1904 = vsel %vm1718, %v1894, %v1896
        %v1905 = vsel %vm1718, %v1896, %v1898
        %v1906 = vsel %vm1718, %v1898, %v1900
        %v1915 = vadd.f32 %v1640, %v1901
        %v1916 = vadd.f32 %v1641, %v1902
        %v1917 = vadd.f32 %v1642, %v1903
        %v1918 = vadd.f32 %v1643, %v1892
        %v1919 = vadd.f32 %v1644, %v1904
        %v1920 = vadd.f32 %v1645, %v1905
        %v1921 = vadd.f32 %v1646, %v1906
        %v1922 = vadd.f32 %v1647, %v1900
        %s1923 = scalar_lea.vmem %s3, 144
        %v1924 = vld [vmem:[%s1923] sm:$0xff]
        %v1925 = vld [vmem:[%s1923 + $0x8] sm:$0xff]
        %v1926 = vld [vmem:[%s1923 + $0x10] sm:$0xff]
        %v1927 = vld [vmem:[%s1923 + $0x18] sm:$0xff]
        %v1928 = vld [vmem:[%s1923 + $0x20] sm:$0xff]
        %v1929 = vld [vmem:[%s1923 + $0x28] sm:$0xff]
        %1936 = vrot.lane.b32.xlu0 %v1924, 126
        %v1937 = vpop.permute.xlu0 %1936
        %1938 = vrot.lane.b32.xlu0 %v1925, 126
        %v1939 = vpop.permute.xlu0 %1938
        %1940 = vrot.lane.b32.xlu0 %v1926, 126
        %v1941 = vpop.permute.xlu0 %1940
        %1942 = vrot.lane.b32.xlu0 %v1927, 126
        %v1943 = vpop.permute.xlu0 %1942
        %1944 = vrot.lane.b32.xlu0 %v1928, 126
        %v1945 = vpop.permute.xlu0 %1944
        %1946 = vrot.lane.b32.xlu0 %v1929, 126
        %v1947 = vpop.permute.xlu0 %1946
        %v1948 = vsel %vm526, %v1937, %v1939
        %v1949 = vsel %vm526, %v1939, %v1941
        %v1950 = vsel %vm526, %v1943, %v1945
        %v1951 = vsel %vm526, %v1945, %v1947
        %v1960 = vmul.f32 %v1234, %v1937
        %v1961 = vmul.f32 %v1235, %v1948
        %v1962 = vmul.f32 %v1236, %v1949
        %v1963 = vmul.f32 %v1237, %v1941
        %v1964 = vmul.f32 %v1238, %v1943
        %v1965 = vmul.f32 %v1239, %v1950
        %v1966 = vmul.f32 %v1240, %v1951
        %v1967 = vmul.f32 %v1241, %v1947
        %1976 = vrot.lane.b32.xlu0 %v1960, 80
        %v1977 = vpop.permute.xlu0 %1976
        %1978 = vrot.lane.b32.xlu0 %v1961, 80
        %v1979 = vpop.permute.xlu0 %1978
        %1980 = vrot.lane.b32.xlu0 %v1962, 80
        %v1981 = vpop.permute.xlu0 %1980
        %1982 = vrot.lane.b32.xlu0 %v1963, 80
        %v1983 = vpop.permute.xlu0 %1982
        %1984 = vrot.lane.b32.xlu0 %v1964, 80
        %v1985 = vpop.permute.xlu0 %1984
        %1986 = vrot.lane.b32.xlu0 %v1965, 80
        %v1987 = vpop.permute.xlu0 %1986
        %1988 = vrot.lane.b32.xlu0 %v1966, 80
        %v1989 = vpop.permute.xlu0 %1988
        %1990 = vrot.lane.b32.xlu0 %v1967, 80
        %v1991 = vpop.permute.xlu0 %1990
        %v1992 = vsel %vm680, %v1977, %v1979
        %v1993 = vsel %vm680, %v1979, %v1981
        %v1994 = vsel %vm680, %v1981, %v1983
        %v1995 = vsel %vm680, %v1985, %v1987
        %v1996 = vsel %vm680, %v1987, %v1989
        %v1997 = vsel %vm680, %v1989, %v1991
        %v2006 = vadd.f32 %v1733, %v1992
        %v2007 = vadd.f32 %v1734, %v1993
        %v2008 = vadd.f32 %v1735, %v1994
        %v2009 = vadd.f32 %v1736, %v1983
        %v2010 = vadd.f32 %v1737, %v1995
        %v2011 = vadd.f32 %v1738, %v1996
        %v2012 = vadd.f32 %v1739, %v1997
        %v2013 = vadd.f32 %v1740, %v1991
        %s2014 = scalar_lea.vmem %s4, 528
        %v2015 = vld [vmem:[%s2014] sm:$0xff]
        %v2016 = vld [vmem:[%s2014 + $0x8] sm:$0xff]
        %v2017 = vld [vmem:[%s2014 + $0x10] sm:$0xff]
        %v2018 = vld [vmem:[%s2014 + $0x18] sm:$0xff]
        %v2019 = vld [vmem:[%s2014 + $0x20] sm:$0xff]
        %v2020 = vld [vmem:[%s2014 + $0x28] sm:$0xff]
        %2027 = vrot.lane.b32.xlu0 %v2015, 126
        %v2028 = vpop.permute.xlu0 %2027
        %2029 = vrot.lane.b32.xlu0 %v2016, 126
        %v2030 = vpop.permute.xlu0 %2029
        %2031 = vrot.lane.b32.xlu0 %v2017, 126
        %v2032 = vpop.permute.xlu0 %2031
        %2033 = vrot.lane.b32.xlu0 %v2018, 126
        %v2034 = vpop.permute.xlu0 %2033
        %2035 = vrot.lane.b32.xlu0 %v2019, 126
        %v2036 = vpop.permute.xlu0 %2035
        %2037 = vrot.lane.b32.xlu0 %v2020, 126
        %v2038 = vpop.permute.xlu0 %2037
        %v2039 = vsel %vm526, %v2028, %v2030
        %v2040 = vsel %vm526, %v2030, %v2032
        %v2041 = vsel %vm526, %v2034, %v2036
        %v2042 = vsel %vm526, %v2036, %v2038
        %v2051 = vmul.f32 %v1234, %v2028
        %v2052 = vmul.f32 %v1235, %v2039
        %v2053 = vmul.f32 %v1236, %v2040
        %v2054 = vmul.f32 %v1237, %v2032
        %v2055 = vmul.f32 %v1238, %v2034
        %v2056 = vmul.f32 %v1239, %v2041
        %v2057 = vmul.f32 %v1240, %v2042
        %v2058 = vmul.f32 %v1241, %v2038
        %2067 = vrot.lane.b32.xlu0 %v2051, 80
        %v2068 = vpop.permute.xlu0 %2067
        %2069 = vrot.lane.b32.xlu0 %v2052, 80
        %v2070 = vpop.permute.xlu0 %2069
        %2071 = vrot.lane.b32.xlu0 %v2053, 80
        %v2072 = vpop.permute.xlu0 %2071
        %2073 = vrot.lane.b32.xlu0 %v2054, 80
        %v2074 = vpop.permute.xlu0 %2073
        %2075 = vrot.lane.b32.xlu0 %v2055, 80
        %v2076 = vpop.permute.xlu0 %2075
        %2077 = vrot.lane.b32.xlu0 %v2056, 80
        %v2078 = vpop.permute.xlu0 %2077
        %2079 = vrot.lane.b32.xlu0 %v2057, 80
        %v2080 = vpop.permute.xlu0 %2079
        %2081 = vrot.lane.b32.xlu0 %v2058, 80
        %v2082 = vpop.permute.xlu0 %2081
        %v2083 = vsel %vm680, %v2068, %v2070
        %v2084 = vsel %vm680, %v2070, %v2072
        %v2085 = vsel %vm680, %v2072, %v2074
        %v2086 = vsel %vm680, %v2076, %v2078
        %v2087 = vsel %vm680, %v2078, %v2080
        %v2088 = vsel %vm680, %v2080, %v2082
        %v2097 = vadd.f32 %v1824, %v2083
        %v2098 = vadd.f32 %v1825, %v2084
        %v2099 = vadd.f32 %v1826, %v2085
        %v2100 = vadd.f32 %v1827, %v2074
        %v2101 = vadd.f32 %v1828, %v2086
        %v2102 = vadd.f32 %v1829, %v2087
        %v2103 = vadd.f32 %v1830, %v2088
        %v2104 = vadd.f32 %v1831, %v2082
        %s2105 = scalar_lea.vmem %s6, 480
        %v2106 = vld [vmem:[%s2105] sm:$0xff]
        %v2107 = vld [vmem:[%s2105 + $0x8] sm:$0xff]
        %v2108 = vld [vmem:[%s2105 + $0x10] sm:$0xff]
        %v2109 = vld [vmem:[%s2105 + $0x18] sm:$0xff]
        %v2110 = vld [vmem:[%s2105 + $0x20] sm:$0xff]
        %v2111 = vld [vmem:[%s2105 + $0x28] sm:$0xff]
        %2118 = vrot.lane.b32.xlu0 %v2106, 126
        %v2119 = vpop.permute.xlu0 %2118
        %2120 = vrot.lane.b32.xlu0 %v2107, 126
        %v2121 = vpop.permute.xlu0 %2120
        %2122 = vrot.lane.b32.xlu0 %v2108, 126
        %v2123 = vpop.permute.xlu0 %2122
        %2124 = vrot.lane.b32.xlu0 %v2109, 126
        %v2125 = vpop.permute.xlu0 %2124
        %2126 = vrot.lane.b32.xlu0 %v2110, 126
        %v2127 = vpop.permute.xlu0 %2126
        %2128 = vrot.lane.b32.xlu0 %v2111, 126
        %v2129 = vpop.permute.xlu0 %2128
        %v2130 = vsel %vm526, %v2119, %v2121
        %v2131 = vsel %vm526, %v2121, %v2123
        %v2132 = vsel %vm526, %v2125, %v2127
        %v2133 = vsel %vm526, %v2127, %v2129
        %v2142 = vmul.f32 %v1234, %v2119
        %v2143 = vmul.f32 %v1235, %v2130
        %v2144 = vmul.f32 %v1236, %v2131
        %v2145 = vmul.f32 %v1237, %v2123
        %v2146 = vmul.f32 %v1238, %v2125
        %v2147 = vmul.f32 %v1239, %v2132
        %v2148 = vmul.f32 %v1240, %v2133
        %v2149 = vmul.f32 %v1241, %v2129
        %2158 = vrot.lane.b32.xlu0 %v2142, 80
        %v2159 = vpop.permute.xlu0 %2158
        %2160 = vrot.lane.b32.xlu0 %v2143, 80
        %v2161 = vpop.permute.xlu0 %2160
        %2162 = vrot.lane.b32.xlu0 %v2144, 80
        %v2163 = vpop.permute.xlu0 %2162
        %2164 = vrot.lane.b32.xlu0 %v2145, 80
        %v2165 = vpop.permute.xlu0 %2164
        %2166 = vrot.lane.b32.xlu0 %v2146, 80
        %v2167 = vpop.permute.xlu0 %2166
        %2168 = vrot.lane.b32.xlu0 %v2147, 80
        %v2169 = vpop.permute.xlu0 %2168
        %2170 = vrot.lane.b32.xlu0 %v2148, 80
        %v2171 = vpop.permute.xlu0 %2170
        %2172 = vrot.lane.b32.xlu0 %v2149, 80
        %v2173 = vpop.permute.xlu0 %2172
        %v2174 = vsel %vm680, %v2159, %v2161
        %v2175 = vsel %vm680, %v2161, %v2163
        %v2176 = vsel %vm680, %v2163, %v2165
        %v2177 = vsel %vm680, %v2167, %v2169
        %v2178 = vsel %vm680, %v2169, %v2171
        %v2179 = vsel %vm680, %v2171, %v2173
        %v2188 = vadd.f32 %v1915, %v2174
        %v2189 = vadd.f32 %v1916, %v2175
        %v2190 = vadd.f32 %v1917, %v2176
        %v2191 = vadd.f32 %v1918, %v2165
        %v2192 = vadd.f32 %v1919, %v2177
        %v2193 = vadd.f32 %v1920, %v2178
        %v2194 = vadd.f32 %v1921, %v2179
        %v2195 = vadd.f32 %v1922, %v2173
        %s2196 = scalar_lea.vmem %s3, 192
        %v2197 = vld [vmem:[%s2196] sm:$0xff]
        %v2198 = vld [vmem:[%s2196 + $0x8] sm:$0xff]
        %v2199 = vld [vmem:[%s2196 + $0x10] sm:$0xff]
        %v2200 = vld [vmem:[%s2196 + $0x18] sm:$0xff]
        %v2201 = vld [vmem:[%s2196 + $0x20] sm:$0xff]
        %v2202 = vld [vmem:[%s2196 + $0x28] sm:$0xff]
        %v2203 = vmul.f32 %v1235, %v2197
        %v2204 = vmul.f32 %v1236, %v2198
        %v2205 = vmul.f32 %v1237, %v2199
        %v2206 = vmul.f32 %v1239, %v2200
        %v2207 = vmul.f32 %v1240, %v2201
        %v2208 = vmul.f32 %v1241, %v2202
        %2215 = vrot.lane.b32.xlu0 %v2203, 78
        %v2216 = vpop.permute.xlu0 %2215
        %2217 = vrot.lane.b32.xlu0 %v2204, 78
        %v2218 = vpop.permute.xlu0 %2217
        %2219 = vrot.lane.b32.xlu0 %v2205, 78
        %v2220 = vpop.permute.xlu0 %2219
        %2221 = vrot.lane.b32.xlu0 %v2206, 78
        %v2222 = vpop.permute.xlu0 %2221
        %2223 = vrot.lane.b32.xlu0 %v2207, 78
        %v2224 = vpop.permute.xlu0 %2223
        %2225 = vrot.lane.b32.xlu0 %v2208, 78
        %v2226 = vpop.permute.xlu0 %2225
        %v2227 = vsel %vm758, %v2216, %v2218
        %v2228 = vsel %vm758, %v2218, %v2220
        %v2229 = vsel %vm758, %v2222, %v2224
        %v2230 = vsel %vm758, %v2224, %v2226
        %v2239 = vadd.f32 %v2006, %v2216
        %v2240 = vadd.f32 %v2007, %v2227
        %v2241 = vadd.f32 %v2008, %v2228
        %v2242 = vadd.f32 %v2009, %v2220
        %v2243 = vadd.f32 %v2010, %v2222
        %v2244 = vadd.f32 %v2011, %v2229
        %v2245 = vadd.f32 %v2012, %v2230
        %v2246 = vadd.f32 %v2013, %v2226
        %s2247 = scalar_lea.vmem %s4, 576
        %v2248 = vld [vmem:[%s2247] sm:$0xff]
        %v2249 = vld [vmem:[%s2247 + $0x8] sm:$0xff]
        %v2250 = vld [vmem:[%s2247 + $0x10] sm:$0xff]
        %v2251 = vld [vmem:[%s2247 + $0x18] sm:$0xff]
        %v2252 = vld [vmem:[%s2247 + $0x20] sm:$0xff]
        %v2253 = vld [vmem:[%s2247 + $0x28] sm:$0xff]
        %v2254 = vmul.f32 %v1235, %v2248
        %v2255 = vmul.f32 %v1236, %v2249
        %v2256 = vmul.f32 %v1237, %v2250
        %v2257 = vmul.f32 %v1239, %v2251
        %v2258 = vmul.f32 %v1240, %v2252
        %v2259 = vmul.f32 %v1241, %v2253
        %2266 = vrot.lane.b32.xlu0 %v2254, 78
        %v2267 = vpop.permute.xlu0 %2266
        %2268 = vrot.lane.b32.xlu0 %v2255, 78
        %v2269 = vpop.permute.xlu0 %2268
        %2270 = vrot.lane.b32.xlu0 %v2256, 78
        %v2271 = vpop.permute.xlu0 %2270
        %2272 = vrot.lane.b32.xlu0 %v2257, 78
        %v2273 = vpop.permute.xlu0 %2272
        %2274 = vrot.lane.b32.xlu0 %v2258, 78
        %v2275 = vpop.permute.xlu0 %2274
        %2276 = vrot.lane.b32.xlu0 %v2259, 78
        %v2277 = vpop.permute.xlu0 %2276
        %v2278 = vsel %vm758, %v2267, %v2269
        %v2279 = vsel %vm758, %v2269, %v2271
        %v2280 = vsel %vm758, %v2273, %v2275
        %v2281 = vsel %vm758, %v2275, %v2277
        %v2290 = vadd.f32 %v2097, %v2267
        %v2291 = vadd.f32 %v2098, %v2278
        %v2292 = vadd.f32 %v2099, %v2279
        %v2293 = vadd.f32 %v2100, %v2271
        %v2294 = vadd.f32 %v2101, %v2273
        %v2295 = vadd.f32 %v2102, %v2280
        %v2296 = vadd.f32 %v2103, %v2281
        %v2297 = vadd.f32 %v2104, %v2277
        %s2298 = scalar_lea.vmem %s5, 192
        %v2299 = vld [vmem:[%s2298] sm:$0xff]
        %v2300 = vld [vmem:[%s2298 + $0x8] sm:$0xff]
        %v2301 = vld [vmem:[%s2298 + $0x10] sm:$0xff]
        %v2302 = vld [vmem:[%s2298 + $0x18] sm:$0xff]
        %v2303 = vld [vmem:[%s2298 + $0x20] sm:$0xff]
        %v2304 = vld [vmem:[%s2298 + $0x28] sm:$0xff]
        %v2305 = vmul.f32 %v1235, %v2299
        %v2306 = vmul.f32 %v1236, %v2300
        %v2307 = vmul.f32 %v1237, %v2301
        %v2308 = vmul.f32 %v1239, %v2302
        %v2309 = vmul.f32 %v1240, %v2303
        %v2310 = vmul.f32 %v1241, %v2304
        %s2311 = scalar_lea.vmem %s6, 576
        %v2312 = vld [vmem:[%s2311] sm:$0xff]
        %v2313 = vld [vmem:[%s2311 + $0x8] sm:$0xff]
        %v2314 = vld [vmem:[%s2311 + $0x10] sm:$0xff]
        %v2315 = vld [vmem:[%s2311 + $0x18] sm:$0xff]
        %v2316 = vld [vmem:[%s2311 + $0x20] sm:$0xff]
        %v2317 = vld [vmem:[%s2311 + $0x28] sm:$0xff]
        %v2318 = vmul.f32 %v1235, %v2312
        %v2319 = vmul.f32 %v1236, %v2313
        %v2320 = vmul.f32 %v1237, %v2314
        %v2321 = vmul.f32 %v1239, %v2315
        %v2322 = vmul.f32 %v1240, %v2316
        %v2323 = vmul.f32 %v1241, %v2317
        %2330 = vrot.lane.b32.xlu0 %v2318, 78
        %v2331 = vpop.permute.xlu0 %2330
        %2332 = vrot.lane.b32.xlu0 %v2319, 78
        %v2333 = vpop.permute.xlu0 %2332
        %2334 = vrot.lane.b32.xlu0 %v2320, 78
        %v2335 = vpop.permute.xlu0 %2334
        %2336 = vrot.lane.b32.xlu0 %v2321, 78
        %v2337 = vpop.permute.xlu0 %2336
        %2338 = vrot.lane.b32.xlu0 %v2322, 78
        %v2339 = vpop.permute.xlu0 %2338
        %2340 = vrot.lane.b32.xlu0 %v2323, 78
        %v2341 = vpop.permute.xlu0 %2340
        %v2342 = vsel %vm758, %v2331, %v2333
        %v2343 = vsel %vm758, %v2333, %v2335
        %v2344 = vsel %vm758, %v2337, %v2339
        %v2345 = vsel %vm758, %v2339, %v2341
        %v2354 = vadd.f32 %v2188, %v2331
        %v2355 = vadd.f32 %v2189, %v2342
        %v2356 = vadd.f32 %v2190, %v2343
        %v2357 = vadd.f32 %v2191, %v2335
        %v2358 = vadd.f32 %v2192, %v2337
        %v2359 = vadd.f32 %v2193, %v2344
        %v2360 = vadd.f32 %v2194, %v2345
        %v2361 = vadd.f32 %v2195, %v2341
        %v2362 = vld [vmem:[#allocation2 + $0x20] sm:$0xff]
        %v2363 = vld [vmem:[#allocation2 + $0x48] sm:$0xff]
        %s2364 = scalar_lea.vmem %s3, 240
        %v2365 = vld [vmem:[%s2364] sm:$0xff]
        %v2366 = vld [vmem:[%s2364 + $0x8] sm:$0xff]
        %v2367 = vld [vmem:[%s2364 + $0x10] sm:$0xff]
        %v2368 = vld [vmem:[%s2364 + $0x18] sm:$0xff]
        %v2369 = vld [vmem:[%s2364 + $0x20] sm:$0xff]
        %v2370 = vld [vmem:[%s2364 + $0x28] sm:$0xff]
        %2377 = vrot.lane.b32.xlu0 %v2365, 2
        %v2378 = vpop.permute.xlu0 %2377
        %2379 = vrot.lane.b32.xlu0 %v2366, 2
        %v2380 = vpop.permute.xlu0 %2379
        %2381 = vrot.lane.b32.xlu0 %v2367, 2
        %v2382 = vpop.permute.xlu0 %2381
        %2383 = vrot.lane.b32.xlu0 %v2368, 2
        %v2384 = vpop.permute.xlu0 %2383
        %2385 = vrot.lane.b32.xlu0 %v2369, 2
        %v2386 = vpop.permute.xlu0 %2385
        %2387 = vrot.lane.b32.xlu0 %v2370, 2
        %v2388 = vpop.permute.xlu0 %2387
        %vm2389 = vcmask 15360
        %v2390 = vsel %vm2389, %v2378, %v2380
        %v2391 = vsel %vm2389, %v2380, %v2382
        %v2392 = vsel %vm2389, %v2384, %v2386
        %v2393 = vsel %vm2389, %v2386, %v2388
        %v2402 = vmul.f32 %v1235, %v2378
        %v2403 = vmul.f32 %v1236, %v2390
        %v2404 = vmul.f32 %v1237, %v2391
        %v2405 = vmul.f32 %v2362, %v2382
        %v2406 = vmul.f32 %v1239, %v2384
        %v2407 = vmul.f32 %v1240, %v2392
        %v2408 = vmul.f32 %v1241, %v2393
        %v2409 = vmul.f32 %v2363, %v2388
        %2418 = vrot.lane.b32.xlu0 %v2402, 76
        %v2419 = vpop.permute.xlu0 %2418
        %2420 = vrot.lane.b32.xlu0 %v2403, 76
        %v2421 = vpop.permute.xlu0 %2420
        %2422 = vrot.lane.b32.xlu0 %v2404, 76
        %v2423 = vpop.permute.xlu0 %2422
        %2424 = vrot.lane.b32.xlu0 %v2405, 76
        %v2425 = vpop.permute.xlu0 %2424
        %2426 = vrot.lane.b32.xlu0 %v2406, 76
        %v2427 = vpop.permute.xlu0 %2426
        %2428 = vrot.lane.b32.xlu0 %v2407, 76
        %v2429 = vpop.permute.xlu0 %2428
        %2430 = vrot.lane.b32.xlu0 %v2408, 76
        %v2431 = vpop.permute.xlu0 %2430
        %2432 = vrot.lane.b32.xlu0 %v2409, 76
        %v2433 = vpop.permute.xlu0 %2432
        %vm2434 = vcmask 621568
        %v2435 = vsel %vm2434, %v2419, %v2421
        %v2436 = vsel %vm2434, %v2421, %v2423
        %v2437 = vsel %vm2434, %v2423, %v2425
        %v2438 = vsel %vm2434, %v2427, %v2429
        %v2439 = vsel %vm2434, %v2429, %v2431
        %v2440 = vsel %vm2434, %v2431, %v2433
        %v2449 = vadd.f32 %v2239, %v2419
        %v2450 = vadd.f32 %v2240, %v2435
        %v2451 = vadd.f32 %v2241, %v2436
        %v2452 = vadd.f32 %v2242, %v2437
        %v2453 = vadd.f32 %v2243, %v2427
        %v2454 = vadd.f32 %v2244, %v2438
        %v2455 = vadd.f32 %v2245, %v2439
        %v2456 = vadd.f32 %v2246, %v2440
        %s2457 = scalar_lea.vmem %s4, 624
        %v2458 = vld [vmem:[%s2457] sm:$0xff]
        %v2459 = vld [vmem:[%s2457 + $0x8] sm:$0xff]
        %v2460 = vld [vmem:[%s2457 + $0x10] sm:$0xff]
        %v2461 = vld [vmem:[%s2457 + $0x18] sm:$0xff]
        %v2462 = vld [vmem:[%s2457 + $0x20] sm:$0xff]
        %v2463 = vld [vmem:[%s2457 + $0x28] sm:$0xff]
        %2470 = vrot.lane.b32.xlu0 %v2458, 2
        %v2471 = vpop.permute.xlu0 %2470
        %2472 = vrot.lane.b32.xlu0 %v2459, 2
        %v2473 = vpop.permute.xlu0 %2472
        %2474 = vrot.lane.b32.xlu0 %v2460, 2
        %v2475 = vpop.permute.xlu0 %2474
        %2476 = vrot.lane.b32.xlu0 %v2461, 2
        %v2477 = vpop.permute.xlu0 %2476
        %2478 = vrot.lane.b32.xlu0 %v2462, 2
        %v2479 = vpop.permute.xlu0 %2478
        %2480 = vrot.lane.b32.xlu0 %v2463, 2
        %v2481 = vpop.permute.xlu0 %2480
        %v2482 = vsel %vm2389, %v2471, %v2473
        %v2483 = vsel %vm2389, %v2473, %v2475
        %v2484 = vsel %vm2389, %v2477, %v2479
        %v2485 = vsel %vm2389, %v2479, %v2481
        %v2494 = vmul.f32 %v1235, %v2471
        %v2495 = vmul.f32 %v1236, %v2482
        %v2496 = vmul.f32 %v1237, %v2483
        %v2497 = vmul.f32 %v2362, %v2475
        %v2498 = vmul.f32 %v1239, %v2477
        %v2499 = vmul.f32 %v1240, %v2484
        %v2500 = vmul.f32 %v1241, %v2485
        %v2501 = vmul.f32 %v2363, %v2481
        %2510 = vrot.lane.b32.xlu0 %v2494, 76
        %v2511 = vpop.permute.xlu0 %2510
        %2512 = vrot.lane.b32.xlu0 %v2495, 76
        %v2513 = vpop.permute.xlu0 %2512
        %2514 = vrot.lane.b32.xlu0 %v2496, 76
        %v2515 = vpop.permute.xlu0 %2514
        %2516 = vrot.lane.b32.xlu0 %v2497, 76
        %v2517 = vpop.permute.xlu0 %2516
        %2518 = vrot.lane.b32.xlu0 %v2498, 76
        %v2519 = vpop.permute.xlu0 %2518
        %2520 = vrot.lane.b32.xlu0 %v2499, 76
        %v2521 = vpop.permute.xlu0 %2520
        %2522 = vrot.lane.b32.xlu0 %v2500, 76
        %v2523 = vpop.permute.xlu0 %2522
        %2524 = vrot.lane.b32.xlu0 %v2501, 76
        %v2525 = vpop.permute.xlu0 %2524
        %v2526 = vsel %vm2434, %v2511, %v2513
        %v2527 = vsel %vm2434, %v2513, %v2515
        %v2528 = vsel %vm2434, %v2515, %v2517
        %v2529 = vsel %vm2434, %v2519, %v2521
        %v2530 = vsel %vm2434, %v2521, %v2523
        %v2531 = vsel %vm2434, %v2523, %v2525
        %v2540 = vadd.f32 %v2290, %v2511
        %v2541 = vadd.f32 %v2291, %v2526
        %v2542 = vadd.f32 %v2292, %v2527
        %v2543 = vadd.f32 %v2293, %v2528
        %v2544 = vadd.f32 %v2294, %v2519
        %v2545 = vadd.f32 %v2295, %v2529
        %v2546 = vadd.f32 %v2296, %v2530
        %v2547 = vadd.f32 %v2297, %v2531
        %s2548 = scalar_lea.vmem %s6, 672
        %v2549 = vld [vmem:[%s2548] sm:$0xff]
        %v2550 = vld [vmem:[%s2548 + $0x8] sm:$0xff]
        %v2551 = vld [vmem:[%s2548 + $0x10] sm:$0xff]
        %v2552 = vld [vmem:[%s2548 + $0x18] sm:$0xff]
        %v2553 = vld [vmem:[%s2548 + $0x20] sm:$0xff]
        %v2554 = vld [vmem:[%s2548 + $0x28] sm:$0xff]
        %2561 = vrot.lane.b32.xlu0 %v2549, 2
        %v2562 = vpop.permute.xlu0 %2561
        %2563 = vrot.lane.b32.xlu0 %v2550, 2
        %v2564 = vpop.permute.xlu0 %2563
        %2565 = vrot.lane.b32.xlu0 %v2551, 2
        %v2566 = vpop.permute.xlu0 %2565
        %2567 = vrot.lane.b32.xlu0 %v2552, 2
        %v2568 = vpop.permute.xlu0 %2567
        %2569 = vrot.lane.b32.xlu0 %v2553, 2
        %v2570 = vpop.permute.xlu0 %2569
        %2571 = vrot.lane.b32.xlu0 %v2554, 2
        %v2572 = vpop.permute.xlu0 %2571
        %v2573 = vsel %vm2389, %v2562, %v2564
        %v2574 = vsel %vm2389, %v2564, %v2566
        %v2575 = vsel %vm2389, %v2568, %v2570
        %v2576 = vsel %vm2389, %v2570, %v2572
        %v2585 = vmul.f32 %v1235, %v2562
        %v2586 = vmul.f32 %v1236, %v2573
        %v2587 = vmul.f32 %v1237, %v2574
        %v2588 = vmul.f32 %v2362, %v2566
        %v2589 = vmul.f32 %v1239, %v2568
        %v2590 = vmul.f32 %v1240, %v2575
        %v2591 = vmul.f32 %v1241, %v2576
        %v2592 = vmul.f32 %v2363, %v2572
        %2601 = vrot.lane.b32.xlu0 %v2585, 76
        %v2602 = vpop.permute.xlu0 %2601
        %2603 = vrot.lane.b32.xlu0 %v2586, 76
        %v2604 = vpop.permute.xlu0 %2603
        %2605 = vrot.lane.b32.xlu0 %v2587, 76
        %v2606 = vpop.permute.xlu0 %2605
        %2607 = vrot.lane.b32.xlu0 %v2588, 76
        %v2608 = vpop.permute.xlu0 %2607
        %2609 = vrot.lane.b32.xlu0 %v2589, 76
        %v2610 = vpop.permute.xlu0 %2609
        %2611 = vrot.lane.b32.xlu0 %v2590, 76
        %v2612 = vpop.permute.xlu0 %2611
        %2613 = vrot.lane.b32.xlu0 %v2591, 76
        %v2614 = vpop.permute.xlu0 %2613
        %2615 = vrot.lane.b32.xlu0 %v2592, 76
        %v2616 = vpop.permute.xlu0 %2615
        %v2617 = vsel %vm2434, %v2602, %v2604
        %v2618 = vsel %vm2434, %v2604, %v2606
        %v2619 = vsel %vm2434, %v2606, %v2608
        %v2620 = vsel %vm2434, %v2610, %v2612
        %v2621 = vsel %vm2434, %v2612, %v2614
        %v2622 = vsel %vm2434, %v2614, %v2616
        %v2631 = vadd.f32 %v2354, %v2602
        %v2632 = vadd.f32 %v2355, %v2617
        %v2633 = vadd.f32 %v2356, %v2618
        %v2634 = vadd.f32 %v2357, %v2619
        %v2635 = vadd.f32 %v2358, %v2610
        %v2636 = vadd.f32 %v2359, %v2620
        %v2637 = vadd.f32 %v2360, %v2621
        %v2638 = vadd.f32 %v2361, %v2622
        %s2639 = scalar_lea.vmem %s3, 288
        %v2640 = vld [vmem:[%s2639] sm:$0xff]
        %v2641 = vld [vmem:[%s2639 + $0x8] sm:$0xff]
        %v2642 = vld [vmem:[%s2639 + $0x10] sm:$0xff]
        %v2643 = vld [vmem:[%s2639 + $0x18] sm:$0xff]
        %v2644 = vld [vmem:[%s2639 + $0x20] sm:$0xff]
        %v2645 = vld [vmem:[%s2639 + $0x28] sm:$0xff]
        %2652 = vrot.lane.b32.xlu0 %v2640, 46
        %v2653 = vpop.permute.xlu0 %2652
        %2654 = vrot.lane.b32.xlu0 %v2641, 46
        %v2655 = vpop.permute.xlu0 %2654
        %2656 = vrot.lane.b32.xlu0 %v2642, 46
        %v2657 = vpop.permute.xlu0 %2656
        %2658 = vrot.lane.b32.xlu0 %v2643, 46
        %v2659 = vpop.permute.xlu0 %2658
        %2660 = vrot.lane.b32.xlu0 %v2644, 46
        %v2661 = vpop.permute.xlu0 %2660
        %2662 = vrot.lane.b32.xlu0 %v2645, 46
        %v2663 = vpop.permute.xlu0 %2662
        %vm2664 = vcmask 375808
        %v2665 = vsel %vm2664, %v2653, %v2655
        %v2666 = vsel %vm2664, %v2655, %v2657
        %v2667 = vsel %vm2664, %v2659, %v2661
        %v2668 = vsel %vm2664, %v2661, %v2663
        %v2677 = vmul.f32 %v1235, %v2653
        %v2678 = vmul.f32 %v1236, %v2665
        %v2679 = vmul.f32 %v1237, %v2666
        %v2680 = vmul.f32 %v2362, %v2657
        %v2681 = vmul.f32 %v1239, %v2659
        %v2682 = vmul.f32 %v1240, %v2667
        %v2683 = vmul.f32 %v1241, %v2668
        %v2684 = vmul.f32 %v2363, %v2663
        %2693 = vrot.lane.b32.xlu0 %v2677, 32
        %v2694 = vpop.permute.xlu0 %2693
        %2695 = vrot.lane.b32.xlu0 %v2678, 32
        %v2696 = vpop.permute.xlu0 %2695
        %2697 = vrot.lane.b32.xlu0 %v2679, 32
        %v2698 = vpop.permute.xlu0 %2697
        %2699 = vrot.lane.b32.xlu0 %v2680, 32
        %v2700 = vpop.permute.xlu0 %2699
        %2701 = vrot.lane.b32.xlu0 %v2681, 32
        %v2702 = vpop.permute.xlu0 %2701
        %2703 = vrot.lane.b32.xlu0 %v2682, 32
        %v2704 = vpop.permute.xlu0 %2703
        %2705 = vrot.lane.b32.xlu0 %v2683, 32
        %v2706 = vpop.permute.xlu0 %2705
        %2707 = vrot.lane.b32.xlu0 %v2684, 32
        %v2708 = vpop.permute.xlu0 %2707
        %vm2709 = vcmask 261120
        %v2710 = vsel %vm2709, %v2694, %v2696
        %v2711 = vsel %vm2709, %v2696, %v2698
        %v2712 = vsel %vm2709, %v2698, %v2700
        %v2713 = vsel %vm2709, %v2702, %v2704
        %v2714 = vsel %vm2709, %v2704, %v2706
        %v2715 = vsel %vm2709, %v2706, %v2708
        %v2724 = vadd.f32 %v2449, %v2694
        %v2725 = vadd.f32 %v2450, %v2710
        %v2726 = vadd.f32 %v2451, %v2711
        %v2727 = vadd.f32 %v2452, %v2712
        %v2728 = vadd.f32 %v2453, %v2702
        %v2729 = vadd.f32 %v2454, %v2713
        %v2730 = vadd.f32 %v2455, %v2714
        %v2731 = vadd.f32 %v2456, %v2715
        %s2732 = scalar_lea.vmem %s4, 768
        %v2733 = vld [vmem:[%s2732] sm:$0xff]
        %v2734 = vld [vmem:[%s2732 + $0x8] sm:$0xff]
        %v2735 = vld [vmem:[%s2732 + $0x10] sm:$0xff]
        %v2736 = vld [vmem:[%s2732 + $0x18] sm:$0xff]
        %v2737 = vld [vmem:[%s2732 + $0x20] sm:$0xff]
        %v2738 = vld [vmem:[%s2732 + $0x28] sm:$0xff]
        %2745 = vrot.lane.b32.xlu0 %v2733, 46
        %v2746 = vpop.permute.xlu0 %2745
        %2747 = vrot.lane.b32.xlu0 %v2734, 46
        %v2748 = vpop.permute.xlu0 %2747
        %2749 = vrot.lane.b32.xlu0 %v2735, 46
        %v2750 = vpop.permute.xlu0 %2749
        %2751 = vrot.lane.b32.xlu0 %v2736, 46
        %v2752 = vpop.permute.xlu0 %2751
        %2753 = vrot.lane.b32.xlu0 %v2737, 46
        %v2754 = vpop.permute.xlu0 %2753
        %2755 = vrot.lane.b32.xlu0 %v2738, 46
        %v2756 = vpop.permute.xlu0 %2755
        %v2757 = vsel %vm2664, %v2746, %v2748
        %v2758 = vsel %vm2664, %v2748, %v2750
        %v2759 = vsel %vm2664, %v2752, %v2754
        %v2760 = vsel %vm2664, %v2754, %v2756
        %v2769 = vmul.f32 %v1235, %v2746
        %v2770 = vmul.f32 %v1236, %v2757
        %v2771 = vmul.f32 %v1237, %v2758
        %v2772 = vmul.f32 %v2362, %v2750
        %v2773 = vmul.f32 %v1239, %v2752
        %v2774 = vmul.f32 %v1240, %v2759
        %v2775 = vmul.f32 %v1241, %v2760
        %v2776 = vmul.f32 %v2363, %v2756
        %2785 = vrot.lane.b32.xlu0 %v2769, 32
        %v2786 = vpop.permute.xlu0 %2785
        %2787 = vrot.lane.b32.xlu0 %v2770, 32
        %v2788 = vpop.permute.xlu0 %2787
        %2789 = vrot.lane.b32.xlu0 %v2771, 32
        %v2790 = vpop.permute.xlu0 %2789
        %2791 = vrot.lane.b32.xlu0 %v2772, 32
        %v2792 = vpop.permute.xlu0 %2791
        %2793 = vrot.lane.b32.xlu0 %v2773, 32
        %v2794 = vpop.permute.xlu0 %2793
        %2795 = vrot.lane.b32.xlu0 %v2774, 32
        %v2796 = vpop.permute.xlu0 %2795
        %2797 = vrot.lane.b32.xlu0 %v2775, 32
        %v2798 = vpop.permute.xlu0 %2797
        %2799 = vrot.lane.b32.xlu0 %v2776, 32
        %v2800 = vpop.permute.xlu0 %2799
        %v2801 = vsel %vm2709, %v2786, %v2788
        %v2802 = vsel %vm2709, %v2788, %v2790
        %v2803 = vsel %vm2709, %v2790, %v2792
        %v2804 = vsel %vm2709, %v2794, %v2796
        %v2805 = vsel %vm2709, %v2796, %v2798
        %v2806 = vsel %vm2709, %v2798, %v2800
        %v2815 = vadd.f32 %v2540, %v2786
        %v2816 = vadd.f32 %v2541, %v2801
        %v2817 = vadd.f32 %v2542, %v2802
        %v2818 = vadd.f32 %v2543, %v2803
        %v2819 = vadd.f32 %v2544, %v2794
        %v2820 = vadd.f32 %v2545, %v2804
        %v2821 = vadd.f32 %v2546, %v2805
        %v2822 = vadd.f32 %v2547, %v2806
        %s2823 = scalar_lea.vmem %s6, 960
        %v2824 = vld [vmem:[%s2823] sm:$0xff]
        %v2825 = vld [vmem:[%s2823 + $0x8] sm:$0xff]
        %v2826 = vld [vmem:[%s2823 + $0x10] sm:$0xff]
        %v2827 = vld [vmem:[%s2823 + $0x18] sm:$0xff]
        %v2828 = vld [vmem:[%s2823 + $0x20] sm:$0xff]
        %v2829 = vld [vmem:[%s2823 + $0x28] sm:$0xff]
        %2836 = vrot.lane.b32.xlu0 %v2824, 46
        %v2837 = vpop.permute.xlu0 %2836
        %2838 = vrot.lane.b32.xlu0 %v2825, 46
        %v2839 = vpop.permute.xlu0 %2838
        %2840 = vrot.lane.b32.xlu0 %v2826, 46
        %v2841 = vpop.permute.xlu0 %2840
        %2842 = vrot.lane.b32.xlu0 %v2827, 46
        %v2843 = vpop.permute.xlu0 %2842
        %2844 = vrot.lane.b32.xlu0 %v2828, 46
        %v2845 = vpop.permute.xlu0 %2844
        %2846 = vrot.lane.b32.xlu0 %v2829, 46
        %v2847 = vpop.permute.xlu0 %2846
        %v2848 = vsel %vm2664, %v2837, %v2839
        %v2849 = vsel %vm2664, %v2839, %v2841
        %v2850 = vsel %vm2664, %v2843, %v2845
        %v2851 = vsel %vm2664, %v2845, %v2847
        %v2860 = vmul.f32 %v1235, %v2837
        %v2861 = vmul.f32 %v1236, %v2848
        %v2862 = vmul.f32 %v1237, %v2849
        %v2863 = vmul.f32 %v2362, %v2841
        %v2864 = vmul.f32 %v1239, %v2843
        %v2865 = vmul.f32 %v1240, %v2850
        %v2866 = vmul.f32 %v1241, %v2851
        %v2867 = vmul.f32 %v2363, %v2847
        %2876 = vrot.lane.b32.xlu0 %v2860, 32
        %v2877 = vpop.permute.xlu0 %2876
        %2878 = vrot.lane.b32.xlu0 %v2861, 32
        %v2879 = vpop.permute.xlu0 %2878
        %2880 = vrot.lane.b32.xlu0 %v2862, 32
        %v2881 = vpop.permute.xlu0 %2880
        %2882 = vrot.lane.b32.xlu0 %v2863, 32
        %v2883 = vpop.permute.xlu0 %2882
        %2884 = vrot.lane.b32.xlu0 %v2864, 32
        %v2885 = vpop.permute.xlu0 %2884
        %2886 = vrot.lane.b32.xlu0 %v2865, 32
        %v2887 = vpop.permute.xlu0 %2886
        %2888 = vrot.lane.b32.xlu0 %v2866, 32
        %v2889 = vpop.permute.xlu0 %2888
        %2890 = vrot.lane.b32.xlu0 %v2867, 32
        %v2891 = vpop.permute.xlu0 %2890
        %v2892 = vsel %vm2709, %v2877, %v2879
        %v2893 = vsel %vm2709, %v2879, %v2881
        %v2894 = vsel %vm2709, %v2881, %v2883
        %v2895 = vsel %vm2709, %v2885, %v2887
        %v2896 = vsel %vm2709, %v2887, %v2889
        %v2897 = vsel %vm2709, %v2889, %v2891
        %v2906 = vadd.f32 %v2631, %v2877
        %v2907 = vadd.f32 %v2632, %v2892
        %v2908 = vadd.f32 %v2633, %v2893
        %v2909 = vadd.f32 %v2634, %v2894
        %v2910 = vadd.f32 %v2635, %v2885
        %v2911 = vadd.f32 %v2636, %v2895
        %v2912 = vadd.f32 %v2637, %v2896
        %v2913 = vadd.f32 %v2638, %v2897
        %s2914 = scalar_lea.vmem %s3, 336
        %v2915 = vld [vmem:[%s2914] sm:$0xff]
        %v2916 = vld [vmem:[%s2914 + $0x8] sm:$0xff]
        %v2917 = vld [vmem:[%s2914 + $0x10] sm:$0xff]
        %v2918 = vld [vmem:[%s2914 + $0x18] sm:$0xff]
        %v2919 = vld [vmem:[%s2914 + $0x20] sm:$0xff]
        %v2920 = vld [vmem:[%s2914 + $0x28] sm:$0xff]
        %2927 = vrot.lane.b32.xlu0 %v2915, 48
        %v2928 = vpop.permute.xlu0 %2927
        %2929 = vrot.lane.b32.xlu0 %v2916, 48
        %v2930 = vpop.permute.xlu0 %2929
        %2931 = vrot.lane.b32.xlu0 %v2917, 48
        %v2932 = vpop.permute.xlu0 %2931
        %2933 = vrot.lane.b32.xlu0 %v2918, 48
        %v2934 = vpop.permute.xlu0 %2933
        %2935 = vrot.lane.b32.xlu0 %v2919, 48
        %v2936 = vpop.permute.xlu0 %2935
        %2937 = vrot.lane.b32.xlu0 %v2920, 48
        %v2938 = vpop.permute.xlu0 %2937
        %vm2939 = vcmask 392192
        %v2940 = vsel %vm2939, %v2928, %v2930
        %v2941 = vsel %vm2939, %v2930, %v2932
        %v2942 = vsel %vm2939, %v2934, %v2936
        %v2943 = vsel %vm2939, %v2936, %v2938
        %v2952 = vmul.f32 %v1235, %v2928
        %v2953 = vmul.f32 %v1236, %v2940
        %v2954 = vmul.f32 %v1237, %v2941
        %v2955 = vmul.f32 %v2362, %v2932
        %v2956 = vmul.f32 %v1239, %v2934
        %v2957 = vmul.f32 %v1240, %v2942
        %v2958 = vmul.f32 %v1241, %v2943
        %v2959 = vmul.f32 %v2363, %v2938
        %2968 = vrot.lane.b32.xlu0 %v2952, 30
        %v2969 = vpop.permute.xlu0 %2968
        %2970 = vrot.lane.b32.xlu0 %v2953, 30
        %v2971 = vpop.permute.xlu0 %2970
        %2972 = vrot.lane.b32.xlu0 %v2954, 30
        %v2973 = vpop.permute.xlu0 %2972
        %2974 = vrot.lane.b32.xlu0 %v2955, 30
        %v2975 = vpop.permute.xlu0 %2974
        %2976 = vrot.lane.b32.xlu0 %v2956, 30
        %v2977 = vpop.permute.xlu0 %2976
        %2978 = vrot.lane.b32.xlu0 %v2957, 30
        %v2979 = vpop.permute.xlu0 %2978
        %2980 = vrot.lane.b32.xlu0 %v2958, 30
        %v2981 = vpop.permute.xlu0 %2980
        %2982 = vrot.lane.b32.xlu0 %v2959, 30
        %v2983 = vpop.permute.xlu0 %2982
        %vm2984 = vcmask 244736
        %v2985 = vsel %vm2984, %v2969, %v2971
        %v2986 = vsel %vm2984, %v2971, %v2973
        %v2987 = vsel %vm2984, %v2973, %v2975
        %v2988 = vsel %vm2984, %v2977, %v2979
        %v2989 = vsel %vm2984, %v2979, %v2981
        %v2990 = vsel %vm2984, %v2981, %v2983
        %v2999 = vadd.f32 %v2724, %v2969
        %v3000 = vadd.f32 %v2725, %v2985
        %v3001 = vadd.f32 %v2726, %v2986
        %v3002 = vadd.f32 %v2727, %v2987
        %v3003 = vadd.f32 %v2728, %v2977
        %v3004 = vadd.f32 %v2729, %v2988
        %v3005 = vadd.f32 %v2730, %v2989
        %v3006 = vadd.f32 %v2731, %v2990
        %s3007 = scalar_lea.vmem %s4, 816
        %v3008 = vld [vmem:[%s3007] sm:$0xff]
        %v3009 = vld [vmem:[%s3007 + $0x8] sm:$0xff]
        %v3010 = vld [vmem:[%s3007 + $0x10] sm:$0xff]
        %v3011 = vld [vmem:[%s3007 + $0x18] sm:$0xff]
        %v3012 = vld [vmem:[%s3007 + $0x20] sm:$0xff]
        %v3013 = vld [vmem:[%s3007 + $0x28] sm:$0xff]
        %3020 = vrot.lane.b32.xlu0 %v3008, 48
        %v3021 = vpop.permute.xlu0 %3020
        %3022 = vrot.lane.b32.xlu0 %v3009, 48
        %v3023 = vpop.permute.xlu0 %3022
        %3024 = vrot.lane.b32.xlu0 %v3010, 48
        %v3025 = vpop.permute.xlu0 %3024
        %3026 = vrot.lane.b32.xlu0 %v3011, 48
        %v3027 = vpop.permute.xlu0 %3026
        %3028 = vrot.lane.b32.xlu0 %v3012, 48
        %v3029 = vpop.permute.xlu0 %3028
        %3030 = vrot.lane.b32.xlu0 %v3013, 48
        %v3031 = vpop.permute.xlu0 %3030
        %v3032 = vsel %vm2939, %v3021, %v3023
        %v3033 = vsel %vm2939, %v3023, %v3025
        %v3034 = vsel %vm2939, %v3027, %v3029
        %v3035 = vsel %vm2939, %v3029, %v3031
        %v3044 = vmul.f32 %v1235, %v3021
        %v3045 = vmul.f32 %v1236, %v3032
        %v3046 = vmul.f32 %v1237, %v3033
        %v3047 = vmul.f32 %v2362, %v3025
        %v3048 = vmul.f32 %v1239, %v3027
        %v3049 = vmul.f32 %v1240, %v3034
        %v3050 = vmul.f32 %v1241, %v3035
        %v3051 = vmul.f32 %v2363, %v3031
        %3060 = vrot.lane.b32.xlu0 %v3044, 30
        %v3061 = vpop.permute.xlu0 %3060
        %3062 = vrot.lane.b32.xlu0 %v3045, 30
        %v3063 = vpop.permute.xlu0 %3062
        %3064 = vrot.lane.b32.xlu0 %v3046, 30
        %v3065 = vpop.permute.xlu0 %3064
        %3066 = vrot.lane.b32.xlu0 %v3047, 30
        %v3067 = vpop.permute.xlu0 %3066
        %3068 = vrot.lane.b32.xlu0 %v3048, 30
        %v3069 = vpop.permute.xlu0 %3068
        %3070 = vrot.lane.b32.xlu0 %v3049, 30
        %v3071 = vpop.permute.xlu0 %3070
        %3072 = vrot.lane.b32.xlu0 %v3050, 30
        %v3073 = vpop.permute.xlu0 %3072
        %3074 = vrot.lane.b32.xlu0 %v3051, 30
        %v3075 = vpop.permute.xlu0 %3074
        %v3076 = vsel %vm2984, %v3061, %v3063
        %v3077 = vsel %vm2984, %v3063, %v3065
        %v3078 = vsel %vm2984, %v3065, %v3067
        %v3079 = vsel %vm2984, %v3069, %v3071
        %v3080 = vsel %vm2984, %v3071, %v3073
        %v3081 = vsel %vm2984, %v3073, %v3075
        %v3090 = vadd.f32 %v2815, %v3061
        %v3091 = vadd.f32 %v2816, %v3076
        %v3092 = vadd.f32 %v2817, %v3077
        %v3093 = vadd.f32 %v2818, %v3078
        %v3094 = vadd.f32 %v2819, %v3069
        %v3095 = vadd.f32 %v2820, %v3079
        %v3096 = vadd.f32 %v2821, %v3080
        %v3097 = vadd.f32 %v2822, %v3081
        %s3098 = scalar_lea.vmem %s6, 1056
        %v3099 = vld [vmem:[%s3098] sm:$0xff]
        %v3100 = vld [vmem:[%s3098 + $0x8] sm:$0xff]
        %v3101 = vld [vmem:[%s3098 + $0x10] sm:$0xff]
        %v3102 = vld [vmem:[%s3098 + $0x18] sm:$0xff]
        %v3103 = vld [vmem:[%s3098 + $0x20] sm:$0xff]
        %v3104 = vld [vmem:[%s3098 + $0x28] sm:$0xff]
        %3111 = vrot.lane.b32.xlu0 %v3099, 48
        %v3112 = vpop.permute.xlu0 %3111
        %3113 = vrot.lane.b32.xlu0 %v3100, 48
        %v3114 = vpop.permute.xlu0 %3113
        %3115 = vrot.lane.b32.xlu0 %v3101, 48
        %v3116 = vpop.permute.xlu0 %3115
        %3117 = vrot.lane.b32.xlu0 %v3102, 48
        %v3118 = vpop.permute.xlu0 %3117
        %3119 = vrot.lane.b32.xlu0 %v3103, 48
        %v3120 = vpop.permute.xlu0 %3119
        %3121 = vrot.lane.b32.xlu0 %v3104, 48
        %v3122 = vpop.permute.xlu0 %3121
        %v3123 = vsel %vm2939, %v3112, %v3114
        %v3124 = vsel %vm2939, %v3114, %v3116
        %v3125 = vsel %vm2939, %v3118, %v3120
        %v3126 = vsel %vm2939, %v3120, %v3122
        %v3135 = vmul.f32 %v1235, %v3112
        %v3136 = vmul.f32 %v1236, %v3123
        %v3137 = vmul.f32 %v1237, %v3124
        %v3138 = vmul.f32 %v2362, %v3116
        %v3139 = vmul.f32 %v1239, %v3118
        %v3140 = vmul.f32 %v1240, %v3125
        %v3141 = vmul.f32 %v1241, %v3126
        %v3142 = vmul.f32 %v2363, %v3122
        %3151 = vrot.lane.b32.xlu0 %v3135, 30
        %v3152 = vpop.permute.xlu0 %3151
        %3153 = vrot.lane.b32.xlu0 %v3136, 30
        %v3154 = vpop.permute.xlu0 %3153
        %3155 = vrot.lane.b32.xlu0 %v3137, 30
        %v3156 = vpop.permute.xlu0 %3155
        %3157 = vrot.lane.b32.xlu0 %v3138, 30
        %v3158 = vpop.permute.xlu0 %3157
        %3159 = vrot.lane.b32.xlu0 %v3139, 30
        %v3160 = vpop.permute.xlu0 %3159
        %3161 = vrot.lane.b32.xlu0 %v3140, 30
        %v3162 = vpop.permute.xlu0 %3161
        %3163 = vrot.lane.b32.xlu0 %v3141, 30
        %v3164 = vpop.permute.xlu0 %3163
        %3165 = vrot.lane.b32.xlu0 %v3142, 30
        %v3166 = vpop.permute.xlu0 %3165
        %v3167 = vsel %vm2984, %v3152, %v3154
        %v3168 = vsel %vm2984, %v3154, %v3156
        %v3169 = vsel %vm2984, %v3156, %v3158
        %v3170 = vsel %vm2984, %v3160, %v3162
        %v3171 = vsel %vm2984, %v3162, %v3164
        %v3172 = vsel %vm2984, %v3164, %v3166
        %v3181 = vadd.f32 %v2906, %v3152
        %v3182 = vadd.f32 %v2907, %v3167
        %v3183 = vadd.f32 %v2908, %v3168
        %v3184 = vadd.f32 %v2909, %v3169
        %v3185 = vadd.f32 %v2910, %v3160
        %v3186 = vadd.f32 %v2911, %v3170
        %v3187 = vadd.f32 %v2912, %v3171
        %v3188 = vadd.f32 %v2913, %v3172
        %s3189 = scalar_lea.vmem %s3, 384
        %v3190 = vld [vmem:[%s3189] sm:$0xff]
        %v3191 = vld [vmem:[%s3189 + $0x8] sm:$0xff]
        %v3192 = vld [vmem:[%s3189 + $0x10] sm:$0xff]
        %v3193 = vld [vmem:[%s3189 + $0x18] sm:$0xff]
        %v3194 = vld [vmem:[%s3189 + $0x20] sm:$0xff]
        %v3195 = vld [vmem:[%s3189 + $0x28] sm:$0xff]
        %3202 = vrot.lane.b32.xlu0 %v3190, 50
        %v3203 = vpop.permute.xlu0 %3202
        %3204 = vrot.lane.b32.xlu0 %v3191, 50
        %v3205 = vpop.permute.xlu0 %3204
        %3206 = vrot.lane.b32.xlu0 %v3192, 50
        %v3207 = vpop.permute.xlu0 %3206
        %3208 = vrot.lane.b32.xlu0 %v3193, 50
        %v3209 = vpop.permute.xlu0 %3208
        %3210 = vrot.lane.b32.xlu0 %v3194, 50
        %v3211 = vpop.permute.xlu0 %3210
        %3212 = vrot.lane.b32.xlu0 %v3195, 50
        %v3213 = vpop.permute.xlu0 %3212
        %vm3214 = vcmask 408576
        %v3215 = vsel %vm3214, %v3203, %v3205
        %v3216 = vsel %vm3214, %v3205, %v3207
        %v3217 = vsel %vm3214, %v3209, %v3211
        %v3218 = vsel %vm3214, %v3211, %v3213
        %v3227 = vmul.f32 %v1235, %v3203
        %v3228 = vmul.f32 %v1236, %v3215
        %v3229 = vmul.f32 %v1237, %v3216
        %v3230 = vmul.f32 %v2362, %v3207
        %v3231 = vmul.f32 %v1239, %v3209
        %v3232 = vmul.f32 %v1240, %v3217
        %v3233 = vmul.f32 %v1241, %v3218
        %v3234 = vmul.f32 %v2363, %v3213
        %3243 = vrot.lane.b32.xlu0 %v3227, 28
        %v3244 = vpop.permute.xlu0 %3243
        %3245 = vrot.lane.b32.xlu0 %v3228, 28
        %v3246 = vpop.permute.xlu0 %3245
        %3247 = vrot.lane.b32.xlu0 %v3229, 28
        %v3248 = vpop.permute.xlu0 %3247
        %3249 = vrot.lane.b32.xlu0 %v3230, 28
        %v3250 = vpop.permute.xlu0 %3249
        %3251 = vrot.lane.b32.xlu0 %v3231, 28
        %v3252 = vpop.permute.xlu0 %3251
        %3253 = vrot.lane.b32.xlu0 %v3232, 28
        %v3254 = vpop.permute.xlu0 %3253
        %3255 = vrot.lane.b32.xlu0 %v3233, 28
        %v3256 = vpop.permute.xlu0 %3255
        %3257 = vrot.lane.b32.xlu0 %v3234, 28
        %v3258 = vpop.permute.xlu0 %3257
        %vm3259 = vcmask 228352
        %v3260 = vsel %vm3259, %v3244, %v3246
        %v3261 = vsel %vm3259, %v3246, %v3248
        %v3262 = vsel %vm3259, %v3248, %v3250
        %v3263 = vsel %vm3259, %v3252, %v3254
        %v3264 = vsel %vm3259, %v3254, %v3256
        %v3265 = vsel %vm3259, %v3256, %v3258
        %v3274 = vadd.f32 %v2999, %v3244
        %v3275 = vadd.f32 %v3000, %v3260
        %v3276 = vadd.f32 %v3001, %v3261
        %v3277 = vadd.f32 %v3002, %v3262
        %v3278 = vadd.f32 %v3003, %v3252
        %v3279 = vadd.f32 %v3004, %v3263
        %v3280 = vadd.f32 %v3005, %v3264
        %v3281 = vadd.f32 %v3006, %v3265
        %s3282 = scalar_lea.vmem %s4, 864
        %v3283 = vld [vmem:[%s3282] sm:$0xff]
        %v3284 = vld [vmem:[%s3282 + $0x8] sm:$0xff]
        %v3285 = vld [vmem:[%s3282 + $0x10] sm:$0xff]
        %v3286 = vld [vmem:[%s3282 + $0x18] sm:$0xff]
        %v3287 = vld [vmem:[%s3282 + $0x20] sm:$0xff]
        %v3288 = vld [vmem:[%s3282 + $0x28] sm:$0xff]
        %3295 = vrot.lane.b32.xlu0 %v3283, 50
        %v3296 = vpop.permute.xlu0 %3295
        %3297 = vrot.lane.b32.xlu0 %v3284, 50
        %v3298 = vpop.permute.xlu0 %3297
        %3299 = vrot.lane.b32.xlu0 %v3285, 50
        %v3300 = vpop.permute.xlu0 %3299
        %3301 = vrot.lane.b32.xlu0 %v3286, 50
        %v3302 = vpop.permute.xlu0 %3301
        %3303 = vrot.lane.b32.xlu0 %v3287, 50
        %v3304 = vpop.permute.xlu0 %3303
        %3305 = vrot.lane.b32.xlu0 %v3288, 50
        %v3306 = vpop.permute.xlu0 %3305
        %v3307 = vsel %vm3214, %v3296, %v3298
        %v3308 = vsel %vm3214, %v3298, %v3300
        %v3309 = vsel %vm3214, %v3302, %v3304
        %v3310 = vsel %vm3214, %v3304, %v3306
        %v3319 = vmul.f32 %v1235, %v3296
        %v3320 = vmul.f32 %v1236, %v3307
        %v3321 = vmul.f32 %v1237, %v3308
        %v3322 = vmul.f32 %v2362, %v3300
        %v3323 = vmul.f32 %v1239, %v3302
        %v3324 = vmul.f32 %v1240, %v3309
        %v3325 = vmul.f32 %v1241, %v3310
        %v3326 = vmul.f32 %v2363, %v3306
        %3335 = vrot.lane.b32.xlu0 %v3319, 28
        %v3336 = vpop.permute.xlu0 %3335
        %3337 = vrot.lane.b32.xlu0 %v3320, 28
        %v3338 = vpop.permute.xlu0 %3337
        %3339 = vrot.lane.b32.xlu0 %v3321, 28
        %v3340 = vpop.permute.xlu0 %3339
        %3341 = vrot.lane.b32.xlu0 %v3322, 28
        %v3342 = vpop.permute.xlu0 %3341
        %3343 = vrot.lane.b32.xlu0 %v3323, 28
        %v3344 = vpop.permute.xlu0 %3343
        %3345 = vrot.lane.b32.xlu0 %v3324, 28
        %v3346 = vpop.permute.xlu0 %3345
        %3347 = vrot.lane.b32.xlu0 %v3325, 28
        %v3348 = vpop.permute.xlu0 %3347
        %3349 = vrot.lane.b32.xlu0 %v3326, 28
        %v3350 = vpop.permute.xlu0 %3349
        %v3351 = vsel %vm3259, %v3336, %v3338
        %v3352 = vsel %vm3259, %v3338, %v3340
        %v3353 = vsel %vm3259, %v3340, %v3342
        %v3354 = vsel %vm3259, %v3344, %v3346
        %v3355 = vsel %vm3259, %v3346, %v3348
        %v3356 = vsel %vm3259, %v3348, %v3350
        %v3365 = vadd.f32 %v3090, %v3336
        %v3366 = vadd.f32 %v3091, %v3351
        %v3367 = vadd.f32 %v3092, %v3352
        %v3368 = vadd.f32 %v3093, %v3353
        %v3369 = vadd.f32 %v3094, %v3344
        %v3370 = vadd.f32 %v3095, %v3354
        %v3371 = vadd.f32 %v3096, %v3355
        %v3372 = vadd.f32 %v3097, %v3356
        %s3373 = scalar_lea.vmem %s6, 1152
        %v3374 = vld [vmem:[%s3373] sm:$0xff]
        %v3375 = vld [vmem:[%s3373 + $0x8] sm:$0xff]
        %v3376 = vld [vmem:[%s3373 + $0x10] sm:$0xff]
        %v3377 = vld [vmem:[%s3373 + $0x18] sm:$0xff]
        %v3378 = vld [vmem:[%s3373 + $0x20] sm:$0xff]
        %v3379 = vld [vmem:[%s3373 + $0x28] sm:$0xff]
        %3386 = vrot.lane.b32.xlu0 %v3374, 50
        %v3387 = vpop.permute.xlu0 %3386
        %3388 = vrot.lane.b32.xlu0 %v3375, 50
        %v3389 = vpop.permute.xlu0 %3388
        %3390 = vrot.lane.b32.xlu0 %v3376, 50
        %v3391 = vpop.permute.xlu0 %3390
        %3392 = vrot.lane.b32.xlu0 %v3377, 50
        %v3393 = vpop.permute.xlu0 %3392
        %3394 = vrot.lane.b32.xlu0 %v3378, 50
        %v3395 = vpop.permute.xlu0 %3394
        %3396 = vrot.lane.b32.xlu0 %v3379, 50
        %v3397 = vpop.permute.xlu0 %3396
        %v3398 = vsel %vm3214, %v3387, %v3389
        %v3399 = vsel %vm3214, %v3389, %v3391
        %v3400 = vsel %vm3214, %v3393, %v3395
        %v3401 = vsel %vm3214, %v3395, %v3397
        %v3410 = vmul.f32 %v1235, %v3387
        %v3411 = vmul.f32 %v1236, %v3398
        %v3412 = vmul.f32 %v1237, %v3399
        %v3413 = vmul.f32 %v2362, %v3391
        %v3414 = vmul.f32 %v1239, %v3393
        %v3415 = vmul.f32 %v1240, %v3400
        %v3416 = vmul.f32 %v1241, %v3401
        %v3417 = vmul.f32 %v2363, %v3397
        %3426 = vrot.lane.b32.xlu0 %v3410, 28
        %v3427 = vpop.permute.xlu0 %3426
        %3428 = vrot.lane.b32.xlu0 %v3411, 28
        %v3429 = vpop.permute.xlu0 %3428
        %3430 = vrot.lane.b32.xlu0 %v3412, 28
        %v3431 = vpop.permute.xlu0 %3430
        %3432 = vrot.lane.b32.xlu0 %v3413, 28
        %v3433 = vpop.permute.xlu0 %3432
        %3434 = vrot.lane.b32.xlu0 %v3414, 28
        %v3435 = vpop.permute.xlu0 %3434
        %3436 = vrot.lane.b32.xlu0 %v3415, 28
        %v3437 = vpop.permute.xlu0 %3436
        %3438 = vrot.lane.b32.xlu0 %v3416, 28
        %v3439 = vpop.permute.xlu0 %3438
        %3440 = vrot.lane.b32.xlu0 %v3417, 28
        %v3441 = vpop.permute.xlu0 %3440
        %v3442 = vsel %vm3259, %v3427, %v3429
        %v3443 = vsel %vm3259, %v3429, %v3431
        %v3444 = vsel %vm3259, %v3431, %v3433
        %v3445 = vsel %vm3259, %v3435, %v3437
        %v3446 = vsel %vm3259, %v3437, %v3439
        %v3447 = vsel %vm3259, %v3439, %v3441
        %v3456 = vadd.f32 %v3181, %v3427
        %v3457 = vadd.f32 %v3182, %v3442
        %v3458 = vadd.f32 %v3183, %v3443
        %v3459 = vadd.f32 %v3184, %v3444
        %v3460 = vadd.f32 %v3185, %v3435
        %v3461 = vadd.f32 %v3186, %v3445
        %v3462 = vadd.f32 %v3187, %v3446
        %v3463 = vadd.f32 %v3188, %v3447
        %v3464 = vld [vmem:[%s4] sm:$0xff]
        %v3465 = vld [vmem:[%s4 + $0x8] sm:$0xff]
        %v3466 = vld [vmem:[%s4 + $0x10] sm:$0xff]
        %v3467 = vld [vmem:[%s4 + $0x18] sm:$0xff]
        %v3468 = vld [vmem:[%s4 + $0x20] sm:$0xff]
        %v3469 = vld [vmem:[%s4 + $0x28] sm:$0xff]
        %3476 = vrot.lane.b32.xlu0 %v3464, 28
        %v3477 = vpop.permute.xlu0 %3476
        %3478 = vrot.lane.b32.xlu0 %v3465, 28
        %v3479 = vpop.permute.xlu0 %3478
        %3480 = vrot.lane.b32.xlu0 %v3466, 28
        %v3481 = vpop.permute.xlu0 %3480
        %3482 = vrot.lane.b32.xlu0 %v3467, 28
        %v3483 = vpop.permute.xlu0 %3482
        %3484 = vrot.lane.b32.xlu0 %v3468, 28
        %v3485 = vpop.permute.xlu0 %3484
        %3486 = vrot.lane.b32.xlu0 %v3469, 28
        %v3487 = vpop.permute.xlu0 %3486
        %v3488 = vsel %vm3259, %v3477, %v3479
        %v3489 = vsel %vm3259, %v3479, %v3481
        %v3490 = vsel %vm3259, %v3483, %v3485
        %v3491 = vsel %vm3259, %v3485, %v3487
        %v3500 = vmul.f32 %v1234, %v3477
        %v3501 = vmul.f32 %v1235, %v3488
        %v3502 = vmul.f32 %v1236, %v3489
        %v3503 = vmul.f32 %v1237, %v3481
        %v3504 = vmul.f32 %v1238, %v3483
        %v3505 = vmul.f32 %v1239, %v3490
        %v3506 = vmul.f32 %v1240, %v3491
        %v3507 = vmul.f32 %v1241, %v3487
        %3516 = vrot.lane.b32.xlu0 %v3500, 50
        %v3517 = vpop.permute.xlu0 %3516
        %3518 = vrot.lane.b32.xlu0 %v3501, 50
        %v3519 = vpop.permute.xlu0 %3518
        %3520 = vrot.lane.b32.xlu0 %v3502, 50
        %v3521 = vpop.permute.xlu0 %3520
        %3522 = vrot.lane.b32.xlu0 %v3503, 50
        %v3523 = vpop.permute.xlu0 %3522
        %3524 = vrot.lane.b32.xlu0 %v3504, 50
        %v3525 = vpop.permute.xlu0 %3524
        %3526 = vrot.lane.b32.xlu0 %v3505, 50
        %v3527 = vpop.permute.xlu0 %3526
        %3528 = vrot.lane.b32.xlu0 %v3506, 50
        %v3529 = vpop.permute.xlu0 %3528
        %3530 = vrot.lane.b32.xlu0 %v3507, 50
        %v3531 = vpop.permute.xlu0 %3530
        %v3532 = vsel %vm3214, %v3517, %v3519
        %v3533 = vsel %vm3214, %v3519, %v3521
        %v3534 = vsel %vm3214, %v3521, %v3523
        %v3535 = vsel %vm3214, %v3525, %v3527
        %v3536 = vsel %vm3214, %v3527, %v3529
        %v3537 = vsel %vm3214, %v3529, %v3531
        %v3546 = vadd.f32 %v3365, %v3517
        %v3547 = vadd.f32 %v3366, %v3532
        %v3548 = vadd.f32 %v3367, %v3533
        %v3549 = vadd.f32 %v3368, %v3534
        %v3550 = vadd.f32 %v3369, %v3525
        %v3551 = vadd.f32 %v3370, %v3535
        %v3552 = vadd.f32 %v3371, %v3536
        %v3553 = vadd.f32 %v3372, %v3537
        %s3554 = scalar_lea.vmem %s4, 48
        %v3555 = vld [vmem:[%s3554] sm:$0xff]
        %v3556 = vld [vmem:[%s3554 + $0x8] sm:$0xff]
        %v3557 = vld [vmem:[%s3554 + $0x10] sm:$0xff]
        %v3558 = vld [vmem:[%s3554 + $0x18] sm:$0xff]
        %v3559 = vld [vmem:[%s3554 + $0x20] sm:$0xff]
        %v3560 = vld [vmem:[%s3554 + $0x28] sm:$0xff]
        %3567 = vrot.lane.b32.xlu0 %v3555, 30
        %v3568 = vpop.permute.xlu0 %3567
        %3569 = vrot.lane.b32.xlu0 %v3556, 30
        %v3570 = vpop.permute.xlu0 %3569
        %3571 = vrot.lane.b32.xlu0 %v3557, 30
        %v3572 = vpop.permute.xlu0 %3571
        %3573 = vrot.lane.b32.xlu0 %v3558, 30
        %v3574 = vpop.permute.xlu0 %3573
        %3575 = vrot.lane.b32.xlu0 %v3559, 30
        %v3576 = vpop.permute.xlu0 %3575
        %3577 = vrot.lane.b32.xlu0 %v3560, 30
        %v3578 = vpop.permute.xlu0 %3577
        %v3579 = vsel %vm2984, %v3568, %v3570
        %v3580 = vsel %vm2984, %v3570, %v3572
        %v3581 = vsel %vm2984, %v3574, %v3576
        %v3582 = vsel %vm2984, %v3576, %v3578
        %v3591 = vmul.f32 %v1234, %v3568
        %v3592 = vmul.f32 %v1235, %v3579
        %v3593 = vmul.f32 %v1236, %v3580
        %v3594 = vmul.f32 %v1237, %v3572
        %v3595 = vmul.f32 %v1238, %v3574
        %v3596 = vmul.f32 %v1239, %v3581
        %v3597 = vmul.f32 %v1240, %v3582
        %v3598 = vmul.f32 %v1241, %v3578
        %3607 = vrot.lane.b32.xlu0 %v3591, 48
        %v3608 = vpop.permute.xlu0 %3607
        %3609 = vrot.lane.b32.xlu0 %v3592, 48
        %v3610 = vpop.permute.xlu0 %3609
        %3611 = vrot.lane.b32.xlu0 %v3593, 48
        %v3612 = vpop.permute.xlu0 %3611
        %3613 = vrot.lane.b32.xlu0 %v3594, 48
        %v3614 = vpop.permute.xlu0 %3613
        %3615 = vrot.lane.b32.xlu0 %v3595, 48
        %v3616 = vpop.permute.xlu0 %3615
        %3617 = vrot.lane.b32.xlu0 %v3596, 48
        %v3618 = vpop.permute.xlu0 %3617
        %3619 = vrot.lane.b32.xlu0 %v3597, 48
        %v3620 = vpop.permute.xlu0 %3619
        %3621 = vrot.lane.b32.xlu0 %v3598, 48
        %v3622 = vpop.permute.xlu0 %3621
        %v3623 = vsel %vm2939, %v3608, %v3610
        %v3624 = vsel %vm2939, %v3610, %v3612
        %v3625 = vsel %vm2939, %v3612, %v3614
        %v3626 = vsel %vm2939, %v3616, %v3618
        %v3627 = vsel %vm2939, %v3618, %v3620
        %v3628 = vsel %vm2939, %v3620, %v3622
        %v3637 = vadd.f32 %v3546, %v3608
        %v3638 = vadd.f32 %v3547, %v3623
        %v3639 = vadd.f32 %v3548, %v3624
        %v3640 = vadd.f32 %v3549, %v3625
        %v3641 = vadd.f32 %v3550, %v3616
        %v3642 = vadd.f32 %v3551, %v3626
        %v3643 = vadd.f32 %v3552, %v3627
        %v3644 = vadd.f32 %v3553, %v3628
        %s3645 = scalar_lea.vmem %s4, 96
        %v3646 = vld [vmem:[%s3645] sm:$0xff]
        %v3647 = vld [vmem:[%s3645 + $0x8] sm:$0xff]
        %v3648 = vld [vmem:[%s3645 + $0x10] sm:$0xff]
        %v3649 = vld [vmem:[%s3645 + $0x18] sm:$0xff]
        %v3650 = vld [vmem:[%s3645 + $0x20] sm:$0xff]
        %v3651 = vld [vmem:[%s3645 + $0x28] sm:$0xff]
        %3658 = vrot.lane.b32.xlu0 %v3646, 32
        %v3659 = vpop.permute.xlu0 %3658
        %3660 = vrot.lane.b32.xlu0 %v3647, 32
        %v3661 = vpop.permute.xlu0 %3660
        %3662 = vrot.lane.b32.xlu0 %v3648, 32
        %v3663 = vpop.permute.xlu0 %3662
        %3664 = vrot.lane.b32.xlu0 %v3649, 32
        %v3665 = vpop.permute.xlu0 %3664
        %3666 = vrot.lane.b32.xlu0 %v3650, 32
        %v3667 = vpop.permute.xlu0 %3666
        %3668 = vrot.lane.b32.xlu0 %v3651, 32
        %v3669 = vpop.permute.xlu0 %3668
        %v3670 = vsel %vm2709, %v3659, %v3661
        %v3671 = vsel %vm2709, %v3661, %v3663
        %v3672 = vsel %vm2709, %v3665, %v3667
        %v3673 = vsel %vm2709, %v3667, %v3669
        %v3682 = vmul.f32 %v1234, %v3659
        %v3683 = vmul.f32 %v1235, %v3670
        %v3684 = vmul.f32 %v1236, %v3671
        %v3685 = vmul.f32 %v1237, %v3663
        %v3686 = vmul.f32 %v1238, %v3665
        %v3687 = vmul.f32 %v1239, %v3672
        %v3688 = vmul.f32 %v1240, %v3673
        %v3689 = vmul.f32 %v1241, %v3669
        %3698 = vrot.lane.b32.xlu0 %v3682, 46
        %v3699 = vpop.permute.xlu0 %3698
        %3700 = vrot.lane.b32.xlu0 %v3683, 46
        %v3701 = vpop.permute.xlu0 %3700
        %3702 = vrot.lane.b32.xlu0 %v3684, 46
        %v3703 = vpop.permute.xlu0 %3702
        %3704 = vrot.lane.b32.xlu0 %v3685, 46
        %v3705 = vpop.permute.xlu0 %3704
        %3706 = vrot.lane.b32.xlu0 %v3686, 46
        %v3707 = vpop.permute.xlu0 %3706
        %3708 = vrot.lane.b32.xlu0 %v3687, 46
        %v3709 = vpop.permute.xlu0 %3708
        %3710 = vrot.lane.b32.xlu0 %v3688, 46
        %v3711 = vpop.permute.xlu0 %3710
        %3712 = vrot.lane.b32.xlu0 %v3689, 46
        %v3713 = vpop.permute.xlu0 %3712
        %v3714 = vsel %vm2664, %v3699, %v3701
        %v3715 = vsel %vm2664, %v3701, %v3703
        %v3716 = vsel %vm2664, %v3703, %v3705
        %v3717 = vsel %vm2664, %v3707, %v3709
        %v3718 = vsel %vm2664, %v3709, %v3711
        %v3719 = vsel %vm2664, %v3711, %v3713
        %v3728 = vadd.f32 %v3637, %v3699
        %v3729 = vadd.f32 %v3638, %v3714
        %v3730 = vadd.f32 %v3639, %v3715
        %v3731 = vadd.f32 %v3640, %v3716
        %v3732 = vadd.f32 %v3641, %v3707
        %v3733 = vadd.f32 %v3642, %v3717
        %v3734 = vadd.f32 %v3643, %v3718
        %v3735 = vadd.f32 %v3644, %v3719
        %s3736 = scalar_lea.vmem %s4, 144
        %v3737 = vld [vmem:[%s3736] sm:$0xff]
        %v3738 = vld [vmem:[%s3736 + $0x8] sm:$0xff]
        %v3739 = vld [vmem:[%s3736 + $0x10] sm:$0xff]
        %v3740 = vld [vmem:[%s3736 + $0x18] sm:$0xff]
        %v3741 = vld [vmem:[%s3736 + $0x20] sm:$0xff]
        %v3742 = vld [vmem:[%s3736 + $0x28] sm:$0xff]
        %3749 = vrot.lane.b32.xlu0 %v3737, 34
        %v3750 = vpop.permute.xlu0 %3749
        %3751 = vrot.lane.b32.xlu0 %v3738, 34
        %v3752 = vpop.permute.xlu0 %3751
        %3753 = vrot.lane.b32.xlu0 %v3739, 34
        %v3754 = vpop.permute.xlu0 %3753
        %3755 = vrot.lane.b32.xlu0 %v3740, 34
        %v3756 = vpop.permute.xlu0 %3755
        %3757 = vrot.lane.b32.xlu0 %v3741, 34
        %v3758 = vpop.permute.xlu0 %3757
        %3759 = vrot.lane.b32.xlu0 %v3742, 34
        %v3760 = vpop.permute.xlu0 %3759
        %vm3761 = vcmask 277504
        %v3762 = vsel %vm3761, %v3750, %v3752
        %v3763 = vsel %vm3761, %v3752, %v3754
        %v3764 = vsel %vm3761, %v3756, %v3758
        %v3765 = vsel %vm3761, %v3758, %v3760
        %v3774 = vmul.f32 %v1234, %v3750
        %v3775 = vmul.f32 %v1235, %v3762
        %v3776 = vmul.f32 %v1236, %v3763
        %v3777 = vmul.f32 %v1237, %v3754
        %v3778 = vmul.f32 %v1238, %v3756
        %v3779 = vmul.f32 %v1239, %v3764
        %v3780 = vmul.f32 %v1240, %v3765
        %v3781 = vmul.f32 %v1241, %v3760
        %3790 = vrot.lane.b32.xlu0 %v3774, 44
        %v3791 = vpop.permute.xlu0 %3790
        %3792 = vrot.lane.b32.xlu0 %v3775, 44
        %v3793 = vpop.permute.xlu0 %3792
        %3794 = vrot.lane.b32.xlu0 %v3776, 44
        %v3795 = vpop.permute.xlu0 %3794
        %3796 = vrot.lane.b32.xlu0 %v3777, 44
        %v3797 = vpop.permute.xlu0 %3796
        %3798 = vrot.lane.b32.xlu0 %v3778, 44
        %v3799 = vpop.permute.xlu0 %3798
        %3800 = vrot.lane.b32.xlu0 %v3779, 44
        %v3801 = vpop.permute.xlu0 %3800
        %3802 = vrot.lane.b32.xlu0 %v3780, 44
        %v3803 = vpop.permute.xlu0 %3802
        %3804 = vrot.lane.b32.xlu0 %v3781, 44
        %v3805 = vpop.permute.xlu0 %3804
        %vm3806 = vcmask 359424
        %v3807 = vsel %vm3806, %v3791, %v3793
        %v3808 = vsel %vm3806, %v3793, %v3795
        %v3809 = vsel %vm3806, %v3795, %v3797
        %v3810 = vsel %vm3806, %v3799, %v3801
        %v3811 = vsel %vm3806, %v3801, %v3803
        %v3812 = vsel %vm3806, %v3803, %v3805
        %v3821 = vadd.f32 %v3728, %v3791
        %v3822 = vadd.f32 %v3729, %v3807
        %v3823 = vadd.f32 %v3730, %v3808
        %v3824 = vadd.f32 %v3731, %v3809
        %v3825 = vadd.f32 %v3732, %v3799
        %v3826 = vadd.f32 %v3733, %v3810
        %v3827 = vadd.f32 %v3734, %v3811
        %v3828 = vadd.f32 %v3735, %v3812
        %s3829 = scalar_lea.vmem %s4, 192
        %v3830 = vld [vmem:[%s3829] sm:$0xff]
        %v3831 = vld [vmem:[%s3829 + $0x8] sm:$0xff]
        %v3832 = vld [vmem:[%s3829 + $0x10] sm:$0xff]
        %v3833 = vld [vmem:[%s3829 + $0x18] sm:$0xff]
        %v3834 = vld [vmem:[%s3829 + $0x20] sm:$0xff]
        %v3835 = vld [vmem:[%s3829 + $0x28] sm:$0xff]
        %3842 = vrot.lane.b32.xlu0 %v3830, 36
        %v3843 = vpop.permute.xlu0 %3842
        %3844 = vrot.lane.b32.xlu0 %v3831, 36
        %v3845 = vpop.permute.xlu0 %3844
        %3846 = vrot.lane.b32.xlu0 %v3832, 36
        %v3847 = vpop.permute.xlu0 %3846
        %3848 = vrot.lane.b32.xlu0 %v3833, 36
        %v3849 = vpop.permute.xlu0 %3848
        %3850 = vrot.lane.b32.xlu0 %v3834, 36
        %v3851 = vpop.permute.xlu0 %3850
        %3852 = vrot.lane.b32.xlu0 %v3835, 36
        %v3853 = vpop.permute.xlu0 %3852
        %vm3854 = vcmask 293888
        %v3855 = vsel %vm3854, %v3843, %v3845
        %v3856 = vsel %vm3854, %v3845, %v3847
        %v3857 = vsel %vm3854, %v3849, %v3851
        %v3858 = vsel %vm3854, %v3851, %v3853
        %v3867 = vmul.f32 %v1234, %v3843
        %v3868 = vmul.f32 %v1235, %v3855
        %v3869 = vmul.f32 %v1236, %v3856
        %v3870 = vmul.f32 %v1237, %v3847
        %v3871 = vmul.f32 %v1238, %v3849
        %v3872 = vmul.f32 %v1239, %v3857
        %v3873 = vmul.f32 %v1240, %v3858
        %v3874 = vmul.f32 %v1241, %v3853
        %3883 = vrot.lane.b32.xlu0 %v3867, 42
        %v3884 = vpop.permute.xlu0 %3883
        %3885 = vrot.lane.b32.xlu0 %v3868, 42
        %v3886 = vpop.permute.xlu0 %3885
        %3887 = vrot.lane.b32.xlu0 %v3869, 42
        %v3888 = vpop.permute.xlu0 %3887
        %3889 = vrot.lane.b32.xlu0 %v3870, 42
        %v3890 = vpop.permute.xlu0 %3889
        %3891 = vrot.lane.b32.xlu0 %v3871, 42
        %v3892 = vpop.permute.xlu0 %3891
        %3893 = vrot.lane.b32.xlu0 %v3872, 42
        %v3894 = vpop.permute.xlu0 %3893
        %3895 = vrot.lane.b32.xlu0 %v3873, 42
        %v3896 = vpop.permute.xlu0 %3895
        %3897 = vrot.lane.b32.xlu0 %v3874, 42
        %v3898 = vpop.permute.xlu0 %3897
        %vm3899 = vcmask 343040
        %v3900 = vsel %vm3899, %v3884, %v3886
        %v3901 = vsel %vm3899, %v3886, %v3888
        %v3902 = vsel %vm3899, %v3888, %v3890
        %v3903 = vsel %vm3899, %v3892, %v3894
        %v3904 = vsel %vm3899, %v3894, %v3896
        %v3905 = vsel %vm3899, %v3896, %v3898
        %v3914 = vadd.f32 %v3821, %v3884
        %v3915 = vadd.f32 %v3822, %v3900
        %v3916 = vadd.f32 %v3823, %v3901
        %v3917 = vadd.f32 %v3824, %v3902
        %v3918 = vadd.f32 %v3825, %v3892
        %v3919 = vadd.f32 %v3826, %v3903
        %v3920 = vadd.f32 %v3827, %v3904
        %v3921 = vadd.f32 %v3828, %v3905
        %s3922 = scalar_lea.vmem %s4, 240
        %v3923 = vld [vmem:[%s3922] sm:$0xff]
        %v3924 = vld [vmem:[%s3922 + $0x8] sm:$0xff]
        %v3925 = vld [vmem:[%s3922 + $0x10] sm:$0xff]
        %v3926 = vld [vmem:[%s3922 + $0x18] sm:$0xff]
        %v3927 = vld [vmem:[%s3922 + $0x20] sm:$0xff]
        %v3928 = vld [vmem:[%s3922 + $0x28] sm:$0xff]
        %3935 = vrot.lane.b32.xlu0 %v3923, 76
        %v3936 = vpop.permute.xlu0 %3935
        %3937 = vrot.lane.b32.xlu0 %v3924, 76
        %v3938 = vpop.permute.xlu0 %3937
        %3939 = vrot.lane.b32.xlu0 %v3925, 76
        %v3940 = vpop.permute.xlu0 %3939
        %3941 = vrot.lane.b32.xlu0 %v3926, 76
        %v3942 = vpop.permute.xlu0 %3941
        %3943 = vrot.lane.b32.xlu0 %v3927, 76
        %v3944 = vpop.permute.xlu0 %3943
        %3945 = vrot.lane.b32.xlu0 %v3928, 76
        %v3946 = vpop.permute.xlu0 %3945
        %v3947 = vsel %vm2434, %v3936, %v3938
        %v3948 = vsel %vm2434, %v3938, %v3940
        %v3949 = vsel %vm2434, %v3942, %v3944
        %v3950 = vsel %vm2434, %v3944, %v3946
        %v3959 = vmul.f32 %v1234, %v3936
        %v3960 = vmul.f32 %v1235, %v3947
        %v3961 = vmul.f32 %v1236, %v3948
        %v3962 = vmul.f32 %v1237, %v3940
        %v3963 = vmul.f32 %v1238, %v3942
        %v3964 = vmul.f32 %v1239, %v3949
        %v3965 = vmul.f32 %v1240, %v3950
        %v3966 = vmul.f32 %v1241, %v3946
        %3975 = vrot.lane.b32.xlu0 %v3959, 2
        %v3976 = vpop.permute.xlu0 %3975
        %3977 = vrot.lane.b32.xlu0 %v3960, 2
        %v3978 = vpop.permute.xlu0 %3977
        %3979 = vrot.lane.b32.xlu0 %v3961, 2
        %v3980 = vpop.permute.xlu0 %3979
        %3981 = vrot.lane.b32.xlu0 %v3962, 2
        %v3982 = vpop.permute.xlu0 %3981
        %3983 = vrot.lane.b32.xlu0 %v3963, 2
        %v3984 = vpop.permute.xlu0 %3983
        %3985 = vrot.lane.b32.xlu0 %v3964, 2
        %v3986 = vpop.permute.xlu0 %3985
        %3987 = vrot.lane.b32.xlu0 %v3965, 2
        %v3988 = vpop.permute.xlu0 %3987
        %3989 = vrot.lane.b32.xlu0 %v3966, 2
        %v3990 = vpop.permute.xlu0 %3989
        %v3991 = vsel %vm2389, %v3976, %v3978
        %v3992 = vsel %vm2389, %v3978, %v3980
        %v3993 = vsel %vm2389, %v3980, %v3982
        %v3994 = vsel %vm2389, %v3984, %v3986
        %v3995 = vsel %vm2389, %v3986, %v3988
        %v3996 = vsel %vm2389, %v3988, %v3990
        %v4005 = vadd.f32 %v3914, %v3976
        %v4006 = vadd.f32 %v3915, %v3991
        %v4007 = vadd.f32 %v3916, %v3992
        %v4008 = vadd.f32 %v3917, %v3993
        %v4009 = vadd.f32 %v3918, %v3984
        %v4010 = vadd.f32 %v3919, %v3994
        %v4011 = vadd.f32 %v3920, %v3995
        %v4012 = vadd.f32 %v3921, %v3996
        %s4013 = scalar_lea.vmem %s4, 432
        %v4014 = vld [vmem:[%s4013] sm:$0xff]
        %v4015 = vld [vmem:[%s4013 + $0x8] sm:$0xff]
        %v4016 = vld [vmem:[%s4013 + $0x10] sm:$0xff]
        %v4017 = vld [vmem:[%s4013 + $0x18] sm:$0xff]
        %v4018 = vld [vmem:[%s4013 + $0x20] sm:$0xff]
        %v4019 = vld [vmem:[%s4013 + $0x28] sm:$0xff]
        %4026 = vrot.lane.b32.xlu0 %v4014, 84
        %v4027 = vpop.permute.xlu0 %4026
        %4028 = vrot.lane.b32.xlu0 %v4015, 84
        %v4029 = vpop.permute.xlu0 %4028
        %4030 = vrot.lane.b32.xlu0 %v4016, 84
        %v4031 = vpop.permute.xlu0 %4030
        %4032 = vrot.lane.b32.xlu0 %v4017, 84
        %v4033 = vpop.permute.xlu0 %4032
        %4034 = vrot.lane.b32.xlu0 %v4018, 84
        %v4035 = vpop.permute.xlu0 %4034
        %4036 = vrot.lane.b32.xlu0 %v4019, 84
        %v4037 = vpop.permute.xlu0 %4036
        %vm4038 = vcmask 687104
        %v4039 = vsel %vm4038, %v4027, %v4029
        %v4040 = vsel %vm4038, %v4029, %v4031
        %v4041 = vsel %vm4038, %v4033, %v4035
        %v4042 = vsel %vm4038, %v4035, %v4037
        %v4051 = vmul.f32 %v1234, %v4027
        %v4052 = vmul.f32 %v1235, %v4039
        %v4053 = vmul.f32 %v1236, %v4040
        %v4054 = vmul.f32 %v1237, %v4031
        %v4055 = vmul.f32 %v1238, %v4033
        %v4056 = vmul.f32 %v1239, %v4041
        %v4057 = vmul.f32 %v1240, %v4042
        %v4058 = vmul.f32 %v1241, %v4037
        %4067 = vrot.lane.b32.xlu0 %v4051, 122
        %v4068 = vpop.permute.xlu0 %4067
        %4069 = vrot.lane.b32.xlu0 %v4052, 122
        %v4070 = vpop.permute.xlu0 %4069
        %4071 = vrot.lane.b32.xlu0 %v4053, 122
        %v4072 = vpop.permute.xlu0 %4071
        %4073 = vrot.lane.b32.xlu0 %v4054, 122
        %v4074 = vpop.permute.xlu0 %4073
        %4075 = vrot.lane.b32.xlu0 %v4055, 122
        %v4076 = vpop.permute.xlu0 %4075
        %4077 = vrot.lane.b32.xlu0 %v4056, 122
        %v4078 = vpop.permute.xlu0 %4077
        %4079 = vrot.lane.b32.xlu0 %v4057, 122
        %v4080 = vpop.permute.xlu0 %4079
        %4081 = vrot.lane.b32.xlu0 %v4058, 122
        %v4082 = vpop.permute.xlu0 %4081
        %vm4083 = vcmask 998400
        %v4084 = vsel %vm4083, %v4068, %v4070
        %v4085 = vsel %vm4083, %v4070, %v4072
        %v4086 = vsel %vm4083, %v4072, %v4074
        %v4087 = vsel %vm4083, %v4076, %v4078
        %v4088 = vsel %vm4083, %v4078, %v4080
        %v4089 = vsel %vm4083, %v4080, %v4082
        %v4098 = vadd.f32 %v4005, %v4084
        %v4099 = vadd.f32 %v4006, %v4085
        %v4100 = vadd.f32 %v4007, %v4086
        %v4101 = vadd.f32 %v4008, %v4074
        %v4102 = vadd.f32 %v4009, %v4087
        %v4103 = vadd.f32 %v4010, %v4088
        %v4104 = vadd.f32 %v4011, %v4089
        %v4105 = vadd.f32 %v4012, %v4082
        %s4106 = scalar_lea.vmem %s4, 480
        %v4107 = vld [vmem:[%s4106] sm:$0xff]
        %v4108 = vld [vmem:[%s4106 + $0x8] sm:$0xff]
        %v4109 = vld [vmem:[%s4106 + $0x10] sm:$0xff]
        %v4110 = vld [vmem:[%s4106 + $0x18] sm:$0xff]
        %v4111 = vld [vmem:[%s4106 + $0x20] sm:$0xff]
        %v4112 = vld [vmem:[%s4106 + $0x28] sm:$0xff]
        %4119 = vrot.lane.b32.xlu0 %v4107, 124
        %v4120 = vpop.permute.xlu0 %4119
        %4121 = vrot.lane.b32.xlu0 %v4108, 124
        %v4122 = vpop.permute.xlu0 %4121
        %4123 = vrot.lane.b32.xlu0 %v4109, 124
        %v4124 = vpop.permute.xlu0 %4123
        %4125 = vrot.lane.b32.xlu0 %v4110, 124
        %v4126 = vpop.permute.xlu0 %4125
        %4127 = vrot.lane.b32.xlu0 %v4111, 124
        %v4128 = vpop.permute.xlu0 %4127
        %4129 = vrot.lane.b32.xlu0 %v4112, 124
        %v4130 = vpop.permute.xlu0 %4129
        %v4131 = vsel %vm1718, %v4120, %v4122
        %v4132 = vsel %vm1718, %v4122, %v4124
        %v4133 = vsel %vm1718, %v4126, %v4128
        %v4134 = vsel %vm1718, %v4128, %v4130
        %v4143 = vmul.f32 %v1234, %v4120
        %v4144 = vmul.f32 %v1235, %v4131
        %v4145 = vmul.f32 %v1236, %v4132
        %v4146 = vmul.f32 %v1237, %v4124
        %v4147 = vmul.f32 %v1238, %v4126
        %v4148 = vmul.f32 %v1239, %v4133
        %v4149 = vmul.f32 %v1240, %v4134
        %v4150 = vmul.f32 %v1241, %v4130
        %4159 = vrot.lane.b32.xlu0 %v4143, 82
        %v4160 = vpop.permute.xlu0 %4159
        %4161 = vrot.lane.b32.xlu0 %v4144, 82
        %v4162 = vpop.permute.xlu0 %4161
        %4163 = vrot.lane.b32.xlu0 %v4145, 82
        %v4164 = vpop.permute.xlu0 %4163
        %4165 = vrot.lane.b32.xlu0 %v4146, 82
        %v4166 = vpop.permute.xlu0 %4165
        %4167 = vrot.lane.b32.xlu0 %v4147, 82
        %v4168 = vpop.permute.xlu0 %4167
        %4169 = vrot.lane.b32.xlu0 %v4148, 82
        %v4170 = vpop.permute.xlu0 %4169
        %4171 = vrot.lane.b32.xlu0 %v4149, 82
        %v4172 = vpop.permute.xlu0 %4171
        %4173 = vrot.lane.b32.xlu0 %v4150, 82
        %v4174 = vpop.permute.xlu0 %4173
        %v4175 = vsel %vm1673, %v4160, %v4162
        %v4176 = vsel %vm1673, %v4162, %v4164
        %v4177 = vsel %vm1673, %v4164, %v4166
        %v4178 = vsel %vm1673, %v4168, %v4170
        %v4179 = vsel %vm1673, %v4170, %v4172
        %v4180 = vsel %vm1673, %v4172, %v4174
        %v4189 = vadd.f32 %v4098, %v4175
        %v4190 = vadd.f32 %v4099, %v4176
        %v4191 = vadd.f32 %v4100, %v4177
        %v4192 = vadd.f32 %v4101, %v4166
        %v4193 = vadd.f32 %v4102, %v4178
        %v4194 = vadd.f32 %v4103, %v4179
        %v4195 = vadd.f32 %v4104, %v4180
        %v4196 = vadd.f32 %v4105, %v4174
        %s4197 = scalar_lea.vmem %s4, 672
        %v4198 = vld [vmem:[%s4197] sm:$0xff]
        %v4199 = vld [vmem:[%s4197 + $0x8] sm:$0xff]
        %v4200 = vld [vmem:[%s4197 + $0x10] sm:$0xff]
        %v4201 = vld [vmem:[%s4197 + $0x18] sm:$0xff]
        %v4202 = vld [vmem:[%s4197 + $0x20] sm:$0xff]
        %v4203 = vld [vmem:[%s4197 + $0x28] sm:$0xff]
        %4210 = vrot.lane.b32.xlu0 %v4198, 4
        %v4211 = vpop.permute.xlu0 %4210
        %4212 = vrot.lane.b32.xlu0 %v4199, 4
        %v4213 = vpop.permute.xlu0 %4212
        %4214 = vrot.lane.b32.xlu0 %v4200, 4
        %v4215 = vpop.permute.xlu0 %4214
        %4216 = vrot.lane.b32.xlu0 %v4201, 4
        %v4217 = vpop.permute.xlu0 %4216
        %4218 = vrot.lane.b32.xlu0 %v4202, 4
        %v4219 = vpop.permute.xlu0 %4218
        %4220 = vrot.lane.b32.xlu0 %v4203, 4
        %v4221 = vpop.permute.xlu0 %4220
        %vm4222 = vcmask 31744
        %v4223 = vsel %vm4222, %v4211, %v4213
        %v4224 = vsel %vm4222, %v4213, %v4215
        %v4225 = vsel %vm4222, %v4217, %v4219
        %v4226 = vsel %vm4222, %v4219, %v4221
        %v4235 = vmul.f32 %v1235, %v4211
        %v4236 = vmul.f32 %v1236, %v4223
        %v4237 = vmul.f32 %v1237, %v4224
        %v4238 = vmul.f32 %v2362, %v4215
        %v4239 = vmul.f32 %v1239, %v4217
        %v4240 = vmul.f32 %v1240, %v4225
        %v4241 = vmul.f32 %v1241, %v4226
        %v4242 = vmul.f32 %v2363, %v4221
        %4251 = vrot.lane.b32.xlu0 %v4235, 74
        %v4252 = vpop.permute.xlu0 %4251
        %4253 = vrot.lane.b32.xlu0 %v4236, 74
        %v4254 = vpop.permute.xlu0 %4253
        %4255 = vrot.lane.b32.xlu0 %v4237, 74
        %v4256 = vpop.permute.xlu0 %4255
        %4257 = vrot.lane.b32.xlu0 %v4238, 74
        %v4258 = vpop.permute.xlu0 %4257
        %4259 = vrot.lane.b32.xlu0 %v4239, 74
        %v4260 = vpop.permute.xlu0 %4259
        %4261 = vrot.lane.b32.xlu0 %v4240, 74
        %v4262 = vpop.permute.xlu0 %4261
        %4263 = vrot.lane.b32.xlu0 %v4241, 74
        %v4264 = vpop.permute.xlu0 %4263
        %4265 = vrot.lane.b32.xlu0 %v4242, 74
        %v4266 = vpop.permute.xlu0 %4265
        %vm4267 = vcmask 605184
        %v4268 = vsel %vm4267, %v4252, %v4254
        %v4269 = vsel %vm4267, %v4254, %v4256
        %v4270 = vsel %vm4267, %v4256, %v4258
        %v4271 = vsel %vm4267, %v4260, %v4262
        %v4272 = vsel %vm4267, %v4262, %v4264
        %v4273 = vsel %vm4267, %v4264, %v4266
        %v4282 = vadd.f32 %v4189, %v4252
        %v4283 = vadd.f32 %v4190, %v4268
        %v4284 = vadd.f32 %v4191, %v4269
        %v4285 = vadd.f32 %v4192, %v4270
        %v4286 = vadd.f32 %v4193, %v4260
        %v4287 = vadd.f32 %v4194, %v4271
        %v4288 = vadd.f32 %v4195, %v4272
        %v4289 = vadd.f32 %v4196, %v4273
        %s4290 = scalar_lea.vmem %s4, 720
        %v4291 = vld [vmem:[%s4290] sm:$0xff]
        %v4292 = vld [vmem:[%s4290 + $0x8] sm:$0xff]
        %v4293 = vld [vmem:[%s4290 + $0x10] sm:$0xff]
        %v4294 = vld [vmem:[%s4290 + $0x18] sm:$0xff]
        %v4295 = vld [vmem:[%s4290 + $0x20] sm:$0xff]
        %v4296 = vld [vmem:[%s4290 + $0x28] sm:$0xff]
        %4303 = vrot.lane.b32.xlu0 %v4291, 44
        %v4304 = vpop.permute.xlu0 %4303
        %4305 = vrot.lane.b32.xlu0 %v4292, 44
        %v4306 = vpop.permute.xlu0 %4305
        %4307 = vrot.lane.b32.xlu0 %v4293, 44
        %v4308 = vpop.permute.xlu0 %4307
        %4309 = vrot.lane.b32.xlu0 %v4294, 44
        %v4310 = vpop.permute.xlu0 %4309
        %4311 = vrot.lane.b32.xlu0 %v4295, 44
        %v4312 = vpop.permute.xlu0 %4311
        %4313 = vrot.lane.b32.xlu0 %v4296, 44
        %v4314 = vpop.permute.xlu0 %4313
        %v4315 = vsel %vm3806, %v4304, %v4306
        %v4316 = vsel %vm3806, %v4306, %v4308
        %v4317 = vsel %vm3806, %v4310, %v4312
        %v4318 = vsel %vm3806, %v4312, %v4314
        %v4327 = vmul.f32 %v1235, %v4304
        %v4328 = vmul.f32 %v1236, %v4315
        %v4329 = vmul.f32 %v1237, %v4316
        %v4330 = vmul.f32 %v2362, %v4308
        %v4331 = vmul.f32 %v1239, %v4310
        %v4332 = vmul.f32 %v1240, %v4317
        %v4333 = vmul.f32 %v1241, %v4318
        %v4334 = vmul.f32 %v2363, %v4314
        %4343 = vrot.lane.b32.xlu0 %v4327, 34
        %v4344 = vpop.permute.xlu0 %4343
        %4345 = vrot.lane.b32.xlu0 %v4328, 34
        %v4346 = vpop.permute.xlu0 %4345
        %4347 = vrot.lane.b32.xlu0 %v4329, 34
        %v4348 = vpop.permute.xlu0 %4347
        %4349 = vrot.lane.b32.xlu0 %v4330, 34
        %v4350 = vpop.permute.xlu0 %4349
        %4351 = vrot.lane.b32.xlu0 %v4331, 34
        %v4352 = vpop.permute.xlu0 %4351
        %4353 = vrot.lane.b32.xlu0 %v4332, 34
        %v4354 = vpop.permute.xlu0 %4353
        %4355 = vrot.lane.b32.xlu0 %v4333, 34
        %v4356 = vpop.permute.xlu0 %4355
        %4357 = vrot.lane.b32.xlu0 %v4334, 34
        %v4358 = vpop.permute.xlu0 %4357
        %v4359 = vsel %vm3761, %v4344, %v4346
        %v4360 = vsel %vm3761, %v4346, %v4348
        %v4361 = vsel %vm3761, %v4348, %v4350
        %v4362 = vsel %vm3761, %v4352, %v4354
        %v4363 = vsel %vm3761, %v4354, %v4356
        %v4364 = vsel %vm3761, %v4356, %v4358
        %v4373 = vadd.f32 %v4282, %v4344
        %v4374 = vadd.f32 %v4283, %v4359
        %v4375 = vadd.f32 %v4284, %v4360
        %v4376 = vadd.f32 %v4285, %v4361
        %v4377 = vadd.f32 %v4286, %v4352
        %v4378 = vadd.f32 %v4287, %v4362
        %v4379 = vadd.f32 %v4288, %v4363
        %v4380 = vadd.f32 %v4289, %v4364
        %s4381 = scalar_lea.vmem %s4, 912
        %v4382 = vld [vmem:[%s4381] sm:$0xff]
        %v4383 = vld [vmem:[%s4381 + $0x8] sm:$0xff]
        %v4384 = vld [vmem:[%s4381 + $0x10] sm:$0xff]
        %v4385 = vld [vmem:[%s4381 + $0x18] sm:$0xff]
        %v4386 = vld [vmem:[%s4381 + $0x20] sm:$0xff]
        %v4387 = vld [vmem:[%s4381 + $0x28] sm:$0xff]
        %4394 = vrot.lane.b32.xlu0 %v4382, 52
        %v4395 = vpop.permute.xlu0 %4394
        %4396 = vrot.lane.b32.xlu0 %v4383, 52
        %v4397 = vpop.permute.xlu0 %4396
        %4398 = vrot.lane.b32.xlu0 %v4384, 52
        %v4399 = vpop.permute.xlu0 %4398
        %4400 = vrot.lane.b32.xlu0 %v4385, 52
        %v4401 = vpop.permute.xlu0 %4400
        %4402 = vrot.lane.b32.xlu0 %v4386, 52
        %v4403 = vpop.permute.xlu0 %4402
        %4404 = vrot.lane.b32.xlu0 %v4387, 52
        %v4405 = vpop.permute.xlu0 %4404
        %vm4406 = vcmask 424960
        %v4407 = vsel %vm4406, %v4395, %v4397
        %v4408 = vsel %vm4406, %v4397, %v4399
        %v4409 = vsel %vm4406, %v4401, %v4403
        %v4410 = vsel %vm4406, %v4403, %v4405
        %v4419 = vmul.f32 %v1235, %v4395
        %v4420 = vmul.f32 %v1236, %v4407
        %v4421 = vmul.f32 %v1237, %v4408
        %v4422 = vmul.f32 %v2362, %v4399
        %v4423 = vmul.f32 %v1239, %v4401
        %v4424 = vmul.f32 %v1240, %v4409
        %v4425 = vmul.f32 %v1241, %v4410
        %v4426 = vmul.f32 %v2363, %v4405
        %4435 = vrot.lane.b32.xlu0 %v4419, 26
        %v4436 = vpop.permute.xlu0 %4435
        %4437 = vrot.lane.b32.xlu0 %v4420, 26
        %v4438 = vpop.permute.xlu0 %4437
        %4439 = vrot.lane.b32.xlu0 %v4421, 26
        %v4440 = vpop.permute.xlu0 %4439
        %4441 = vrot.lane.b32.xlu0 %v4422, 26
        %v4442 = vpop.permute.xlu0 %4441
        %4443 = vrot.lane.b32.xlu0 %v4423, 26
        %v4444 = vpop.permute.xlu0 %4443
        %4445 = vrot.lane.b32.xlu0 %v4424, 26
        %v4446 = vpop.permute.xlu0 %4445
        %4447 = vrot.lane.b32.xlu0 %v4425, 26
        %v4448 = vpop.permute.xlu0 %4447
        %4449 = vrot.lane.b32.xlu0 %v4426, 26
        %v4450 = vpop.permute.xlu0 %4449
        %vm4451 = vcmask 211968
        %v4452 = vsel %vm4451, %v4436, %v4438
        %v4453 = vsel %vm4451, %v4438, %v4440
        %v4454 = vsel %vm4451, %v4440, %v4442
        %v4455 = vsel %vm4451, %v4444, %v4446
        %v4456 = vsel %vm4451, %v4446, %v4448
        %v4457 = vsel %vm4451, %v4448, %v4450
        %v4466 = vadd.f32 %v4373, %v4436
        %v4467 = vadd.f32 %v4374, %v4452
        %v4468 = vadd.f32 %v4375, %v4453
        %v4469 = vadd.f32 %v4376, %v4454
        %v4470 = vadd.f32 %v4377, %v4444
        %v4471 = vadd.f32 %v4378, %v4455
        %v4472 = vadd.f32 %v4379, %v4456
        %v4473 = vadd.f32 %v4380, %v4457
        %s4474 = scalar_lea.vmem %s4, 960
        %v4475 = vld [vmem:[%s4474] sm:$0xff]
        %v4476 = vld [vmem:[%s4474 + $0x8] sm:$0xff]
        %v4477 = vld [vmem:[%s4474 + $0x10] sm:$0xff]
        %v4478 = vld [vmem:[%s4474 + $0x18] sm:$0xff]
        %v4479 = vld [vmem:[%s4474 + $0x20] sm:$0xff]
        %v4480 = vld [vmem:[%s4474 + $0x28] sm:$0xff]
        %4487 = vrot.lane.b32.xlu0 %v4475, 92
        %v4488 = vpop.permute.xlu0 %4487
        %4489 = vrot.lane.b32.xlu0 %v4476, 92
        %v4490 = vpop.permute.xlu0 %4489
        %4491 = vrot.lane.b32.xlu0 %v4477, 92
        %v4492 = vpop.permute.xlu0 %4491
        %4493 = vrot.lane.b32.xlu0 %v4478, 92
        %v4494 = vpop.permute.xlu0 %4493
        %4495 = vrot.lane.b32.xlu0 %v4479, 92
        %v4496 = vpop.permute.xlu0 %4495
        %4497 = vrot.lane.b32.xlu0 %v4480, 92
        %v4498 = vpop.permute.xlu0 %4497
        %vm4499 = vcmask 752640
        %v4500 = vsel %vm4499, %v4488, %v4490
        %v4501 = vsel %vm4499, %v4490, %v4492
        %v4502 = vsel %vm4499, %v4494, %v4496
        %v4503 = vsel %vm4499, %v4496, %v4498
        %v4512 = vmul.f32 %v1235, %v4488
        %v4513 = vmul.f32 %v1236, %v4500
        %v4514 = vmul.f32 %v1237, %v4501
        %v4515 = vmul.f32 %v2362, %v4492
        %v4516 = vmul.f32 %v1239, %v4494
        %v4517 = vmul.f32 %v1240, %v4502
        %v4518 = vmul.f32 %v1241, %v4503
        %v4519 = vmul.f32 %v2363, %v4498
        %4528 = vrot.lane.b32.xlu0 %v4512, 114
        %v4529 = vpop.permute.xlu0 %4528
        %4530 = vrot.lane.b32.xlu0 %v4513, 114
        %v4531 = vpop.permute.xlu0 %4530
        %4532 = vrot.lane.b32.xlu0 %v4514, 114
        %v4533 = vpop.permute.xlu0 %4532
        %4534 = vrot.lane.b32.xlu0 %v4515, 114
        %v4535 = vpop.permute.xlu0 %4534
        %4536 = vrot.lane.b32.xlu0 %v4516, 114
        %v4537 = vpop.permute.xlu0 %4536
        %4538 = vrot.lane.b32.xlu0 %v4517, 114
        %v4539 = vpop.permute.xlu0 %4538
        %4540 = vrot.lane.b32.xlu0 %v4518, 114
        %v4541 = vpop.permute.xlu0 %4540
        %4542 = vrot.lane.b32.xlu0 %v4519, 114
        %v4543 = vpop.permute.xlu0 %4542
        %vm4544 = vcmask 932864
        %v4545 = vsel %vm4544, %v4529, %v4531
        %v4546 = vsel %vm4544, %v4531, %v4533
        %v4547 = vsel %vm4544, %v4533, %v4535
        %v4548 = vsel %vm4544, %v4537, %v4539
        %v4549 = vsel %vm4544, %v4539, %v4541
        %v4550 = vsel %vm4544, %v4541, %v4543
        %v4559 = vadd.f32 %v4466, %v4545
        %v4560 = vadd.f32 %v4467, %v4546
        %v4561 = vadd.f32 %v4468, %v4547
        %v4562 = vadd.f32 %v4469, %v4535
        %v4563 = vadd.f32 %v4470, %v4548
        %v4564 = vadd.f32 %v4471, %v4549
        %v4565 = vadd.f32 %v4472, %v4550
        %v4566 = vadd.f32 %v4473, %v4543
        %s4567 = scalar_lea.vmem %s4, 1008
        %v4568 = vld [vmem:[%s4567] sm:$0xff]
        %v4569 = vld [vmem:[%s4567 + $0x8] sm:$0xff]
        %v4570 = vld [vmem:[%s4567 + $0x10] sm:$0xff]
        %v4571 = vld [vmem:[%s4567 + $0x18] sm:$0xff]
        %v4572 = vld [vmem:[%s4567 + $0x20] sm:$0xff]
        %v4573 = vld [vmem:[%s4567 + $0x28] sm:$0xff]
        %4580 = vrot.lane.b32.xlu0 %v4568, 94
        %v4581 = vpop.permute.xlu0 %4580
        %4582 = vrot.lane.b32.xlu0 %v4569, 94
        %v4583 = vpop.permute.xlu0 %4582
        %4584 = vrot.lane.b32.xlu0 %v4570, 94
        %v4585 = vpop.permute.xlu0 %4584
        %4586 = vrot.lane.b32.xlu0 %v4571, 94
        %v4587 = vpop.permute.xlu0 %4586
        %4588 = vrot.lane.b32.xlu0 %v4572, 94
        %v4589 = vpop.permute.xlu0 %4588
        %4590 = vrot.lane.b32.xlu0 %v4573, 94
        %v4591 = vpop.permute.xlu0 %4590
        %vm4592 = vcmask 769024
        %v4593 = vsel %vm4592, %v4581, %v4583
        %v4594 = vsel %vm4592, %v4583, %v4585
        %v4595 = vsel %vm4592, %v4587, %v4589
        %v4596 = vsel %vm4592, %v4589, %v4591
        %v4605 = vmul.f32 %v1235, %v4581
        %v4606 = vmul.f32 %v1236, %v4593
        %v4607 = vmul.f32 %v1237, %v4594
        %v4608 = vmul.f32 %v2362, %v4585
        %v4609 = vmul.f32 %v1239, %v4587
        %v4610 = vmul.f32 %v1240, %v4595
        %v4611 = vmul.f32 %v1241, %v4596
        %v4612 = vmul.f32 %v2363, %v4591
        %4621 = vrot.lane.b32.xlu0 %v4605, 112
        %v4622 = vpop.permute.xlu0 %4621
        %4623 = vrot.lane.b32.xlu0 %v4606, 112
        %v4624 = vpop.permute.xlu0 %4623
        %4625 = vrot.lane.b32.xlu0 %v4607, 112
        %v4626 = vpop.permute.xlu0 %4625
        %4627 = vrot.lane.b32.xlu0 %v4608, 112
        %v4628 = vpop.permute.xlu0 %4627
        %4629 = vrot.lane.b32.xlu0 %v4609, 112
        %v4630 = vpop.permute.xlu0 %4629
        %4631 = vrot.lane.b32.xlu0 %v4610, 112
        %v4632 = vpop.permute.xlu0 %4631
        %4633 = vrot.lane.b32.xlu0 %v4611, 112
        %v4634 = vpop.permute.xlu0 %4633
        %4635 = vrot.lane.b32.xlu0 %v4612, 112
        %v4636 = vpop.permute.xlu0 %4635
        %vm4637 = vcmask 916480
        %v4638 = vsel %vm4637, %v4622, %v4624
        %v4639 = vsel %vm4637, %v4624, %v4626
        %v4640 = vsel %vm4637, %v4626, %v4628
        %v4641 = vsel %vm4637, %v4630, %v4632
        %v4642 = vsel %vm4637, %v4632, %v4634
        %v4643 = vsel %vm4637, %v4634, %v4636
        %v4652 = vadd.f32 %v4559, %v4638
        %v4653 = vadd.f32 %v4560, %v4639
        %v4654 = vadd.f32 %v4561, %v4640
        %v4655 = vadd.f32 %v4562, %v4628
        %v4656 = vadd.f32 %v4563, %v4641
        %v4657 = vadd.f32 %v4564, %v4642
        %v4658 = vadd.f32 %v4565, %v4643
        %v4659 = vadd.f32 %v4566, %v4636
        %s4660 = scalar_lea.vmem %s4, 1056
        %v4661 = vld [vmem:[%s4660] sm:$0xff]
        %v4662 = vld [vmem:[%s4660 + $0x8] sm:$0xff]
        %v4663 = vld [vmem:[%s4660 + $0x10] sm:$0xff]
        %v4664 = vld [vmem:[%s4660 + $0x18] sm:$0xff]
        %v4665 = vld [vmem:[%s4660 + $0x20] sm:$0xff]
        %v4666 = vld [vmem:[%s4660 + $0x28] sm:$0xff]
        %4673 = vrot.lane.b32.xlu0 %v4661, 96
        %v4674 = vpop.permute.xlu0 %4673
        %4675 = vrot.lane.b32.xlu0 %v4662, 96
        %v4676 = vpop.permute.xlu0 %4675
        %4677 = vrot.lane.b32.xlu0 %v4663, 96
        %v4678 = vpop.permute.xlu0 %4677
        %4679 = vrot.lane.b32.xlu0 %v4664, 96
        %v4680 = vpop.permute.xlu0 %4679
        %4681 = vrot.lane.b32.xlu0 %v4665, 96
        %v4682 = vpop.permute.xlu0 %4681
        %4683 = vrot.lane.b32.xlu0 %v4666, 96
        %v4684 = vpop.permute.xlu0 %4683
        %vm4685 = vcmask 785408
        %v4686 = vsel %vm4685, %v4674, %v4676
        %v4687 = vsel %vm4685, %v4676, %v4678
        %v4688 = vsel %vm4685, %v4680, %v4682
        %v4689 = vsel %vm4685, %v4682, %v4684
        %v4698 = vmul.f32 %v1235, %v4674
        %v4699 = vmul.f32 %v1236, %v4686
        %v4700 = vmul.f32 %v1237, %v4687
        %v4701 = vmul.f32 %v2362, %v4678
        %v4702 = vmul.f32 %v1239, %v4680
        %v4703 = vmul.f32 %v1240, %v4688
        %v4704 = vmul.f32 %v1241, %v4689
        %v4705 = vmul.f32 %v2363, %v4684
        %4714 = vrot.lane.b32.xlu0 %v4698, 110
        %v4715 = vpop.permute.xlu0 %4714
        %4716 = vrot.lane.b32.xlu0 %v4699, 110
        %v4717 = vpop.permute.xlu0 %4716
        %4718 = vrot.lane.b32.xlu0 %v4700, 110
        %v4719 = vpop.permute.xlu0 %4718
        %4720 = vrot.lane.b32.xlu0 %v4701, 110
        %v4721 = vpop.permute.xlu0 %4720
        %4722 = vrot.lane.b32.xlu0 %v4702, 110
        %v4723 = vpop.permute.xlu0 %4722
        %4724 = vrot.lane.b32.xlu0 %v4703, 110
        %v4725 = vpop.permute.xlu0 %4724
        %4726 = vrot.lane.b32.xlu0 %v4704, 110
        %v4727 = vpop.permute.xlu0 %4726
        %4728 = vrot.lane.b32.xlu0 %v4705, 110
        %v4729 = vpop.permute.xlu0 %4728
        %vm4730 = vcmask 900096
        %v4731 = vsel %vm4730, %v4715, %v4717
        %v4732 = vsel %vm4730, %v4717, %v4719
        %v4733 = vsel %vm4730, %v4719, %v4721
        %v4734 = vsel %vm4730, %v4723, %v4725
        %v4735 = vsel %vm4730, %v4725, %v4727
        %v4736 = vsel %vm4730, %v4727, %v4729
        %v4745 = vadd.f32 %v4652, %v4731
        %v4746 = vadd.f32 %v4653, %v4732
        %v4747 = vadd.f32 %v4654, %v4733
        %v4748 = vadd.f32 %v4655, %v4721
        %v4749 = vadd.f32 %v4656, %v4734
        %v4750 = vadd.f32 %v4657, %v4735
        %v4751 = vadd.f32 %v4658, %v4736
        %v4752 = vadd.f32 %v4659, %v4729
        %s4753 = scalar_lea.vmem %s4, 1104
        %v4754 = vld [vmem:[%s4753] sm:$0xff]
        %v4755 = vld [vmem:[%s4753 + $0x8] sm:$0xff]
        %v4756 = vld [vmem:[%s4753 + $0x10] sm:$0xff]
        %v4757 = vld [vmem:[%s4753 + $0x18] sm:$0xff]
        %v4758 = vld [vmem:[%s4753 + $0x20] sm:$0xff]
        %v4759 = vld [vmem:[%s4753 + $0x28] sm:$0xff]
        %4766 = vrot.lane.b32.xlu0 %v4754, 98
        %v4767 = vpop.permute.xlu0 %4766
        %4768 = vrot.lane.b32.xlu0 %v4755, 98
        %v4769 = vpop.permute.xlu0 %4768
        %4770 = vrot.lane.b32.xlu0 %v4756, 98
        %v4771 = vpop.permute.xlu0 %4770
        %4772 = vrot.lane.b32.xlu0 %v4757, 98
        %v4773 = vpop.permute.xlu0 %4772
        %4774 = vrot.lane.b32.xlu0 %v4758, 98
        %v4775 = vpop.permute.xlu0 %4774
        %4776 = vrot.lane.b32.xlu0 %v4759, 98
        %v4777 = vpop.permute.xlu0 %4776
        %vm4778 = vcmask 801792
        %v4779 = vsel %vm4778, %v4767, %v4769
        %v4780 = vsel %vm4778, %v4769, %v4771
        %v4781 = vsel %vm4778, %v4773, %v4775
        %v4782 = vsel %vm4778, %v4775, %v4777
        %v4791 = vmul.f32 %v1235, %v4767
        %v4792 = vmul.f32 %v1236, %v4779
        %v4793 = vmul.f32 %v1237, %v4780
        %v4794 = vmul.f32 %v2362, %v4771
        %v4795 = vmul.f32 %v1239, %v4773
        %v4796 = vmul.f32 %v1240, %v4781
        %v4797 = vmul.f32 %v1241, %v4782
        %v4798 = vmul.f32 %v2363, %v4777
        %4807 = vrot.lane.b32.xlu0 %v4791, 108
        %v4808 = vpop.permute.xlu0 %4807
        %4809 = vrot.lane.b32.xlu0 %v4792, 108
        %v4810 = vpop.permute.xlu0 %4809
        %4811 = vrot.lane.b32.xlu0 %v4793, 108
        %v4812 = vpop.permute.xlu0 %4811
        %4813 = vrot.lane.b32.xlu0 %v4794, 108
        %v4814 = vpop.permute.xlu0 %4813
        %4815 = vrot.lane.b32.xlu0 %v4795, 108
        %v4816 = vpop.permute.xlu0 %4815
        %4817 = vrot.lane.b32.xlu0 %v4796, 108
        %v4818 = vpop.permute.xlu0 %4817
        %4819 = vrot.lane.b32.xlu0 %v4797, 108
        %v4820 = vpop.permute.xlu0 %4819
        %4821 = vrot.lane.b32.xlu0 %v4798, 108
        %v4822 = vpop.permute.xlu0 %4821
        %vm4823 = vcmask 883712
        %v4824 = vsel %vm4823, %v4808, %v4810
        %v4825 = vsel %vm4823, %v4810, %v4812
        %v4826 = vsel %vm4823, %v4812, %v4814
        %v4827 = vsel %vm4823, %v4816, %v4818
        %v4828 = vsel %vm4823, %v4818, %v4820
        %v4829 = vsel %vm4823, %v4820, %v4822
        %v4838 = vadd.f32 %v4745, %v4824
        %v4839 = vadd.f32 %v4746, %v4825
        %v4840 = vadd.f32 %v4747, %v4826
        %v4841 = vadd.f32 %v4748, %v4814
        %v4842 = vadd.f32 %v4749, %v4827
        %v4843 = vadd.f32 %v4750, %v4828
        %v4844 = vadd.f32 %v4751, %v4829
        %v4845 = vadd.f32 %v4752, %v4822
        %s4846 = scalar_lea.vmem %s4, 1152
        %v4847 = vld [vmem:[%s4846] sm:$0xff]
        %v4848 = vld [vmem:[%s4846 + $0x8] sm:$0xff]
        %v4849 = vld [vmem:[%s4846 + $0x10] sm:$0xff]
        %v4850 = vld [vmem:[%s4846 + $0x18] sm:$0xff]
        %v4851 = vld [vmem:[%s4846 + $0x20] sm:$0xff]
        %v4852 = vld [vmem:[%s4846 + $0x28] sm:$0xff]
        %4859 = vrot.lane.b32.xlu0 %v4847, 100
        %v4860 = vpop.permute.xlu0 %4859
        %4861 = vrot.lane.b32.xlu0 %v4848, 100
        %v4862 = vpop.permute.xlu0 %4861
        %4863 = vrot.lane.b32.xlu0 %v4849, 100
        %v4864 = vpop.permute.xlu0 %4863
        %4865 = vrot.lane.b32.xlu0 %v4850, 100
        %v4866 = vpop.permute.xlu0 %4865
        %4867 = vrot.lane.b32.xlu0 %v4851, 100
        %v4868 = vpop.permute.xlu0 %4867
        %4869 = vrot.lane.b32.xlu0 %v4852, 100
        %v4870 = vpop.permute.xlu0 %4869
        %v4871 = vsel %vm418, %v4860, %v4862
        %v4872 = vsel %vm418, %v4862, %v4864
        %v4873 = vsel %vm418, %v4866, %v4868
        %v4874 = vsel %vm418, %v4868, %v4870
        %v4883 = vmul.f32 %v1235, %v4860
        %v4884 = vmul.f32 %v1236, %v4871
        %v4885 = vmul.f32 %v1237, %v4872
        %v4886 = vmul.f32 %v2362, %v4864
        %v4887 = vmul.f32 %v1239, %v4866
        %v4888 = vmul.f32 %v1240, %v4873
        %v4889 = vmul.f32 %v1241, %v4874
        %v4890 = vmul.f32 %v2363, %v4870
        %4899 = vrot.lane.b32.xlu0 %v4883, 106
        %v4900 = vpop.permute.xlu0 %4899
        %4901 = vrot.lane.b32.xlu0 %v4884, 106
        %v4902 = vpop.permute.xlu0 %4901
        %4903 = vrot.lane.b32.xlu0 %v4885, 106
        %v4904 = vpop.permute.xlu0 %4903
        %4905 = vrot.lane.b32.xlu0 %v4886, 106
        %v4906 = vpop.permute.xlu0 %4905
        %4907 = vrot.lane.b32.xlu0 %v4887, 106
        %v4908 = vpop.permute.xlu0 %4907
        %4909 = vrot.lane.b32.xlu0 %v4888, 106
        %v4910 = vpop.permute.xlu0 %4909
        %4911 = vrot.lane.b32.xlu0 %v4889, 106
        %v4912 = vpop.permute.xlu0 %4911
        %4913 = vrot.lane.b32.xlu0 %v4890, 106
        %v4914 = vpop.permute.xlu0 %4913
        %vm4915 = vcmask 867328
        %v4916 = vsel %vm4915, %v4900, %v4902
        %v4917 = vsel %vm4915, %v4902, %v4904
        %v4918 = vsel %vm4915, %v4904, %v4906
        %v4919 = vsel %vm4915, %v4908, %v4910
        %v4920 = vsel %vm4915, %v4910, %v4912
        %v4921 = vsel %vm4915, %v4912, %v4914
        %v4930 = vadd.f32 %v4838, %v4916
        %v4931 = vadd.f32 %v4839, %v4917
        %v4932 = vadd.f32 %v4840, %v4918
        %v4933 = vadd.f32 %v4841, %v4906
        %v4934 = vadd.f32 %v4842, %v4919
        %v4935 = vadd.f32 %v4843, %v4920
        %v4936 = vadd.f32 %v4844, %v4921
        %v4937 = vadd.f32 %v4845, %v4914
        %v4938 = vld [vmem:[%s5] sm:$0xff]
        %v4939 = vld [vmem:[%s5 + $0x8] sm:$0xff]
        %v4940 = vld [vmem:[%s5 + $0x10] sm:$0xff]
        %v4941 = vld [vmem:[%s5 + $0x18] sm:$0xff]
        %v4942 = vld [vmem:[%s5 + $0x20] sm:$0xff]
        %v4943 = vld [vmem:[%s5 + $0x28] sm:$0xff]
        %4950 = vrot.lane.b32.xlu0 %v4938, 103
        %v4951 = vpop.permute.xlu0 %4950
        %4952 = vrot.lane.b32.xlu0 %v4939, 103
        %v4953 = vpop.permute.xlu0 %4952
        %4954 = vrot.lane.b32.xlu0 %v4940, 103
        %v4955 = vpop.permute.xlu0 %4954
        %4956 = vrot.lane.b32.xlu0 %v4941, 103
        %v4957 = vpop.permute.xlu0 %4956
        %4958 = vrot.lane.b32.xlu0 %v4942, 103
        %v4959 = vpop.permute.xlu0 %4958
        %4960 = vrot.lane.b32.xlu0 %v4943, 103
        %v4961 = vpop.permute.xlu0 %4960
        %v4962 = vsel %vm600, %v4951, %v4953
        %v4963 = vsel %vm600, %v4953, %v4955
        %v4964 = vsel %vm600, %v4957, %v4959
        %v4965 = vsel %vm600, %v4959, %v4961
        %v4974 = vmul.f32 %v1234, %v4951
        %v4975 = vmul.f32 %v1235, %v4962
        %v4976 = vmul.f32 %v1236, %v4963
        %v4977 = vmul.f32 %v1237, %v4955
        %v4978 = vmul.f32 %v1238, %v4957
        %v4979 = vmul.f32 %v1239, %v4964
        %v4980 = vmul.f32 %v1240, %v4965
        %v4981 = vmul.f32 %v1241, %v4961
        %4990 = vrot.lane.b32.xlu0 %v4974, 25
        %v4991 = vpop.permute.xlu0 %4990
        %4992 = vrot.lane.b32.xlu0 %v4975, 25
        %v4993 = vpop.permute.xlu0 %4992
        %4994 = vrot.lane.b32.xlu0 %v4976, 25
        %v4995 = vpop.permute.xlu0 %4994
        %4996 = vrot.lane.b32.xlu0 %v4977, 25
        %v4997 = vpop.permute.xlu0 %4996
        %4998 = vrot.lane.b32.xlu0 %v4978, 25
        %v4999 = vpop.permute.xlu0 %4998
        %5000 = vrot.lane.b32.xlu0 %v4979, 25
        %v5001 = vpop.permute.xlu0 %5000
        %5002 = vrot.lane.b32.xlu0 %v4980, 25
        %v5003 = vpop.permute.xlu0 %5002
        %5004 = vrot.lane.b32.xlu0 %v4981, 25
        %v5005 = vpop.permute.xlu0 %5004
        %vm5006 = vcmask 203776
        %v5007 = vsel %vm5006, %v4991, %v4993
        %v5008 = vsel %vm5006, %v4993, %v4995
        %v5009 = vsel %vm5006, %v4995, %v4997
        %v5010 = vsel %vm5006, %v4999, %v5001
        %v5011 = vsel %vm5006, %v5001, %v5003
        %v5012 = vsel %vm5006, %v5003, %v5005
        %v5019 = vadd.f32 %v2305, %v5007
        %v5020 = vadd.f32 %v2306, %v5008
        %v5021 = vadd.f32 %v2307, %v5009
        %v5022 = vadd.f32 %v2308, %v5010
        %v5023 = vadd.f32 %v2309, %v5011
        %v5024 = vadd.f32 %v2310, %v5012
        %s5025 = scalar_lea.vmem %s6, 288
        %v5026 = vld [vmem:[%s5025] sm:$0xff]
        %v5027 = vld [vmem:[%s5025 + $0x8] sm:$0xff]
        %v5028 = vld [vmem:[%s5025 + $0x10] sm:$0xff]
        %v5029 = vld [vmem:[%s5025 + $0x18] sm:$0xff]
        %v5030 = vld [vmem:[%s5025 + $0x20] sm:$0xff]
        %v5031 = vld [vmem:[%s5025 + $0x28] sm:$0xff]
        %5038 = vrot.lane.b32.xlu0 %v5026, 103
        %v5039 = vpop.permute.xlu0 %5038
        %5040 = vrot.lane.b32.xlu0 %v5027, 103
        %v5041 = vpop.permute.xlu0 %5040
        %5042 = vrot.lane.b32.xlu0 %v5028, 103
        %v5043 = vpop.permute.xlu0 %5042
        %5044 = vrot.lane.b32.xlu0 %v5029, 103
        %v5045 = vpop.permute.xlu0 %5044
        %5046 = vrot.lane.b32.xlu0 %v5030, 103
        %v5047 = vpop.permute.xlu0 %5046
        %5048 = vrot.lane.b32.xlu0 %v5031, 103
        %v5049 = vpop.permute.xlu0 %5048
        %v5050 = vsel %vm600, %v5039, %v5041
        %v5051 = vsel %vm600, %v5041, %v5043
        %v5052 = vsel %vm600, %v5045, %v5047
        %v5053 = vsel %vm600, %v5047, %v5049
        %v5062 = vmul.f32 %v1234, %v5039
        %v5063 = vmul.f32 %v1235, %v5050
        %v5064 = vmul.f32 %v1236, %v5051
        %v5065 = vmul.f32 %v1237, %v5043
        %v5066 = vmul.f32 %v1238, %v5045
        %v5067 = vmul.f32 %v1239, %v5052
        %v5068 = vmul.f32 %v1240, %v5053
        %v5069 = vmul.f32 %v1241, %v5049
        %5078 = vrot.lane.b32.xlu0 %v5062, 103
        %v5079 = vpop.permute.xlu0 %5078
        %5080 = vrot.lane.b32.xlu0 %v5063, 103
        %v5081 = vpop.permute.xlu0 %5080
        %5082 = vrot.lane.b32.xlu0 %v5064, 103
        %v5083 = vpop.permute.xlu0 %5082
        %5084 = vrot.lane.b32.xlu0 %v5065, 103
        %v5085 = vpop.permute.xlu0 %5084
        %5086 = vrot.lane.b32.xlu0 %v5066, 103
        %v5087 = vpop.permute.xlu0 %5086
        %5088 = vrot.lane.b32.xlu0 %v5067, 103
        %v5089 = vpop.permute.xlu0 %5088
        %5090 = vrot.lane.b32.xlu0 %v5068, 103
        %v5091 = vpop.permute.xlu0 %5090
        %5092 = vrot.lane.b32.xlu0 %v5069, 103
        %v5093 = vpop.permute.xlu0 %5092
        %v5094 = vsel %vm600, %v5079, %v5081
        %v5095 = vsel %vm600, %v5081, %v5083
        %v5096 = vsel %vm600, %v5083, %v5085
        %v5097 = vsel %vm600, %v5087, %v5089
        %v5098 = vsel %vm600, %v5089, %v5091
        %v5099 = vsel %vm600, %v5091, %v5093
        %v5108 = vadd.f32 %v3456, %v5094
        %v5109 = vadd.f32 %v3457, %v5095
        %v5110 = vadd.f32 %v3458, %v5096
        %v5111 = vadd.f32 %v3459, %v5085
        %v5112 = vadd.f32 %v3460, %v5097
        %v5113 = vadd.f32 %v3461, %v5098
        %v5114 = vadd.f32 %v3462, %v5099
        %v5115 = vadd.f32 %v3463, %v5093
        %s5116 = scalar_lea.vmem %s5, 48
        %v5117 = vld [vmem:[%s5116] sm:$0xff]
        %v5118 = vld [vmem:[%s5116 + $0x8] sm:$0xff]
        %v5119 = vld [vmem:[%s5116 + $0x10] sm:$0xff]
        %v5120 = vld [vmem:[%s5116 + $0x18] sm:$0xff]
        %v5121 = vld [vmem:[%s5116 + $0x20] sm:$0xff]
        %v5122 = vld [vmem:[%s5116 + $0x28] sm:$0xff]
        %5129 = vrot.lane.b32.xlu0 %v5117, 104
        %v5130 = vpop.permute.xlu0 %5129
        %5131 = vrot.lane.b32.xlu0 %v5118, 104
        %v5132 = vpop.permute.xlu0 %5131
        %5133 = vrot.lane.b32.xlu0 %v5119, 104
        %v5134 = vpop.permute.xlu0 %5133
        %5135 = vrot.lane.b32.xlu0 %v5120, 104
        %v5136 = vpop.permute.xlu0 %5135
        %5137 = vrot.lane.b32.xlu0 %v5121, 104
        %v5138 = vpop.permute.xlu0 %5137
        %5139 = vrot.lane.b32.xlu0 %v5122, 104
        %v5140 = vpop.permute.xlu0 %5139
        %v5141 = vsel %vm565, %v5130, %v5132
        %v5142 = vsel %vm565, %v5132, %v5134
        %v5143 = vsel %vm565, %v5136, %v5138
        %v5144 = vsel %vm565, %v5138, %v5140
        %v5153 = vmul.f32 %v1234, %v5130
        %v5154 = vmul.f32 %v1235, %v5141
        %v5155 = vmul.f32 %v1236, %v5142
        %v5156 = vmul.f32 %v1237, %v5134
        %v5157 = vmul.f32 %v1238, %v5136
        %v5158 = vmul.f32 %v1239, %v5143
        %v5159 = vmul.f32 %v1240, %v5144
        %v5160 = vmul.f32 %v1241, %v5140
        %5169 = vrot.lane.b32.xlu0 %v5153, 24
        %v5170 = vpop.permute.xlu0 %5169
        %5171 = vrot.lane.b32.xlu0 %v5154, 24
        %v5172 = vpop.permute.xlu0 %5171
        %5173 = vrot.lane.b32.xlu0 %v5155, 24
        %v5174 = vpop.permute.xlu0 %5173
        %5175 = vrot.lane.b32.xlu0 %v5156, 24
        %v5176 = vpop.permute.xlu0 %5175
        %5177 = vrot.lane.b32.xlu0 %v5157, 24
        %v5178 = vpop.permute.xlu0 %5177
        %5179 = vrot.lane.b32.xlu0 %v5158, 24
        %v5180 = vpop.permute.xlu0 %5179
        %5181 = vrot.lane.b32.xlu0 %v5159, 24
        %v5182 = vpop.permute.xlu0 %5181
        %5183 = vrot.lane.b32.xlu0 %v5160, 24
        %v5184 = vpop.permute.xlu0 %5183
        %vm5185 = vcmask 195584
        %v5186 = vsel %vm5185, %v5170, %v5172
        %v5187 = vsel %vm5185, %v5172, %v5174
        %v5188 = vsel %vm5185, %v5174, %v5176
        %v5189 = vsel %vm5185, %v5178, %v5180
        %v5190 = vsel %vm5185, %v5180, %v5182
        %v5191 = vsel %vm5185, %v5182, %v5184
        %v5198 = vadd.f32 %v5019, %v5186
        %v5199 = vadd.f32 %v5020, %v5187
        %v5200 = vadd.f32 %v5021, %v5188
        %v5201 = vadd.f32 %v5022, %v5189
        %v5202 = vadd.f32 %v5023, %v5190
        %v5203 = vadd.f32 %v5024, %v5191
        %s5204 = scalar_lea.vmem %s6, 336
        %v5205 = vld [vmem:[%s5204] sm:$0xff]
        %v5206 = vld [vmem:[%s5204 + $0x8] sm:$0xff]
        %v5207 = vld [vmem:[%s5204 + $0x10] sm:$0xff]
        %v5208 = vld [vmem:[%s5204 + $0x18] sm:$0xff]
        %v5209 = vld [vmem:[%s5204 + $0x20] sm:$0xff]
        %v5210 = vld [vmem:[%s5204 + $0x28] sm:$0xff]
        %5217 = vrot.lane.b32.xlu0 %v5205, 104
        %v5218 = vpop.permute.xlu0 %5217
        %5219 = vrot.lane.b32.xlu0 %v5206, 104
        %v5220 = vpop.permute.xlu0 %5219
        %5221 = vrot.lane.b32.xlu0 %v5207, 104
        %v5222 = vpop.permute.xlu0 %5221
        %5223 = vrot.lane.b32.xlu0 %v5208, 104
        %v5224 = vpop.permute.xlu0 %5223
        %5225 = vrot.lane.b32.xlu0 %v5209, 104
        %v5226 = vpop.permute.xlu0 %5225
        %5227 = vrot.lane.b32.xlu0 %v5210, 104
        %v5228 = vpop.permute.xlu0 %5227
        %v5229 = vsel %vm565, %v5218, %v5220
        %v5230 = vsel %vm565, %v5220, %v5222
        %v5231 = vsel %vm565, %v5224, %v5226
        %v5232 = vsel %vm565, %v5226, %v5228
        %v5241 = vmul.f32 %v1234, %v5218
        %v5242 = vmul.f32 %v1235, %v5229
        %v5243 = vmul.f32 %v1236, %v5230
        %v5244 = vmul.f32 %v1237, %v5222
        %v5245 = vmul.f32 %v1238, %v5224
        %v5246 = vmul.f32 %v1239, %v5231
        %v5247 = vmul.f32 %v1240, %v5232
        %v5248 = vmul.f32 %v1241, %v5228
        %5257 = vrot.lane.b32.xlu0 %v5241, 102
        %v5258 = vpop.permute.xlu0 %5257
        %5259 = vrot.lane.b32.xlu0 %v5242, 102
        %v5260 = vpop.permute.xlu0 %5259
        %5261 = vrot.lane.b32.xlu0 %v5243, 102
        %v5262 = vpop.permute.xlu0 %5261
        %5263 = vrot.lane.b32.xlu0 %v5244, 102
        %v5264 = vpop.permute.xlu0 %5263
        %5265 = vrot.lane.b32.xlu0 %v5245, 102
        %v5266 = vpop.permute.xlu0 %5265
        %5267 = vrot.lane.b32.xlu0 %v5246, 102
        %v5268 = vpop.permute.xlu0 %5267
        %5269 = vrot.lane.b32.xlu0 %v5247, 102
        %v5270 = vpop.permute.xlu0 %5269
        %5271 = vrot.lane.b32.xlu0 %v5248, 102
        %v5272 = vpop.permute.xlu0 %5271
        %v5273 = vsel %vm641, %v5258, %v5260
        %v5274 = vsel %vm641, %v5260, %v5262
        %v5275 = vsel %vm641, %v5262, %v5264
        %v5276 = vsel %vm641, %v5266, %v5268
        %v5277 = vsel %vm641, %v5268, %v5270
        %v5278 = vsel %vm641, %v5270, %v5272
        %v5287 = vadd.f32 %v5108, %v5273
        %v5288 = vadd.f32 %v5109, %v5274
        %v5289 = vadd.f32 %v5110, %v5275
        %v5290 = vadd.f32 %v5111, %v5264
        %v5291 = vadd.f32 %v5112, %v5276
        %v5292 = vadd.f32 %v5113, %v5277
        %v5293 = vadd.f32 %v5114, %v5278
        %v5294 = vadd.f32 %v5115, %v5272
        %s5295 = scalar_lea.vmem %s5, 96
        %v5296 = vld [vmem:[%s5295] sm:$0xff]
        %v5297 = vld [vmem:[%s5295 + $0x8] sm:$0xff]
        %v5298 = vld [vmem:[%s5295 + $0x10] sm:$0xff]
        %v5299 = vld [vmem:[%s5295 + $0x18] sm:$0xff]
        %v5300 = vld [vmem:[%s5295 + $0x20] sm:$0xff]
        %v5301 = vld [vmem:[%s5295 + $0x28] sm:$0xff]
        %5308 = vrot.lane.b32.xlu0 %v5296, 105
        %v5309 = vpop.permute.xlu0 %5308
        %5310 = vrot.lane.b32.xlu0 %v5297, 105
        %v5311 = vpop.permute.xlu0 %5310
        %5312 = vrot.lane.b32.xlu0 %v5298, 105
        %v5313 = vpop.permute.xlu0 %5312
        %5314 = vrot.lane.b32.xlu0 %v5299, 105
        %v5315 = vpop.permute.xlu0 %5314
        %5316 = vrot.lane.b32.xlu0 %v5300, 105
        %v5317 = vpop.permute.xlu0 %5316
        %5318 = vrot.lane.b32.xlu0 %v5301, 105
        %v5319 = vpop.permute.xlu0 %5318
        %vm5320 = vcmask 859136
        %v5321 = vsel %vm5320, %v5309, %v5311
        %v5322 = vsel %vm5320, %v5311, %v5313
        %v5323 = vsel %vm5320, %v5315, %v5317
        %v5324 = vsel %vm5320, %v5317, %v5319
        %v5333 = vmul.f32 %v1234, %v5309
        %v5334 = vmul.f32 %v1235, %v5321
        %v5335 = vmul.f32 %v1236, %v5322
        %v5336 = vmul.f32 %v1237, %v5313
        %v5337 = vmul.f32 %v1238, %v5315
        %v5338 = vmul.f32 %v1239, %v5323
        %v5339 = vmul.f32 %v1240, %v5324
        %v5340 = vmul.f32 %v1241, %v5319
        %5349 = vrot.lane.b32.xlu0 %v5333, 23
        %v5350 = vpop.permute.xlu0 %5349
        %5351 = vrot.lane.b32.xlu0 %v5334, 23
        %v5352 = vpop.permute.xlu0 %5351
        %5353 = vrot.lane.b32.xlu0 %v5335, 23
        %v5354 = vpop.permute.xlu0 %5353
        %5355 = vrot.lane.b32.xlu0 %v5336, 23
        %v5356 = vpop.permute.xlu0 %5355
        %5357 = vrot.lane.b32.xlu0 %v5337, 23
        %v5358 = vpop.permute.xlu0 %5357
        %5359 = vrot.lane.b32.xlu0 %v5338, 23
        %v5360 = vpop.permute.xlu0 %5359
        %5361 = vrot.lane.b32.xlu0 %v5339, 23
        %v5362 = vpop.permute.xlu0 %5361
        %5363 = vrot.lane.b32.xlu0 %v5340, 23
        %v5364 = vpop.permute.xlu0 %5363
        %vm5365 = vcmask 187392
        %v5366 = vsel %vm5365, %v5350, %v5352
        %v5367 = vsel %vm5365, %v5352, %v5354
        %v5368 = vsel %vm5365, %v5354, %v5356
        %v5369 = vsel %vm5365, %v5358, %v5360
        %v5370 = vsel %vm5365, %v5360, %v5362
        %v5371 = vsel %vm5365, %v5362, %v5364
        %v5378 = vadd.f32 %v5198, %v5366
        %v5379 = vadd.f32 %v5199, %v5367
        %v5380 = vadd.f32 %v5200, %v5368
        %v5381 = vadd.f32 %v5201, %v5369
        %v5382 = vadd.f32 %v5202, %v5370
        %v5383 = vadd.f32 %v5203, %v5371
        %s5384 = scalar_lea.vmem %s6, 384
        %v5385 = vld [vmem:[%s5384] sm:$0xff]
        %v5386 = vld [vmem:[%s5384 + $0x8] sm:$0xff]
        %v5387 = vld [vmem:[%s5384 + $0x10] sm:$0xff]
        %v5388 = vld [vmem:[%s5384 + $0x18] sm:$0xff]
        %v5389 = vld [vmem:[%s5384 + $0x20] sm:$0xff]
        %v5390 = vld [vmem:[%s5384 + $0x28] sm:$0xff]
        %5397 = vrot.lane.b32.xlu0 %v5385, 105
        %v5398 = vpop.permute.xlu0 %5397
        %5399 = vrot.lane.b32.xlu0 %v5386, 105
        %v5400 = vpop.permute.xlu0 %5399
        %5401 = vrot.lane.b32.xlu0 %v5387, 105
        %v5402 = vpop.permute.xlu0 %5401
        %5403 = vrot.lane.b32.xlu0 %v5388, 105
        %v5404 = vpop.permute.xlu0 %5403
        %5405 = vrot.lane.b32.xlu0 %v5389, 105
        %v5406 = vpop.permute.xlu0 %5405
        %5407 = vrot.lane.b32.xlu0 %v5390, 105
        %v5408 = vpop.permute.xlu0 %5407
        %v5409 = vsel %vm5320, %v5398, %v5400
        %v5410 = vsel %vm5320, %v5400, %v5402
        %v5411 = vsel %vm5320, %v5404, %v5406
        %v5412 = vsel %vm5320, %v5406, %v5408
        %v5421 = vmul.f32 %v1234, %v5398
        %v5422 = vmul.f32 %v1235, %v5409
        %v5423 = vmul.f32 %v1236, %v5410
        %v5424 = vmul.f32 %v1237, %v5402
        %v5425 = vmul.f32 %v1238, %v5404
        %v5426 = vmul.f32 %v1239, %v5411
        %v5427 = vmul.f32 %v1240, %v5412
        %v5428 = vmul.f32 %v1241, %v5408
        %5437 = vrot.lane.b32.xlu0 %v5421, 101
        %v5438 = vpop.permute.xlu0 %5437
        %5439 = vrot.lane.b32.xlu0 %v5422, 101
        %v5440 = vpop.permute.xlu0 %5439
        %5441 = vrot.lane.b32.xlu0 %v5423, 101
        %v5442 = vpop.permute.xlu0 %5441
        %5443 = vrot.lane.b32.xlu0 %v5424, 101
        %v5444 = vpop.permute.xlu0 %5443
        %5445 = vrot.lane.b32.xlu0 %v5425, 101
        %v5446 = vpop.permute.xlu0 %5445
        %5447 = vrot.lane.b32.xlu0 %v5426, 101
        %v5448 = vpop.permute.xlu0 %5447
        %5449 = vrot.lane.b32.xlu0 %v5427, 101
        %v5450 = vpop.permute.xlu0 %5449
        %5451 = vrot.lane.b32.xlu0 %v5428, 101
        %v5452 = vpop.permute.xlu0 %5451
        %vm5453 = vcmask 826368
        %v5454 = vsel %vm5453, %v5438, %v5440
        %v5455 = vsel %vm5453, %v5440, %v5442
        %v5456 = vsel %vm5453, %v5442, %v5444
        %v5457 = vsel %vm5453, %v5446, %v5448
        %v5458 = vsel %vm5453, %v5448, %v5450
        %v5459 = vsel %vm5453, %v5450, %v5452
        %v5468 = vadd.f32 %v5287, %v5454
        %v5469 = vadd.f32 %v5288, %v5455
        %v5470 = vadd.f32 %v5289, %v5456
        %v5471 = vadd.f32 %v5290, %v5444
        %v5472 = vadd.f32 %v5291, %v5457
        %v5473 = vadd.f32 %v5292, %v5458
        %v5474 = vadd.f32 %v5293, %v5459
        %v5475 = vadd.f32 %v5294, %v5452
        %s5476 = scalar_lea.vmem %s5, 144
        %v5477 = vld [vmem:[%s5476] sm:$0xff]
        %v5478 = vld [vmem:[%s5476 + $0x8] sm:$0xff]
        %v5479 = vld [vmem:[%s5476 + $0x10] sm:$0xff]
        %v5480 = vld [vmem:[%s5476 + $0x18] sm:$0xff]
        %v5481 = vld [vmem:[%s5476 + $0x20] sm:$0xff]
        %v5482 = vld [vmem:[%s5476 + $0x28] sm:$0xff]
        %5489 = vrot.lane.b32.xlu0 %v5477, 127
        %v5490 = vpop.permute.xlu0 %5489
        %5491 = vrot.lane.b32.xlu0 %v5478, 127
        %v5492 = vpop.permute.xlu0 %5491
        %5493 = vrot.lane.b32.xlu0 %v5479, 127
        %v5494 = vpop.permute.xlu0 %5493
        %5495 = vrot.lane.b32.xlu0 %v5480, 127
        %v5496 = vpop.permute.xlu0 %5495
        %5497 = vrot.lane.b32.xlu0 %v5481, 127
        %v5498 = vpop.permute.xlu0 %5497
        %5499 = vrot.lane.b32.xlu0 %v5482, 127
        %v5500 = vpop.permute.xlu0 %5499
        %v5501 = vsel %vm487, %v5490, %v5492
        %v5502 = vsel %vm487, %v5492, %v5494
        %v5503 = vsel %vm487, %v5496, %v5498
        %v5504 = vsel %vm487, %v5498, %v5500
        %v5513 = vmul.f32 %v1234, %v5490
        %v5514 = vmul.f32 %v1235, %v5501
        %v5515 = vmul.f32 %v1236, %v5502
        %v5516 = vmul.f32 %v1237, %v5494
        %v5517 = vmul.f32 %v1238, %v5496
        %v5518 = vmul.f32 %v1239, %v5503
        %v5519 = vmul.f32 %v1240, %v5504
        %v5520 = vmul.f32 %v1241, %v5500
        %5529 = vrot.lane.b32.xlu0 %v5513, 1
        %v5530 = vpop.permute.xlu0 %5529
        %5531 = vrot.lane.b32.xlu0 %v5514, 1
        %v5532 = vpop.permute.xlu0 %5531
        %5533 = vrot.lane.b32.xlu0 %v5515, 1
        %v5534 = vpop.permute.xlu0 %5533
        %5535 = vrot.lane.b32.xlu0 %v5516, 1
        %v5536 = vpop.permute.xlu0 %5535
        %5537 = vrot.lane.b32.xlu0 %v5517, 1
        %v5538 = vpop.permute.xlu0 %5537
        %5539 = vrot.lane.b32.xlu0 %v5518, 1
        %v5540 = vpop.permute.xlu0 %5539
        %5541 = vrot.lane.b32.xlu0 %v5519, 1
        %v5542 = vpop.permute.xlu0 %5541
        %5543 = vrot.lane.b32.xlu0 %v5520, 1
        %v5544 = vpop.permute.xlu0 %5543
        %vm5545 = vcmask 7168
        %v5546 = vsel %vm5545, %v5530, %v5532
        %v5547 = vsel %vm5545, %v5532, %v5534
        %v5548 = vsel %vm5545, %v5534, %v5536
        %v5549 = vsel %vm5545, %v5538, %v5540
        %v5550 = vsel %vm5545, %v5540, %v5542
        %v5551 = vsel %vm5545, %v5542, %v5544
        %v5558 = vadd.f32 %v5378, %v5546
        %v5559 = vadd.f32 %v5379, %v5547
        %v5560 = vadd.f32 %v5380, %v5548
        %v5561 = vadd.f32 %v5381, %v5549
        %v5562 = vadd.f32 %v5382, %v5550
        %v5563 = vadd.f32 %v5383, %v5551
        %s5564 = scalar_lea.vmem %s6, 528
        %v5565 = vld [vmem:[%s5564] sm:$0xff]
        %v5566 = vld [vmem:[%s5564 + $0x8] sm:$0xff]
        %v5567 = vld [vmem:[%s5564 + $0x10] sm:$0xff]
        %v5568 = vld [vmem:[%s5564 + $0x18] sm:$0xff]
        %v5569 = vld [vmem:[%s5564 + $0x20] sm:$0xff]
        %v5570 = vld [vmem:[%s5564 + $0x28] sm:$0xff]
        %5577 = vrot.lane.b32.xlu0 %v5565, 127
        %v5578 = vpop.permute.xlu0 %5577
        %5579 = vrot.lane.b32.xlu0 %v5566, 127
        %v5580 = vpop.permute.xlu0 %5579
        %5581 = vrot.lane.b32.xlu0 %v5567, 127
        %v5582 = vpop.permute.xlu0 %5581
        %5583 = vrot.lane.b32.xlu0 %v5568, 127
        %v5584 = vpop.permute.xlu0 %5583
        %5585 = vrot.lane.b32.xlu0 %v5569, 127
        %v5586 = vpop.permute.xlu0 %5585
        %5587 = vrot.lane.b32.xlu0 %v5570, 127
        %v5588 = vpop.permute.xlu0 %5587
        %v5589 = vsel %vm487, %v5578, %v5580
        %v5590 = vsel %vm487, %v5580, %v5582
        %v5591 = vsel %vm487, %v5584, %v5586
        %v5592 = vsel %vm487, %v5586, %v5588
        %v5601 = vmul.f32 %v1234, %v5578
        %v5602 = vmul.f32 %v1235, %v5589
        %v5603 = vmul.f32 %v1236, %v5590
        %v5604 = vmul.f32 %v1237, %v5582
        %v5605 = vmul.f32 %v1238, %v5584
        %v5606 = vmul.f32 %v1239, %v5591
        %v5607 = vmul.f32 %v1240, %v5592
        %v5608 = vmul.f32 %v1241, %v5588
        %5617 = vrot.lane.b32.xlu0 %v5601, 79
        %v5618 = vpop.permute.xlu0 %5617
        %5619 = vrot.lane.b32.xlu0 %v5602, 79
        %v5620 = vpop.permute.xlu0 %5619
        %5621 = vrot.lane.b32.xlu0 %v5603, 79
        %v5622 = vpop.permute.xlu0 %5621
        %5623 = vrot.lane.b32.xlu0 %v5604, 79
        %v5624 = vpop.permute.xlu0 %5623
        %5625 = vrot.lane.b32.xlu0 %v5605, 79
        %v5626 = vpop.permute.xlu0 %5625
        %5627 = vrot.lane.b32.xlu0 %v5606, 79
        %v5628 = vpop.permute.xlu0 %5627
        %5629 = vrot.lane.b32.xlu0 %v5607, 79
        %v5630 = vpop.permute.xlu0 %5629
        %5631 = vrot.lane.b32.xlu0 %v5608, 79
        %v5632 = vpop.permute.xlu0 %5631
        %v5633 = vsel %vm719, %v5618, %v5620
        %v5634 = vsel %vm719, %v5620, %v5622
        %v5635 = vsel %vm719, %v5622, %v5624
        %v5636 = vsel %vm719, %v5626, %v5628
        %v5637 = vsel %vm719, %v5628, %v5630
        %v5638 = vsel %vm719, %v5630, %v5632
        %v5647 = vadd.f32 %v5468, %v5633
        %v5648 = vadd.f32 %v5469, %v5634
        %v5649 = vadd.f32 %v5470, %v5635
        %v5650 = vadd.f32 %v5471, %v5624
        %v5651 = vadd.f32 %v5472, %v5636
        %v5652 = vadd.f32 %v5473, %v5637
        %v5653 = vadd.f32 %v5474, %v5638
        %v5654 = vadd.f32 %v5475, %v5632
        %s5655 = scalar_lea.vmem %s5, 240
        %v5656 = vld [vmem:[%s5655] sm:$0xff]
        %v5657 = vld [vmem:[%s5655 + $0x8] sm:$0xff]
        %v5658 = vld [vmem:[%s5655 + $0x10] sm:$0xff]
        %v5659 = vld [vmem:[%s5655 + $0x18] sm:$0xff]
        %v5660 = vld [vmem:[%s5655 + $0x20] sm:$0xff]
        %v5661 = vld [vmem:[%s5655 + $0x28] sm:$0xff]
        %5668 = vrot.lane.b32.xlu0 %v5656, 1
        %v5669 = vpop.permute.xlu0 %5668
        %5670 = vrot.lane.b32.xlu0 %v5657, 1
        %v5671 = vpop.permute.xlu0 %5670
        %5672 = vrot.lane.b32.xlu0 %v5658, 1
        %v5673 = vpop.permute.xlu0 %5672
        %5674 = vrot.lane.b32.xlu0 %v5659, 1
        %v5675 = vpop.permute.xlu0 %5674
        %5676 = vrot.lane.b32.xlu0 %v5660, 1
        %v5677 = vpop.permute.xlu0 %5676
        %5678 = vrot.lane.b32.xlu0 %v5661, 1
        %v5679 = vpop.permute.xlu0 %5678
        %v5680 = vsel %vm5545, %v5669, %v5671
        %v5681 = vsel %vm5545, %v5671, %v5673
        %v5682 = vsel %vm5545, %v5675, %v5677
        %v5683 = vsel %vm5545, %v5677, %v5679
        %v5692 = vmul.f32 %v1235, %v5669
        %v5693 = vmul.f32 %v1236, %v5680
        %v5694 = vmul.f32 %v1237, %v5681
        %v5695 = vmul.f32 %v2362, %v5673
        %v5696 = vmul.f32 %v1239, %v5675
        %v5697 = vmul.f32 %v1240, %v5682
        %v5698 = vmul.f32 %v1241, %v5683
        %v5699 = vmul.f32 %v2363, %v5679
        %5708 = vrot.lane.b32.xlu0 %v5692, 127
        %v5709 = vpop.permute.xlu0 %5708
        %5710 = vrot.lane.b32.xlu0 %v5693, 127
        %v5711 = vpop.permute.xlu0 %5710
        %5712 = vrot.lane.b32.xlu0 %v5694, 127
        %v5713 = vpop.permute.xlu0 %5712
        %5714 = vrot.lane.b32.xlu0 %v5695, 127
        %v5715 = vpop.permute.xlu0 %5714
        %5716 = vrot.lane.b32.xlu0 %v5696, 127
        %v5717 = vpop.permute.xlu0 %5716
        %5718 = vrot.lane.b32.xlu0 %v5697, 127
        %v5719 = vpop.permute.xlu0 %5718
        %5720 = vrot.lane.b32.xlu0 %v5698, 127
        %v5721 = vpop.permute.xlu0 %5720
        %5722 = vrot.lane.b32.xlu0 %v5699, 127
        %v5723 = vpop.permute.xlu0 %5722
        %v5724 = vsel %vm487, %v5709, %v5711
        %v5725 = vsel %vm487, %v5711, %v5713
        %v5726 = vsel %vm487, %v5713, %v5715
        %v5727 = vsel %vm487, %v5717, %v5719
        %v5728 = vsel %vm487, %v5719, %v5721
        %v5729 = vsel %vm487, %v5721, %v5723
        %v5736 = vadd.f32 %v5558, %v5724
        %v5737 = vadd.f32 %v5559, %v5725
        %v5738 = vadd.f32 %v5560, %v5726
        %v5739 = vadd.f32 %v5561, %v5727
        %v5740 = vadd.f32 %v5562, %v5728
        %v5741 = vadd.f32 %v5563, %v5729
        %s5742 = scalar_lea.vmem %s6, 624
        %v5743 = vld [vmem:[%s5742] sm:$0xff]
        %v5744 = vld [vmem:[%s5742 + $0x8] sm:$0xff]
        %v5745 = vld [vmem:[%s5742 + $0x10] sm:$0xff]
        %v5746 = vld [vmem:[%s5742 + $0x18] sm:$0xff]
        %v5747 = vld [vmem:[%s5742 + $0x20] sm:$0xff]
        %v5748 = vld [vmem:[%s5742 + $0x28] sm:$0xff]
        %5755 = vrot.lane.b32.xlu0 %v5743, 1
        %v5756 = vpop.permute.xlu0 %5755
        %5757 = vrot.lane.b32.xlu0 %v5744, 1
        %v5758 = vpop.permute.xlu0 %5757
        %5759 = vrot.lane.b32.xlu0 %v5745, 1
        %v5760 = vpop.permute.xlu0 %5759
        %5761 = vrot.lane.b32.xlu0 %v5746, 1
        %v5762 = vpop.permute.xlu0 %5761
        %5763 = vrot.lane.b32.xlu0 %v5747, 1
        %v5764 = vpop.permute.xlu0 %5763
        %5765 = vrot.lane.b32.xlu0 %v5748, 1
        %v5766 = vpop.permute.xlu0 %5765
        %v5767 = vsel %vm5545, %v5756, %v5758
        %v5768 = vsel %vm5545, %v5758, %v5760
        %v5769 = vsel %vm5545, %v5762, %v5764
        %v5770 = vsel %vm5545, %v5764, %v5766
        %v5779 = vmul.f32 %v1235, %v5756
        %v5780 = vmul.f32 %v1236, %v5767
        %v5781 = vmul.f32 %v1237, %v5768
        %v5782 = vmul.f32 %v2362, %v5760
        %v5783 = vmul.f32 %v1239, %v5762
        %v5784 = vmul.f32 %v1240, %v5769
        %v5785 = vmul.f32 %v1241, %v5770
        %v5786 = vmul.f32 %v2363, %v5766
        %5795 = vrot.lane.b32.xlu0 %v5779, 77
        %v5796 = vpop.permute.xlu0 %5795
        %5797 = vrot.lane.b32.xlu0 %v5780, 77
        %v5798 = vpop.permute.xlu0 %5797
        %5799 = vrot.lane.b32.xlu0 %v5781, 77
        %v5800 = vpop.permute.xlu0 %5799
        %5801 = vrot.lane.b32.xlu0 %v5782, 77
        %v5802 = vpop.permute.xlu0 %5801
        %5803 = vrot.lane.b32.xlu0 %v5783, 77
        %v5804 = vpop.permute.xlu0 %5803
        %5805 = vrot.lane.b32.xlu0 %v5784, 77
        %v5806 = vpop.permute.xlu0 %5805
        %5807 = vrot.lane.b32.xlu0 %v5785, 77
        %v5808 = vpop.permute.xlu0 %5807
        %5809 = vrot.lane.b32.xlu0 %v5786, 77
        %v5810 = vpop.permute.xlu0 %5809
        %vm5811 = vcmask 629760
        %v5812 = vsel %vm5811, %v5796, %v5798
        %v5813 = vsel %vm5811, %v5798, %v5800
        %v5814 = vsel %vm5811, %v5800, %v5802
        %v5815 = vsel %vm5811, %v5804, %v5806
        %v5816 = vsel %vm5811, %v5806, %v5808
        %v5817 = vsel %vm5811, %v5808, %v5810
        %v5826 = vadd.f32 %v5647, %v5796
        %v5827 = vadd.f32 %v5648, %v5812
        %v5828 = vadd.f32 %v5649, %v5813
        %v5829 = vadd.f32 %v5650, %v5814
        %v5830 = vadd.f32 %v5651, %v5804
        %v5831 = vadd.f32 %v5652, %v5815
        %v5832 = vadd.f32 %v5653, %v5816
        %v5833 = vadd.f32 %v5654, %v5817
        %s5834 = scalar_lea.vmem %s5, 288
        %v5835 = vld [vmem:[%s5834] sm:$0xff]
        %v5836 = vld [vmem:[%s5834 + $0x8] sm:$0xff]
        %v5837 = vld [vmem:[%s5834 + $0x10] sm:$0xff]
        %v5838 = vld [vmem:[%s5834 + $0x18] sm:$0xff]
        %v5839 = vld [vmem:[%s5834 + $0x20] sm:$0xff]
        %v5840 = vld [vmem:[%s5834 + $0x28] sm:$0xff]
        %5847 = vrot.lane.b32.xlu0 %v5835, 23
        %v5848 = vpop.permute.xlu0 %5847
        %5849 = vrot.lane.b32.xlu0 %v5836, 23
        %v5850 = vpop.permute.xlu0 %5849
        %5851 = vrot.lane.b32.xlu0 %v5837, 23
        %v5852 = vpop.permute.xlu0 %5851
        %5853 = vrot.lane.b32.xlu0 %v5838, 23
        %v5854 = vpop.permute.xlu0 %5853
        %5855 = vrot.lane.b32.xlu0 %v5839, 23
        %v5856 = vpop.permute.xlu0 %5855
        %5857 = vrot.lane.b32.xlu0 %v5840, 23
        %v5858 = vpop.permute.xlu0 %5857
        %v5859 = vsel %vm5365, %v5848, %v5850
        %v5860 = vsel %vm5365, %v5850, %v5852
        %v5861 = vsel %vm5365, %v5854, %v5856
        %v5862 = vsel %vm5365, %v5856, %v5858
        %v5871 = vmul.f32 %v1235, %v5848
        %v5872 = vmul.f32 %v1236, %v5859
        %v5873 = vmul.f32 %v1237, %v5860
        %v5874 = vmul.f32 %v2362, %v5852
        %v5875 = vmul.f32 %v1239, %v5854
        %v5876 = vmul.f32 %v1240, %v5861
        %v5877 = vmul.f32 %v1241, %v5862
        %v5878 = vmul.f32 %v2363, %v5858
        %5887 = vrot.lane.b32.xlu0 %v5871, 105
        %v5888 = vpop.permute.xlu0 %5887
        %5889 = vrot.lane.b32.xlu0 %v5872, 105
        %v5890 = vpop.permute.xlu0 %5889
        %5891 = vrot.lane.b32.xlu0 %v5873, 105
        %v5892 = vpop.permute.xlu0 %5891
        %5893 = vrot.lane.b32.xlu0 %v5874, 105
        %v5894 = vpop.permute.xlu0 %5893
        %5895 = vrot.lane.b32.xlu0 %v5875, 105
        %v5896 = vpop.permute.xlu0 %5895
        %5897 = vrot.lane.b32.xlu0 %v5876, 105
        %v5898 = vpop.permute.xlu0 %5897
        %5899 = vrot.lane.b32.xlu0 %v5877, 105
        %v5900 = vpop.permute.xlu0 %5899
        %5901 = vrot.lane.b32.xlu0 %v5878, 105
        %v5902 = vpop.permute.xlu0 %5901
        %v5903 = vsel %vm5320, %v5888, %v5890
        %v5904 = vsel %vm5320, %v5890, %v5892
        %v5905 = vsel %vm5320, %v5892, %v5894
        %v5906 = vsel %vm5320, %v5896, %v5898
        %v5907 = vsel %vm5320, %v5898, %v5900
        %v5908 = vsel %vm5320, %v5900, %v5902
        %v5915 = vadd.f32 %v5736, %v5903
        %v5916 = vadd.f32 %v5737, %v5904
        %v5917 = vadd.f32 %v5738, %v5905
        %v5918 = vadd.f32 %v5739, %v5906
        %v5919 = vadd.f32 %v5740, %v5907
        %v5920 = vadd.f32 %v5741, %v5908
        %s5921 = scalar_lea.vmem %s6, 768
        %v5922 = vld [vmem:[%s5921] sm:$0xff]
        %v5923 = vld [vmem:[%s5921 + $0x8] sm:$0xff]
        %v5924 = vld [vmem:[%s5921 + $0x10] sm:$0xff]
        %v5925 = vld [vmem:[%s5921 + $0x18] sm:$0xff]
        %v5926 = vld [vmem:[%s5921 + $0x20] sm:$0xff]
        %v5927 = vld [vmem:[%s5921 + $0x28] sm:$0xff]
        %5934 = vrot.lane.b32.xlu0 %v5922, 23
        %v5935 = vpop.permute.xlu0 %5934
        %5936 = vrot.lane.b32.xlu0 %v5923, 23
        %v5937 = vpop.permute.xlu0 %5936
        %5938 = vrot.lane.b32.xlu0 %v5924, 23
        %v5939 = vpop.permute.xlu0 %5938
        %5940 = vrot.lane.b32.xlu0 %v5925, 23
        %v5941 = vpop.permute.xlu0 %5940
        %5942 = vrot.lane.b32.xlu0 %v5926, 23
        %v5943 = vpop.permute.xlu0 %5942
        %5944 = vrot.lane.b32.xlu0 %v5927, 23
        %v5945 = vpop.permute.xlu0 %5944
        %v5946 = vsel %vm5365, %v5935, %v5937
        %v5947 = vsel %vm5365, %v5937, %v5939
        %v5948 = vsel %vm5365, %v5941, %v5943
        %v5949 = vsel %vm5365, %v5943, %v5945
        %v5958 = vmul.f32 %v1235, %v5935
        %v5959 = vmul.f32 %v1236, %v5946
        %v5960 = vmul.f32 %v1237, %v5947
        %v5961 = vmul.f32 %v2362, %v5939
        %v5962 = vmul.f32 %v1239, %v5941
        %v5963 = vmul.f32 %v1240, %v5948
        %v5964 = vmul.f32 %v1241, %v5949
        %v5965 = vmul.f32 %v2363, %v5945
        %5974 = vrot.lane.b32.xlu0 %v5958, 55
        %v5975 = vpop.permute.xlu0 %5974
        %5976 = vrot.lane.b32.xlu0 %v5959, 55
        %v5977 = vpop.permute.xlu0 %5976
        %5978 = vrot.lane.b32.xlu0 %v5960, 55
        %v5979 = vpop.permute.xlu0 %5978
        %5980 = vrot.lane.b32.xlu0 %v5961, 55
        %v5981 = vpop.permute.xlu0 %5980
        %5982 = vrot.lane.b32.xlu0 %v5962, 55
        %v5983 = vpop.permute.xlu0 %5982
        %5984 = vrot.lane.b32.xlu0 %v5963, 55
        %v5985 = vpop.permute.xlu0 %5984
        %5986 = vrot.lane.b32.xlu0 %v5964, 55
        %v5987 = vpop.permute.xlu0 %5986
        %5988 = vrot.lane.b32.xlu0 %v5965, 55
        %v5989 = vpop.permute.xlu0 %5988
        %vm5990 = vcmask 449536
        %v5991 = vsel %vm5990, %v5975, %v5977
        %v5992 = vsel %vm5990, %v5977, %v5979
        %v5993 = vsel %vm5990, %v5979, %v5981
        %v5994 = vsel %vm5990, %v5983, %v5985
        %v5995 = vsel %vm5990, %v5985, %v5987
        %v5996 = vsel %vm5990, %v5987, %v5989
        %v6005 = vadd.f32 %v5826, %v5975
        %v6006 = vadd.f32 %v5827, %v5991
        %v6007 = vadd.f32 %v5828, %v5992
        %v6008 = vadd.f32 %v5829, %v5993
        %v6009 = vadd.f32 %v5830, %v5983
        %v6010 = vadd.f32 %v5831, %v5994
        %v6011 = vadd.f32 %v5832, %v5995
        %v6012 = vadd.f32 %v5833, %v5996
        %s6013 = scalar_lea.vmem %s5, 336
        %v6014 = vld [vmem:[%s6013] sm:$0xff]
        %v6015 = vld [vmem:[%s6013 + $0x8] sm:$0xff]
        %v6016 = vld [vmem:[%s6013 + $0x10] sm:$0xff]
        %v6017 = vld [vmem:[%s6013 + $0x18] sm:$0xff]
        %v6018 = vld [vmem:[%s6013 + $0x20] sm:$0xff]
        %v6019 = vld [vmem:[%s6013 + $0x28] sm:$0xff]
        %6026 = vrot.lane.b32.xlu0 %v6014, 24
        %v6027 = vpop.permute.xlu0 %6026
        %6028 = vrot.lane.b32.xlu0 %v6015, 24
        %v6029 = vpop.permute.xlu0 %6028
        %6030 = vrot.lane.b32.xlu0 %v6016, 24
        %v6031 = vpop.permute.xlu0 %6030
        %6032 = vrot.lane.b32.xlu0 %v6017, 24
        %v6033 = vpop.permute.xlu0 %6032
        %6034 = vrot.lane.b32.xlu0 %v6018, 24
        %v6035 = vpop.permute.xlu0 %6034
        %6036 = vrot.lane.b32.xlu0 %v6019, 24
        %v6037 = vpop.permute.xlu0 %6036
        %v6038 = vsel %vm5185, %v6027, %v6029
        %v6039 = vsel %vm5185, %v6029, %v6031
        %v6040 = vsel %vm5185, %v6033, %v6035
        %v6041 = vsel %vm5185, %v6035, %v6037
        %v6050 = vmul.f32 %v1235, %v6027
        %v6051 = vmul.f32 %v1236, %v6038
        %v6052 = vmul.f32 %v1237, %v6039
        %v6053 = vmul.f32 %v2362, %v6031
        %v6054 = vmul.f32 %v1239, %v6033
        %v6055 = vmul.f32 %v1240, %v6040
        %v6056 = vmul.f32 %v1241, %v6041
        %v6057 = vmul.f32 %v2363, %v6037
        %6066 = vrot.lane.b32.xlu0 %v6050, 104
        %v6067 = vpop.permute.xlu0 %6066
        %6068 = vrot.lane.b32.xlu0 %v6051, 104
        %v6069 = vpop.permute.xlu0 %6068
        %6070 = vrot.lane.b32.xlu0 %v6052, 104
        %v6071 = vpop.permute.xlu0 %6070
        %6072 = vrot.lane.b32.xlu0 %v6053, 104
        %v6073 = vpop.permute.xlu0 %6072
        %6074 = vrot.lane.b32.xlu0 %v6054, 104
        %v6075 = vpop.permute.xlu0 %6074
        %6076 = vrot.lane.b32.xlu0 %v6055, 104
        %v6077 = vpop.permute.xlu0 %6076
        %6078 = vrot.lane.b32.xlu0 %v6056, 104
        %v6079 = vpop.permute.xlu0 %6078
        %6080 = vrot.lane.b32.xlu0 %v6057, 104
        %v6081 = vpop.permute.xlu0 %6080
        %v6082 = vsel %vm565, %v6067, %v6069
        %v6083 = vsel %vm565, %v6069, %v6071
        %v6084 = vsel %vm565, %v6071, %v6073
        %v6085 = vsel %vm565, %v6075, %v6077
        %v6086 = vsel %vm565, %v6077, %v6079
        %v6087 = vsel %vm565, %v6079, %v6081
        %v6094 = vadd.f32 %v5915, %v6082
        %v6095 = vadd.f32 %v5916, %v6083
        %v6096 = vadd.f32 %v5917, %v6084
        %v6097 = vadd.f32 %v5918, %v6085
        %v6098 = vadd.f32 %v5919, %v6086
        %v6099 = vadd.f32 %v5920, %v6087
        %s6100 = scalar_lea.vmem %s6, 816
        %v6101 = vld [vmem:[%s6100] sm:$0xff]
        %v6102 = vld [vmem:[%s6100 + $0x8] sm:$0xff]
        %v6103 = vld [vmem:[%s6100 + $0x10] sm:$0xff]
        %v6104 = vld [vmem:[%s6100 + $0x18] sm:$0xff]
        %v6105 = vld [vmem:[%s6100 + $0x20] sm:$0xff]
        %v6106 = vld [vmem:[%s6100 + $0x28] sm:$0xff]
        %6113 = vrot.lane.b32.xlu0 %v6101, 24
        %v6114 = vpop.permute.xlu0 %6113
        %6115 = vrot.lane.b32.xlu0 %v6102, 24
        %v6116 = vpop.permute.xlu0 %6115
        %6117 = vrot.lane.b32.xlu0 %v6103, 24
        %v6118 = vpop.permute.xlu0 %6117
        %6119 = vrot.lane.b32.xlu0 %v6104, 24
        %v6120 = vpop.permute.xlu0 %6119
        %6121 = vrot.lane.b32.xlu0 %v6105, 24
        %v6122 = vpop.permute.xlu0 %6121
        %6123 = vrot.lane.b32.xlu0 %v6106, 24
        %v6124 = vpop.permute.xlu0 %6123
        %v6125 = vsel %vm5185, %v6114, %v6116
        %v6126 = vsel %vm5185, %v6116, %v6118
        %v6127 = vsel %vm5185, %v6120, %v6122
        %v6128 = vsel %vm5185, %v6122, %v6124
        %v6137 = vmul.f32 %v1235, %v6114
        %v6138 = vmul.f32 %v1236, %v6125
        %v6139 = vmul.f32 %v1237, %v6126
        %v6140 = vmul.f32 %v2362, %v6118
        %v6141 = vmul.f32 %v1239, %v6120
        %v6142 = vmul.f32 %v1240, %v6127
        %v6143 = vmul.f32 %v1241, %v6128
        %v6144 = vmul.f32 %v2363, %v6124
        %6153 = vrot.lane.b32.xlu0 %v6137, 54
        %v6154 = vpop.permute.xlu0 %6153
        %6155 = vrot.lane.b32.xlu0 %v6138, 54
        %v6156 = vpop.permute.xlu0 %6155
        %6157 = vrot.lane.b32.xlu0 %v6139, 54
        %v6158 = vpop.permute.xlu0 %6157
        %6159 = vrot.lane.b32.xlu0 %v6140, 54
        %v6160 = vpop.permute.xlu0 %6159
        %6161 = vrot.lane.b32.xlu0 %v6141, 54
        %v6162 = vpop.permute.xlu0 %6161
        %6163 = vrot.lane.b32.xlu0 %v6142, 54
        %v6164 = vpop.permute.xlu0 %6163
        %6165 = vrot.lane.b32.xlu0 %v6143, 54
        %v6166 = vpop.permute.xlu0 %6165
        %6167 = vrot.lane.b32.xlu0 %v6144, 54
        %v6168 = vpop.permute.xlu0 %6167
        %vm6169 = vcmask 441344
        %v6170 = vsel %vm6169, %v6154, %v6156
        %v6171 = vsel %vm6169, %v6156, %v6158
        %v6172 = vsel %vm6169, %v6158, %v6160
        %v6173 = vsel %vm6169, %v6162, %v6164
        %v6174 = vsel %vm6169, %v6164, %v6166
        %v6175 = vsel %vm6169, %v6166, %v6168
        %v6184 = vadd.f32 %v6005, %v6154
        %v6185 = vadd.f32 %v6006, %v6170
        %v6186 = vadd.f32 %v6007, %v6171
        %v6187 = vadd.f32 %v6008, %v6172
        %v6188 = vadd.f32 %v6009, %v6162
        %v6189 = vadd.f32 %v6010, %v6173
        %v6190 = vadd.f32 %v6011, %v6174
        %v6191 = vadd.f32 %v6012, %v6175
        %s6192 = scalar_lea.vmem %s5, 384
        %v6193 = vld [vmem:[%s6192] sm:$0xff]
        %v6194 = vld [vmem:[%s6192 + $0x8] sm:$0xff]
        %v6195 = vld [vmem:[%s6192 + $0x10] sm:$0xff]
        %v6196 = vld [vmem:[%s6192 + $0x18] sm:$0xff]
        %v6197 = vld [vmem:[%s6192 + $0x20] sm:$0xff]
        %v6198 = vld [vmem:[%s6192 + $0x28] sm:$0xff]
        %6205 = vrot.lane.b32.xlu0 %v6193, 25
        %v6206 = vpop.permute.xlu0 %6205
        %6207 = vrot.lane.b32.xlu0 %v6194, 25
        %v6208 = vpop.permute.xlu0 %6207
        %6209 = vrot.lane.b32.xlu0 %v6195, 25
        %v6210 = vpop.permute.xlu0 %6209
        %6211 = vrot.lane.b32.xlu0 %v6196, 25
        %v6212 = vpop.permute.xlu0 %6211
        %6213 = vrot.lane.b32.xlu0 %v6197, 25
        %v6214 = vpop.permute.xlu0 %6213
        %6215 = vrot.lane.b32.xlu0 %v6198, 25
        %v6216 = vpop.permute.xlu0 %6215
        %v6217 = vsel %vm5006, %v6206, %v6208
        %v6218 = vsel %vm5006, %v6208, %v6210
        %v6219 = vsel %vm5006, %v6212, %v6214
        %v6220 = vsel %vm5006, %v6214, %v6216
        %v6229 = vmul.f32 %v1235, %v6206
        %v6230 = vmul.f32 %v1236, %v6217
        %v6231 = vmul.f32 %v1237, %v6218
        %v6232 = vmul.f32 %v2362, %v6210
        %v6233 = vmul.f32 %v1239, %v6212
        %v6234 = vmul.f32 %v1240, %v6219
        %v6235 = vmul.f32 %v1241, %v6220
        %v6236 = vmul.f32 %v2363, %v6216
        %6245 = vrot.lane.b32.xlu0 %v6229, 103
        %v6246 = vpop.permute.xlu0 %6245
        %6247 = vrot.lane.b32.xlu0 %v6230, 103
        %v6248 = vpop.permute.xlu0 %6247
        %6249 = vrot.lane.b32.xlu0 %v6231, 103
        %v6250 = vpop.permute.xlu0 %6249
        %6251 = vrot.lane.b32.xlu0 %v6232, 103
        %v6252 = vpop.permute.xlu0 %6251
        %6253 = vrot.lane.b32.xlu0 %v6233, 103
        %v6254 = vpop.permute.xlu0 %6253
        %6255 = vrot.lane.b32.xlu0 %v6234, 103
        %v6256 = vpop.permute.xlu0 %6255
        %6257 = vrot.lane.b32.xlu0 %v6235, 103
        %v6258 = vpop.permute.xlu0 %6257
        %6259 = vrot.lane.b32.xlu0 %v6236, 103
        %v6260 = vpop.permute.xlu0 %6259
        %v6261 = vsel %vm600, %v6246, %v6248
        %v6262 = vsel %vm600, %v6248, %v6250
        %v6263 = vsel %vm600, %v6250, %v6252
        %v6264 = vsel %vm600, %v6254, %v6256
        %v6265 = vsel %vm600, %v6256, %v6258
        %v6266 = vsel %vm600, %v6258, %v6260
        %v6273 = vadd.f32 %v6094, %v6261
        %v6274 = vadd.f32 %v6095, %v6262
        %v6275 = vadd.f32 %v6096, %v6263
        %v6276 = vadd.f32 %v6097, %v6264
        %v6277 = vadd.f32 %v6098, %v6265
        %v6278 = vadd.f32 %v6099, %v6266
        %s6279 = scalar_lea.vmem %s6, 864
        %v6280 = vld [vmem:[%s6279] sm:$0xff]
        %v6281 = vld [vmem:[%s6279 + $0x8] sm:$0xff]
        %v6282 = vld [vmem:[%s6279 + $0x10] sm:$0xff]
        %v6283 = vld [vmem:[%s6279 + $0x18] sm:$0xff]
        %v6284 = vld [vmem:[%s6279 + $0x20] sm:$0xff]
        %v6285 = vld [vmem:[%s6279 + $0x28] sm:$0xff]
        %6292 = vrot.lane.b32.xlu0 %v6280, 25
        %v6293 = vpop.permute.xlu0 %6292
        %6294 = vrot.lane.b32.xlu0 %v6281, 25
        %v6295 = vpop.permute.xlu0 %6294
        %6296 = vrot.lane.b32.xlu0 %v6282, 25
        %v6297 = vpop.permute.xlu0 %6296
        %6298 = vrot.lane.b32.xlu0 %v6283, 25
        %v6299 = vpop.permute.xlu0 %6298
        %6300 = vrot.lane.b32.xlu0 %v6284, 25
        %v6301 = vpop.permute.xlu0 %6300
        %6302 = vrot.lane.b32.xlu0 %v6285, 25
        %v6303 = vpop.permute.xlu0 %6302
        %v6304 = vsel %vm5006, %v6293, %v6295
        %v6305 = vsel %vm5006, %v6295, %v6297
        %v6306 = vsel %vm5006, %v6299, %v6301
        %v6307 = vsel %vm5006, %v6301, %v6303
        %v6316 = vmul.f32 %v1235, %v6293
        %v6317 = vmul.f32 %v1236, %v6304
        %v6318 = vmul.f32 %v1237, %v6305
        %v6319 = vmul.f32 %v2362, %v6297
        %v6320 = vmul.f32 %v1239, %v6299
        %v6321 = vmul.f32 %v1240, %v6306
        %v6322 = vmul.f32 %v1241, %v6307
        %v6323 = vmul.f32 %v2363, %v6303
        %6332 = vrot.lane.b32.xlu0 %v6316, 53
        %v6333 = vpop.permute.xlu0 %6332
        %6334 = vrot.lane.b32.xlu0 %v6317, 53
        %v6335 = vpop.permute.xlu0 %6334
        %6336 = vrot.lane.b32.xlu0 %v6318, 53
        %v6337 = vpop.permute.xlu0 %6336
        %6338 = vrot.lane.b32.xlu0 %v6319, 53
        %v6339 = vpop.permute.xlu0 %6338
        %6340 = vrot.lane.b32.xlu0 %v6320, 53
        %v6341 = vpop.permute.xlu0 %6340
        %6342 = vrot.lane.b32.xlu0 %v6321, 53
        %v6343 = vpop.permute.xlu0 %6342
        %6344 = vrot.lane.b32.xlu0 %v6322, 53
        %v6345 = vpop.permute.xlu0 %6344
        %6346 = vrot.lane.b32.xlu0 %v6323, 53
        %v6347 = vpop.permute.xlu0 %6346
        %vm6348 = vcmask 433152
        %v6349 = vsel %vm6348, %v6333, %v6335
        %v6350 = vsel %vm6348, %v6335, %v6337
        %v6351 = vsel %vm6348, %v6337, %v6339
        %v6352 = vsel %vm6348, %v6341, %v6343
        %v6353 = vsel %vm6348, %v6343, %v6345
        %v6354 = vsel %vm6348, %v6345, %v6347
        %v6363 = vadd.f32 %v6184, %v6333
        %v6364 = vadd.f32 %v6185, %v6349
        %v6365 = vadd.f32 %v6186, %v6350
        %v6366 = vadd.f32 %v6187, %v6351
        %v6367 = vadd.f32 %v6188, %v6341
        %v6368 = vadd.f32 %v6189, %v6352
        %v6369 = vadd.f32 %v6190, %v6353
        %v6370 = vadd.f32 %v6191, %v6354
        %s6371 = scalar_lea.vmem %s6, 48
        %v6372 = vld [vmem:[%s6371] sm:$0xff]
        %v6373 = vld [vmem:[%s6371 + $0x8] sm:$0xff]
        %v6374 = vld [vmem:[%s6371 + $0x10] sm:$0xff]
        %v6375 = vld [vmem:[%s6371 + $0x18] sm:$0xff]
        %v6376 = vld [vmem:[%s6371 + $0x20] sm:$0xff]
        %v6377 = vld [vmem:[%s6371 + $0x28] sm:$0xff]
        %6384 = vrot.lane.b32.xlu0 %v6372, 79
        %v6385 = vpop.permute.xlu0 %6384
        %6386 = vrot.lane.b32.xlu0 %v6373, 79
        %v6387 = vpop.permute.xlu0 %6386
        %6388 = vrot.lane.b32.xlu0 %v6374, 79
        %v6389 = vpop.permute.xlu0 %6388
        %6390 = vrot.lane.b32.xlu0 %v6375, 79
        %v6391 = vpop.permute.xlu0 %6390
        %6392 = vrot.lane.b32.xlu0 %v6376, 79
        %v6393 = vpop.permute.xlu0 %6392
        %6394 = vrot.lane.b32.xlu0 %v6377, 79
        %v6395 = vpop.permute.xlu0 %6394
        %v6396 = vsel %vm719, %v6385, %v6387
        %v6397 = vsel %vm719, %v6387, %v6389
        %v6398 = vsel %vm719, %v6391, %v6393
        %v6399 = vsel %vm719, %v6393, %v6395
        %v6408 = vmul.f32 %v1234, %v6385
        %v6409 = vmul.f32 %v1235, %v6396
        %v6410 = vmul.f32 %v1236, %v6397
        %v6411 = vmul.f32 %v1237, %v6389
        %v6412 = vmul.f32 %v1238, %v6391
        %v6413 = vmul.f32 %v1239, %v6398
        %v6414 = vmul.f32 %v1240, %v6399
        %v6415 = vmul.f32 %v1241, %v6395
        %6424 = vrot.lane.b32.xlu0 %v6408, 127
        %v6425 = vpop.permute.xlu0 %6424
        %6426 = vrot.lane.b32.xlu0 %v6409, 127
        %v6427 = vpop.permute.xlu0 %6426
        %6428 = vrot.lane.b32.xlu0 %v6410, 127
        %v6429 = vpop.permute.xlu0 %6428
        %6430 = vrot.lane.b32.xlu0 %v6411, 127
        %v6431 = vpop.permute.xlu0 %6430
        %6432 = vrot.lane.b32.xlu0 %v6412, 127
        %v6433 = vpop.permute.xlu0 %6432
        %6434 = vrot.lane.b32.xlu0 %v6413, 127
        %v6435 = vpop.permute.xlu0 %6434
        %6436 = vrot.lane.b32.xlu0 %v6414, 127
        %v6437 = vpop.permute.xlu0 %6436
        %6438 = vrot.lane.b32.xlu0 %v6415, 127
        %v6439 = vpop.permute.xlu0 %6438
        %v6440 = vsel %vm487, %v6425, %v6427
        %v6441 = vsel %vm487, %v6427, %v6429
        %v6442 = vsel %vm487, %v6429, %v6431
        %v6443 = vsel %vm487, %v6433, %v6435
        %v6444 = vsel %vm487, %v6435, %v6437
        %v6445 = vsel %vm487, %v6437, %v6439
        %v6454 = vadd.f32 %v6363, %v6440
        %v6455 = vadd.f32 %v6364, %v6441
        %v6456 = vadd.f32 %v6365, %v6442
        %v6457 = vadd.f32 %v6366, %v6431
        %v6458 = vadd.f32 %v6367, %v6443
        %v6459 = vadd.f32 %v6368, %v6444
        %v6460 = vadd.f32 %v6369, %v6445
        %v6461 = vadd.f32 %v6370, %v6439
        %s6462 = scalar_lea.vmem %s6, 144
        %v6463 = vld [vmem:[%s6462] sm:$0xff]
        %v6464 = vld [vmem:[%s6462 + $0x8] sm:$0xff]
        %v6465 = vld [vmem:[%s6462 + $0x10] sm:$0xff]
        %v6466 = vld [vmem:[%s6462 + $0x18] sm:$0xff]
        %v6467 = vld [vmem:[%s6462 + $0x20] sm:$0xff]
        %v6468 = vld [vmem:[%s6462 + $0x28] sm:$0xff]
        %6475 = vrot.lane.b32.xlu0 %v6463, 81
        %v6476 = vpop.permute.xlu0 %6475
        %6477 = vrot.lane.b32.xlu0 %v6464, 81
        %v6478 = vpop.permute.xlu0 %6477
        %6479 = vrot.lane.b32.xlu0 %v6465, 81
        %v6480 = vpop.permute.xlu0 %6479
        %6481 = vrot.lane.b32.xlu0 %v6466, 81
        %v6482 = vpop.permute.xlu0 %6481
        %6483 = vrot.lane.b32.xlu0 %v6467, 81
        %v6484 = vpop.permute.xlu0 %6483
        %6485 = vrot.lane.b32.xlu0 %v6468, 81
        %v6486 = vpop.permute.xlu0 %6485
        %vm6487 = vcmask 662528
        %v6488 = vsel %vm6487, %v6476, %v6478
        %v6489 = vsel %vm6487, %v6478, %v6480
        %v6490 = vsel %vm6487, %v6482, %v6484
        %v6491 = vsel %vm6487, %v6484, %v6486
        %v6500 = vmul.f32 %v1234, %v6476
        %v6501 = vmul.f32 %v1235, %v6488
        %v6502 = vmul.f32 %v1236, %v6489
        %v6503 = vmul.f32 %v1237, %v6480
        %v6504 = vmul.f32 %v1238, %v6482
        %v6505 = vmul.f32 %v1239, %v6490
        %v6506 = vmul.f32 %v1240, %v6491
        %v6507 = vmul.f32 %v1241, %v6486
        %6516 = vrot.lane.b32.xlu0 %v6500, 125
        %v6517 = vpop.permute.xlu0 %6516
        %6518 = vrot.lane.b32.xlu0 %v6501, 125
        %v6519 = vpop.permute.xlu0 %6518
        %6520 = vrot.lane.b32.xlu0 %v6502, 125
        %v6521 = vpop.permute.xlu0 %6520
        %6522 = vrot.lane.b32.xlu0 %v6503, 125
        %v6523 = vpop.permute.xlu0 %6522
        %6524 = vrot.lane.b32.xlu0 %v6504, 125
        %v6525 = vpop.permute.xlu0 %6524
        %6526 = vrot.lane.b32.xlu0 %v6505, 125
        %v6527 = vpop.permute.xlu0 %6526
        %6528 = vrot.lane.b32.xlu0 %v6506, 125
        %v6529 = vpop.permute.xlu0 %6528
        %6530 = vrot.lane.b32.xlu0 %v6507, 125
        %v6531 = vpop.permute.xlu0 %6530
        %vm6532 = vcmask 1022976
        %v6533 = vsel %vm6532, %v6517, %v6519
        %v6534 = vsel %vm6532, %v6519, %v6521
        %v6535 = vsel %vm6532, %v6521, %v6523
        %v6536 = vsel %vm6532, %v6525, %v6527
        %v6537 = vsel %vm6532, %v6527, %v6529
        %v6538 = vsel %vm6532, %v6529, %v6531
        %v6547 = vadd.f32 %v6454, %v6533
        %v6548 = vadd.f32 %v6455, %v6534
        %v6549 = vadd.f32 %v6456, %v6535
        %v6550 = vadd.f32 %v6457, %v6523
        %v6551 = vadd.f32 %v6458, %v6536
        %v6552 = vadd.f32 %v6459, %v6537
        %v6553 = vadd.f32 %v6460, %v6538
        %v6554 = vadd.f32 %v6461, %v6531
        %s6555 = scalar_lea.vmem %s6, 240
        %v6556 = vld [vmem:[%s6555] sm:$0xff]
        %v6557 = vld [vmem:[%s6555 + $0x8] sm:$0xff]
        %v6558 = vld [vmem:[%s6555 + $0x10] sm:$0xff]
        %v6559 = vld [vmem:[%s6555 + $0x18] sm:$0xff]
        %v6560 = vld [vmem:[%s6555 + $0x20] sm:$0xff]
        %v6561 = vld [vmem:[%s6555 + $0x28] sm:$0xff]
        %6568 = vrot.lane.b32.xlu0 %v6556, 102
        %v6569 = vpop.permute.xlu0 %6568
        %6570 = vrot.lane.b32.xlu0 %v6557, 102
        %v6571 = vpop.permute.xlu0 %6570
        %6572 = vrot.lane.b32.xlu0 %v6558, 102
        %v6573 = vpop.permute.xlu0 %6572
        %6574 = vrot.lane.b32.xlu0 %v6559, 102
        %v6575 = vpop.permute.xlu0 %6574
        %6576 = vrot.lane.b32.xlu0 %v6560, 102
        %v6577 = vpop.permute.xlu0 %6576
        %6578 = vrot.lane.b32.xlu0 %v6561, 102
        %v6579 = vpop.permute.xlu0 %6578
        %v6580 = vsel %vm641, %v6569, %v6571
        %v6581 = vsel %vm641, %v6571, %v6573
        %v6582 = vsel %vm641, %v6575, %v6577
        %v6583 = vsel %vm641, %v6577, %v6579
        %v6592 = vmul.f32 %v1234, %v6569
        %v6593 = vmul.f32 %v1235, %v6580
        %v6594 = vmul.f32 %v1236, %v6581
        %v6595 = vmul.f32 %v1237, %v6573
        %v6596 = vmul.f32 %v1238, %v6575
        %v6597 = vmul.f32 %v1239, %v6582
        %v6598 = vmul.f32 %v1240, %v6583
        %v6599 = vmul.f32 %v1241, %v6579
        %6608 = vrot.lane.b32.xlu0 %v6592, 104
        %v6609 = vpop.permute.xlu0 %6608
        %6610 = vrot.lane.b32.xlu0 %v6593, 104
        %v6611 = vpop.permute.xlu0 %6610
        %6612 = vrot.lane.b32.xlu0 %v6594, 104
        %v6613 = vpop.permute.xlu0 %6612
        %6614 = vrot.lane.b32.xlu0 %v6595, 104
        %v6615 = vpop.permute.xlu0 %6614
        %6616 = vrot.lane.b32.xlu0 %v6596, 104
        %v6617 = vpop.permute.xlu0 %6616
        %6618 = vrot.lane.b32.xlu0 %v6597, 104
        %v6619 = vpop.permute.xlu0 %6618
        %6620 = vrot.lane.b32.xlu0 %v6598, 104
        %v6621 = vpop.permute.xlu0 %6620
        %6622 = vrot.lane.b32.xlu0 %v6599, 104
        %v6623 = vpop.permute.xlu0 %6622
        %v6624 = vsel %vm565, %v6609, %v6611
        %v6625 = vsel %vm565, %v6611, %v6613
        %v6626 = vsel %vm565, %v6613, %v6615
        %v6627 = vsel %vm565, %v6617, %v6619
        %v6628 = vsel %vm565, %v6619, %v6621
        %v6629 = vsel %vm565, %v6621, %v6623
        %v6638 = vadd.f32 %v6547, %v6624
        %v6639 = vadd.f32 %v6548, %v6625
        %v6640 = vadd.f32 %v6549, %v6626
        %v6641 = vadd.f32 %v6550, %v6615
        %v6642 = vadd.f32 %v6551, %v6627
        %v6643 = vadd.f32 %v6552, %v6628
        %v6644 = vadd.f32 %v6553, %v6629
        %v6645 = vadd.f32 %v6554, %v6623
        %s6646 = scalar_lea.vmem %s6, 432
        %v6647 = vld [vmem:[%s6646] sm:$0xff]
        %v6648 = vld [vmem:[%s6646 + $0x8] sm:$0xff]
        %v6649 = vld [vmem:[%s6646 + $0x10] sm:$0xff]
        %v6650 = vld [vmem:[%s6646 + $0x18] sm:$0xff]
        %v6651 = vld [vmem:[%s6646 + $0x20] sm:$0xff]
        %v6652 = vld [vmem:[%s6646 + $0x28] sm:$0xff]
        %6659 = vrot.lane.b32.xlu0 %v6647, 106
        %v6660 = vpop.permute.xlu0 %6659
        %6661 = vrot.lane.b32.xlu0 %v6648, 106
        %v6662 = vpop.permute.xlu0 %6661
        %6663 = vrot.lane.b32.xlu0 %v6649, 106
        %v6664 = vpop.permute.xlu0 %6663
        %6665 = vrot.lane.b32.xlu0 %v6650, 106
        %v6666 = vpop.permute.xlu0 %6665
        %6667 = vrot.lane.b32.xlu0 %v6651, 106
        %v6668 = vpop.permute.xlu0 %6667
        %6669 = vrot.lane.b32.xlu0 %v6652, 106
        %v6670 = vpop.permute.xlu0 %6669
        %v6671 = vsel %vm4915, %v6660, %v6662
        %v6672 = vsel %vm4915, %v6662, %v6664
        %v6673 = vsel %vm4915, %v6666, %v6668
        %v6674 = vsel %vm4915, %v6668, %v6670
        %v6683 = vmul.f32 %v1234, %v6660
        %v6684 = vmul.f32 %v1235, %v6671
        %v6685 = vmul.f32 %v1236, %v6672
        %v6686 = vmul.f32 %v1237, %v6664
        %v6687 = vmul.f32 %v1238, %v6666
        %v6688 = vmul.f32 %v1239, %v6673
        %v6689 = vmul.f32 %v1240, %v6674
        %v6690 = vmul.f32 %v1241, %v6670
        %6699 = vrot.lane.b32.xlu0 %v6683, 100
        %v6700 = vpop.permute.xlu0 %6699
        %6701 = vrot.lane.b32.xlu0 %v6684, 100
        %v6702 = vpop.permute.xlu0 %6701
        %6703 = vrot.lane.b32.xlu0 %v6685, 100
        %v6704 = vpop.permute.xlu0 %6703
        %6705 = vrot.lane.b32.xlu0 %v6686, 100
        %v6706 = vpop.permute.xlu0 %6705
        %6707 = vrot.lane.b32.xlu0 %v6687, 100
        %v6708 = vpop.permute.xlu0 %6707
        %6709 = vrot.lane.b32.xlu0 %v6688, 100
        %v6710 = vpop.permute.xlu0 %6709
        %6711 = vrot.lane.b32.xlu0 %v6689, 100
        %v6712 = vpop.permute.xlu0 %6711
        %6713 = vrot.lane.b32.xlu0 %v6690, 100
        %v6714 = vpop.permute.xlu0 %6713
        %v6715 = vsel %vm418, %v6700, %v6702
        %v6716 = vsel %vm418, %v6702, %v6704
        %v6717 = vsel %vm418, %v6704, %v6706
        %v6718 = vsel %vm418, %v6708, %v6710
        %v6719 = vsel %vm418, %v6710, %v6712
        %v6720 = vsel %vm418, %v6712, %v6714
        %v6729 = vadd.f32 %v6638, %v6715
        %v6730 = vadd.f32 %v6639, %v6716
        %v6731 = vadd.f32 %v6640, %v6717
        %v6732 = vadd.f32 %v6641, %v6706
        %v6733 = vadd.f32 %v6642, %v6718
        %v6734 = vadd.f32 %v6643, %v6719
        %v6735 = vadd.f32 %v6644, %v6720
        %v6736 = vadd.f32 %v6645, %v6714
        %s6737 = scalar_lea.vmem %s6, 720
        %v6738 = vld [vmem:[%s6737] sm:$0xff]
        %v6739 = vld [vmem:[%s6737 + $0x8] sm:$0xff]
        %v6740 = vld [vmem:[%s6737 + $0x10] sm:$0xff]
        %v6741 = vld [vmem:[%s6737 + $0x18] sm:$0xff]
        %v6742 = vld [vmem:[%s6737 + $0x20] sm:$0xff]
        %v6743 = vld [vmem:[%s6737 + $0x28] sm:$0xff]
        %6750 = vrot.lane.b32.xlu0 %v6738, 22
        %v6751 = vpop.permute.xlu0 %6750
        %6752 = vrot.lane.b32.xlu0 %v6739, 22
        %v6753 = vpop.permute.xlu0 %6752
        %6754 = vrot.lane.b32.xlu0 %v6740, 22
        %v6755 = vpop.permute.xlu0 %6754
        %6756 = vrot.lane.b32.xlu0 %v6741, 22
        %v6757 = vpop.permute.xlu0 %6756
        %6758 = vrot.lane.b32.xlu0 %v6742, 22
        %v6759 = vpop.permute.xlu0 %6758
        %6760 = vrot.lane.b32.xlu0 %v6743, 22
        %v6761 = vpop.permute.xlu0 %6760
        %vm6762 = vcmask 179200
        %v6763 = vsel %vm6762, %v6751, %v6753
        %v6764 = vsel %vm6762, %v6753, %v6755
        %v6765 = vsel %vm6762, %v6757, %v6759
        %v6766 = vsel %vm6762, %v6759, %v6761
        %v6775 = vmul.f32 %v1235, %v6751
        %v6776 = vmul.f32 %v1236, %v6763
        %v6777 = vmul.f32 %v1237, %v6764
        %v6778 = vmul.f32 %v2362, %v6755
        %v6779 = vmul.f32 %v1239, %v6757
        %v6780 = vmul.f32 %v1240, %v6765
        %v6781 = vmul.f32 %v1241, %v6766
        %v6782 = vmul.f32 %v2363, %v6761
        %6791 = vrot.lane.b32.xlu0 %v6775, 56
        %v6792 = vpop.permute.xlu0 %6791
        %6793 = vrot.lane.b32.xlu0 %v6776, 56
        %v6794 = vpop.permute.xlu0 %6793
        %6795 = vrot.lane.b32.xlu0 %v6777, 56
        %v6796 = vpop.permute.xlu0 %6795
        %6797 = vrot.lane.b32.xlu0 %v6778, 56
        %v6798 = vpop.permute.xlu0 %6797
        %6799 = vrot.lane.b32.xlu0 %v6779, 56
        %v6800 = vpop.permute.xlu0 %6799
        %6801 = vrot.lane.b32.xlu0 %v6780, 56
        %v6802 = vpop.permute.xlu0 %6801
        %6803 = vrot.lane.b32.xlu0 %v6781, 56
        %v6804 = vpop.permute.xlu0 %6803
        %6805 = vrot.lane.b32.xlu0 %v6782, 56
        %v6806 = vpop.permute.xlu0 %6805
        %vm6807 = vcmask 457728
        %v6808 = vsel %vm6807, %v6792, %v6794
        %v6809 = vsel %vm6807, %v6794, %v6796
        %v6810 = vsel %vm6807, %v6796, %v6798
        %v6811 = vsel %vm6807, %v6800, %v6802
        %v6812 = vsel %vm6807, %v6802, %v6804
        %v6813 = vsel %vm6807, %v6804, %v6806
        %v6822 = vadd.f32 %v6729, %v6792
        %v6823 = vadd.f32 %v6730, %v6808
        %v6824 = vadd.f32 %v6731, %v6809
        %v6825 = vadd.f32 %v6732, %v6810
        %v6826 = vadd.f32 %v6733, %v6800
        %v6827 = vadd.f32 %v6734, %v6811
        %v6828 = vadd.f32 %v6735, %v6812
        %v6829 = vadd.f32 %v6736, %v6813
        %s6830 = scalar_lea.vmem %s6, 912
        %v6831 = vld [vmem:[%s6830] sm:$0xff]
        %v6832 = vld [vmem:[%s6830 + $0x8] sm:$0xff]
        %v6833 = vld [vmem:[%s6830 + $0x10] sm:$0xff]
        %v6834 = vld [vmem:[%s6830 + $0x18] sm:$0xff]
        %v6835 = vld [vmem:[%s6830 + $0x20] sm:$0xff]
        %v6836 = vld [vmem:[%s6830 + $0x28] sm:$0xff]
        %6843 = vrot.lane.b32.xlu0 %v6831, 26
        %v6844 = vpop.permute.xlu0 %6843
        %6845 = vrot.lane.b32.xlu0 %v6832, 26
        %v6846 = vpop.permute.xlu0 %6845
        %6847 = vrot.lane.b32.xlu0 %v6833, 26
        %v6848 = vpop.permute.xlu0 %6847
        %6849 = vrot.lane.b32.xlu0 %v6834, 26
        %v6850 = vpop.permute.xlu0 %6849
        %6851 = vrot.lane.b32.xlu0 %v6835, 26
        %v6852 = vpop.permute.xlu0 %6851
        %6853 = vrot.lane.b32.xlu0 %v6836, 26
        %v6854 = vpop.permute.xlu0 %6853
        %v6855 = vsel %vm4451, %v6844, %v6846
        %v6856 = vsel %vm4451, %v6846, %v6848
        %v6857 = vsel %vm4451, %v6850, %v6852
        %v6858 = vsel %vm4451, %v6852, %v6854
        %v6867 = vmul.f32 %v1235, %v6844
        %v6868 = vmul.f32 %v1236, %v6855
        %v6869 = vmul.f32 %v1237, %v6856
        %v6870 = vmul.f32 %v2362, %v6848
        %v6871 = vmul.f32 %v1239, %v6850
        %v6872 = vmul.f32 %v1240, %v6857
        %v6873 = vmul.f32 %v1241, %v6858
        %v6874 = vmul.f32 %v2363, %v6854
        %6883 = vrot.lane.b32.xlu0 %v6867, 52
        %v6884 = vpop.permute.xlu0 %6883
        %6885 = vrot.lane.b32.xlu0 %v6868, 52
        %v6886 = vpop.permute.xlu0 %6885
        %6887 = vrot.lane.b32.xlu0 %v6869, 52
        %v6888 = vpop.permute.xlu0 %6887
        %6889 = vrot.lane.b32.xlu0 %v6870, 52
        %v6890 = vpop.permute.xlu0 %6889
        %6891 = vrot.lane.b32.xlu0 %v6871, 52
        %v6892 = vpop.permute.xlu0 %6891
        %6893 = vrot.lane.b32.xlu0 %v6872, 52
        %v6894 = vpop.permute.xlu0 %6893
        %6895 = vrot.lane.b32.xlu0 %v6873, 52
        %v6896 = vpop.permute.xlu0 %6895
        %6897 = vrot.lane.b32.xlu0 %v6874, 52
        %v6898 = vpop.permute.xlu0 %6897
        %v6899 = vsel %vm4406, %v6884, %v6886
        %v6900 = vsel %vm4406, %v6886, %v6888
        %v6901 = vsel %vm4406, %v6888, %v6890
        %v6902 = vsel %vm4406, %v6892, %v6894
        %v6903 = vsel %vm4406, %v6894, %v6896
        %v6904 = vsel %vm4406, %v6896, %v6898
        %v6913 = vadd.f32 %v6822, %v6884
        %v6914 = vadd.f32 %v6823, %v6899
        %v6915 = vadd.f32 %v6824, %v6900
        %v6916 = vadd.f32 %v6825, %v6901
        %v6917 = vadd.f32 %v6826, %v6892
        %v6918 = vadd.f32 %v6827, %v6902
        %v6919 = vadd.f32 %v6828, %v6903
        %v6920 = vadd.f32 %v6829, %v6904
        %s6921 = scalar_lea.vmem %s6, 1008
        %v6922 = vld [vmem:[%s6921] sm:$0xff]
        %v6923 = vld [vmem:[%s6921 + $0x8] sm:$0xff]
        %v6924 = vld [vmem:[%s6921 + $0x10] sm:$0xff]
        %v6925 = vld [vmem:[%s6921 + $0x18] sm:$0xff]
        %v6926 = vld [vmem:[%s6921 + $0x20] sm:$0xff]
        %v6927 = vld [vmem:[%s6921 + $0x28] sm:$0xff]
        %6934 = vrot.lane.b32.xlu0 %v6922, 47
        %v6935 = vpop.permute.xlu0 %6934
        %6936 = vrot.lane.b32.xlu0 %v6923, 47
        %v6937 = vpop.permute.xlu0 %6936
        %6938 = vrot.lane.b32.xlu0 %v6924, 47
        %v6939 = vpop.permute.xlu0 %6938
        %6940 = vrot.lane.b32.xlu0 %v6925, 47
        %v6941 = vpop.permute.xlu0 %6940
        %6942 = vrot.lane.b32.xlu0 %v6926, 47
        %v6943 = vpop.permute.xlu0 %6942
        %6944 = vrot.lane.b32.xlu0 %v6927, 47
        %v6945 = vpop.permute.xlu0 %6944
        %vm6946 = vcmask 384000
        %v6947 = vsel %vm6946, %v6935, %v6937
        %v6948 = vsel %vm6946, %v6937, %v6939
        %v6949 = vsel %vm6946, %v6941, %v6943
        %v6950 = vsel %vm6946, %v6943, %v6945
        %v6959 = vmul.f32 %v1235, %v6935
        %v6960 = vmul.f32 %v1236, %v6947
        %v6961 = vmul.f32 %v1237, %v6948
        %v6962 = vmul.f32 %v2362, %v6939
        %v6963 = vmul.f32 %v1239, %v6941
        %v6964 = vmul.f32 %v1240, %v6949
        %v6965 = vmul.f32 %v1241, %v6950
        %v6966 = vmul.f32 %v2363, %v6945
        %6975 = vrot.lane.b32.xlu0 %v6959, 31
        %v6976 = vpop.permute.xlu0 %6975
        %6977 = vrot.lane.b32.xlu0 %v6960, 31
        %v6978 = vpop.permute.xlu0 %6977
        %6979 = vrot.lane.b32.xlu0 %v6961, 31
        %v6980 = vpop.permute.xlu0 %6979
        %6981 = vrot.lane.b32.xlu0 %v6962, 31
        %v6982 = vpop.permute.xlu0 %6981
        %6983 = vrot.lane.b32.xlu0 %v6963, 31
        %v6984 = vpop.permute.xlu0 %6983
        %6985 = vrot.lane.b32.xlu0 %v6964, 31
        %v6986 = vpop.permute.xlu0 %6985
        %6987 = vrot.lane.b32.xlu0 %v6965, 31
        %v6988 = vpop.permute.xlu0 %6987
        %6989 = vrot.lane.b32.xlu0 %v6966, 31
        %v6990 = vpop.permute.xlu0 %6989
        %vm6991 = vcmask 252928
        %v6992 = vsel %vm6991, %v6976, %v6978
        %v6993 = vsel %vm6991, %v6978, %v6980
        %v6994 = vsel %vm6991, %v6980, %v6982
        %v6995 = vsel %vm6991, %v6984, %v6986
        %v6996 = vsel %vm6991, %v6986, %v6988
        %v6997 = vsel %vm6991, %v6988, %v6990
        %v7006 = vadd.f32 %v6913, %v6976
        %v7007 = vadd.f32 %v6914, %v6992
        %v7008 = vadd.f32 %v6915, %v6993
        %v7009 = vadd.f32 %v6916, %v6994
        %v7010 = vadd.f32 %v6917, %v6984
        %v7011 = vadd.f32 %v6918, %v6995
        %v7012 = vadd.f32 %v6919, %v6996
        %v7013 = vadd.f32 %v6920, %v6997
        %s7014 = scalar_lea.vmem %s6, 1104
        %v7015 = vld [vmem:[%s7014] sm:$0xff]
        %v7016 = vld [vmem:[%s7014 + $0x8] sm:$0xff]
        %v7017 = vld [vmem:[%s7014 + $0x10] sm:$0xff]
        %v7018 = vld [vmem:[%s7014 + $0x18] sm:$0xff]
        %v7019 = vld [vmem:[%s7014 + $0x20] sm:$0xff]
        %v7020 = vld [vmem:[%s7014 + $0x28] sm:$0xff]
        %7027 = vrot.lane.b32.xlu0 %v7015, 49
        %v7028 = vpop.permute.xlu0 %7027
        %7029 = vrot.lane.b32.xlu0 %v7016, 49
        %v7030 = vpop.permute.xlu0 %7029
        %7031 = vrot.lane.b32.xlu0 %v7017, 49
        %v7032 = vpop.permute.xlu0 %7031
        %7033 = vrot.lane.b32.xlu0 %v7018, 49
        %v7034 = vpop.permute.xlu0 %7033
        %7035 = vrot.lane.b32.xlu0 %v7019, 49
        %v7036 = vpop.permute.xlu0 %7035
        %7037 = vrot.lane.b32.xlu0 %v7020, 49
        %v7038 = vpop.permute.xlu0 %7037
        %vm7039 = vcmask 400384
        %v7040 = vsel %vm7039, %v7028, %v7030
        %v7041 = vsel %vm7039, %v7030, %v7032
        %v7042 = vsel %vm7039, %v7034, %v7036
        %v7043 = vsel %vm7039, %v7036, %v7038
        %v7052 = vmul.f32 %v1235, %v7028
        %v7053 = vmul.f32 %v1236, %v7040
        %v7054 = vmul.f32 %v1237, %v7041
        %v7055 = vmul.f32 %v2362, %v7032
        %v7056 = vmul.f32 %v1239, %v7034
        %v7057 = vmul.f32 %v1240, %v7042
        %v7058 = vmul.f32 %v1241, %v7043
        %v7059 = vmul.f32 %v2363, %v7038
        %7068 = vrot.lane.b32.xlu0 %v7052, 29
        %v7069 = vpop.permute.xlu0 %7068
        %7070 = vrot.lane.b32.xlu0 %v7053, 29
        %v7071 = vpop.permute.xlu0 %7070
        %7072 = vrot.lane.b32.xlu0 %v7054, 29
        %v7073 = vpop.permute.xlu0 %7072
        %7074 = vrot.lane.b32.xlu0 %v7055, 29
        %v7075 = vpop.permute.xlu0 %7074
        %7076 = vrot.lane.b32.xlu0 %v7056, 29
        %v7077 = vpop.permute.xlu0 %7076
        %7078 = vrot.lane.b32.xlu0 %v7057, 29
        %v7079 = vpop.permute.xlu0 %7078
        %7080 = vrot.lane.b32.xlu0 %v7058, 29
        %v7081 = vpop.permute.xlu0 %7080
        %7082 = vrot.lane.b32.xlu0 %v7059, 29
        %v7083 = vpop.permute.xlu0 %7082
        %vm7084 = vcmask 236544
        %v7085 = vsel %vm7084, %v7069, %v7071
        %v7086 = vsel %vm7084, %v7071, %v7073
        %v7087 = vsel %vm7084, %v7073, %v7075
        %v7088 = vsel %vm7084, %v7077, %v7079
        %v7089 = vsel %vm7084, %v7079, %v7081
        %v7090 = vsel %vm7084, %v7081, %v7083
        %v7099 = vadd.f32 %v7006, %v7069
        %v7100 = vadd.f32 %v7007, %v7085
        %v7101 = vadd.f32 %v7008, %v7086
        %v7102 = vadd.f32 %v7009, %v7087
        %v7103 = vadd.f32 %v7010, %v7077
        %v7104 = vadd.f32 %v7011, %v7088
        %v7105 = vadd.f32 %v7012, %v7089
        %v7106 = vadd.f32 %v7013, %v7090
        %v7107 = vld [vmem:[%s9] sm:$0xff]
        %v7108 = vld [vmem:[%s9 + $0x8] sm:$0xff]
        %v7109 = vld [vmem:[%s9 + $0x10] sm:$0xff]
        %v7110 = vld [vmem:[%s9 + $0x18] sm:$0xff]
        %v7111 = vld [vmem:[%s9 + $0x20] sm:$0xff]
        %v7112 = vld [vmem:[%s9 + $0x28] sm:$0xff]
        %7119 = vrot.lane.b32.xlu0 %v6273, 78
        %v7120 = vpop.permute.xlu0 %7119
        %7121 = vrot.lane.b32.xlu0 %v6274, 78
        %v7122 = vpop.permute.xlu0 %7121
        %7123 = vrot.lane.b32.xlu0 %v6275, 78
        %v7124 = vpop.permute.xlu0 %7123
        %7125 = vrot.lane.b32.xlu0 %v6276, 78
        %v7126 = vpop.permute.xlu0 %7125
        %7127 = vrot.lane.b32.xlu0 %v6277, 78
        %v7128 = vpop.permute.xlu0 %7127
        %7129 = vrot.lane.b32.xlu0 %v6278, 78
        %v7130 = vpop.permute.xlu0 %7129
        %v7131 = vsel %vm758, %v7120, %v7122
        %v7132 = vsel %vm758, %v7122, %v7124
        %v7133 = vsel %vm758, %v7126, %v7128
        %v7134 = vsel %vm758, %v7128, %v7130
        %7159 = vrot.lane.b32.xlu0 %v3274, 50
        %v7160 = vpop.permute.xlu0 %7159
        %7161 = vrot.lane.b32.xlu0 %v3275, 50
        %v7162 = vpop.permute.xlu0 %7161
        %7163 = vrot.lane.b32.xlu0 %v3276, 50
        %v7164 = vpop.permute.xlu0 %7163
        %7165 = vrot.lane.b32.xlu0 %v3277, 50
        %v7166 = vpop.permute.xlu0 %7165
        %7167 = vrot.lane.b32.xlu0 %v3278, 50
        %v7168 = vpop.permute.xlu0 %7167
        %7169 = vrot.lane.b32.xlu0 %v3279, 50
        %v7170 = vpop.permute.xlu0 %7169
        %7171 = vrot.lane.b32.xlu0 %v3280, 50
        %v7172 = vpop.permute.xlu0 %7171
        %7173 = vrot.lane.b32.xlu0 %v3281, 50
        %v7174 = vpop.permute.xlu0 %7173
        %7175 = vrot.lane.b32.xlu0 %v4930, 50
        %v7176 = vpop.permute.xlu0 %7175
        %7177 = vrot.lane.b32.xlu0 %v4931, 50
        %v7178 = vpop.permute.xlu0 %7177
        %7179 = vrot.lane.b32.xlu0 %v4932, 50
        %v7180 = vpop.permute.xlu0 %7179
        %7181 = vrot.lane.b32.xlu0 %v4933, 50
        %v7182 = vpop.permute.xlu0 %7181
        %7183 = vrot.lane.b32.xlu0 %v4934, 50
        %v7184 = vpop.permute.xlu0 %7183
        %7185 = vrot.lane.b32.xlu0 %v4935, 50
        %v7186 = vpop.permute.xlu0 %7185
        %7187 = vrot.lane.b32.xlu0 %v4936, 50
        %v7188 = vpop.permute.xlu0 %7187
        %7189 = vrot.lane.b32.xlu0 %v4937, 50
        %v7190 = vpop.permute.xlu0 %7189
        %7191 = vrot.lane.b32.xlu0 %v7120, 50
        %v7192 = vpop.permute.xlu0 %7191
        %7193 = vrot.lane.b32.xlu0 %v7131, 50
        %v7194 = vpop.permute.xlu0 %7193
        %7195 = vrot.lane.b32.xlu0 %v7132, 50
        %v7196 = vpop.permute.xlu0 %7195
        %7197 = vrot.lane.b32.xlu0 %v7124, 50
        %v7198 = vpop.permute.xlu0 %7197
        %7199 = vrot.lane.b32.xlu0 %v7126, 50
        %v7200 = vpop.permute.xlu0 %7199
        %7201 = vrot.lane.b32.xlu0 %v7133, 50
        %v7202 = vpop.permute.xlu0 %7201
        %7203 = vrot.lane.b32.xlu0 %v7134, 50
        %v7204 = vpop.permute.xlu0 %7203
        %7205 = vrot.lane.b32.xlu0 %v7130, 50
        %v7206 = vpop.permute.xlu0 %7205
        %7207 = vrot.lane.b32.xlu0 %v7099, 50
        %v7208 = vpop.permute.xlu0 %7207
        %7209 = vrot.lane.b32.xlu0 %v7100, 50
        %v7210 = vpop.permute.xlu0 %7209
        %7211 = vrot.lane.b32.xlu0 %v7101, 50
        %v7212 = vpop.permute.xlu0 %7211
        %7213 = vrot.lane.b32.xlu0 %v7102, 50
        %v7214 = vpop.permute.xlu0 %7213
        %7215 = vrot.lane.b32.xlu0 %v7103, 50
        %v7216 = vpop.permute.xlu0 %7215
        %7217 = vrot.lane.b32.xlu0 %v7104, 50
        %v7218 = vpop.permute.xlu0 %7217
        %7219 = vrot.lane.b32.xlu0 %v7105, 50
        %v7220 = vpop.permute.xlu0 %7219
        %7221 = vrot.lane.b32.xlu0 %v7106, 50
        %v7222 = vpop.permute.xlu0 %7221
        %v7223 = vsel %vm3214, %v7160, %v7162
        %v7224 = vsel %vm3214, %v7162, %v7164
        %v7225 = vsel %vm3214, %v7164, %v7166
        %v7226 = vsel %vm3214, %v7168, %v7170
        %v7227 = vsel %vm3214, %v7170, %v7172
        %v7228 = vsel %vm3214, %v7172, %v7174
        %v7229 = vsel %vm3214, %v7176, %v7178
        %v7230 = vsel %vm3214, %v7178, %v7180
        %v7231 = vsel %vm3214, %v7180, %v7182
        %v7232 = vsel %vm3214, %v7184, %v7186
        %v7233 = vsel %vm3214, %v7186, %v7188
        %v7234 = vsel %vm3214, %v7188, %v7190
        %v7235 = vsel %vm3214, %v7192, %v7194
        %v7236 = vsel %vm3214, %v7194, %v7196
        %v7237 = vsel %vm3214, %v7196, %v7198
        %v7238 = vsel %vm3214, %v7200, %v7202
        %v7239 = vsel %vm3214, %v7202, %v7204
        %v7240 = vsel %vm3214, %v7204, %v7206
        %v7241 = vsel %vm3214, %v7208, %v7210
        %v7242 = vsel %vm3214, %v7210, %v7212
        %v7243 = vsel %vm3214, %v7212, %v7214
        %v7244 = vsel %vm3214, %v7216, %v7218
        %v7245 = vsel %vm3214, %v7218, %v7220
        %v7246 = vsel %vm3214, %v7220, %v7222
        %vm7271 = vcmask 523264
        %v7273 = vsel %vm7271, %v7107, 0
        %v7276 = vsel %vm7271, %v7108, 0
        %v7279 = vsel %vm7271, %v7109, 0
        %v7282 = vsel %vm7271, %v7110, 0
        %v7285 = vsel %vm7271, %v7111, 0
        %v7288 = vsel %vm7271, %v7112, 0
        %7290 = vmatprep.subr.mxu0 %v7224
        %7291 = vmatpush1.msra.mxu0 %v7223
        %7292 = vmatprep.subr.mxu0 %v7227
        %7293 = vmatpush1.msra.mxu0 %v7226
        %7294 = vmatprep.subr.mxu0 %v7230
        %7295 = vmatpush1.msra.mxu0 %v7229
        %7296 = vmatprep.subr.mxu0 %v7233
        %7297 = vmatpush1.msra.mxu0 %v7232
        %7298 = vmatprep.subr.mxu0 %v7236
        %7299 = vmatpush1.msra.mxu0 %v7235
        %7300 = vmatprep.subr.mxu0 %v7239
        %7301 = vmatpush1.msra.mxu0 %v7238
        %7302 = vmatprep.subr.mxu0 %v7242
        %7303 = vmatpush1.msra.mxu0 %v7241
        %7304 = vmatprep.subr.mxu0 %v7245
        %7305 = vmatpush1.msra.mxu0 %v7244
        %7306 = vmatprep.subr.mxu0 0.0
        %7307 = vmatpush1.msra.mxu0 0.0
        %7308 = vmatprep.subr.mxu0 0.0
        %7309 = vmatpush1.msra.mxu0 0.0
        %7310 = vmatprep.subr.mxu0 0.0
        %7311 = vmatpush1.msra.mxu0 0.0
        %7312 = vmatprep.subr.mxu0 0.0
        %7313 = vmatpush1.msra.mxu0 0.0
        %7314 = vmatprep.subr.mxu0 0.0
        %7315 = vmatpush1.msra.mxu0 0.0
        %7316 = vmatprep.subr.mxu0 0.0
        %7317 = vmatpush1.msra.mxu0 0.0
        %7318 = vmatprep.subr.mxu0 0.0
        %7319 = vmatpush1.msra.mxu0 0.0
        %7320 = vmatprep.subr.mxu0 0.0
        %7321 = vmatpush1.msra.mxu0 0.0
        %7322 = vmatprep.subr.mxu0 0.0
        %7323 = vmatpush1.msra.mxu0 0.0
        %7324 = vmatprep.subr.mxu0 0.0
        %7325 = vmatpush1.msra.mxu0 0.0
        %7326 = vmatprep.subr.mxu0 0.0
        %7327 = vmatpush1.msra.mxu0 0.0
        %7328 = vmatprep.subr.mxu0 0.0
        %7329 = vmatpush1.msra.mxu0 0.0
        %7330 = vmatprep.subr.mxu0 0.0
        %7331 = vmatpush1.msra.mxu0 0.0
        %7332 = vmatprep.subr.mxu0 0.0
        %7333 = vmatpush1.msra.mxu0 0.0
        %7334 = vmatprep.subr.mxu0 0.0
        %7335 = vmatpush1.msra.mxu0 0.0
        %7336 = vmatprep.subr.mxu0 0.0
        %7337 = vmatpush1.msra.mxu0 0.0
        %7338 = vmatprep.subr.mxu0 0.0
        %7339 = vmatpush1.msra.mxu0 0.0
        %7340 = vmatprep.subr.mxu0 0.0
        %7341 = vmatpush1.msra.mxu0 0.0
        %7342 = vmatprep.subr.mxu0 0.0
        %7343 = vmatpush1.msra.mxu0 0.0
        %7344 = vmatprep.subr.mxu0 0.0
        %7345 = vmatpush1.msra.mxu0 0.0
        %7346 = vmatprep.subr.mxu0 0.0
        %7347 = vmatpush1.msra.mxu0 0.0
        %7348 = vmatprep.subr.mxu0 0.0
        %7349 = vmatpush1.msra.mxu0 0.0
        %7350 = vmatprep.subr.mxu0 0.0
        %7351 = vmatpush1.msra.mxu0 0.0
        %7352 = vmatprep.subr.mxu0 0.0
        %7353 = vmatpush1.msra.mxu0 0.0
        %7354 = vmatprep.mubr.f32.mxu0 0.0
        %7355 = vmatmul.mubr.f32.gmra.mrb[0].mxu0 %v7273
        %v7356 = vpop.f32.mrb[0].mxu0
        %v7357 = vadd.f32 0.0, %v7356
        %v7358 = vpop.f32.mrb[0].mxu0
        %v7359 = vadd.f32 0.0, %v7358
        %7360 = vmatprep.mubr.f32.mxu0 0.0
        %7361 = vmatmul.mubr.f32.gmra.mrb[0].mxu0 %v7276
        %v7362 = vpop.f32.mrb[0].mxu0
        %v7363 = vadd.f32 0.0, %v7362
        %v7364 = vpop.f32.mrb[0].mxu0
        %v7365 = vadd.f32 0.0, %v7364
        %7366 = vmatprep.mubr.f32.mxu0 0.0
        %7367 = vmatmul.mubr.f32.gmra.mrb[0].mxu0 %v7279
        %v7368 = vpop.f32.mrb[0].mxu0
        %v7369 = vadd.f32 0.0, %v7368
        %v7370 = vpop.f32.mrb[0].mxu0
        %v7371 = vadd.f32 0.0, %v7370
        %7372 = vmatprep.mubr.f32.mxu0 0.0
        %7373 = vmatmul.mubr.f32.gmra.mrb[0].mxu0 %v7282
        %v7374 = vpop.f32.mrb[0].mxu0
        %v7375 = vadd.f32 0.0, %v7374
        %v7376 = vpop.f32.mrb[0].mxu0
        %v7377 = vadd.f32 0.0, %v7376
        %7378 = vmatprep.mubr.f32.mxu0 0.0
        %7379 = vmatmul.mubr.f32.gmra.mrb[0].mxu0 %v7285
        %v7380 = vpop.f32.mrb[0].mxu0
        %v7381 = vadd.f32 0.0, %v7380
        %v7382 = vpop.f32.mrb[0].mxu0
        %v7383 = vadd.f32 0.0, %v7382
        %7384 = vmatprep.mubr.f32.mxu0 0.0
        %7385 = vmatmul.mubr.f32.gmra.mrb[0].mxu0 %v7288
        %v7386 = vpop.f32.mrb[0].mxu0
        %v7387 = vadd.f32 0.0, %v7386
        %v7388 = vpop.f32.mrb[0].mxu0
        %v7389 = vadd.f32 0.0, %v7388
        %7390 = vdwg.mxu0
        %7391 = vmatprep.subr.mxu0 0.0
        %7392 = vmatpush1.msra.mxu0 %v7225
        %7393 = vmatprep.subr.mxu0 0.0
        %7394 = vmatpush1.msra.mxu0 %v7228
        %7395 = vmatprep.subr.mxu0 0.0
        %7396 = vmatpush1.msra.mxu0 %v7231
        %7397 = vmatprep.subr.mxu0 0.0
        %7398 = vmatpush1.msra.mxu0 %v7234
        %7399 = vmatprep.subr.mxu0 0.0
        %7400 = vmatpush1.msra.mxu0 %v7237
        %7401 = vmatprep.subr.mxu0 0.0
        %7402 = vmatpush1.msra.mxu0 %v7240
        %7403 = vmatprep.subr.mxu0 0.0
        %7404 = vmatpush1.msra.mxu0 %v7243
        %7405 = vmatprep.subr.mxu0 0.0
        %7406 = vmatpush1.msra.mxu0 %v7246
        %7407 = vmatprep.subr.mxu0 0.0
        %7408 = vmatpush1.msra.mxu0 0.0
        %7409 = vmatprep.subr.mxu0 0.0
        %7410 = vmatpush1.msra.mxu0 0.0
        %7411 = vmatprep.subr.mxu0 0.0
        %7412 = vmatpush1.msra.mxu0 0.0
        %7413 = vmatprep.subr.mxu0 0.0
        %7414 = vmatpush1.msra.mxu0 0.0
        %7415 = vmatprep.subr.mxu0 0.0
        %7416 = vmatpush1.msra.mxu0 0.0
        %7417 = vmatprep.subr.mxu0 0.0
        %7418 = vmatpush1.msra.mxu0 0.0
        %7419 = vmatprep.subr.mxu0 0.0
        %7420 = vmatpush1.msra.mxu0 0.0
        %7421 = vmatprep.subr.mxu0 0.0
        %7422 = vmatpush1.msra.mxu0 0.0
        %7423 = vmatprep.subr.mxu0 0.0
        %7424 = vmatpush1.msra.mxu0 0.0
        %7425 = vmatprep.subr.mxu0 0.0
        %7426 = vmatpush1.msra.mxu0 0.0
        %7427 = vmatprep.subr.mxu0 0.0
        %7428 = vmatpush1.msra.mxu0 0.0
        %7429 = vmatprep.subr.mxu0 0.0
        %7430 = vmatpush1.msra.mxu0 0.0
        %7431 = vmatprep.subr.mxu0 0.0
        %7432 = vmatpush1.msra.mxu0 0.0
        %7433 = vmatprep.subr.mxu0 0.0
        %7434 = vmatpush1.msra.mxu0 0.0
        %7435 = vmatprep.subr.mxu0 0.0
        %7436 = vmatpush1.msra.mxu0 0.0
        %7437 = vmatprep.subr.mxu0 0.0
        %7438 = vmatpush1.msra.mxu0 0.0
        %7439 = vmatprep.subr.mxu0 0.0
        %7440 = vmatpush1.msra.mxu0 0.0
        %7441 = vmatprep.subr.mxu0 0.0
        %7442 = vmatpush1.msra.mxu0 0.0
        %7443 = vmatprep.subr.mxu0 0.0
        %7444 = vmatpush1.msra.mxu0 0.0
        %7445 = vmatprep.subr.mxu0 0.0
        %7446 = vmatpush1.msra.mxu0 0.0
        %7447 = vmatprep.subr.mxu0 0.0
        %7448 = vmatpush1.msra.mxu0 0.0
        %7449 = vmatprep.subr.mxu0 0.0
        %7450 = vmatpush1.msra.mxu0 0.0
        %7451 = vmatprep.subr.mxu0 0.0
        %7452 = vmatpush1.msra.mxu0 0.0
        %7453 = vmatprep.subr.mxu0 0.0
        %7454 = vmatpush1.msra.mxu0 0.0
        %7455 = vmatprep.mubr.f32.mxu0 0.0
        %7456 = vmatmul.mubr.f32.gmra.mrb[0].mxu0 %v7273
        %v7457 = vpop.f32.mrb[0].mxu0
        %v7458 = vadd.f32 0.0, %v7457
        %v7459 = vpop.f32.mrb[0].mxu0
        %7460 = vmatprep.mubr.f32.mxu0 0.0
        %7461 = vmatmul.mubr.f32.gmra.mrb[0].mxu0 %v7276
        %v7462 = vpop.f32.mrb[0].mxu0
        %v7463 = vadd.f32 0.0, %v7462
        %v7464 = vpop.f32.mrb[0].mxu0
        %7465 = vmatprep.mubr.f32.mxu0 0.0
        %7466 = vmatmul.mubr.f32.gmra.mrb[0].mxu0 %v7279
        %v7467 = vpop.f32.mrb[0].mxu0
        %v7468 = vadd.f32 0.0, %v7467
        %v7469 = vpop.f32.mrb[0].mxu0
        %7470 = vmatprep.mubr.f32.mxu0 0.0
        %7471 = vmatmul.mubr.f32.gmra.mrb[0].mxu0 %v7282
        %v7472 = vpop.f32.mrb[0].mxu0
        %v7473 = vadd.f32 0.0, %v7472
        %v7474 = vpop.f32.mrb[0].mxu0
        %7475 = vmatprep.mubr.f32.mxu0 0.0
        %7476 = vmatmul.mubr.f32.gmra.mrb[0].mxu0 %v7285
        %v7477 = vpop.f32.mrb[0].mxu0
        %v7478 = vadd.f32 0.0, %v7477
        %v7479 = vpop.f32.mrb[0].mxu0
        %7480 = vmatprep.mubr.f32.mxu0 0.0
        %7481 = vmatmul.mubr.f32.gmra.mrb[0].mxu0 %v7288
        %v7482 = vpop.f32.mrb[0].mxu0
        %v7483 = vadd.f32 0.0, %v7482
        %v7484 = vpop.f32.mrb[0].mxu0
        %7485 = vdwg.mxu0
        %7492 = vrot.lane.b32.xlu0 %v7357, 103
        %v7493 = vpop.permute.xlu0 %7492
        %7494 = vrot.lane.b32.xlu0 %v7359, 103
        %v7495 = vpop.permute.xlu0 %7494
        %7496 = vrot.lane.b32.xlu0 %v7458, 103
        %v7497 = vpop.permute.xlu0 %7496
        %7498 = vrot.lane.b32.xlu0 %v7363, 103
        %v7499 = vpop.permute.xlu0 %7498
        %7500 = vrot.lane.b32.xlu0 %v7365, 103
        %v7501 = vpop.permute.xlu0 %7500
        %7502 = vrot.lane.b32.xlu0 %v7463, 103
        %v7503 = vpop.permute.xlu0 %7502
        %v7504 = vsel %vm600, %v7493, %v7495
        %v7505 = vsel %vm600, %v7495, %v7497
        %v7506 = vsel %vm600, %v7499, %v7501
        %v7507 = vsel %vm600, %v7501, %v7503
        %v7516 = vadd.f32 %v1208, %v7493
        %v7517 = vadd.f32 %v1209, %v7504
        %v7518 = vadd.f32 %v1210, %v7505
        %v7519 = vadd.f32 %v1211, %v7497
        %v7520 = vadd.f32 %v1212, %v7499
        %v7521 = vadd.f32 %v1213, %v7506
        %v7522 = vadd.f32 %v1214, %v7507
        %v7523 = vadd.f32 %v1215, %v7503
        %v7524 = vmax.f32 %v7369, 0.0
        %v7525 = vmax.f32 %v7371, 0.0
        %v7526 = vmax.f32 %v7468, 0.0
        %v7527 = vmax.f32 %v7375, 0.0
        %v7528 = vmax.f32 %v7377, 0.0
        %v7529 = vmax.f32 %v7473, 0.0
        %v7531 = vlaneseq
        %v7532 = vshrl.u32 %v7531, 7
        %v7533 = vsub.s32 0, %v7532
        %v7534 = vrot.slane %v411, %v7533
        %v7535 = vlaneseq
        %v7536 = vshrl.u32 %v7535, 7
        %v7537 = vsub.s32 1, %v7536
        %v7538 = vrot.slane %v411, %v7537
        %v7539 = vlaneseq
        %v7540 = vshrl.u32 %v7539, 7
        %v7541 = vsub.s32 2, %v7540
        %v7542 = vrot.slane %v411, %v7541
        %v7546 = vmul.f32 %v7524, %v7534
        %v7547 = vmul.f32 %v7525, %v7538
        %v7548 = vmul.f32 %v7526, %v7542
        %v7549 = vmul.f32 %v7527, %v7534
        %v7550 = vmul.f32 %v7528, %v7538
        %v7551 = vmul.f32 %v7529, %v7542
        %7552 = vst [vmem:[#allocation2 + $0x8] sm:$0xff] %v7546
        %7553 = vst [vmem:[#allocation2 + $0x10] sm:$0xff] %v7547
        %7554 = vst [vmem:[#allocation2 + $0x18] sm:$0xff] %v7548
        %7555 = vst [vmem:[#allocation2 + $0x30] sm:$0xff] %v7549
        %7556 = vst [vmem:[#allocation2 + $0x38] sm:$0xff] %v7550
        %7557 = vst [vmem:[#allocation2 + $0x40] sm:$0xff] %v7551
        %v7558 = vld [vmem:[#allocation2] sm:$0xff]
        %v7559 = vld [vmem:[#allocation2 + $0x8] sm:$0xff]
        %v7560 = vld [vmem:[#allocation2 + $0x10] sm:$0xff]
        %v7561 = vld [vmem:[#allocation2 + $0x18] sm:$0xff]
        %v7562 = vld [vmem:[#allocation2 + $0x28] sm:$0xff]
        %v7563 = vld [vmem:[#allocation2 + $0x30] sm:$0xff]
        %v7564 = vld [vmem:[#allocation2 + $0x38] sm:$0xff]
        %v7565 = vld [vmem:[#allocation2 + $0x40] sm:$0xff]
        %v7566 = vld [vmem:[%s7] sm:$0xff]
        %v7567 = vld [vmem:[%s7 + $0x8] sm:$0xff]
        %v7568 = vld [vmem:[%s7 + $0x10] sm:$0xff]
        %v7569 = vld [vmem:[%s7 + $0x18] sm:$0xff]
        %v7570 = vld [vmem:[%s7 + $0x20] sm:$0xff]
        %v7571 = vld [vmem:[%s7 + $0x28] sm:$0xff]
        %7578 = vrot.lane.b32.xlu0 %v7566, 103
        %v7579 = vpop.permute.xlu0 %7578
        %7580 = vrot.lane.b32.xlu0 %v7567, 103
        %v7581 = vpop.permute.xlu0 %7580
        %7582 = vrot.lane.b32.xlu0 %v7568, 103
        %v7583 = vpop.permute.xlu0 %7582
        %7584 = vrot.lane.b32.xlu0 %v7569, 103
        %v7585 = vpop.permute.xlu0 %7584
        %7586 = vrot.lane.b32.xlu0 %v7570, 103
        %v7587 = vpop.permute.xlu0 %7586
        %7588 = vrot.lane.b32.xlu0 %v7571, 103
        %v7589 = vpop.permute.xlu0 %7588
        %v7590 = vsel %vm600, %v7579, %v7581
        %v7591 = vsel %vm600, %v7581, %v7583
        %v7592 = vsel %vm600, %v7585, %v7587
        %v7593 = vsel %vm600, %v7587, %v7589
        %v7602 = vmul.f32 %v7558, %v7579
        %v7603 = vmul.f32 %v7559, %v7590
        %v7604 = vmul.f32 %v7560, %v7591
        %v7605 = vmul.f32 %v7561, %v7583
        %v7606 = vmul.f32 %v7562, %v7585
        %v7607 = vmul.f32 %v7563, %v7592
        %v7608 = vmul.f32 %v7564, %v7593
        %v7609 = vmul.f32 %v7565, %v7589
        %s7610 = scalar_lea.vmem %s7, 48
        %v7611 = vld [vmem:[%s7610] sm:$0xff]
        %v7612 = vld [vmem:[%s7610 + $0x8] sm:$0xff]
        %v7613 = vld [vmem:[%s7610 + $0x10] sm:$0xff]
        %v7614 = vld [vmem:[%s7610 + $0x18] sm:$0xff]
        %v7615 = vld [vmem:[%s7610 + $0x20] sm:$0xff]
        %v7616 = vld [vmem:[%s7610 + $0x28] sm:$0xff]
        %7623 = vrot.lane.b32.xlu0 %v7611, 104
        %v7624 = vpop.permute.xlu0 %7623
        %7625 = vrot.lane.b32.xlu0 %v7612, 104
        %v7626 = vpop.permute.xlu0 %7625
        %7627 = vrot.lane.b32.xlu0 %v7613, 104
        %v7628 = vpop.permute.xlu0 %7627
        %7629 = vrot.lane.b32.xlu0 %v7614, 104
        %v7630 = vpop.permute.xlu0 %7629
        %7631 = vrot.lane.b32.xlu0 %v7615, 104
        %v7632 = vpop.permute.xlu0 %7631
        %7633 = vrot.lane.b32.xlu0 %v7616, 104
        %v7634 = vpop.permute.xlu0 %7633
        %v7635 = vsel %vm565, %v7624, %v7626
        %v7636 = vsel %vm565, %v7626, %v7628
        %v7637 = vsel %vm565, %v7630, %v7632
        %v7638 = vsel %vm565, %v7632, %v7634
        %v7647 = vmul.f32 %v7558, %v7624
        %v7648 = vmul.f32 %v7559, %v7635
        %v7649 = vmul.f32 %v7560, %v7636
        %v7650 = vmul.f32 %v7561, %v7628
        %v7651 = vmul.f32 %v7562, %v7630
        %v7652 = vmul.f32 %v7563, %v7637
        %v7653 = vmul.f32 %v7564, %v7638
        %v7654 = vmul.f32 %v7565, %v7634
        %7663 = vrot.lane.b32.xlu0 %v7647, 127
        %v7664 = vpop.permute.xlu0 %7663
        %7665 = vrot.lane.b32.xlu0 %v7648, 127
        %v7666 = vpop.permute.xlu0 %7665
        %7667 = vrot.lane.b32.xlu0 %v7649, 127
        %v7668 = vpop.permute.xlu0 %7667
        %7669 = vrot.lane.b32.xlu0 %v7650, 127
        %v7670 = vpop.permute.xlu0 %7669
        %7671 = vrot.lane.b32.xlu0 %v7651, 127
        %v7672 = vpop.permute.xlu0 %7671
        %7673 = vrot.lane.b32.xlu0 %v7652, 127
        %v7674 = vpop.permute.xlu0 %7673
        %7675 = vrot.lane.b32.xlu0 %v7653, 127
        %v7676 = vpop.permute.xlu0 %7675
        %7677 = vrot.lane.b32.xlu0 %v7654, 127
        %v7678 = vpop.permute.xlu0 %7677
        %v7679 = vsel %vm487, %v7664, %v7666
        %v7680 = vsel %vm487, %v7666, %v7668
        %v7681 = vsel %vm487, %v7668, %v7670
        %v7682 = vsel %vm487, %v7672, %v7674
        %v7683 = vsel %vm487, %v7674, %v7676
        %v7684 = vsel %vm487, %v7676, %v7678
        %v7693 = vadd.f32 %v7602, %v7679
        %v7694 = vadd.f32 %v7603, %v7680
        %v7695 = vadd.f32 %v7604, %v7681
        %v7696 = vadd.f32 %v7605, %v7670
        %v7697 = vadd.f32 %v7606, %v7682
        %v7698 = vadd.f32 %v7607, %v7683
        %v7699 = vadd.f32 %v7608, %v7684
        %v7700 = vadd.f32 %v7609, %v7678
        %s7701 = scalar_lea.vmem %s7, 96
        %v7702 = vld [vmem:[%s7701] sm:$0xff]
        %v7703 = vld [vmem:[%s7701 + $0x8] sm:$0xff]
        %v7704 = vld [vmem:[%s7701 + $0x10] sm:$0xff]
        %v7705 = vld [vmem:[%s7701 + $0x18] sm:$0xff]
        %v7706 = vld [vmem:[%s7701 + $0x20] sm:$0xff]
        %v7707 = vld [vmem:[%s7701 + $0x28] sm:$0xff]
        %7714 = vrot.lane.b32.xlu0 %v7702, 105
        %v7715 = vpop.permute.xlu0 %7714
        %7716 = vrot.lane.b32.xlu0 %v7703, 105
        %v7717 = vpop.permute.xlu0 %7716
        %7718 = vrot.lane.b32.xlu0 %v7704, 105
        %v7719 = vpop.permute.xlu0 %7718
        %7720 = vrot.lane.b32.xlu0 %v7705, 105
        %v7721 = vpop.permute.xlu0 %7720
        %7722 = vrot.lane.b32.xlu0 %v7706, 105
        %v7723 = vpop.permute.xlu0 %7722
        %7724 = vrot.lane.b32.xlu0 %v7707, 105
        %v7725 = vpop.permute.xlu0 %7724
        %v7726 = vsel %vm5320, %v7715, %v7717
        %v7727 = vsel %vm5320, %v7717, %v7719
        %v7728 = vsel %vm5320, %v7721, %v7723
        %v7729 = vsel %vm5320, %v7723, %v7725
        %v7738 = vmul.f32 %v7558, %v7715
        %v7739 = vmul.f32 %v7559, %v7726
        %v7740 = vmul.f32 %v7560, %v7727
        %v7741 = vmul.f32 %v7561, %v7719
        %v7742 = vmul.f32 %v7562, %v7721
        %v7743 = vmul.f32 %v7563, %v7728
        %v7744 = vmul.f32 %v7564, %v7729
        %v7745 = vmul.f32 %v7565, %v7725
        %7754 = vrot.lane.b32.xlu0 %v7738, 126
        %v7755 = vpop.permute.xlu0 %7754
        %7756 = vrot.lane.b32.xlu0 %v7739, 126
        %v7757 = vpop.permute.xlu0 %7756
        %7758 = vrot.lane.b32.xlu0 %v7740, 126
        %v7759 = vpop.permute.xlu0 %7758
        %7760 = vrot.lane.b32.xlu0 %v7741, 126
        %v7761 = vpop.permute.xlu0 %7760
        %7762 = vrot.lane.b32.xlu0 %v7742, 126
        %v7763 = vpop.permute.xlu0 %7762
        %7764 = vrot.lane.b32.xlu0 %v7743, 126
        %v7765 = vpop.permute.xlu0 %7764
        %7766 = vrot.lane.b32.xlu0 %v7744, 126
        %v7767 = vpop.permute.xlu0 %7766
        %7768 = vrot.lane.b32.xlu0 %v7745, 126
        %v7769 = vpop.permute.xlu0 %7768
        %v7770 = vsel %vm526, %v7755, %v7757
        %v7771 = vsel %vm526, %v7757, %v7759
        %v7772 = vsel %vm526, %v7759, %v7761
        %v7773 = vsel %vm526, %v7763, %v7765
        %v7774 = vsel %vm526, %v7765, %v7767
        %v7775 = vsel %vm526, %v7767, %v7769
        %v7784 = vadd.f32 %v7693, %v7770
        %v7785 = vadd.f32 %v7694, %v7771
        %v7786 = vadd.f32 %v7695, %v7772
        %v7787 = vadd.f32 %v7696, %v7761
        %v7788 = vadd.f32 %v7697, %v7773
        %v7789 = vadd.f32 %v7698, %v7774
        %v7790 = vadd.f32 %v7699, %v7775
        %v7791 = vadd.f32 %v7700, %v7769
        %s7792 = scalar_lea.vmem %s7, 144
        %v7793 = vld [vmem:[%s7792] sm:$0xff]
        %v7794 = vld [vmem:[%s7792 + $0x8] sm:$0xff]
        %v7795 = vld [vmem:[%s7792 + $0x10] sm:$0xff]
        %v7796 = vld [vmem:[%s7792 + $0x18] sm:$0xff]
        %v7797 = vld [vmem:[%s7792 + $0x20] sm:$0xff]
        %v7798 = vld [vmem:[%s7792 + $0x28] sm:$0xff]
        %7805 = vrot.lane.b32.xlu0 %v7793, 127
        %v7806 = vpop.permute.xlu0 %7805
        %7807 = vrot.lane.b32.xlu0 %v7794, 127
        %v7808 = vpop.permute.xlu0 %7807
        %7809 = vrot.lane.b32.xlu0 %v7795, 127
        %v7810 = vpop.permute.xlu0 %7809
        %7811 = vrot.lane.b32.xlu0 %v7796, 127
        %v7812 = vpop.permute.xlu0 %7811
        %7813 = vrot.lane.b32.xlu0 %v7797, 127
        %v7814 = vpop.permute.xlu0 %7813
        %7815 = vrot.lane.b32.xlu0 %v7798, 127
        %v7816 = vpop.permute.xlu0 %7815
        %v7817 = vsel %vm487, %v7806, %v7808
        %v7818 = vsel %vm487, %v7808, %v7810
        %v7819 = vsel %vm487, %v7812, %v7814
        %v7820 = vsel %vm487, %v7814, %v7816
        %v7829 = vmul.f32 %v7558, %v7806
        %v7830 = vmul.f32 %v7559, %v7817
        %v7831 = vmul.f32 %v7560, %v7818
        %v7832 = vmul.f32 %v7561, %v7810
        %v7833 = vmul.f32 %v7562, %v7812
        %v7834 = vmul.f32 %v7563, %v7819
        %v7835 = vmul.f32 %v7564, %v7820
        %v7836 = vmul.f32 %v7565, %v7816
        %7845 = vrot.lane.b32.xlu0 %v7829, 104
        %v7846 = vpop.permute.xlu0 %7845
        %7847 = vrot.lane.b32.xlu0 %v7830, 104
        %v7848 = vpop.permute.xlu0 %7847
        %7849 = vrot.lane.b32.xlu0 %v7831, 104
        %v7850 = vpop.permute.xlu0 %7849
        %7851 = vrot.lane.b32.xlu0 %v7832, 104
        %v7852 = vpop.permute.xlu0 %7851
        %7853 = vrot.lane.b32.xlu0 %v7833, 104
        %v7854 = vpop.permute.xlu0 %7853
        %7855 = vrot.lane.b32.xlu0 %v7834, 104
        %v7856 = vpop.permute.xlu0 %7855
        %7857 = vrot.lane.b32.xlu0 %v7835, 104
        %v7858 = vpop.permute.xlu0 %7857
        %7859 = vrot.lane.b32.xlu0 %v7836, 104
        %v7860 = vpop.permute.xlu0 %7859
        %v7861 = vsel %vm565, %v7846, %v7848
        %v7862 = vsel %vm565, %v7848, %v7850
        %v7863 = vsel %vm565, %v7850, %v7852
        %v7864 = vsel %vm565, %v7854, %v7856
        %v7865 = vsel %vm565, %v7856, %v7858
        %v7866 = vsel %vm565, %v7858, %v7860
        %v7875 = vadd.f32 %v7784, %v7861
        %v7876 = vadd.f32 %v7785, %v7862
        %v7877 = vadd.f32 %v7786, %v7863
        %v7878 = vadd.f32 %v7787, %v7852
        %v7879 = vadd.f32 %v7788, %v7864
        %v7880 = vadd.f32 %v7789, %v7865
        %v7881 = vadd.f32 %v7790, %v7866
        %v7882 = vadd.f32 %v7791, %v7860
        %s7883 = scalar_lea.vmem %s7, 192
        %v7884 = vld [vmem:[%s7883] sm:$0xff]
        %v7885 = vld [vmem:[%s7883 + $0x8] sm:$0xff]
        %v7886 = vld [vmem:[%s7883 + $0x10] sm:$0xff]
        %v7887 = vld [vmem:[%s7883 + $0x18] sm:$0xff]
        %v7888 = vld [vmem:[%s7883 + $0x20] sm:$0xff]
        %v7889 = vld [vmem:[%s7883 + $0x28] sm:$0xff]
        %v7890 = vmul.f32 %v7559, %v7884
        %v7891 = vmul.f32 %v7560, %v7885
        %v7892 = vmul.f32 %v7561, %v7886
        %v7893 = vmul.f32 %v7563, %v7887
        %v7894 = vmul.f32 %v7564, %v7888
        %v7895 = vmul.f32 %v7565, %v7889
        %7902 = vrot.lane.b32.xlu0 %v7890, 103
        %v7903 = vpop.permute.xlu0 %7902
        %7904 = vrot.lane.b32.xlu0 %v7891, 103
        %v7905 = vpop.permute.xlu0 %7904
        %7906 = vrot.lane.b32.xlu0 %v7892, 103
        %v7907 = vpop.permute.xlu0 %7906
        %7908 = vrot.lane.b32.xlu0 %v7893, 103
        %v7909 = vpop.permute.xlu0 %7908
        %7910 = vrot.lane.b32.xlu0 %v7894, 103
        %v7911 = vpop.permute.xlu0 %7910
        %7912 = vrot.lane.b32.xlu0 %v7895, 103
        %v7913 = vpop.permute.xlu0 %7912
        %v7914 = vsel %vm600, %v7903, %v7905
        %v7915 = vsel %vm600, %v7905, %v7907
        %v7916 = vsel %vm600, %v7909, %v7911
        %v7917 = vsel %vm600, %v7911, %v7913
        %v7926 = vadd.f32 %v7875, %v7903
        %v7927 = vadd.f32 %v7876, %v7914
        %v7928 = vadd.f32 %v7877, %v7915
        %v7929 = vadd.f32 %v7878, %v7907
        %v7930 = vadd.f32 %v7879, %v7909
        %v7931 = vadd.f32 %v7880, %v7916
        %v7932 = vadd.f32 %v7881, %v7917
        %v7933 = vadd.f32 %v7882, %v7913
        %v7934 = vld [vmem:[#allocation2 + $0x20] sm:$0xff]
        %v7935 = vld [vmem:[#allocation2 + $0x48] sm:$0xff]
        %s7936 = scalar_lea.vmem %s7, 240
        %v7937 = vld [vmem:[%s7936] sm:$0xff]
        %v7938 = vld [vmem:[%s7936 + $0x8] sm:$0xff]
        %v7939 = vld [vmem:[%s7936 + $0x10] sm:$0xff]
        %v7940 = vld [vmem:[%s7936 + $0x18] sm:$0xff]
        %v7941 = vld [vmem:[%s7936 + $0x20] sm:$0xff]
        %v7942 = vld [vmem:[%s7936 + $0x28] sm:$0xff]
        %7949 = vrot.lane.b32.xlu0 %v7937, 1
        %v7950 = vpop.permute.xlu0 %7949
        %7951 = vrot.lane.b32.xlu0 %v7938, 1
        %v7952 = vpop.permute.xlu0 %7951
        %7953 = vrot.lane.b32.xlu0 %v7939, 1
        %v7954 = vpop.permute.xlu0 %7953
        %7955 = vrot.lane.b32.xlu0 %v7940, 1
        %v7956 = vpop.permute.xlu0 %7955
        %7957 = vrot.lane.b32.xlu0 %v7941, 1
        %v7958 = vpop.permute.xlu0 %7957
        %7959 = vrot.lane.b32.xlu0 %v7942, 1
        %v7960 = vpop.permute.xlu0 %7959
        %v7961 = vsel %vm5545, %v7950, %v7952
        %v7962 = vsel %vm5545, %v7952, %v7954
        %v7963 = vsel %vm5545, %v7956, %v7958
        %v7964 = vsel %vm5545, %v7958, %v7960
        %v7973 = vmul.f32 %v7559, %v7950
        %v7974 = vmul.f32 %v7560, %v7961
        %v7975 = vmul.f32 %v7561, %v7962
        %v7976 = vmul.f32 %v7934, %v7954
        %v7977 = vmul.f32 %v7563, %v7956
        %v7978 = vmul.f32 %v7564, %v7963
        %v7979 = vmul.f32 %v7565, %v7964
        %v7980 = vmul.f32 %v7935, %v7960
        %7989 = vrot.lane.b32.xlu0 %v7973, 102
        %v7990 = vpop.permute.xlu0 %7989
        %7991 = vrot.lane.b32.xlu0 %v7974, 102
        %v7992 = vpop.permute.xlu0 %7991
        %7993 = vrot.lane.b32.xlu0 %v7975, 102
        %v7994 = vpop.permute.xlu0 %7993
        %7995 = vrot.lane.b32.xlu0 %v7976, 102
        %v7996 = vpop.permute.xlu0 %7995
        %7997 = vrot.lane.b32.xlu0 %v7977, 102
        %v7998 = vpop.permute.xlu0 %7997
        %7999 = vrot.lane.b32.xlu0 %v7978, 102
        %v8000 = vpop.permute.xlu0 %7999
        %8001 = vrot.lane.b32.xlu0 %v7979, 102
        %v8002 = vpop.permute.xlu0 %8001
        %8003 = vrot.lane.b32.xlu0 %v7980, 102
        %v8004 = vpop.permute.xlu0 %8003
        %v8005 = vsel %vm641, %v7990, %v7992
        %v8006 = vsel %vm641, %v7992, %v7994
        %v8007 = vsel %vm641, %v7994, %v7996
        %v8008 = vsel %vm641, %v7998, %v8000
        %v8009 = vsel %vm641, %v8000, %v8002
        %v8010 = vsel %vm641, %v8002, %v8004
        %v8019 = vadd.f32 %v7926, %v7990
        %v8020 = vadd.f32 %v7927, %v8005
        %v8021 = vadd.f32 %v7928, %v8006
        %v8022 = vadd.f32 %v7929, %v8007
        %v8023 = vadd.f32 %v7930, %v7998
        %v8024 = vadd.f32 %v7931, %v8008
        %v8025 = vadd.f32 %v7932, %v8009
        %v8026 = vadd.f32 %v7933, %v8010
        %s8027 = scalar_lea.vmem %s7, 288
        %v8028 = vld [vmem:[%s8027] sm:$0xff]
        %v8029 = vld [vmem:[%s8027 + $0x8] sm:$0xff]
        %v8030 = vld [vmem:[%s8027 + $0x10] sm:$0xff]
        %v8031 = vld [vmem:[%s8027 + $0x18] sm:$0xff]
        %v8032 = vld [vmem:[%s8027 + $0x20] sm:$0xff]
        %v8033 = vld [vmem:[%s8027 + $0x28] sm:$0xff]
        %8040 = vrot.lane.b32.xlu0 %v8028, 23
        %v8041 = vpop.permute.xlu0 %8040
        %8042 = vrot.lane.b32.xlu0 %v8029, 23
        %v8043 = vpop.permute.xlu0 %8042
        %8044 = vrot.lane.b32.xlu0 %v8030, 23
        %v8045 = vpop.permute.xlu0 %8044
        %8046 = vrot.lane.b32.xlu0 %v8031, 23
        %v8047 = vpop.permute.xlu0 %8046
        %8048 = vrot.lane.b32.xlu0 %v8032, 23
        %v8049 = vpop.permute.xlu0 %8048
        %8050 = vrot.lane.b32.xlu0 %v8033, 23
        %v8051 = vpop.permute.xlu0 %8050
        %v8052 = vsel %vm5365, %v8041, %v8043
        %v8053 = vsel %vm5365, %v8043, %v8045
        %v8054 = vsel %vm5365, %v8047, %v8049
        %v8055 = vsel %vm5365, %v8049, %v8051
        %v8064 = vmul.f32 %v7559, %v8041
        %v8065 = vmul.f32 %v7560, %v8052
        %v8066 = vmul.f32 %v7561, %v8053
        %v8067 = vmul.f32 %v7934, %v8045
        %v8068 = vmul.f32 %v7563, %v8047
        %v8069 = vmul.f32 %v7564, %v8054
        %v8070 = vmul.f32 %v7565, %v8055
        %v8071 = vmul.f32 %v7935, %v8051
        %8080 = vrot.lane.b32.xlu0 %v8064, 80
        %v8081 = vpop.permute.xlu0 %8080
        %8082 = vrot.lane.b32.xlu0 %v8065, 80
        %v8083 = vpop.permute.xlu0 %8082
        %8084 = vrot.lane.b32.xlu0 %v8066, 80
        %v8085 = vpop.permute.xlu0 %8084
        %8086 = vrot.lane.b32.xlu0 %v8067, 80
        %v8087 = vpop.permute.xlu0 %8086
        %8088 = vrot.lane.b32.xlu0 %v8068, 80
        %v8089 = vpop.permute.xlu0 %8088
        %8090 = vrot.lane.b32.xlu0 %v8069, 80
        %v8091 = vpop.permute.xlu0 %8090
        %8092 = vrot.lane.b32.xlu0 %v8070, 80
        %v8093 = vpop.permute.xlu0 %8092
        %8094 = vrot.lane.b32.xlu0 %v8071, 80
        %v8095 = vpop.permute.xlu0 %8094
        %v8096 = vsel %vm680, %v8081, %v8083
        %v8097 = vsel %vm680, %v8083, %v8085
        %v8098 = vsel %vm680, %v8085, %v8087
        %v8099 = vsel %vm680, %v8089, %v8091
        %v8100 = vsel %vm680, %v8091, %v8093
        %v8101 = vsel %vm680, %v8093, %v8095
        %v8110 = vadd.f32 %v8019, %v8081
        %v8111 = vadd.f32 %v8020, %v8096
        %v8112 = vadd.f32 %v8021, %v8097
        %v8113 = vadd.f32 %v8022, %v8098
        %v8114 = vadd.f32 %v8023, %v8089
        %v8115 = vadd.f32 %v8024, %v8099
        %v8116 = vadd.f32 %v8025, %v8100
        %v8117 = vadd.f32 %v8026, %v8101
        %s8118 = scalar_lea.vmem %s7, 336
        %v8119 = vld [vmem:[%s8118] sm:$0xff]
        %v8120 = vld [vmem:[%s8118 + $0x8] sm:$0xff]
        %v8121 = vld [vmem:[%s8118 + $0x10] sm:$0xff]
        %v8122 = vld [vmem:[%s8118 + $0x18] sm:$0xff]
        %v8123 = vld [vmem:[%s8118 + $0x20] sm:$0xff]
        %v8124 = vld [vmem:[%s8118 + $0x28] sm:$0xff]
        %8131 = vrot.lane.b32.xlu0 %v8119, 24
        %v8132 = vpop.permute.xlu0 %8131
        %8133 = vrot.lane.b32.xlu0 %v8120, 24
        %v8134 = vpop.permute.xlu0 %8133
        %8135 = vrot.lane.b32.xlu0 %v8121, 24
        %v8136 = vpop.permute.xlu0 %8135
        %8137 = vrot.lane.b32.xlu0 %v8122, 24
        %v8138 = vpop.permute.xlu0 %8137
        %8139 = vrot.lane.b32.xlu0 %v8123, 24
        %v8140 = vpop.permute.xlu0 %8139
        %8141 = vrot.lane.b32.xlu0 %v8124, 24
        %v8142 = vpop.permute.xlu0 %8141
        %v8143 = vsel %vm5185, %v8132, %v8134
        %v8144 = vsel %vm5185, %v8134, %v8136
        %v8145 = vsel %vm5185, %v8138, %v8140
        %v8146 = vsel %vm5185, %v8140, %v8142
        %v8155 = vmul.f32 %v7559, %v8132
        %v8156 = vmul.f32 %v7560, %v8143
        %v8157 = vmul.f32 %v7561, %v8144
        %v8158 = vmul.f32 %v7934, %v8136
        %v8159 = vmul.f32 %v7563, %v8138
        %v8160 = vmul.f32 %v7564, %v8145
        %v8161 = vmul.f32 %v7565, %v8146
        %v8162 = vmul.f32 %v7935, %v8142
        %8171 = vrot.lane.b32.xlu0 %v8155, 79
        %v8172 = vpop.permute.xlu0 %8171
        %8173 = vrot.lane.b32.xlu0 %v8156, 79
        %v8174 = vpop.permute.xlu0 %8173
        %8175 = vrot.lane.b32.xlu0 %v8157, 79
        %v8176 = vpop.permute.xlu0 %8175
        %8177 = vrot.lane.b32.xlu0 %v8158, 79
        %v8178 = vpop.permute.xlu0 %8177
        %8179 = vrot.lane.b32.xlu0 %v8159, 79
        %v8180 = vpop.permute.xlu0 %8179
        %8181 = vrot.lane.b32.xlu0 %v8160, 79
        %v8182 = vpop.permute.xlu0 %8181
        %8183 = vrot.lane.b32.xlu0 %v8161, 79
        %v8184 = vpop.permute.xlu0 %8183
        %8185 = vrot.lane.b32.xlu0 %v8162, 79
        %v8186 = vpop.permute.xlu0 %8185
        %v8187 = vsel %vm719, %v8172, %v8174
        %v8188 = vsel %vm719, %v8174, %v8176
        %v8189 = vsel %vm719, %v8176, %v8178
        %v8190 = vsel %vm719, %v8180, %v8182
        %v8191 = vsel %vm719, %v8182, %v8184
        %v8192 = vsel %vm719, %v8184, %v8186
        %v8201 = vadd.f32 %v8110, %v8172
        %v8202 = vadd.f32 %v8111, %v8187
        %v8203 = vadd.f32 %v8112, %v8188
        %v8204 = vadd.f32 %v8113, %v8189
        %v8205 = vadd.f32 %v8114, %v8180
        %v8206 = vadd.f32 %v8115, %v8190
        %v8207 = vadd.f32 %v8116, %v8191
        %v8208 = vadd.f32 %v8117, %v8192
        %s8209 = scalar_lea.vmem %s7, 384
        %v8210 = vld [vmem:[%s8209] sm:$0xff]
        %v8211 = vld [vmem:[%s8209 + $0x8] sm:$0xff]
        %v8212 = vld [vmem:[%s8209 + $0x10] sm:$0xff]
        %v8213 = vld [vmem:[%s8209 + $0x18] sm:$0xff]
        %v8214 = vld [vmem:[%s8209 + $0x20] sm:$0xff]
        %v8215 = vld [vmem:[%s8209 + $0x28] sm:$0xff]
        %8222 = vrot.lane.b32.xlu0 %v8210, 25
        %v8223 = vpop.permute.xlu0 %8222
        %8224 = vrot.lane.b32.xlu0 %v8211, 25
        %v8225 = vpop.permute.xlu0 %8224
        %8226 = vrot.lane.b32.xlu0 %v8212, 25
        %v8227 = vpop.permute.xlu0 %8226
        %8228 = vrot.lane.b32.xlu0 %v8213, 25
        %v8229 = vpop.permute.xlu0 %8228
        %8230 = vrot.lane.b32.xlu0 %v8214, 25
        %v8231 = vpop.permute.xlu0 %8230
        %8232 = vrot.lane.b32.xlu0 %v8215, 25
        %v8233 = vpop.permute.xlu0 %8232
        %v8234 = vsel %vm5006, %v8223, %v8225
        %v8235 = vsel %vm5006, %v8225, %v8227
        %v8236 = vsel %vm5006, %v8229, %v8231
        %v8237 = vsel %vm5006, %v8231, %v8233
        %v8246 = vmul.f32 %v7559, %v8223
        %v8247 = vmul.f32 %v7560, %v8234
        %v8248 = vmul.f32 %v7561, %v8235
        %v8249 = vmul.f32 %v7934, %v8227
        %v8250 = vmul.f32 %v7563, %v8229
        %v8251 = vmul.f32 %v7564, %v8236
        %v8252 = vmul.f32 %v7565, %v8237
        %v8253 = vmul.f32 %v7935, %v8233
        %8262 = vrot.lane.b32.xlu0 %v8246, 78
        %v8263 = vpop.permute.xlu0 %8262
        %8264 = vrot.lane.b32.xlu0 %v8247, 78
        %v8265 = vpop.permute.xlu0 %8264
        %8266 = vrot.lane.b32.xlu0 %v8248, 78
        %v8267 = vpop.permute.xlu0 %8266
        %8268 = vrot.lane.b32.xlu0 %v8249, 78
        %v8269 = vpop.permute.xlu0 %8268
        %8270 = vrot.lane.b32.xlu0 %v8250, 78
        %v8271 = vpop.permute.xlu0 %8270
        %8272 = vrot.lane.b32.xlu0 %v8251, 78
        %v8273 = vpop.permute.xlu0 %8272
        %8274 = vrot.lane.b32.xlu0 %v8252, 78
        %v8275 = vpop.permute.xlu0 %8274
        %8276 = vrot.lane.b32.xlu0 %v8253, 78
        %v8277 = vpop.permute.xlu0 %8276
        %v8278 = vsel %vm758, %v8263, %v8265
        %v8279 = vsel %vm758, %v8265, %v8267
        %v8280 = vsel %vm758, %v8267, %v8269
        %v8281 = vsel %vm758, %v8271, %v8273
        %v8282 = vsel %vm758, %v8273, %v8275
        %v8283 = vsel %vm758, %v8275, %v8277
        %v8292 = vadd.f32 %v8201, %v8263
        %v8293 = vadd.f32 %v8202, %v8278
        %v8294 = vadd.f32 %v8203, %v8279
        %v8295 = vadd.f32 %v8204, %v8280
        %v8296 = vadd.f32 %v8205, %v8271
        %v8297 = vadd.f32 %v8206, %v8281
        %v8298 = vadd.f32 %v8207, %v8282
        %v8299 = vadd.f32 %v8208, %v8283
        %v8300 = vmax.f32 %v7381, 0.0
        %v8301 = vmax.f32 %v7383, 0.0
        %v8302 = vmax.f32 %v7478, 0.0
        %v8303 = vmax.f32 %v7387, 0.0
        %v8304 = vmax.f32 %v7389, 0.0
        %v8305 = vmax.f32 %v7483, 0.0
        %v8306 = vmul.f32 %v8300, %v7534
        %v8307 = vmul.f32 %v8301, %v7538
        %v8308 = vmul.f32 %v8302, %v7542
        %v8309 = vmul.f32 %v8303, %v7534
        %v8310 = vmul.f32 %v8304, %v7538
        %v8311 = vmul.f32 %v8305, %v7542
        %8312 = vst [vmem:[#allocation2 + $0x8] sm:$0xff] %v8306
        %8313 = vst [vmem:[#allocation2 + $0x10] sm:$0xff] %v8307
        %8314 = vst [vmem:[#allocation2 + $0x18] sm:$0xff] %v8308
        %8315 = vst [vmem:[#allocation2 + $0x30] sm:$0xff] %v8309
        %8316 = vst [vmem:[#allocation2 + $0x38] sm:$0xff] %v8310
        %8317 = vst [vmem:[#allocation2 + $0x40] sm:$0xff] %v8311
        %v8318 = vld [vmem:[#allocation2] sm:$0xff]
        %v8319 = vld [vmem:[#allocation2 + $0x8] sm:$0xff]
        %v8320 = vld [vmem:[#allocation2 + $0x10] sm:$0xff]
        %v8321 = vld [vmem:[#allocation2 + $0x18] sm:$0xff]
        %v8322 = vld [vmem:[#allocation2 + $0x28] sm:$0xff]
        %v8323 = vld [vmem:[#allocation2 + $0x30] sm:$0xff]
        %v8324 = vld [vmem:[#allocation2 + $0x38] sm:$0xff]
        %v8325 = vld [vmem:[#allocation2 + $0x40] sm:$0xff]
        %v8326 = vld [vmem:[%s8] sm:$0xff]
        %v8327 = vld [vmem:[%s8 + $0x8] sm:$0xff]
        %v8328 = vld [vmem:[%s8 + $0x10] sm:$0xff]
        %v8329 = vld [vmem:[%s8 + $0x18] sm:$0xff]
        %v8330 = vld [vmem:[%s8 + $0x20] sm:$0xff]
        %v8331 = vld [vmem:[%s8 + $0x28] sm:$0xff]
        %8338 = vrot.lane.b32.xlu0 %v8326, 78
        %v8339 = vpop.permute.xlu0 %8338
        %8340 = vrot.lane.b32.xlu0 %v8327, 78
        %v8341 = vpop.permute.xlu0 %8340
        %8342 = vrot.lane.b32.xlu0 %v8328, 78
        %v8343 = vpop.permute.xlu0 %8342
        %8344 = vrot.lane.b32.xlu0 %v8329, 78
        %v8345 = vpop.permute.xlu0 %8344
        %8346 = vrot.lane.b32.xlu0 %v8330, 78
        %v8347 = vpop.permute.xlu0 %8346
        %8348 = vrot.lane.b32.xlu0 %v8331, 78
        %v8349 = vpop.permute.xlu0 %8348
        %v8350 = vsel %vm758, %v8339, %v8341
        %v8351 = vsel %vm758, %v8341, %v8343
        %v8352 = vsel %vm758, %v8345, %v8347
        %v8353 = vsel %vm758, %v8347, %v8349
        %v8362 = vmul.f32 %v8318, %v8339
        %v8363 = vmul.f32 %v8319, %v8350
        %v8364 = vmul.f32 %v8320, %v8351
        %v8365 = vmul.f32 %v8321, %v8343
        %v8366 = vmul.f32 %v8322, %v8345
        %v8367 = vmul.f32 %v8323, %v8352
        %v8368 = vmul.f32 %v8324, %v8353
        %v8369 = vmul.f32 %v8325, %v8349
        %s8370 = scalar_lea.vmem %s8, 48
        %v8371 = vld [vmem:[%s8370] sm:$0xff]
        %v8372 = vld [vmem:[%s8370 + $0x8] sm:$0xff]
        %v8373 = vld [vmem:[%s8370 + $0x10] sm:$0xff]
        %v8374 = vld [vmem:[%s8370 + $0x18] sm:$0xff]
        %v8375 = vld [vmem:[%s8370 + $0x20] sm:$0xff]
        %v8376 = vld [vmem:[%s8370 + $0x28] sm:$0xff]
        %8383 = vrot.lane.b32.xlu0 %v8371, 79
        %v8384 = vpop.permute.xlu0 %8383
        %8385 = vrot.lane.b32.xlu0 %v8372, 79
        %v8386 = vpop.permute.xlu0 %8385
        %8387 = vrot.lane.b32.xlu0 %v8373, 79
        %v8388 = vpop.permute.xlu0 %8387
        %8389 = vrot.lane.b32.xlu0 %v8374, 79
        %v8390 = vpop.permute.xlu0 %8389
        %8391 = vrot.lane.b32.xlu0 %v8375, 79
        %v8392 = vpop.permute.xlu0 %8391
        %8393 = vrot.lane.b32.xlu0 %v8376, 79
        %v8394 = vpop.permute.xlu0 %8393
        %v8395 = vsel %vm719, %v8384, %v8386
        %v8396 = vsel %vm719, %v8386, %v8388
        %v8397 = vsel %vm719, %v8390, %v8392
        %v8398 = vsel %vm719, %v8392, %v8394
        %v8407 = vmul.f32 %v8318, %v8384
        %v8408 = vmul.f32 %v8319, %v8395
        %v8409 = vmul.f32 %v8320, %v8396
        %v8410 = vmul.f32 %v8321, %v8388
        %v8411 = vmul.f32 %v8322, %v8390
        %v8412 = vmul.f32 %v8323, %v8397
        %v8413 = vmul.f32 %v8324, %v8398
        %v8414 = vmul.f32 %v8325, %v8394
        %8423 = vrot.lane.b32.xlu0 %v8407, 127
        %v8424 = vpop.permute.xlu0 %8423
        %8425 = vrot.lane.b32.xlu0 %v8408, 127
        %v8426 = vpop.permute.xlu0 %8425
        %8427 = vrot.lane.b32.xlu0 %v8409, 127
        %v8428 = vpop.permute.xlu0 %8427
        %8429 = vrot.lane.b32.xlu0 %v8410, 127
        %v8430 = vpop.permute.xlu0 %8429
        %8431 = vrot.lane.b32.xlu0 %v8411, 127
        %v8432 = vpop.permute.xlu0 %8431
        %8433 = vrot.lane.b32.xlu0 %v8412, 127
        %v8434 = vpop.permute.xlu0 %8433
        %8435 = vrot.lane.b32.xlu0 %v8413, 127
        %v8436 = vpop.permute.xlu0 %8435
        %8437 = vrot.lane.b32.xlu0 %v8414, 127
        %v8438 = vpop.permute.xlu0 %8437
        %v8439 = vsel %vm487, %v8424, %v8426
        %v8440 = vsel %vm487, %v8426, %v8428
        %v8441 = vsel %vm487, %v8428, %v8430
        %v8442 = vsel %vm487, %v8432, %v8434
        %v8443 = vsel %vm487, %v8434, %v8436
        %v8444 = vsel %vm487, %v8436, %v8438
        %v8453 = vadd.f32 %v8362, %v8439
        %v8454 = vadd.f32 %v8363, %v8440
        %v8455 = vadd.f32 %v8364, %v8441
        %v8456 = vadd.f32 %v8365, %v8430
        %v8457 = vadd.f32 %v8366, %v8442
        %v8458 = vadd.f32 %v8367, %v8443
        %v8459 = vadd.f32 %v8368, %v8444
        %v8460 = vadd.f32 %v8369, %v8438
        %s8461 = scalar_lea.vmem %s8, 96
        %v8462 = vld [vmem:[%s8461] sm:$0xff]
        %v8463 = vld [vmem:[%s8461 + $0x8] sm:$0xff]
        %v8464 = vld [vmem:[%s8461 + $0x10] sm:$0xff]
        %v8465 = vld [vmem:[%s8461 + $0x18] sm:$0xff]
        %v8466 = vld [vmem:[%s8461 + $0x20] sm:$0xff]
        %v8467 = vld [vmem:[%s8461 + $0x28] sm:$0xff]
        %8474 = vrot.lane.b32.xlu0 %v8462, 80
        %v8475 = vpop.permute.xlu0 %8474
        %8476 = vrot.lane.b32.xlu0 %v8463, 80
        %v8477 = vpop.permute.xlu0 %8476
        %8478 = vrot.lane.b32.xlu0 %v8464, 80
        %v8479 = vpop.permute.xlu0 %8478
        %8480 = vrot.lane.b32.xlu0 %v8465, 80
        %v8481 = vpop.permute.xlu0 %8480
        %8482 = vrot.lane.b32.xlu0 %v8466, 80
        %v8483 = vpop.permute.xlu0 %8482
        %8484 = vrot.lane.b32.xlu0 %v8467, 80
        %v8485 = vpop.permute.xlu0 %8484
        %v8486 = vsel %vm680, %v8475, %v8477
        %v8487 = vsel %vm680, %v8477, %v8479
        %v8488 = vsel %vm680, %v8481, %v8483
        %v8489 = vsel %vm680, %v8483, %v8485
        %v8498 = vmul.f32 %v8318, %v8475
        %v8499 = vmul.f32 %v8319, %v8486
        %v8500 = vmul.f32 %v8320, %v8487
        %v8501 = vmul.f32 %v8321, %v8479
        %v8502 = vmul.f32 %v8322, %v8481
        %v8503 = vmul.f32 %v8323, %v8488
        %v8504 = vmul.f32 %v8324, %v8489
        %v8505 = vmul.f32 %v8325, %v8485
        %8514 = vrot.lane.b32.xlu0 %v8498, 126
        %v8515 = vpop.permute.xlu0 %8514
        %8516 = vrot.lane.b32.xlu0 %v8499, 126
        %v8517 = vpop.permute.xlu0 %8516
        %8518 = vrot.lane.b32.xlu0 %v8500, 126
        %v8519 = vpop.permute.xlu0 %8518
        %8520 = vrot.lane.b32.xlu0 %v8501, 126
        %v8521 = vpop.permute.xlu0 %8520
        %8522 = vrot.lane.b32.xlu0 %v8502, 126
        %v8523 = vpop.permute.xlu0 %8522
        %8524 = vrot.lane.b32.xlu0 %v8503, 126
        %v8525 = vpop.permute.xlu0 %8524
        %8526 = vrot.lane.b32.xlu0 %v8504, 126
        %v8527 = vpop.permute.xlu0 %8526
        %8528 = vrot.lane.b32.xlu0 %v8505, 126
        %v8529 = vpop.permute.xlu0 %8528
        %v8530 = vsel %vm526, %v8515, %v8517
        %v8531 = vsel %vm526, %v8517, %v8519
        %v8532 = vsel %vm526, %v8519, %v8521
        %v8533 = vsel %vm526, %v8523, %v8525
        %v8534 = vsel %vm526, %v8525, %v8527
        %v8535 = vsel %vm526, %v8527, %v8529
        %v8544 = vadd.f32 %v8453, %v8530
        %v8545 = vadd.f32 %v8454, %v8531
        %v8546 = vadd.f32 %v8455, %v8532
        %v8547 = vadd.f32 %v8456, %v8521
        %v8548 = vadd.f32 %v8457, %v8533
        %v8549 = vadd.f32 %v8458, %v8534
        %v8550 = vadd.f32 %v8459, %v8535
        %v8551 = vadd.f32 %v8460, %v8529
        %s8552 = scalar_lea.vmem %s8, 144
        %v8553 = vld [vmem:[%s8552] sm:$0xff]
        %v8554 = vld [vmem:[%s8552 + $0x8] sm:$0xff]
        %v8555 = vld [vmem:[%s8552 + $0x10] sm:$0xff]
        %v8556 = vld [vmem:[%s8552 + $0x18] sm:$0xff]
        %v8557 = vld [vmem:[%s8552 + $0x20] sm:$0xff]
        %v8558 = vld [vmem:[%s8552 + $0x28] sm:$0xff]
        %8565 = vrot.lane.b32.xlu0 %v8553, 81
        %v8566 = vpop.permute.xlu0 %8565
        %8567 = vrot.lane.b32.xlu0 %v8554, 81
        %v8568 = vpop.permute.xlu0 %8567
        %8569 = vrot.lane.b32.xlu0 %v8555, 81
        %v8570 = vpop.permute.xlu0 %8569
        %8571 = vrot.lane.b32.xlu0 %v8556, 81
        %v8572 = vpop.permute.xlu0 %8571
        %8573 = vrot.lane.b32.xlu0 %v8557, 81
        %v8574 = vpop.permute.xlu0 %8573
        %8575 = vrot.lane.b32.xlu0 %v8558, 81
        %v8576 = vpop.permute.xlu0 %8575
        %v8577 = vsel %vm6487, %v8566, %v8568
        %v8578 = vsel %vm6487, %v8568, %v8570
        %v8579 = vsel %vm6487, %v8572, %v8574
        %v8580 = vsel %vm6487, %v8574, %v8576
        %v8589 = vmul.f32 %v8318, %v8566
        %v8590 = vmul.f32 %v8319, %v8577
        %v8591 = vmul.f32 %v8320, %v8578
        %v8592 = vmul.f32 %v8321, %v8570
        %v8593 = vmul.f32 %v8322, %v8572
        %v8594 = vmul.f32 %v8323, %v8579
        %v8595 = vmul.f32 %v8324, %v8580
        %v8596 = vmul.f32 %v8325, %v8576
        %8605 = vrot.lane.b32.xlu0 %v8589, 125
        %v8606 = vpop.permute.xlu0 %8605
        %8607 = vrot.lane.b32.xlu0 %v8590, 125
        %v8608 = vpop.permute.xlu0 %8607
        %8609 = vrot.lane.b32.xlu0 %v8591, 125
        %v8610 = vpop.permute.xlu0 %8609
        %8611 = vrot.lane.b32.xlu0 %v8592, 125
        %v8612 = vpop.permute.xlu0 %8611
        %8613 = vrot.lane.b32.xlu0 %v8593, 125
        %v8614 = vpop.permute.xlu0 %8613
        %8615 = vrot.lane.b32.xlu0 %v8594, 125
        %v8616 = vpop.permute.xlu0 %8615
        %8617 = vrot.lane.b32.xlu0 %v8595, 125
        %v8618 = vpop.permute.xlu0 %8617
        %8619 = vrot.lane.b32.xlu0 %v8596, 125
        %v8620 = vpop.permute.xlu0 %8619
        %v8621 = vsel %vm6532, %v8606, %v8608
        %v8622 = vsel %vm6532, %v8608, %v8610
        %v8623 = vsel %vm6532, %v8610, %v8612
        %v8624 = vsel %vm6532, %v8614, %v8616
        %v8625 = vsel %vm6532, %v8616, %v8618
        %v8626 = vsel %vm6532, %v8618, %v8620
        %v8635 = vadd.f32 %v8544, %v8621
        %v8636 = vadd.f32 %v8545, %v8622
        %v8637 = vadd.f32 %v8546, %v8623
        %v8638 = vadd.f32 %v8547, %v8612
        %v8639 = vadd.f32 %v8548, %v8624
        %v8640 = vadd.f32 %v8549, %v8625
        %v8641 = vadd.f32 %v8550, %v8626
        %v8642 = vadd.f32 %v8551, %v8620
        %s8643 = scalar_lea.vmem %s8, 192
        %v8644 = vld [vmem:[%s8643] sm:$0xff]
        %v8645 = vld [vmem:[%s8643 + $0x8] sm:$0xff]
        %v8646 = vld [vmem:[%s8643 + $0x10] sm:$0xff]
        %v8647 = vld [vmem:[%s8643 + $0x18] sm:$0xff]
        %v8648 = vld [vmem:[%s8643 + $0x20] sm:$0xff]
        %v8649 = vld [vmem:[%s8643 + $0x28] sm:$0xff]
        %8656 = vrot.lane.b32.xlu0 %v8644, 82
        %v8657 = vpop.permute.xlu0 %8656
        %8658 = vrot.lane.b32.xlu0 %v8645, 82
        %v8659 = vpop.permute.xlu0 %8658
        %8660 = vrot.lane.b32.xlu0 %v8646, 82
        %v8661 = vpop.permute.xlu0 %8660
        %8662 = vrot.lane.b32.xlu0 %v8647, 82
        %v8663 = vpop.permute.xlu0 %8662
        %8664 = vrot.lane.b32.xlu0 %v8648, 82
        %v8665 = vpop.permute.xlu0 %8664
        %8666 = vrot.lane.b32.xlu0 %v8649, 82
        %v8667 = vpop.permute.xlu0 %8666
        %v8668 = vsel %vm1673, %v8657, %v8659
        %v8669 = vsel %vm1673, %v8659, %v8661
        %v8670 = vsel %vm1673, %v8663, %v8665
        %v8671 = vsel %vm1673, %v8665, %v8667
        %v8680 = vmul.f32 %v8318, %v8657
        %v8681 = vmul.f32 %v8319, %v8668
        %v8682 = vmul.f32 %v8320, %v8669
        %v8683 = vmul.f32 %v8321, %v8661
        %v8684 = vmul.f32 %v8322, %v8663
        %v8685 = vmul.f32 %v8323, %v8670
        %v8686 = vmul.f32 %v8324, %v8671
        %v8687 = vmul.f32 %v8325, %v8667
        %8696 = vrot.lane.b32.xlu0 %v8680, 124
        %v8697 = vpop.permute.xlu0 %8696
        %8698 = vrot.lane.b32.xlu0 %v8681, 124
        %v8699 = vpop.permute.xlu0 %8698
        %8700 = vrot.lane.b32.xlu0 %v8682, 124
        %v8701 = vpop.permute.xlu0 %8700
        %8702 = vrot.lane.b32.xlu0 %v8683, 124
        %v8703 = vpop.permute.xlu0 %8702
        %8704 = vrot.lane.b32.xlu0 %v8684, 124
        %v8705 = vpop.permute.xlu0 %8704
        %8706 = vrot.lane.b32.xlu0 %v8685, 124
        %v8707 = vpop.permute.xlu0 %8706
        %8708 = vrot.lane.b32.xlu0 %v8686, 124
        %v8709 = vpop.permute.xlu0 %8708
        %8710 = vrot.lane.b32.xlu0 %v8687, 124
        %v8711 = vpop.permute.xlu0 %8710
        %v8712 = vsel %vm1718, %v8697, %v8699
        %v8713 = vsel %vm1718, %v8699, %v8701
        %v8714 = vsel %vm1718, %v8701, %v8703
        %v8715 = vsel %vm1718, %v8705, %v8707
        %v8716 = vsel %vm1718, %v8707, %v8709
        %v8717 = vsel %vm1718, %v8709, %v8711
        %v8726 = vadd.f32 %v8635, %v8712
        %v8727 = vadd.f32 %v8636, %v8713
        %v8728 = vadd.f32 %v8637, %v8714
        %v8729 = vadd.f32 %v8638, %v8703
        %v8730 = vadd.f32 %v8639, %v8715
        %v8731 = vadd.f32 %v8640, %v8716
        %v8732 = vadd.f32 %v8641, %v8717
        %v8733 = vadd.f32 %v8642, %v8711
        %s8734 = scalar_lea.vmem %s8, 240
        %v8735 = vld [vmem:[%s8734] sm:$0xff]
        %v8736 = vld [vmem:[%s8734 + $0x8] sm:$0xff]
        %v8737 = vld [vmem:[%s8734 + $0x10] sm:$0xff]
        %v8738 = vld [vmem:[%s8734 + $0x18] sm:$0xff]
        %v8739 = vld [vmem:[%s8734 + $0x20] sm:$0xff]
        %v8740 = vld [vmem:[%s8734 + $0x28] sm:$0xff]
        %8747 = vrot.lane.b32.xlu0 %v8735, 102
        %v8748 = vpop.permute.xlu0 %8747
        %8749 = vrot.lane.b32.xlu0 %v8736, 102
        %v8750 = vpop.permute.xlu0 %8749
        %8751 = vrot.lane.b32.xlu0 %v8737, 102
        %v8752 = vpop.permute.xlu0 %8751
        %8753 = vrot.lane.b32.xlu0 %v8738, 102
        %v8754 = vpop.permute.xlu0 %8753
        %8755 = vrot.lane.b32.xlu0 %v8739, 102
        %v8756 = vpop.permute.xlu0 %8755
        %8757 = vrot.lane.b32.xlu0 %v8740, 102
        %v8758 = vpop.permute.xlu0 %8757
        %v8759 = vsel %vm641, %v8748, %v8750
        %v8760 = vsel %vm641, %v8750, %v8752
        %v8761 = vsel %vm641, %v8754, %v8756
        %v8762 = vsel %vm641, %v8756, %v8758
        %v8771 = vmul.f32 %v8318, %v8748
        %v8772 = vmul.f32 %v8319, %v8759
        %v8773 = vmul.f32 %v8320, %v8760
        %v8774 = vmul.f32 %v8321, %v8752
        %v8775 = vmul.f32 %v8322, %v8754
        %v8776 = vmul.f32 %v8323, %v8761
        %v8777 = vmul.f32 %v8324, %v8762
        %v8778 = vmul.f32 %v8325, %v8758
        %8787 = vrot.lane.b32.xlu0 %v8771, 104
        %v8788 = vpop.permute.xlu0 %8787
        %8789 = vrot.lane.b32.xlu0 %v8772, 104
        %v8790 = vpop.permute.xlu0 %8789
        %8791 = vrot.lane.b32.xlu0 %v8773, 104
        %v8792 = vpop.permute.xlu0 %8791
        %8793 = vrot.lane.b32.xlu0 %v8774, 104
        %v8794 = vpop.permute.xlu0 %8793
        %8795 = vrot.lane.b32.xlu0 %v8775, 104
        %v8796 = vpop.permute.xlu0 %8795
        %8797 = vrot.lane.b32.xlu0 %v8776, 104
        %v8798 = vpop.permute.xlu0 %8797
        %8799 = vrot.lane.b32.xlu0 %v8777, 104
        %v8800 = vpop.permute.xlu0 %8799
        %8801 = vrot.lane.b32.xlu0 %v8778, 104
        %v8802 = vpop.permute.xlu0 %8801
        %v8803 = vsel %vm565, %v8788, %v8790
        %v8804 = vsel %vm565, %v8790, %v8792
        %v8805 = vsel %vm565, %v8792, %v8794
        %v8806 = vsel %vm565, %v8796, %v8798
        %v8807 = vsel %vm565, %v8798, %v8800
        %v8808 = vsel %vm565, %v8800, %v8802
        %v8817 = vadd.f32 %v8726, %v8803
        %v8818 = vadd.f32 %v8727, %v8804
        %v8819 = vadd.f32 %v8728, %v8805
        %v8820 = vadd.f32 %v8729, %v8794
        %v8821 = vadd.f32 %v8730, %v8806
        %v8822 = vadd.f32 %v8731, %v8807
        %v8823 = vadd.f32 %v8732, %v8808
        %v8824 = vadd.f32 %v8733, %v8802
        %s8825 = scalar_lea.vmem %s8, 288
        %v8826 = vld [vmem:[%s8825] sm:$0xff]
        %v8827 = vld [vmem:[%s8825 + $0x8] sm:$0xff]
        %v8828 = vld [vmem:[%s8825 + $0x10] sm:$0xff]
        %v8829 = vld [vmem:[%s8825 + $0x18] sm:$0xff]
        %v8830 = vld [vmem:[%s8825 + $0x20] sm:$0xff]
        %v8831 = vld [vmem:[%s8825 + $0x28] sm:$0xff]
        %8838 = vrot.lane.b32.xlu0 %v8826, 103
        %v8839 = vpop.permute.xlu0 %8838
        %8840 = vrot.lane.b32.xlu0 %v8827, 103
        %v8841 = vpop.permute.xlu0 %8840
        %8842 = vrot.lane.b32.xlu0 %v8828, 103
        %v8843 = vpop.permute.xlu0 %8842
        %8844 = vrot.lane.b32.xlu0 %v8829, 103
        %v8845 = vpop.permute.xlu0 %8844
        %8846 = vrot.lane.b32.xlu0 %v8830, 103
        %v8847 = vpop.permute.xlu0 %8846
        %8848 = vrot.lane.b32.xlu0 %v8831, 103
        %v8849 = vpop.permute.xlu0 %8848
        %v8850 = vsel %vm600, %v8839, %v8841
        %v8851 = vsel %vm600, %v8841, %v8843
        %v8852 = vsel %vm600, %v8845, %v8847
        %v8853 = vsel %vm600, %v8847, %v8849
        %v8862 = vmul.f32 %v8318, %v8839
        %v8863 = vmul.f32 %v8319, %v8850
        %v8864 = vmul.f32 %v8320, %v8851
        %v8865 = vmul.f32 %v8321, %v8843
        %v8866 = vmul.f32 %v8322, %v8845
        %v8867 = vmul.f32 %v8323, %v8852
        %v8868 = vmul.f32 %v8324, %v8853
        %v8869 = vmul.f32 %v8325, %v8849
        %8878 = vrot.lane.b32.xlu0 %v8862, 103
        %v8879 = vpop.permute.xlu0 %8878
        %8880 = vrot.lane.b32.xlu0 %v8863, 103
        %v8881 = vpop.permute.xlu0 %8880
        %8882 = vrot.lane.b32.xlu0 %v8864, 103
        %v8883 = vpop.permute.xlu0 %8882
        %8884 = vrot.lane.b32.xlu0 %v8865, 103
        %v8885 = vpop.permute.xlu0 %8884
        %8886 = vrot.lane.b32.xlu0 %v8866, 103
        %v8887 = vpop.permute.xlu0 %8886
        %8888 = vrot.lane.b32.xlu0 %v8867, 103
        %v8889 = vpop.permute.xlu0 %8888
        %8890 = vrot.lane.b32.xlu0 %v8868, 103
        %v8891 = vpop.permute.xlu0 %8890
        %8892 = vrot.lane.b32.xlu0 %v8869, 103
        %v8893 = vpop.permute.xlu0 %8892
        %v8894 = vsel %vm600, %v8879, %v8881
        %v8895 = vsel %vm600, %v8881, %v8883
        %v8896 = vsel %vm600, %v8883, %v8885
        %v8897 = vsel %vm600, %v8887, %v8889
        %v8898 = vsel %vm600, %v8889, %v8891
        %v8899 = vsel %vm600, %v8891, %v8893
        %v8908 = vadd.f32 %v8817, %v8894
        %v8909 = vadd.f32 %v8818, %v8895
        %v8910 = vadd.f32 %v8819, %v8896
        %v8911 = vadd.f32 %v8820, %v8885
        %v8912 = vadd.f32 %v8821, %v8897
        %v8913 = vadd.f32 %v8822, %v8898
        %v8914 = vadd.f32 %v8823, %v8899
        %v8915 = vadd.f32 %v8824, %v8893
        %s8916 = scalar_lea.vmem %s8, 336
        %v8917 = vld [vmem:[%s8916] sm:$0xff]
        %v8918 = vld [vmem:[%s8916 + $0x8] sm:$0xff]
        %v8919 = vld [vmem:[%s8916 + $0x10] sm:$0xff]
        %v8920 = vld [vmem:[%s8916 + $0x18] sm:$0xff]
        %v8921 = vld [vmem:[%s8916 + $0x20] sm:$0xff]
        %v8922 = vld [vmem:[%s8916 + $0x28] sm:$0xff]
        %8929 = vrot.lane.b32.xlu0 %v8917, 104
        %v8930 = vpop.permute.xlu0 %8929
        %8931 = vrot.lane.b32.xlu0 %v8918, 104
        %v8932 = vpop.permute.xlu0 %8931
        %8933 = vrot.lane.b32.xlu0 %v8919, 104
        %v8934 = vpop.permute.xlu0 %8933
        %8935 = vrot.lane.b32.xlu0 %v8920, 104
        %v8936 = vpop.permute.xlu0 %8935
        %8937 = vrot.lane.b32.xlu0 %v8921, 104
        %v8938 = vpop.permute.xlu0 %8937
        %8939 = vrot.lane.b32.xlu0 %v8922, 104
        %v8940 = vpop.permute.xlu0 %8939
        %v8941 = vsel %vm565, %v8930, %v8932
        %v8942 = vsel %vm565, %v8932, %v8934
        %v8943 = vsel %vm565, %v8936, %v8938
        %v8944 = vsel %vm565, %v8938, %v8940
        %v8953 = vmul.f32 %v8318, %v8930
        %v8954 = vmul.f32 %v8319, %v8941
        %v8955 = vmul.f32 %v8320, %v8942
        %v8956 = vmul.f32 %v8321, %v8934
        %v8957 = vmul.f32 %v8322, %v8936
        %v8958 = vmul.f32 %v8323, %v8943
        %v8959 = vmul.f32 %v8324, %v8944
        %v8960 = vmul.f32 %v8325, %v8940
        %8969 = vrot.lane.b32.xlu0 %v8953, 102
        %v8970 = vpop.permute.xlu0 %8969
        %8971 = vrot.lane.b32.xlu0 %v8954, 102
        %v8972 = vpop.permute.xlu0 %8971
        %8973 = vrot.lane.b32.xlu0 %v8955, 102
        %v8974 = vpop.permute.xlu0 %8973
        %8975 = vrot.lane.b32.xlu0 %v8956, 102
        %v8976 = vpop.permute.xlu0 %8975
        %8977 = vrot.lane.b32.xlu0 %v8957, 102
        %v8978 = vpop.permute.xlu0 %8977
        %8979 = vrot.lane.b32.xlu0 %v8958, 102
        %v8980 = vpop.permute.xlu0 %8979
        %8981 = vrot.lane.b32.xlu0 %v8959, 102
        %v8982 = vpop.permute.xlu0 %8981
        %8983 = vrot.lane.b32.xlu0 %v8960, 102
        %v8984 = vpop.permute.xlu0 %8983
        %v8985 = vsel %vm641, %v8970, %v8972
        %v8986 = vsel %vm641, %v8972, %v8974
        %v8987 = vsel %vm641, %v8974, %v8976
        %v8988 = vsel %vm641, %v8978, %v8980
        %v8989 = vsel %vm641, %v8980, %v8982
        %v8990 = vsel %vm641, %v8982, %v8984
        %v8999 = vadd.f32 %v8908, %v8985
        %v9000 = vadd.f32 %v8909, %v8986
        %v9001 = vadd.f32 %v8910, %v8987
        %v9002 = vadd.f32 %v8911, %v8976
        %v9003 = vadd.f32 %v8912, %v8988
        %v9004 = vadd.f32 %v8913, %v8989
        %v9005 = vadd.f32 %v8914, %v8990
        %v9006 = vadd.f32 %v8915, %v8984
        %s9007 = scalar_lea.vmem %s8, 384
        %v9008 = vld [vmem:[%s9007] sm:$0xff]
        %v9009 = vld [vmem:[%s9007 + $0x8] sm:$0xff]
        %v9010 = vld [vmem:[%s9007 + $0x10] sm:$0xff]
        %v9011 = vld [vmem:[%s9007 + $0x18] sm:$0xff]
        %v9012 = vld [vmem:[%s9007 + $0x20] sm:$0xff]
        %v9013 = vld [vmem:[%s9007 + $0x28] sm:$0xff]
        %9020 = vrot.lane.b32.xlu0 %v9008, 105
        %v9021 = vpop.permute.xlu0 %9020
        %9022 = vrot.lane.b32.xlu0 %v9009, 105
        %v9023 = vpop.permute.xlu0 %9022
        %9024 = vrot.lane.b32.xlu0 %v9010, 105
        %v9025 = vpop.permute.xlu0 %9024
        %9026 = vrot.lane.b32.xlu0 %v9011, 105
        %v9027 = vpop.permute.xlu0 %9026
        %9028 = vrot.lane.b32.xlu0 %v9012, 105
        %v9029 = vpop.permute.xlu0 %9028
        %9030 = vrot.lane.b32.xlu0 %v9013, 105
        %v9031 = vpop.permute.xlu0 %9030
        %v9032 = vsel %vm5320, %v9021, %v9023
        %v9033 = vsel %vm5320, %v9023, %v9025
        %v9034 = vsel %vm5320, %v9027, %v9029
        %v9035 = vsel %vm5320, %v9029, %v9031
        %v9044 = vmul.f32 %v8318, %v9021
        %v9045 = vmul.f32 %v8319, %v9032
        %v9046 = vmul.f32 %v8320, %v9033
        %v9047 = vmul.f32 %v8321, %v9025
        %v9048 = vmul.f32 %v8322, %v9027
        %v9049 = vmul.f32 %v8323, %v9034
        %v9050 = vmul.f32 %v8324, %v9035
        %v9051 = vmul.f32 %v8325, %v9031
        %9060 = vrot.lane.b32.xlu0 %v9044, 101
        %v9061 = vpop.permute.xlu0 %9060
        %9062 = vrot.lane.b32.xlu0 %v9045, 101
        %v9063 = vpop.permute.xlu0 %9062
        %9064 = vrot.lane.b32.xlu0 %v9046, 101
        %v9065 = vpop.permute.xlu0 %9064
        %9066 = vrot.lane.b32.xlu0 %v9047, 101
        %v9067 = vpop.permute.xlu0 %9066
        %9068 = vrot.lane.b32.xlu0 %v9048, 101
        %v9069 = vpop.permute.xlu0 %9068
        %9070 = vrot.lane.b32.xlu0 %v9049, 101
        %v9071 = vpop.permute.xlu0 %9070
        %9072 = vrot.lane.b32.xlu0 %v9050, 101
        %v9073 = vpop.permute.xlu0 %9072
        %9074 = vrot.lane.b32.xlu0 %v9051, 101
        %v9075 = vpop.permute.xlu0 %9074
        %v9076 = vsel %vm5453, %v9061, %v9063
        %v9077 = vsel %vm5453, %v9063, %v9065
        %v9078 = vsel %vm5453, %v9065, %v9067
        %v9079 = vsel %vm5453, %v9069, %v9071
        %v9080 = vsel %vm5453, %v9071, %v9073
        %v9081 = vsel %vm5453, %v9073, %v9075
        %v9090 = vadd.f32 %v8999, %v9076
        %v9091 = vadd.f32 %v9000, %v9077
        %v9092 = vadd.f32 %v9001, %v9078
        %v9093 = vadd.f32 %v9002, %v9067
        %v9094 = vadd.f32 %v9003, %v9079
        %v9095 = vadd.f32 %v9004, %v9080
        %v9096 = vadd.f32 %v9005, %v9081
        %v9097 = vadd.f32 %v9006, %v9075
        %s9098 = scalar_lea.vmem %s8, 432
        %v9099 = vld [vmem:[%s9098] sm:$0xff]
        %v9100 = vld [vmem:[%s9098 + $0x8] sm:$0xff]
        %v9101 = vld [vmem:[%s9098 + $0x10] sm:$0xff]
        %v9102 = vld [vmem:[%s9098 + $0x18] sm:$0xff]
        %v9103 = vld [vmem:[%s9098 + $0x20] sm:$0xff]
        %v9104 = vld [vmem:[%s9098 + $0x28] sm:$0xff]
        %9111 = vrot.lane.b32.xlu0 %v9099, 106
        %v9112 = vpop.permute.xlu0 %9111
        %9113 = vrot.lane.b32.xlu0 %v9100, 106
        %v9114 = vpop.permute.xlu0 %9113
        %9115 = vrot.lane.b32.xlu0 %v9101, 106
        %v9116 = vpop.permute.xlu0 %9115
        %9117 = vrot.lane.b32.xlu0 %v9102, 106
        %v9118 = vpop.permute.xlu0 %9117
        %9119 = vrot.lane.b32.xlu0 %v9103, 106
        %v9120 = vpop.permute.xlu0 %9119
        %9121 = vrot.lane.b32.xlu0 %v9104, 106
        %v9122 = vpop.permute.xlu0 %9121
        %v9123 = vsel %vm4915, %v9112, %v9114
        %v9124 = vsel %vm4915, %v9114, %v9116
        %v9125 = vsel %vm4915, %v9118, %v9120
        %v9126 = vsel %vm4915, %v9120, %v9122
        %v9135 = vmul.f32 %v8318, %v9112
        %v9136 = vmul.f32 %v8319, %v9123
        %v9137 = vmul.f32 %v8320, %v9124
        %v9138 = vmul.f32 %v8321, %v9116
        %v9139 = vmul.f32 %v8322, %v9118
        %v9140 = vmul.f32 %v8323, %v9125
        %v9141 = vmul.f32 %v8324, %v9126
        %v9142 = vmul.f32 %v8325, %v9122
        %9151 = vrot.lane.b32.xlu0 %v9135, 100
        %v9152 = vpop.permute.xlu0 %9151
        %9153 = vrot.lane.b32.xlu0 %v9136, 100
        %v9154 = vpop.permute.xlu0 %9153
        %9155 = vrot.lane.b32.xlu0 %v9137, 100
        %v9156 = vpop.permute.xlu0 %9155
        %9157 = vrot.lane.b32.xlu0 %v9138, 100
        %v9158 = vpop.permute.xlu0 %9157
        %9159 = vrot.lane.b32.xlu0 %v9139, 100
        %v9160 = vpop.permute.xlu0 %9159
        %9161 = vrot.lane.b32.xlu0 %v9140, 100
        %v9162 = vpop.permute.xlu0 %9161
        %9163 = vrot.lane.b32.xlu0 %v9141, 100
        %v9164 = vpop.permute.xlu0 %9163
        %9165 = vrot.lane.b32.xlu0 %v9142, 100
        %v9166 = vpop.permute.xlu0 %9165
        %v9167 = vsel %vm418, %v9152, %v9154
        %v9168 = vsel %vm418, %v9154, %v9156
        %v9169 = vsel %vm418, %v9156, %v9158
        %v9170 = vsel %vm418, %v9160, %v9162
        %v9171 = vsel %vm418, %v9162, %v9164
        %v9172 = vsel %vm418, %v9164, %v9166
        %v9181 = vadd.f32 %v9090, %v9167
        %v9182 = vadd.f32 %v9091, %v9168
        %v9183 = vadd.f32 %v9092, %v9169
        %v9184 = vadd.f32 %v9093, %v9158
        %v9185 = vadd.f32 %v9094, %v9170
        %v9186 = vadd.f32 %v9095, %v9171
        %v9187 = vadd.f32 %v9096, %v9172
        %v9188 = vadd.f32 %v9097, %v9166
        %s9189 = scalar_lea.vmem %s8, 480
        %v9190 = vld [vmem:[%s9189] sm:$0xff]
        %v9191 = vld [vmem:[%s9189 + $0x8] sm:$0xff]
        %v9192 = vld [vmem:[%s9189 + $0x10] sm:$0xff]
        %v9193 = vld [vmem:[%s9189 + $0x18] sm:$0xff]
        %v9194 = vld [vmem:[%s9189 + $0x20] sm:$0xff]
        %v9195 = vld [vmem:[%s9189 + $0x28] sm:$0xff]
        %9202 = vrot.lane.b32.xlu0 %v9190, 126
        %v9203 = vpop.permute.xlu0 %9202
        %9204 = vrot.lane.b32.xlu0 %v9191, 126
        %v9205 = vpop.permute.xlu0 %9204
        %9206 = vrot.lane.b32.xlu0 %v9192, 126
        %v9207 = vpop.permute.xlu0 %9206
        %9208 = vrot.lane.b32.xlu0 %v9193, 126
        %v9209 = vpop.permute.xlu0 %9208
        %9210 = vrot.lane.b32.xlu0 %v9194, 126
        %v9211 = vpop.permute.xlu0 %9210
        %9212 = vrot.lane.b32.xlu0 %v9195, 126
        %v9213 = vpop.permute.xlu0 %9212
        %v9214 = vsel %vm526, %v9203, %v9205
        %v9215 = vsel %vm526, %v9205, %v9207
        %v9216 = vsel %vm526, %v9209, %v9211
        %v9217 = vsel %vm526, %v9211, %v9213
        %v9226 = vmul.f32 %v8318, %v9203
        %v9227 = vmul.f32 %v8319, %v9214
        %v9228 = vmul.f32 %v8320, %v9215
        %v9229 = vmul.f32 %v8321, %v9207
        %v9230 = vmul.f32 %v8322, %v9209
        %v9231 = vmul.f32 %v8323, %v9216
        %v9232 = vmul.f32 %v8324, %v9217
        %v9233 = vmul.f32 %v8325, %v9213
        %9242 = vrot.lane.b32.xlu0 %v9226, 80
        %v9243 = vpop.permute.xlu0 %9242
        %9244 = vrot.lane.b32.xlu0 %v9227, 80
        %v9245 = vpop.permute.xlu0 %9244
        %9246 = vrot.lane.b32.xlu0 %v9228, 80
        %v9247 = vpop.permute.xlu0 %9246
        %9248 = vrot.lane.b32.xlu0 %v9229, 80
        %v9249 = vpop.permute.xlu0 %9248
        %9250 = vrot.lane.b32.xlu0 %v9230, 80
        %v9251 = vpop.permute.xlu0 %9250
        %9252 = vrot.lane.b32.xlu0 %v9231, 80
        %v9253 = vpop.permute.xlu0 %9252
        %9254 = vrot.lane.b32.xlu0 %v9232, 80
        %v9255 = vpop.permute.xlu0 %9254
        %9256 = vrot.lane.b32.xlu0 %v9233, 80
        %v9257 = vpop.permute.xlu0 %9256
        %v9258 = vsel %vm680, %v9243, %v9245
        %v9259 = vsel %vm680, %v9245, %v9247
        %v9260 = vsel %vm680, %v9247, %v9249
        %v9261 = vsel %vm680, %v9251, %v9253
        %v9262 = vsel %vm680, %v9253, %v9255
        %v9263 = vsel %vm680, %v9255, %v9257
        %v9272 = vadd.f32 %v9181, %v9258
        %v9273 = vadd.f32 %v9182, %v9259
        %v9274 = vadd.f32 %v9183, %v9260
        %v9275 = vadd.f32 %v9184, %v9249
        %v9276 = vadd.f32 %v9185, %v9261
        %v9277 = vadd.f32 %v9186, %v9262
        %v9278 = vadd.f32 %v9187, %v9263
        %v9279 = vadd.f32 %v9188, %v9257
        %s9280 = scalar_lea.vmem %s8, 528
        %v9281 = vld [vmem:[%s9280] sm:$0xff]
        %v9282 = vld [vmem:[%s9280 + $0x8] sm:$0xff]
        %v9283 = vld [vmem:[%s9280 + $0x10] sm:$0xff]
        %v9284 = vld [vmem:[%s9280 + $0x18] sm:$0xff]
        %v9285 = vld [vmem:[%s9280 + $0x20] sm:$0xff]
        %v9286 = vld [vmem:[%s9280 + $0x28] sm:$0xff]
        %9293 = vrot.lane.b32.xlu0 %v9281, 127
        %v9294 = vpop.permute.xlu0 %9293
        %9295 = vrot.lane.b32.xlu0 %v9282, 127
        %v9296 = vpop.permute.xlu0 %9295
        %9297 = vrot.lane.b32.xlu0 %v9283, 127
        %v9298 = vpop.permute.xlu0 %9297
        %9299 = vrot.lane.b32.xlu0 %v9284, 127
        %v9300 = vpop.permute.xlu0 %9299
        %9301 = vrot.lane.b32.xlu0 %v9285, 127
        %v9302 = vpop.permute.xlu0 %9301
        %9303 = vrot.lane.b32.xlu0 %v9286, 127
        %v9304 = vpop.permute.xlu0 %9303
        %v9305 = vsel %vm487, %v9294, %v9296
        %v9306 = vsel %vm487, %v9296, %v9298
        %v9307 = vsel %vm487, %v9300, %v9302
        %v9308 = vsel %vm487, %v9302, %v9304
        %v9317 = vmul.f32 %v8318, %v9294
        %v9318 = vmul.f32 %v8319, %v9305
        %v9319 = vmul.f32 %v8320, %v9306
        %v9320 = vmul.f32 %v8321, %v9298
        %v9321 = vmul.f32 %v8322, %v9300
        %v9322 = vmul.f32 %v8323, %v9307
        %v9323 = vmul.f32 %v8324, %v9308
        %v9324 = vmul.f32 %v8325, %v9304
        %9333 = vrot.lane.b32.xlu0 %v9317, 79
        %v9334 = vpop.permute.xlu0 %9333
        %9335 = vrot.lane.b32.xlu0 %v9318, 79
        %v9336 = vpop.permute.xlu0 %9335
        %9337 = vrot.lane.b32.xlu0 %v9319, 79
        %v9338 = vpop.permute.xlu0 %9337
        %9339 = vrot.lane.b32.xlu0 %v9320, 79
        %v9340 = vpop.permute.xlu0 %9339
        %9341 = vrot.lane.b32.xlu0 %v9321, 79
        %v9342 = vpop.permute.xlu0 %9341
        %9343 = vrot.lane.b32.xlu0 %v9322, 79
        %v9344 = vpop.permute.xlu0 %9343
        %9345 = vrot.lane.b32.xlu0 %v9323, 79
        %v9346 = vpop.permute.xlu0 %9345
        %9347 = vrot.lane.b32.xlu0 %v9324, 79
        %v9348 = vpop.permute.xlu0 %9347
        %v9349 = vsel %vm719, %v9334, %v9336
        %v9350 = vsel %vm719, %v9336, %v9338
        %v9351 = vsel %vm719, %v9338, %v9340
        %v9352 = vsel %vm719, %v9342, %v9344
        %v9353 = vsel %vm719, %v9344, %v9346
        %v9354 = vsel %vm719, %v9346, %v9348
        %v9363 = vadd.f32 %v9272, %v9349
        %v9364 = vadd.f32 %v9273, %v9350
        %v9365 = vadd.f32 %v9274, %v9351
        %v9366 = vadd.f32 %v9275, %v9340
        %v9367 = vadd.f32 %v9276, %v9352
        %v9368 = vadd.f32 %v9277, %v9353
        %v9369 = vadd.f32 %v9278, %v9354
        %v9370 = vadd.f32 %v9279, %v9348
        %s9371 = scalar_lea.vmem %s8, 576
        %v9372 = vld [vmem:[%s9371] sm:$0xff]
        %v9373 = vld [vmem:[%s9371 + $0x8] sm:$0xff]
        %v9374 = vld [vmem:[%s9371 + $0x10] sm:$0xff]
        %v9375 = vld [vmem:[%s9371 + $0x18] sm:$0xff]
        %v9376 = vld [vmem:[%s9371 + $0x20] sm:$0xff]
        %v9377 = vld [vmem:[%s9371 + $0x28] sm:$0xff]
        %v9378 = vmul.f32 %v8319, %v9372
        %v9379 = vmul.f32 %v8320, %v9373
        %v9380 = vmul.f32 %v8321, %v9374
        %v9381 = vmul.f32 %v8323, %v9375
        %v9382 = vmul.f32 %v8324, %v9376
        %v9383 = vmul.f32 %v8325, %v9377
        %9390 = vrot.lane.b32.xlu0 %v9378, 78
        %v9391 = vpop.permute.xlu0 %9390
        %9392 = vrot.lane.b32.xlu0 %v9379, 78
        %v9393 = vpop.permute.xlu0 %9392
        %9394 = vrot.lane.b32.xlu0 %v9380, 78
        %v9395 = vpop.permute.xlu0 %9394
        %9396 = vrot.lane.b32.xlu0 %v9381, 78
        %v9397 = vpop.permute.xlu0 %9396
        %9398 = vrot.lane.b32.xlu0 %v9382, 78
        %v9399 = vpop.permute.xlu0 %9398
        %9400 = vrot.lane.b32.xlu0 %v9383, 78
        %v9401 = vpop.permute.xlu0 %9400
        %v9402 = vsel %vm758, %v9391, %v9393
        %v9403 = vsel %vm758, %v9393, %v9395
        %v9404 = vsel %vm758, %v9397, %v9399
        %v9405 = vsel %vm758, %v9399, %v9401
        %v9414 = vadd.f32 %v9363, %v9391
        %v9415 = vadd.f32 %v9364, %v9402
        %v9416 = vadd.f32 %v9365, %v9403
        %v9417 = vadd.f32 %v9366, %v9395
        %v9418 = vadd.f32 %v9367, %v9397
        %v9419 = vadd.f32 %v9368, %v9404
        %v9420 = vadd.f32 %v9369, %v9405
        %v9421 = vadd.f32 %v9370, %v9401
        %v9422 = vld [vmem:[#allocation2 + $0x20] sm:$0xff]
        %v9423 = vld [vmem:[#allocation2 + $0x48] sm:$0xff]
        %s9424 = scalar_lea.vmem %s8, 624
        %v9425 = vld [vmem:[%s9424] sm:$0xff]
        %v9426 = vld [vmem:[%s9424 + $0x8] sm:$0xff]
        %v9427 = vld [vmem:[%s9424 + $0x10] sm:$0xff]
        %v9428 = vld [vmem:[%s9424 + $0x18] sm:$0xff]
        %v9429 = vld [vmem:[%s9424 + $0x20] sm:$0xff]
        %v9430 = vld [vmem:[%s9424 + $0x28] sm:$0xff]
        %9437 = vrot.lane.b32.xlu0 %v9425, 1
        %v9438 = vpop.permute.xlu0 %9437
        %9439 = vrot.lane.b32.xlu0 %v9426, 1
        %v9440 = vpop.permute.xlu0 %9439
        %9441 = vrot.lane.b32.xlu0 %v9427, 1
        %v9442 = vpop.permute.xlu0 %9441
        %9443 = vrot.lane.b32.xlu0 %v9428, 1
        %v9444 = vpop.permute.xlu0 %9443
        %9445 = vrot.lane.b32.xlu0 %v9429, 1
        %v9446 = vpop.permute.xlu0 %9445
        %9447 = vrot.lane.b32.xlu0 %v9430, 1
        %v9448 = vpop.permute.xlu0 %9447
        %v9449 = vsel %vm5545, %v9438, %v9440
        %v9450 = vsel %vm5545, %v9440, %v9442
        %v9451 = vsel %vm5545, %v9444, %v9446
        %v9452 = vsel %vm5545, %v9446, %v9448
        %v9461 = vmul.f32 %v8319, %v9438
        %v9462 = vmul.f32 %v8320, %v9449
        %v9463 = vmul.f32 %v8321, %v9450
        %v9464 = vmul.f32 %v9422, %v9442
        %v9465 = vmul.f32 %v8323, %v9444
        %v9466 = vmul.f32 %v8324, %v9451
        %v9467 = vmul.f32 %v8325, %v9452
        %v9468 = vmul.f32 %v9423, %v9448
        %9477 = vrot.lane.b32.xlu0 %v9461, 77
        %v9478 = vpop.permute.xlu0 %9477
        %9479 = vrot.lane.b32.xlu0 %v9462, 77
        %v9480 = vpop.permute.xlu0 %9479
        %9481 = vrot.lane.b32.xlu0 %v9463, 77
        %v9482 = vpop.permute.xlu0 %9481
        %9483 = vrot.lane.b32.xlu0 %v9464, 77
        %v9484 = vpop.permute.xlu0 %9483
        %9485 = vrot.lane.b32.xlu0 %v9465, 77
        %v9486 = vpop.permute.xlu0 %9485
        %9487 = vrot.lane.b32.xlu0 %v9466, 77
        %v9488 = vpop.permute.xlu0 %9487
        %9489 = vrot.lane.b32.xlu0 %v9467, 77
        %v9490 = vpop.permute.xlu0 %9489
        %9491 = vrot.lane.b32.xlu0 %v9468, 77
        %v9492 = vpop.permute.xlu0 %9491
        %v9493 = vsel %vm5811, %v9478, %v9480
        %v9494 = vsel %vm5811, %v9480, %v9482
        %v9495 = vsel %vm5811, %v9482, %v9484
        %v9496 = vsel %vm5811, %v9486, %v9488
        %v9497 = vsel %vm5811, %v9488, %v9490
        %v9498 = vsel %vm5811, %v9490, %v9492
        %v9507 = vadd.f32 %v9414, %v9478
        %v9508 = vadd.f32 %v9415, %v9493
        %v9509 = vadd.f32 %v9416, %v9494
        %v9510 = vadd.f32 %v9417, %v9495
        %v9511 = vadd.f32 %v9418, %v9486
        %v9512 = vadd.f32 %v9419, %v9496
        %v9513 = vadd.f32 %v9420, %v9497
        %v9514 = vadd.f32 %v9421, %v9498
        %s9515 = scalar_lea.vmem %s8, 672
        %v9516 = vld [vmem:[%s9515] sm:$0xff]
        %v9517 = vld [vmem:[%s9515 + $0x8] sm:$0xff]
        %v9518 = vld [vmem:[%s9515 + $0x10] sm:$0xff]
        %v9519 = vld [vmem:[%s9515 + $0x18] sm:$0xff]
        %v9520 = vld [vmem:[%s9515 + $0x20] sm:$0xff]
        %v9521 = vld [vmem:[%s9515 + $0x28] sm:$0xff]
        %9528 = vrot.lane.b32.xlu0 %v9516, 2
        %v9529 = vpop.permute.xlu0 %9528
        %9530 = vrot.lane.b32.xlu0 %v9517, 2
        %v9531 = vpop.permute.xlu0 %9530
        %9532 = vrot.lane.b32.xlu0 %v9518, 2
        %v9533 = vpop.permute.xlu0 %9532
        %9534 = vrot.lane.b32.xlu0 %v9519, 2
        %v9535 = vpop.permute.xlu0 %9534
        %9536 = vrot.lane.b32.xlu0 %v9520, 2
        %v9537 = vpop.permute.xlu0 %9536
        %9538 = vrot.lane.b32.xlu0 %v9521, 2
        %v9539 = vpop.permute.xlu0 %9538
        %v9540 = vsel %vm2389, %v9529, %v9531
        %v9541 = vsel %vm2389, %v9531, %v9533
        %v9542 = vsel %vm2389, %v9535, %v9537
        %v9543 = vsel %vm2389, %v9537, %v9539
        %v9552 = vmul.f32 %v8319, %v9529
        %v9553 = vmul.f32 %v8320, %v9540
        %v9554 = vmul.f32 %v8321, %v9541
        %v9555 = vmul.f32 %v9422, %v9533
        %v9556 = vmul.f32 %v8323, %v9535
        %v9557 = vmul.f32 %v8324, %v9542
        %v9558 = vmul.f32 %v8325, %v9543
        %v9559 = vmul.f32 %v9423, %v9539
        %9568 = vrot.lane.b32.xlu0 %v9552, 76
        %v9569 = vpop.permute.xlu0 %9568
        %9570 = vrot.lane.b32.xlu0 %v9553, 76
        %v9571 = vpop.permute.xlu0 %9570
        %9572 = vrot.lane.b32.xlu0 %v9554, 76
        %v9573 = vpop.permute.xlu0 %9572
        %9574 = vrot.lane.b32.xlu0 %v9555, 76
        %v9575 = vpop.permute.xlu0 %9574
        %9576 = vrot.lane.b32.xlu0 %v9556, 76
        %v9577 = vpop.permute.xlu0 %9576
        %9578 = vrot.lane.b32.xlu0 %v9557, 76
        %v9579 = vpop.permute.xlu0 %9578
        %9580 = vrot.lane.b32.xlu0 %v9558, 76
        %v9581 = vpop.permute.xlu0 %9580
        %9582 = vrot.lane.b32.xlu0 %v9559, 76
        %v9583 = vpop.permute.xlu0 %9582
        %v9584 = vsel %vm2434, %v9569, %v9571
        %v9585 = vsel %vm2434, %v9571, %v9573
        %v9586 = vsel %vm2434, %v9573, %v9575
        %v9587 = vsel %vm2434, %v9577, %v9579
        %v9588 = vsel %vm2434, %v9579, %v9581
        %v9589 = vsel %vm2434, %v9581, %v9583
        %v9598 = vadd.f32 %v9507, %v9569
        %v9599 = vadd.f32 %v9508, %v9584
        %v9600 = vadd.f32 %v9509, %v9585
        %v9601 = vadd.f32 %v9510, %v9586
        %v9602 = vadd.f32 %v9511, %v9577
        %v9603 = vadd.f32 %v9512, %v9587
        %v9604 = vadd.f32 %v9513, %v9588
        %v9605 = vadd.f32 %v9514, %v9589
        %s9606 = scalar_lea.vmem %s8, 720
        %v9607 = vld [vmem:[%s9606] sm:$0xff]
        %v9608 = vld [vmem:[%s9606 + $0x8] sm:$0xff]
        %v9609 = vld [vmem:[%s9606 + $0x10] sm:$0xff]
        %v9610 = vld [vmem:[%s9606 + $0x18] sm:$0xff]
        %v9611 = vld [vmem:[%s9606 + $0x20] sm:$0xff]
        %v9612 = vld [vmem:[%s9606 + $0x28] sm:$0xff]
        %9619 = vrot.lane.b32.xlu0 %v9607, 22
        %v9620 = vpop.permute.xlu0 %9619
        %9621 = vrot.lane.b32.xlu0 %v9608, 22
        %v9622 = vpop.permute.xlu0 %9621
        %9623 = vrot.lane.b32.xlu0 %v9609, 22
        %v9624 = vpop.permute.xlu0 %9623
        %9625 = vrot.lane.b32.xlu0 %v9610, 22
        %v9626 = vpop.permute.xlu0 %9625
        %9627 = vrot.lane.b32.xlu0 %v9611, 22
        %v9628 = vpop.permute.xlu0 %9627
        %9629 = vrot.lane.b32.xlu0 %v9612, 22
        %v9630 = vpop.permute.xlu0 %9629
        %v9631 = vsel %vm6762, %v9620, %v9622
        %v9632 = vsel %vm6762, %v9622, %v9624
        %v9633 = vsel %vm6762, %v9626, %v9628
        %v9634 = vsel %vm6762, %v9628, %v9630
        %v9643 = vmul.f32 %v8319, %v9620
        %v9644 = vmul.f32 %v8320, %v9631
        %v9645 = vmul.f32 %v8321, %v9632
        %v9646 = vmul.f32 %v9422, %v9624
        %v9647 = vmul.f32 %v8323, %v9626
        %v9648 = vmul.f32 %v8324, %v9633
        %v9649 = vmul.f32 %v8325, %v9634
        %v9650 = vmul.f32 %v9423, %v9630
        %9659 = vrot.lane.b32.xlu0 %v9643, 56
        %v9660 = vpop.permute.xlu0 %9659
        %9661 = vrot.lane.b32.xlu0 %v9644, 56
        %v9662 = vpop.permute.xlu0 %9661
        %9663 = vrot.lane.b32.xlu0 %v9645, 56
        %v9664 = vpop.permute.xlu0 %9663
        %9665 = vrot.lane.b32.xlu0 %v9646, 56
        %v9666 = vpop.permute.xlu0 %9665
        %9667 = vrot.lane.b32.xlu0 %v9647, 56
        %v9668 = vpop.permute.xlu0 %9667
        %9669 = vrot.lane.b32.xlu0 %v9648, 56
        %v9670 = vpop.permute.xlu0 %9669
        %9671 = vrot.lane.b32.xlu0 %v9649, 56
        %v9672 = vpop.permute.xlu0 %9671
        %9673 = vrot.lane.b32.xlu0 %v9650, 56
        %v9674 = vpop.permute.xlu0 %9673
        %v9675 = vsel %vm6807, %v9660, %v9662
        %v9676 = vsel %vm6807, %v9662, %v9664
        %v9677 = vsel %vm6807, %v9664, %v9666
        %v9678 = vsel %vm6807, %v9668, %v9670
        %v9679 = vsel %vm6807, %v9670, %v9672
        %v9680 = vsel %vm6807, %v9672, %v9674
        %v9689 = vadd.f32 %v9598, %v9660
        %v9690 = vadd.f32 %v9599, %v9675
        %v9691 = vadd.f32 %v9600, %v9676
        %v9692 = vadd.f32 %v9601, %v9677
        %v9693 = vadd.f32 %v9602, %v9668
        %v9694 = vadd.f32 %v9603, %v9678
        %v9695 = vadd.f32 %v9604, %v9679
        %v9696 = vadd.f32 %v9605, %v9680
        %s9697 = scalar_lea.vmem %s8, 768
        %v9698 = vld [vmem:[%s9697] sm:$0xff]
        %v9699 = vld [vmem:[%s9697 + $0x8] sm:$0xff]
        %v9700 = vld [vmem:[%s9697 + $0x10] sm:$0xff]
        %v9701 = vld [vmem:[%s9697 + $0x18] sm:$0xff]
        %v9702 = vld [vmem:[%s9697 + $0x20] sm:$0xff]
        %v9703 = vld [vmem:[%s9697 + $0x28] sm:$0xff]
        %9710 = vrot.lane.b32.xlu0 %v9698, 23
        %v9711 = vpop.permute.xlu0 %9710
        %9712 = vrot.lane.b32.xlu0 %v9699, 23
        %v9713 = vpop.permute.xlu0 %9712
        %9714 = vrot.lane.b32.xlu0 %v9700, 23
        %v9715 = vpop.permute.xlu0 %9714
        %9716 = vrot.lane.b32.xlu0 %v9701, 23
        %v9717 = vpop.permute.xlu0 %9716
        %9718 = vrot.lane.b32.xlu0 %v9702, 23
        %v9719 = vpop.permute.xlu0 %9718
        %9720 = vrot.lane.b32.xlu0 %v9703, 23
        %v9721 = vpop.permute.xlu0 %9720
        %v9722 = vsel %vm5365, %v9711, %v9713
        %v9723 = vsel %vm5365, %v9713, %v9715
        %v9724 = vsel %vm5365, %v9717, %v9719
        %v9725 = vsel %vm5365, %v9719, %v9721
        %v9734 = vmul.f32 %v8319, %v9711
        %v9735 = vmul.f32 %v8320, %v9722
        %v9736 = vmul.f32 %v8321, %v9723
        %v9737 = vmul.f32 %v9422, %v9715
        %v9738 = vmul.f32 %v8323, %v9717
        %v9739 = vmul.f32 %v8324, %v9724
        %v9740 = vmul.f32 %v8325, %v9725
        %v9741 = vmul.f32 %v9423, %v9721
        %9750 = vrot.lane.b32.xlu0 %v9734, 55
        %v9751 = vpop.permute.xlu0 %9750
        %9752 = vrot.lane.b32.xlu0 %v9735, 55
        %v9753 = vpop.permute.xlu0 %9752
        %9754 = vrot.lane.b32.xlu0 %v9736, 55
        %v9755 = vpop.permute.xlu0 %9754
        %9756 = vrot.lane.b32.xlu0 %v9737, 55
        %v9757 = vpop.permute.xlu0 %9756
        %9758 = vrot.lane.b32.xlu0 %v9738, 55
        %v9759 = vpop.permute.xlu0 %9758
        %9760 = vrot.lane.b32.xlu0 %v9739, 55
        %v9761 = vpop.permute.xlu0 %9760
        %9762 = vrot.lane.b32.xlu0 %v9740, 55
        %v9763 = vpop.permute.xlu0 %9762
        %9764 = vrot.lane.b32.xlu0 %v9741, 55
        %v9765 = vpop.permute.xlu0 %9764
        %v9766 = vsel %vm5990, %v9751, %v9753
        %v9767 = vsel %vm5990, %v9753, %v9755
        %v9768 = vsel %vm5990, %v9755, %v9757
        %v9769 = vsel %vm5990, %v9759, %v9761
        %v9770 = vsel %vm5990, %v9761, %v9763
        %v9771 = vsel %vm5990, %v9763, %v9765
        %v9780 = vadd.f32 %v9689, %v9751
        %v9781 = vadd.f32 %v9690, %v9766
        %v9782 = vadd.f32 %v9691, %v9767
        %v9783 = vadd.f32 %v9692, %v9768
        %v9784 = vadd.f32 %v9693, %v9759
        %v9785 = vadd.f32 %v9694, %v9769
        %v9786 = vadd.f32 %v9695, %v9770
        %v9787 = vadd.f32 %v9696, %v9771
        %s9788 = scalar_lea.vmem %s8, 816
        %v9789 = vld [vmem:[%s9788] sm:$0xff]
        %v9790 = vld [vmem:[%s9788 + $0x8] sm:$0xff]
        %v9791 = vld [vmem:[%s9788 + $0x10] sm:$0xff]
        %v9792 = vld [vmem:[%s9788 + $0x18] sm:$0xff]
        %v9793 = vld [vmem:[%s9788 + $0x20] sm:$0xff]
        %v9794 = vld [vmem:[%s9788 + $0x28] sm:$0xff]
        %9801 = vrot.lane.b32.xlu0 %v9789, 24
        %v9802 = vpop.permute.xlu0 %9801
        %9803 = vrot.lane.b32.xlu0 %v9790, 24
        %v9804 = vpop.permute.xlu0 %9803
        %9805 = vrot.lane.b32.xlu0 %v9791, 24
        %v9806 = vpop.permute.xlu0 %9805
        %9807 = vrot.lane.b32.xlu0 %v9792, 24
        %v9808 = vpop.permute.xlu0 %9807
        %9809 = vrot.lane.b32.xlu0 %v9793, 24
        %v9810 = vpop.permute.xlu0 %9809
        %9811 = vrot.lane.b32.xlu0 %v9794, 24
        %v9812 = vpop.permute.xlu0 %9811
        %v9813 = vsel %vm5185, %v9802, %v9804
        %v9814 = vsel %vm5185, %v9804, %v9806
        %v9815 = vsel %vm5185, %v9808, %v9810
        %v9816 = vsel %vm5185, %v9810, %v9812
        %v9825 = vmul.f32 %v8319, %v9802
        %v9826 = vmul.f32 %v8320, %v9813
        %v9827 = vmul.f32 %v8321, %v9814
        %v9828 = vmul.f32 %v9422, %v9806
        %v9829 = vmul.f32 %v8323, %v9808
        %v9830 = vmul.f32 %v8324, %v9815
        %v9831 = vmul.f32 %v8325, %v9816
        %v9832 = vmul.f32 %v9423, %v9812
        %9841 = vrot.lane.b32.xlu0 %v9825, 54
        %v9842 = vpop.permute.xlu0 %9841
        %9843 = vrot.lane.b32.xlu0 %v9826, 54
        %v9844 = vpop.permute.xlu0 %9843
        %9845 = vrot.lane.b32.xlu0 %v9827, 54
        %v9846 = vpop.permute.xlu0 %9845
        %9847 = vrot.lane.b32.xlu0 %v9828, 54
        %v9848 = vpop.permute.xlu0 %9847
        %9849 = vrot.lane.b32.xlu0 %v9829, 54
        %v9850 = vpop.permute.xlu0 %9849
        %9851 = vrot.lane.b32.xlu0 %v9830, 54
        %v9852 = vpop.permute.xlu0 %9851
        %9853 = vrot.lane.b32.xlu0 %v9831, 54
        %v9854 = vpop.permute.xlu0 %9853
        %9855 = vrot.lane.b32.xlu0 %v9832, 54
        %v9856 = vpop.permute.xlu0 %9855
        %v9857 = vsel %vm6169, %v9842, %v9844
        %v9858 = vsel %vm6169, %v9844, %v9846
        %v9859 = vsel %vm6169, %v9846, %v9848
        %v9860 = vsel %vm6169, %v9850, %v9852
        %v9861 = vsel %vm6169, %v9852, %v9854
        %v9862 = vsel %vm6169, %v9854, %v9856
        %v9871 = vadd.f32 %v9780, %v9842
        %v9872 = vadd.f32 %v9781, %v9857
        %v9873 = vadd.f32 %v9782, %v9858
        %v9874 = vadd.f32 %v9783, %v9859
        %v9875 = vadd.f32 %v9784, %v9850
        %v9876 = vadd.f32 %v9785, %v9860
        %v9877 = vadd.f32 %v9786, %v9861
        %v9878 = vadd.f32 %v9787, %v9862
        %s9879 = scalar_lea.vmem %s8, 864
        %v9880 = vld [vmem:[%s9879] sm:$0xff]
        %v9881 = vld [vmem:[%s9879 + $0x8] sm:$0xff]
        %v9882 = vld [vmem:[%s9879 + $0x10] sm:$0xff]
        %v9883 = vld [vmem:[%s9879 + $0x18] sm:$0xff]
        %v9884 = vld [vmem:[%s9879 + $0x20] sm:$0xff]
        %v9885 = vld [vmem:[%s9879 + $0x28] sm:$0xff]
        %9892 = vrot.lane.b32.xlu0 %v9880, 25
        %v9893 = vpop.permute.xlu0 %9892
        %9894 = vrot.lane.b32.xlu0 %v9881, 25
        %v9895 = vpop.permute.xlu0 %9894
        %9896 = vrot.lane.b32.xlu0 %v9882, 25
        %v9897 = vpop.permute.xlu0 %9896
        %9898 = vrot.lane.b32.xlu0 %v9883, 25
        %v9899 = vpop.permute.xlu0 %9898
        %9900 = vrot.lane.b32.xlu0 %v9884, 25
        %v9901 = vpop.permute.xlu0 %9900
        %9902 = vrot.lane.b32.xlu0 %v9885, 25
        %v9903 = vpop.permute.xlu0 %9902
        %v9904 = vsel %vm5006, %v9893, %v9895
        %v9905 = vsel %vm5006, %v9895, %v9897
        %v9906 = vsel %vm5006, %v9899, %v9901
        %v9907 = vsel %vm5006, %v9901, %v9903
        %v9916 = vmul.f32 %v8319, %v9893
        %v9917 = vmul.f32 %v8320, %v9904
        %v9918 = vmul.f32 %v8321, %v9905
        %v9919 = vmul.f32 %v9422, %v9897
        %v9920 = vmul.f32 %v8323, %v9899
        %v9921 = vmul.f32 %v8324, %v9906
        %v9922 = vmul.f32 %v8325, %v9907
        %v9923 = vmul.f32 %v9423, %v9903
        %9932 = vrot.lane.b32.xlu0 %v9916, 53
        %v9933 = vpop.permute.xlu0 %9932
        %9934 = vrot.lane.b32.xlu0 %v9917, 53
        %v9935 = vpop.permute.xlu0 %9934
        %9936 = vrot.lane.b32.xlu0 %v9918, 53
        %v9937 = vpop.permute.xlu0 %9936
        %9938 = vrot.lane.b32.xlu0 %v9919, 53
        %v9939 = vpop.permute.xlu0 %9938
        %9940 = vrot.lane.b32.xlu0 %v9920, 53
        %v9941 = vpop.permute.xlu0 %9940
        %9942 = vrot.lane.b32.xlu0 %v9921, 53
        %v9943 = vpop.permute.xlu0 %9942
        %9944 = vrot.lane.b32.xlu0 %v9922, 53
        %v9945 = vpop.permute.xlu0 %9944
        %9946 = vrot.lane.b32.xlu0 %v9923, 53
        %v9947 = vpop.permute.xlu0 %9946
        %v9948 = vsel %vm6348, %v9933, %v9935
        %v9949 = vsel %vm6348, %v9935, %v9937
        %v9950 = vsel %vm6348, %v9937, %v9939
        %v9951 = vsel %vm6348, %v9941, %v9943
        %v9952 = vsel %vm6348, %v9943, %v9945
        %v9953 = vsel %vm6348, %v9945, %v9947
        %v9962 = vadd.f32 %v9871, %v9933
        %v9963 = vadd.f32 %v9872, %v9948
        %v9964 = vadd.f32 %v9873, %v9949
        %v9965 = vadd.f32 %v9874, %v9950
        %v9966 = vadd.f32 %v9875, %v9941
        %v9967 = vadd.f32 %v9876, %v9951
        %v9968 = vadd.f32 %v9877, %v9952
        %v9969 = vadd.f32 %v9878, %v9953
        %s9970 = scalar_lea.vmem %s8, 912
        %v9971 = vld [vmem:[%s9970] sm:$0xff]
        %v9972 = vld [vmem:[%s9970 + $0x8] sm:$0xff]
        %v9973 = vld [vmem:[%s9970 + $0x10] sm:$0xff]
        %v9974 = vld [vmem:[%s9970 + $0x18] sm:$0xff]
        %v9975 = vld [vmem:[%s9970 + $0x20] sm:$0xff]
        %v9976 = vld [vmem:[%s9970 + $0x28] sm:$0xff]
        %9983 = vrot.lane.b32.xlu0 %v9971, 26
        %v9984 = vpop.permute.xlu0 %9983
        %9985 = vrot.lane.b32.xlu0 %v9972, 26
        %v9986 = vpop.permute.xlu0 %9985
        %9987 = vrot.lane.b32.xlu0 %v9973, 26
        %v9988 = vpop.permute.xlu0 %9987
        %9989 = vrot.lane.b32.xlu0 %v9974, 26
        %v9990 = vpop.permute.xlu0 %9989
        %9991 = vrot.lane.b32.xlu0 %v9975, 26
        %v9992 = vpop.permute.xlu0 %9991
        %9993 = vrot.lane.b32.xlu0 %v9976, 26
        %v9994 = vpop.permute.xlu0 %9993
        %v9995 = vsel %vm4451, %v9984, %v9986
        %v9996 = vsel %vm4451, %v9986, %v9988
        %v9997 = vsel %vm4451, %v9990, %v9992
        %v9998 = vsel %vm4451, %v9992, %v9994
        %v10007 = vmul.f32 %v8319, %v9984
        %v10008 = vmul.f32 %v8320, %v9995
        %v10009 = vmul.f32 %v8321, %v9996
        %v10010 = vmul.f32 %v9422, %v9988
        %v10011 = vmul.f32 %v8323, %v9990
        %v10012 = vmul.f32 %v8324, %v9997
        %v10013 = vmul.f32 %v8325, %v9998
        %v10014 = vmul.f32 %v9423, %v9994
        %10023 = vrot.lane.b32.xlu0 %v10007, 52
        %v10024 = vpop.permute.xlu0 %10023
        %10025 = vrot.lane.b32.xlu0 %v10008, 52
        %v10026 = vpop.permute.xlu0 %10025
        %10027 = vrot.lane.b32.xlu0 %v10009, 52
        %v10028 = vpop.permute.xlu0 %10027
        %10029 = vrot.lane.b32.xlu0 %v10010, 52
        %v10030 = vpop.permute.xlu0 %10029
        %10031 = vrot.lane.b32.xlu0 %v10011, 52
        %v10032 = vpop.permute.xlu0 %10031
        %10033 = vrot.lane.b32.xlu0 %v10012, 52
        %v10034 = vpop.permute.xlu0 %10033
        %10035 = vrot.lane.b32.xlu0 %v10013, 52
        %v10036 = vpop.permute.xlu0 %10035
        %10037 = vrot.lane.b32.xlu0 %v10014, 52
        %v10038 = vpop.permute.xlu0 %10037
        %v10039 = vsel %vm4406, %v10024, %v10026
        %v10040 = vsel %vm4406, %v10026, %v10028
        %v10041 = vsel %vm4406, %v10028, %v10030
        %v10042 = vsel %vm4406, %v10032, %v10034
        %v10043 = vsel %vm4406, %v10034, %v10036
        %v10044 = vsel %vm4406, %v10036, %v10038
        %v10053 = vadd.f32 %v9962, %v10024
        %v10054 = vadd.f32 %v9963, %v10039
        %v10055 = vadd.f32 %v9964, %v10040
        %v10056 = vadd.f32 %v9965, %v10041
        %v10057 = vadd.f32 %v9966, %v10032
        %v10058 = vadd.f32 %v9967, %v10042
        %v10059 = vadd.f32 %v9968, %v10043
        %v10060 = vadd.f32 %v9969, %v10044
        %s10061 = scalar_lea.vmem %s8, 960
        %v10062 = vld [vmem:[%s10061] sm:$0xff]
        %v10063 = vld [vmem:[%s10061 + $0x8] sm:$0xff]
        %v10064 = vld [vmem:[%s10061 + $0x10] sm:$0xff]
        %v10065 = vld [vmem:[%s10061 + $0x18] sm:$0xff]
        %v10066 = vld [vmem:[%s10061 + $0x20] sm:$0xff]
        %v10067 = vld [vmem:[%s10061 + $0x28] sm:$0xff]
        %10074 = vrot.lane.b32.xlu0 %v10062, 46
        %v10075 = vpop.permute.xlu0 %10074
        %10076 = vrot.lane.b32.xlu0 %v10063, 46
        %v10077 = vpop.permute.xlu0 %10076
        %10078 = vrot.lane.b32.xlu0 %v10064, 46
        %v10079 = vpop.permute.xlu0 %10078
        %10080 = vrot.lane.b32.xlu0 %v10065, 46
        %v10081 = vpop.permute.xlu0 %10080
        %10082 = vrot.lane.b32.xlu0 %v10066, 46
        %v10083 = vpop.permute.xlu0 %10082
        %10084 = vrot.lane.b32.xlu0 %v10067, 46
        %v10085 = vpop.permute.xlu0 %10084
        %v10086 = vsel %vm2664, %v10075, %v10077
        %v10087 = vsel %vm2664, %v10077, %v10079
        %v10088 = vsel %vm2664, %v10081, %v10083
        %v10089 = vsel %vm2664, %v10083, %v10085
        %v10098 = vmul.f32 %v8319, %v10075
        %v10099 = vmul.f32 %v8320, %v10086
        %v10100 = vmul.f32 %v8321, %v10087
        %v10101 = vmul.f32 %v9422, %v10079
        %v10102 = vmul.f32 %v8323, %v10081
        %v10103 = vmul.f32 %v8324, %v10088
        %v10104 = vmul.f32 %v8325, %v10089
        %v10105 = vmul.f32 %v9423, %v10085
        %10114 = vrot.lane.b32.xlu0 %v10098, 32
        %v10115 = vpop.permute.xlu0 %10114
        %10116 = vrot.lane.b32.xlu0 %v10099, 32
        %v10117 = vpop.permute.xlu0 %10116
        %10118 = vrot.lane.b32.xlu0 %v10100, 32
        %v10119 = vpop.permute.xlu0 %10118
        %10120 = vrot.lane.b32.xlu0 %v10101, 32
        %v10121 = vpop.permute.xlu0 %10120
        %10122 = vrot.lane.b32.xlu0 %v10102, 32
        %v10123 = vpop.permute.xlu0 %10122
        %10124 = vrot.lane.b32.xlu0 %v10103, 32
        %v10125 = vpop.permute.xlu0 %10124
        %10126 = vrot.lane.b32.xlu0 %v10104, 32
        %v10127 = vpop.permute.xlu0 %10126
        %10128 = vrot.lane.b32.xlu0 %v10105, 32
        %v10129 = vpop.permute.xlu0 %10128
        %v10130 = vsel %vm2709, %v10115, %v10117
        %v10131 = vsel %vm2709, %v10117, %v10119
        %v10132 = vsel %vm2709, %v10119, %v10121
        %v10133 = vsel %vm2709, %v10123, %v10125
        %v10134 = vsel %vm2709, %v10125, %v10127
        %v10135 = vsel %vm2709, %v10127, %v10129
        %v10144 = vadd.f32 %v10053, %v10115
        %v10145 = vadd.f32 %v10054, %v10130
        %v10146 = vadd.f32 %v10055, %v10131
        %v10147 = vadd.f32 %v10056, %v10132
        %v10148 = vadd.f32 %v10057, %v10123
        %v10149 = vadd.f32 %v10058, %v10133
        %v10150 = vadd.f32 %v10059, %v10134
        %v10151 = vadd.f32 %v10060, %v10135
        %s10152 = scalar_lea.vmem %s8, 1008
        %v10153 = vld [vmem:[%s10152] sm:$0xff]
        %v10154 = vld [vmem:[%s10152 + $0x8] sm:$0xff]
        %v10155 = vld [vmem:[%s10152 + $0x10] sm:$0xff]
        %v10156 = vld [vmem:[%s10152 + $0x18] sm:$0xff]
        %v10157 = vld [vmem:[%s10152 + $0x20] sm:$0xff]
        %v10158 = vld [vmem:[%s10152 + $0x28] sm:$0xff]
        %10165 = vrot.lane.b32.xlu0 %v10153, 47
        %v10166 = vpop.permute.xlu0 %10165
        %10167 = vrot.lane.b32.xlu0 %v10154, 47
        %v10168 = vpop.permute.xlu0 %10167
        %10169 = vrot.lane.b32.xlu0 %v10155, 47
        %v10170 = vpop.permute.xlu0 %10169
        %10171 = vrot.lane.b32.xlu0 %v10156, 47
        %v10172 = vpop.permute.xlu0 %10171
        %10173 = vrot.lane.b32.xlu0 %v10157, 47
        %v10174 = vpop.permute.xlu0 %10173
        %10175 = vrot.lane.b32.xlu0 %v10158, 47
        %v10176 = vpop.permute.xlu0 %10175
        %v10177 = vsel %vm6946, %v10166, %v10168
        %v10178 = vsel %vm6946, %v10168, %v10170
        %v10179 = vsel %vm6946, %v10172, %v10174
        %v10180 = vsel %vm6946, %v10174, %v10176
        %v10189 = vmul.f32 %v8319, %v10166
        %v10190 = vmul.f32 %v8320, %v10177
        %v10191 = vmul.f32 %v8321, %v10178
        %v10192 = vmul.f32 %v9422, %v10170
        %v10193 = vmul.f32 %v8323, %v10172
        %v10194 = vmul.f32 %v8324, %v10179
        %v10195 = vmul.f32 %v8325, %v10180
        %v10196 = vmul.f32 %v9423, %v10176
        %10205 = vrot.lane.b32.xlu0 %v10189, 31
        %v10206 = vpop.permute.xlu0 %10205
        %10207 = vrot.lane.b32.xlu0 %v10190, 31
        %v10208 = vpop.permute.xlu0 %10207
        %10209 = vrot.lane.b32.xlu0 %v10191, 31
        %v10210 = vpop.permute.xlu0 %10209
        %10211 = vrot.lane.b32.xlu0 %v10192, 31
        %v10212 = vpop.permute.xlu0 %10211
        %10213 = vrot.lane.b32.xlu0 %v10193, 31
        %v10214 = vpop.permute.xlu0 %10213
        %10215 = vrot.lane.b32.xlu0 %v10194, 31
        %v10216 = vpop.permute.xlu0 %10215
        %10217 = vrot.lane.b32.xlu0 %v10195, 31
        %v10218 = vpop.permute.xlu0 %10217
        %10219 = vrot.lane.b32.xlu0 %v10196, 31
        %v10220 = vpop.permute.xlu0 %10219
        %v10221 = vsel %vm6991, %v10206, %v10208
        %v10222 = vsel %vm6991, %v10208, %v10210
        %v10223 = vsel %vm6991, %v10210, %v10212
        %v10224 = vsel %vm6991, %v10214, %v10216
        %v10225 = vsel %vm6991, %v10216, %v10218
        %v10226 = vsel %vm6991, %v10218, %v10220
        %v10235 = vadd.f32 %v10144, %v10206
        %v10236 = vadd.f32 %v10145, %v10221
        %v10237 = vadd.f32 %v10146, %v10222
        %v10238 = vadd.f32 %v10147, %v10223
        %v10239 = vadd.f32 %v10148, %v10214
        %v10240 = vadd.f32 %v10149, %v10224
        %v10241 = vadd.f32 %v10150, %v10225
        %v10242 = vadd.f32 %v10151, %v10226
        %s10243 = scalar_lea.vmem %s8, 1056
        %v10244 = vld [vmem:[%s10243] sm:$0xff]
        %v10245 = vld [vmem:[%s10243 + $0x8] sm:$0xff]
        %v10246 = vld [vmem:[%s10243 + $0x10] sm:$0xff]
        %v10247 = vld [vmem:[%s10243 + $0x18] sm:$0xff]
        %v10248 = vld [vmem:[%s10243 + $0x20] sm:$0xff]
        %v10249 = vld [vmem:[%s10243 + $0x28] sm:$0xff]
        %10256 = vrot.lane.b32.xlu0 %v10244, 48
        %v10257 = vpop.permute.xlu0 %10256
        %10258 = vrot.lane.b32.xlu0 %v10245, 48
        %v10259 = vpop.permute.xlu0 %10258
        %10260 = vrot.lane.b32.xlu0 %v10246, 48
        %v10261 = vpop.permute.xlu0 %10260
        %10262 = vrot.lane.b32.xlu0 %v10247, 48
        %v10263 = vpop.permute.xlu0 %10262
        %10264 = vrot.lane.b32.xlu0 %v10248, 48
        %v10265 = vpop.permute.xlu0 %10264
        %10266 = vrot.lane.b32.xlu0 %v10249, 48
        %v10267 = vpop.permute.xlu0 %10266
        %v10268 = vsel %vm2939, %v10257, %v10259
        %v10269 = vsel %vm2939, %v10259, %v10261
        %v10270 = vsel %vm2939, %v10263, %v10265
        %v10271 = vsel %vm2939, %v10265, %v10267
        %v10280 = vmul.f32 %v8319, %v10257
        %v10281 = vmul.f32 %v8320, %v10268
        %v10282 = vmul.f32 %v8321, %v10269
        %v10283 = vmul.f32 %v9422, %v10261
        %v10284 = vmul.f32 %v8323, %v10263
        %v10285 = vmul.f32 %v8324, %v10270
        %v10286 = vmul.f32 %v8325, %v10271
        %v10287 = vmul.f32 %v9423, %v10267
        %10296 = vrot.lane.b32.xlu0 %v10280, 30
        %v10297 = vpop.permute.xlu0 %10296
        %10298 = vrot.lane.b32.xlu0 %v10281, 30
        %v10299 = vpop.permute.xlu0 %10298
        %10300 = vrot.lane.b32.xlu0 %v10282, 30
        %v10301 = vpop.permute.xlu0 %10300
        %10302 = vrot.lane.b32.xlu0 %v10283, 30
        %v10303 = vpop.permute.xlu0 %10302
        %10304 = vrot.lane.b32.xlu0 %v10284, 30
        %v10305 = vpop.permute.xlu0 %10304
        %10306 = vrot.lane.b32.xlu0 %v10285, 30
        %v10307 = vpop.permute.xlu0 %10306
        %10308 = vrot.lane.b32.xlu0 %v10286, 30
        %v10309 = vpop.permute.xlu0 %10308
        %10310 = vrot.lane.b32.xlu0 %v10287, 30
        %v10311 = vpop.permute.xlu0 %10310
        %v10312 = vsel %vm2984, %v10297, %v10299
        %v10313 = vsel %vm2984, %v10299, %v10301
        %v10314 = vsel %vm2984, %v10301, %v10303
        %v10315 = vsel %vm2984, %v10305, %v10307
        %v10316 = vsel %vm2984, %v10307, %v10309
        %v10317 = vsel %vm2984, %v10309, %v10311
        %v10326 = vadd.f32 %v10235, %v10297
        %v10327 = vadd.f32 %v10236, %v10312
        %v10328 = vadd.f32 %v10237, %v10313
        %v10329 = vadd.f32 %v10238, %v10314
        %v10330 = vadd.f32 %v10239, %v10305
        %v10331 = vadd.f32 %v10240, %v10315
        %v10332 = vadd.f32 %v10241, %v10316
        %v10333 = vadd.f32 %v10242, %v10317
        %s10334 = scalar_lea.vmem %s8, 1104
        %v10335 = vld [vmem:[%s10334] sm:$0xff]
        %v10336 = vld [vmem:[%s10334 + $0x8] sm:$0xff]
        %v10337 = vld [vmem:[%s10334 + $0x10] sm:$0xff]
        %v10338 = vld [vmem:[%s10334 + $0x18] sm:$0xff]
        %v10339 = vld [vmem:[%s10334 + $0x20] sm:$0xff]
        %v10340 = vld [vmem:[%s10334 + $0x28] sm:$0xff]
        %10347 = vrot.lane.b32.xlu0 %v10335, 49
        %v10348 = vpop.permute.xlu0 %10347
        %10349 = vrot.lane.b32.xlu0 %v10336, 49
        %v10350 = vpop.permute.xlu0 %10349
        %10351 = vrot.lane.b32.xlu0 %v10337, 49
        %v10352 = vpop.permute.xlu0 %10351
        %10353 = vrot.lane.b32.xlu0 %v10338, 49
        %v10354 = vpop.permute.xlu0 %10353
        %10355 = vrot.lane.b32.xlu0 %v10339, 49
        %v10356 = vpop.permute.xlu0 %10355
        %10357 = vrot.lane.b32.xlu0 %v10340, 49
        %v10358 = vpop.permute.xlu0 %10357
        %v10359 = vsel %vm7039, %v10348, %v10350
        %v10360 = vsel %vm7039, %v10350, %v10352
        %v10361 = vsel %vm7039, %v10354, %v10356
        %v10362 = vsel %vm7039, %v10356, %v10358
        %v10371 = vmul.f32 %v8319, %v10348
        %v10372 = vmul.f32 %v8320, %v10359
        %v10373 = vmul.f32 %v8321, %v10360
        %v10374 = vmul.f32 %v9422, %v10352
        %v10375 = vmul.f32 %v8323, %v10354
        %v10376 = vmul.f32 %v8324, %v10361
        %v10377 = vmul.f32 %v8325, %v10362
        %v10378 = vmul.f32 %v9423, %v10358
        %10387 = vrot.lane.b32.xlu0 %v10371, 29
        %v10388 = vpop.permute.xlu0 %10387
        %10389 = vrot.lane.b32.xlu0 %v10372, 29
        %v10390 = vpop.permute.xlu0 %10389
        %10391 = vrot.lane.b32.xlu0 %v10373, 29
        %v10392 = vpop.permute.xlu0 %10391
        %10393 = vrot.lane.b32.xlu0 %v10374, 29
        %v10394 = vpop.permute.xlu0 %10393
        %10395 = vrot.lane.b32.xlu0 %v10375, 29
        %v10396 = vpop.permute.xlu0 %10395
        %10397 = vrot.lane.b32.xlu0 %v10376, 29
        %v10398 = vpop.permute.xlu0 %10397
        %10399 = vrot.lane.b32.xlu0 %v10377, 29
        %v10400 = vpop.permute.xlu0 %10399
        %10401 = vrot.lane.b32.xlu0 %v10378, 29
        %v10402 = vpop.permute.xlu0 %10401
        %v10403 = vsel %vm7084, %v10388, %v10390
        %v10404 = vsel %vm7084, %v10390, %v10392
        %v10405 = vsel %vm7084, %v10392, %v10394
        %v10406 = vsel %vm7084, %v10396, %v10398
        %v10407 = vsel %vm7084, %v10398, %v10400
        %v10408 = vsel %vm7084, %v10400, %v10402
        %v10417 = vadd.f32 %v10326, %v10388
        %v10418 = vadd.f32 %v10327, %v10403
        %v10419 = vadd.f32 %v10328, %v10404
        %v10420 = vadd.f32 %v10329, %v10405
        %v10421 = vadd.f32 %v10330, %v10396
        %v10422 = vadd.f32 %v10331, %v10406
        %v10423 = vadd.f32 %v10332, %v10407
        %v10424 = vadd.f32 %v10333, %v10408
        %s10425 = scalar_lea.vmem %s8, 1152
        %v10426 = vld [vmem:[%s10425] sm:$0xff]
        %v10427 = vld [vmem:[%s10425 + $0x8] sm:$0xff]
        %v10428 = vld [vmem:[%s10425 + $0x10] sm:$0xff]
        %v10429 = vld [vmem:[%s10425 + $0x18] sm:$0xff]
        %v10430 = vld [vmem:[%s10425 + $0x20] sm:$0xff]
        %v10431 = vld [vmem:[%s10425 + $0x28] sm:$0xff]
        %10438 = vrot.lane.b32.xlu0 %v10426, 50
        %v10439 = vpop.permute.xlu0 %10438
        %10440 = vrot.lane.b32.xlu0 %v10427, 50
        %v10441 = vpop.permute.xlu0 %10440
        %10442 = vrot.lane.b32.xlu0 %v10428, 50
        %v10443 = vpop.permute.xlu0 %10442
        %10444 = vrot.lane.b32.xlu0 %v10429, 50
        %v10445 = vpop.permute.xlu0 %10444
        %10446 = vrot.lane.b32.xlu0 %v10430, 50
        %v10447 = vpop.permute.xlu0 %10446
        %10448 = vrot.lane.b32.xlu0 %v10431, 50
        %v10449 = vpop.permute.xlu0 %10448
        %v10450 = vsel %vm3214, %v10439, %v10441
        %v10451 = vsel %vm3214, %v10441, %v10443
        %v10452 = vsel %vm3214, %v10445, %v10447
        %v10453 = vsel %vm3214, %v10447, %v10449
        %v10462 = vmul.f32 %v8319, %v10439
        %v10463 = vmul.f32 %v8320, %v10450
        %v10464 = vmul.f32 %v8321, %v10451
        %v10465 = vmul.f32 %v9422, %v10443
        %v10466 = vmul.f32 %v8323, %v10445
        %v10467 = vmul.f32 %v8324, %v10452
        %v10468 = vmul.f32 %v8325, %v10453
        %v10469 = vmul.f32 %v9423, %v10449
        %10478 = vrot.lane.b32.xlu0 %v10462, 28
        %v10479 = vpop.permute.xlu0 %10478
        %10480 = vrot.lane.b32.xlu0 %v10463, 28
        %v10481 = vpop.permute.xlu0 %10480
        %10482 = vrot.lane.b32.xlu0 %v10464, 28
        %v10483 = vpop.permute.xlu0 %10482
        %10484 = vrot.lane.b32.xlu0 %v10465, 28
        %v10485 = vpop.permute.xlu0 %10484
        %10486 = vrot.lane.b32.xlu0 %v10466, 28
        %v10487 = vpop.permute.xlu0 %10486
        %10488 = vrot.lane.b32.xlu0 %v10467, 28
        %v10489 = vpop.permute.xlu0 %10488
        %10490 = vrot.lane.b32.xlu0 %v10468, 28
        %v10491 = vpop.permute.xlu0 %10490
        %10492 = vrot.lane.b32.xlu0 %v10469, 28
        %v10493 = vpop.permute.xlu0 %10492
        %v10494 = vsel %vm3259, %v10479, %v10481
        %v10495 = vsel %vm3259, %v10481, %v10483
        %v10496 = vsel %vm3259, %v10483, %v10485
        %v10497 = vsel %vm3259, %v10487, %v10489
        %v10498 = vsel %vm3259, %v10489, %v10491
        %v10499 = vsel %vm3259, %v10491, %v10493
        %v10508 = vadd.f32 %v10417, %v10479
        %v10509 = vadd.f32 %v10418, %v10494
        %v10510 = vadd.f32 %v10419, %v10495
        %v10511 = vadd.f32 %v10420, %v10496
        %v10512 = vadd.f32 %v10421, %v10487
        %v10513 = vadd.f32 %v10422, %v10497
        %v10514 = vadd.f32 %v10423, %v10498
        %v10515 = vadd.f32 %v10424, %v10499
        %v10516 = vld [vmem:[%s10] sm:$0xff]
        %v10517 = vld [vmem:[%s10 + $0x8] sm:$0xff]
        %10526 = vrot.lane.b32.xlu0 %v10508, 25
        %v10527 = vpop.permute.xlu0 %10526
        %10528 = vrot.lane.b32.xlu0 %v10509, 25
        %v10529 = vpop.permute.xlu0 %10528
        %10530 = vrot.lane.b32.xlu0 %v10510, 25
        %v10531 = vpop.permute.xlu0 %10530
        %10532 = vrot.lane.b32.xlu0 %v10511, 25
        %v10533 = vpop.permute.xlu0 %10532
        %10534 = vrot.lane.b32.xlu0 %v10512, 25
        %v10535 = vpop.permute.xlu0 %10534
        %10536 = vrot.lane.b32.xlu0 %v10513, 25
        %v10537 = vpop.permute.xlu0 %10536
        %10538 = vrot.lane.b32.xlu0 %v10514, 25
        %v10539 = vpop.permute.xlu0 %10538
        %10540 = vrot.lane.b32.xlu0 %v10515, 25
        %v10541 = vpop.permute.xlu0 %10540
        %v10542 = vsel %vm5006, %v10527, %v10529
        %v10543 = vsel %vm5006, %v10529, %v10531
        %v10544 = vsel %vm5006, %v10531, %v10533
        %v10545 = vsel %vm5006, %v10535, %v10537
        %v10546 = vsel %vm5006, %v10537, %v10539
        %v10547 = vsel %vm5006, %v10539, %v10541
        %10556 = vrot.lane.b32.xlu0 %v8292, 25
        %v10557 = vpop.permute.xlu0 %10556
        %10558 = vrot.lane.b32.xlu0 %v8293, 25
        %v10559 = vpop.permute.xlu0 %10558
        %10560 = vrot.lane.b32.xlu0 %v8294, 25
        %v10561 = vpop.permute.xlu0 %10560
        %10562 = vrot.lane.b32.xlu0 %v8295, 25
        %v10563 = vpop.permute.xlu0 %10562
        %10564 = vrot.lane.b32.xlu0 %v8296, 25
        %v10565 = vpop.permute.xlu0 %10564
        %10566 = vrot.lane.b32.xlu0 %v8297, 25
        %v10567 = vpop.permute.xlu0 %10566
        %10568 = vrot.lane.b32.xlu0 %v8298, 25
        %v10569 = vpop.permute.xlu0 %10568
        %10570 = vrot.lane.b32.xlu0 %v8299, 25
        %v10571 = vpop.permute.xlu0 %10570
        %10572 = vrot.lane.b32.xlu0 %v10527, 25
        %v10573 = vpop.permute.xlu0 %10572
        %10574 = vrot.lane.b32.xlu0 %v10542, 25
        %v10575 = vpop.permute.xlu0 %10574
        %10576 = vrot.lane.b32.xlu0 %v10543, 25
        %v10577 = vpop.permute.xlu0 %10576
        %10578 = vrot.lane.b32.xlu0 %v10544, 25
        %v10579 = vpop.permute.xlu0 %10578
        %10580 = vrot.lane.b32.xlu0 %v10535, 25
        %v10581 = vpop.permute.xlu0 %10580
        %10582 = vrot.lane.b32.xlu0 %v10545, 25
        %v10583 = vpop.permute.xlu0 %10582
        %10584 = vrot.lane.b32.xlu0 %v10546, 25
        %v10585 = vpop.permute.xlu0 %10584
        %10586 = vrot.lane.b32.xlu0 %v10547, 25
        %v10587 = vpop.permute.xlu0 %10586
        %v10588 = vsel %vm5006, %v10557, %v10559
        %v10589 = vsel %vm5006, %v10559, %v10561
        %v10590 = vsel %vm5006, %v10561, %v10563
        %v10591 = vsel %vm5006, %v10565, %v10567
        %v10592 = vsel %vm5006, %v10567, %v10569
        %v10593 = vsel %vm5006, %v10569, %v10571
        %v10594 = vsel %vm5006, %v10573, %v10575
        %v10595 = vsel %vm5006, %v10575, %v10577
        %v10596 = vsel %vm5006, %v10577, %v10579
        %v10597 = vsel %vm5006, %v10581, %v10583
        %v10598 = vsel %vm5006, %v10583, %v10585
        %v10599 = vsel %vm5006, %v10585, %v10587
        %v10613 = vsel %vm2709, %v10516, 0
        %v10616 = vsel %vm2709, %v10517, 0
        %10618 = vmatprep.subr.mxu0 %v10589
        %10619 = vmatpush1.msra.mxu0 %v10588
        %10620 = vmatprep.subr.mxu0 %v10592
        %10621 = vmatpush1.msra.mxu0 %v10591
        %10622 = vmatprep.subr.mxu0 %v10595
        %10623 = vmatpush1.msra.mxu0 %v10594
        %10624 = vmatprep.subr.mxu0 %v10598
        %10625 = vmatpush1.msra.mxu0 %v10597
        %10626 = vmatprep.subr.mxu0 0.0
        %10627 = vmatpush1.msra.mxu0 0.0
        %10628 = vmatprep.subr.mxu0 0.0
        %10629 = vmatpush1.msra.mxu0 0.0
        %10630 = vmatprep.subr.mxu0 0.0
        %10631 = vmatpush1.msra.mxu0 0.0
        %10632 = vmatprep.subr.mxu0 0.0
        %10633 = vmatpush1.msra.mxu0 0.0
        %10634 = vmatprep.subr.mxu0 0.0
        %10635 = vmatpush1.msra.mxu0 0.0
        %10636 = vmatprep.subr.mxu0 0.0
        %10637 = vmatpush1.msra.mxu0 0.0
        %10638 = vmatprep.subr.mxu0 0.0
        %10639 = vmatpush1.msra.mxu0 0.0
        %10640 = vmatprep.subr.mxu0 0.0
        %10641 = vmatpush1.msra.mxu0 0.0
        %10642 = vmatprep.subr.mxu0 0.0
        %10643 = vmatpush1.msra.mxu0 0.0
        %10644 = vmatprep.subr.mxu0 0.0
        %10645 = vmatpush1.msra.mxu0 0.0
        %10646 = vmatprep.subr.mxu0 0.0
        %10647 = vmatpush1.msra.mxu0 0.0
        %10648 = vmatprep.subr.mxu0 0.0
        %10649 = vmatpush1.msra.mxu0 0.0
        %10650 = vmatprep.subr.mxu0 0.0
        %10651 = vmatpush1.msra.mxu0 0.0
        %10652 = vmatprep.subr.mxu0 0.0
        %10653 = vmatpush1.msra.mxu0 0.0
        %10654 = vmatprep.subr.mxu0 0.0
        %10655 = vmatpush1.msra.mxu0 0.0
        %10656 = vmatprep.subr.mxu0 0.0
        %10657 = vmatpush1.msra.mxu0 0.0
        %10658 = vmatprep.subr.mxu0 0.0
        %10659 = vmatpush1.msra.mxu0 0.0
        %10660 = vmatprep.subr.mxu0 0.0
        %10661 = vmatpush1.msra.mxu0 0.0
        %10662 = vmatprep.subr.mxu0 0.0
        %10663 = vmatpush1.msra.mxu0 0.0
        %10664 = vmatprep.subr.mxu0 0.0
        %10665 = vmatpush1.msra.mxu0 0.0
        %10666 = vmatprep.subr.mxu0 0.0
        %10667 = vmatpush1.msra.mxu0 0.0
        %10668 = vmatprep.subr.mxu0 0.0
        %10669 = vmatpush1.msra.mxu0 0.0
        %10670 = vmatprep.subr.mxu0 0.0
        %10671 = vmatpush1.msra.mxu0 0.0
        %10672 = vmatprep.subr.mxu0 0.0
        %10673 = vmatpush1.msra.mxu0 0.0
        %10674 = vmatprep.subr.mxu0 0.0
        %10675 = vmatpush1.msra.mxu0 0.0
        %10676 = vmatprep.subr.mxu0 0.0
        %10677 = vmatpush1.msra.mxu0 0.0
        %10678 = vmatprep.subr.mxu0 0.0
        %10679 = vmatpush1.msra.mxu0 0.0
        %10680 = vmatprep.subr.mxu0 0.0
        %10681 = vmatpush1.msra.mxu0 0.0
        %10682 = vmatprep.mubr.f32.mxu0 0.0
        %10683 = vmatmul.mubr.f32.gmra.mrb[0].mxu0 %v10613
        %v10684 = vpop.f32.mrb[0].mxu0
        %v10685 = vadd.f32 0.0, %v10684
        %v10686 = vpop.f32.mrb[0].mxu0
        %v10687 = vadd.f32 0.0, %v10686
        %10688 = vmatprep.mubr.f32.mxu0 0.0
        %10689 = vmatmul.mubr.f32.gmra.mrb[0].mxu0 %v10616
        %v10690 = vpop.f32.mrb[0].mxu0
        %v10691 = vadd.f32 0.0, %v10690
        %v10692 = vpop.f32.mrb[0].mxu0
        %v10693 = vadd.f32 0.0, %v10692
        %10694 = vdwg.mxu0
        %10695 = vmatprep.subr.mxu0 0.0
        %10696 = vmatpush1.msra.mxu0 %v10590
        %10697 = vmatprep.subr.mxu0 0.0
        %10698 = vmatpush1.msra.mxu0 %v10593
        %10699 = vmatprep.subr.mxu0 0.0
        %10700 = vmatpush1.msra.mxu0 %v10596
        %10701 = vmatprep.subr.mxu0 0.0
        %10702 = vmatpush1.msra.mxu0 %v10599
        %10703 = vmatprep.subr.mxu0 0.0
        %10704 = vmatpush1.msra.mxu0 0.0
        %10705 = vmatprep.subr.mxu0 0.0
        %10706 = vmatpush1.msra.mxu0 0.0
        %10707 = vmatprep.subr.mxu0 0.0
        %10708 = vmatpush1.msra.mxu0 0.0
        %10709 = vmatprep.subr.mxu0 0.0
        %10710 = vmatpush1.msra.mxu0 0.0
        %10711 = vmatprep.subr.mxu0 0.0
        %10712 = vmatpush1.msra.mxu0 0.0
        %10713 = vmatprep.subr.mxu0 0.0
        %10714 = vmatpush1.msra.mxu0 0.0
        %10715 = vmatprep.subr.mxu0 0.0
        %10716 = vmatpush1.msra.mxu0 0.0
        %10717 = vmatprep.subr.mxu0 0.0
        %10718 = vmatpush1.msra.mxu0 0.0
        %10719 = vmatprep.subr.mxu0 0.0
        %10720 = vmatpush1.msra.mxu0 0.0
        %10721 = vmatprep.subr.mxu0 0.0
        %10722 = vmatpush1.msra.mxu0 0.0
        %10723 = vmatprep.subr.mxu0 0.0
        %10724 = vmatpush1.msra.mxu0 0.0
        %10725 = vmatprep.subr.mxu0 0.0
        %10726 = vmatpush1.msra.mxu0 0.0
        %10727 = vmatprep.subr.mxu0 0.0
        %10728 = vmatpush1.msra.mxu0 0.0
        %10729 = vmatprep.subr.mxu0 0.0
        %10730 = vmatpush1.msra.mxu0 0.0
        %10731 = vmatprep.subr.mxu0 0.0
        %10732 = vmatpush1.msra.mxu0 0.0
        %10733 = vmatprep.subr.mxu0 0.0
        %10734 = vmatpush1.msra.mxu0 0.0
        %10735 = vmatprep.subr.mxu0 0.0
        %10736 = vmatpush1.msra.mxu0 0.0
        %10737 = vmatprep.subr.mxu0 0.0
        %10738 = vmatpush1.msra.mxu0 0.0
        %10739 = vmatprep.subr.mxu0 0.0
        %10740 = vmatpush1.msra.mxu0 0.0
        %10741 = vmatprep.subr.mxu0 0.0
        %10742 = vmatpush1.msra.mxu0 0.0
        %10743 = vmatprep.subr.mxu0 0.0
        %10744 = vmatpush1.msra.mxu0 0.0
        %10745 = vmatprep.subr.mxu0 0.0
        %10746 = vmatpush1.msra.mxu0 0.0
        %10747 = vmatprep.subr.mxu0 0.0
        %10748 = vmatpush1.msra.mxu0 0.0
        %10749 = vmatprep.subr.mxu0 0.0
        %10750 = vmatpush1.msra.mxu0 0.0
        %10751 = vmatprep.subr.mxu0 0.0
        %10752 = vmatpush1.msra.mxu0 0.0
        %10753 = vmatprep.subr.mxu0 0.0
        %10754 = vmatpush1.msra.mxu0 0.0
        %10755 = vmatprep.subr.mxu0 0.0
        %10756 = vmatpush1.msra.mxu0 0.0
        %10757 = vmatprep.subr.mxu0 0.0
        %10758 = vmatpush1.msra.mxu0 0.0
        %10759 = vmatprep.mubr.f32.mxu0 0.0
        %10760 = vmatmul.mubr.f32.gmra.mrb[0].mxu0 %v10613
        %v10761 = vpop.f32.mrb[0].mxu0
        %v10762 = vadd.f32 0.0, %v10761
        %v10763 = vpop.f32.mrb[0].mxu0
        %10764 = vmatprep.mubr.f32.mxu0 0.0
        %10765 = vmatmul.mubr.f32.gmra.mrb[0].mxu0 %v10616
        %v10766 = vpop.f32.mrb[0].mxu0
        %v10767 = vadd.f32 0.0, %v10766
        %v10768 = vpop.f32.mrb[0].mxu0
        %10769 = vdwg.mxu0
        %10776 = vrot.lane.b32.xlu0 %v10685, 103
        %v10777 = vpop.permute.xlu0 %10776
        %10778 = vrot.lane.b32.xlu0 %v10687, 103
        %v10779 = vpop.permute.xlu0 %10778
        %10780 = vrot.lane.b32.xlu0 %v10762, 103
        %v10781 = vpop.permute.xlu0 %10780
        %10782 = vrot.lane.b32.xlu0 %v10691, 103
        %v10783 = vpop.permute.xlu0 %10782
        %10784 = vrot.lane.b32.xlu0 %v10693, 103
        %v10785 = vpop.permute.xlu0 %10784
        %10786 = vrot.lane.b32.xlu0 %v10767, 103
        %v10787 = vpop.permute.xlu0 %10786
        %v10788 = vsel %vm600, %v10777, %v10779
        %v10789 = vsel %vm600, %v10779, %v10781
        %v10790 = vsel %vm600, %v10783, %v10785
        %v10791 = vsel %vm600, %v10785, %v10787
        %v10800 = vadd.f32 %v7516, %v10777
        %v10801 = vadd.f32 %v7517, %v10788
        %v10802 = vadd.f32 %v7518, %v10789
        %v10803 = vadd.f32 %v7519, %v10781
        %v10804 = vadd.f32 %v7520, %v10783
        %v10805 = vadd.f32 %v7521, %v10790
        %v10806 = vadd.f32 %v7522, %v10791
        %v10807 = vadd.f32 %v7523, %v10787
        %10816 = vrot.lane.b32.xlu0 %v10800, 25
        %v10817 = vpop.permute.xlu0 %10816
        %10818 = vrot.lane.b32.xlu0 %v10801, 25
        %v10819 = vpop.permute.xlu0 %10818
        %10820 = vrot.lane.b32.xlu0 %v10802, 25
        %v10821 = vpop.permute.xlu0 %10820
        %10822 = vrot.lane.b32.xlu0 %v10803, 25
        %v10823 = vpop.permute.xlu0 %10822
        %10824 = vrot.lane.b32.xlu0 %v10804, 25
        %v10825 = vpop.permute.xlu0 %10824
        %10826 = vrot.lane.b32.xlu0 %v10805, 25
        %v10827 = vpop.permute.xlu0 %10826
        %10828 = vrot.lane.b32.xlu0 %v10806, 25
        %v10829 = vpop.permute.xlu0 %10828
        %10830 = vrot.lane.b32.xlu0 %v10807, 25
        %v10831 = vpop.permute.xlu0 %10830
        %v10832 = vsel %vm5006, %v10817, %v10819
        %v10833 = vsel %vm5006, %v10819, %v10821
        %v10834 = vsel %vm5006, %v10821, %v10823
        %v10835 = vsel %vm5006, %v10825, %v10827
        %v10836 = vsel %vm5006, %v10827, %v10829
        %v10837 = vsel %vm5006, %v10829, %v10831
        %10844 = vst [vmem:[%s407] sm:$0xff] %v10832
        %10845 = vst [vmem:[%s407 + $0x8] sm:$0xff] %v10833
        %10846 = vst [vmem:[%s407 + $0x10] sm:$0xff] %v10834
        %10847 = vst [vmem:[%s407 + $0x18] sm:$0xff] %v10835
        %10848 = vst [vmem:[%s407 + $0x20] sm:$0xff] %v10836
        %10849 = vst [vmem:[%s407 + $0x28] sm:$0xff] %v10837
        %s10850 = smul.u32 2, %s23
        %p10851 = scmp.lt.s32.totalorder %s10850, 3
        %s10852 = scalar_select %p10851, %s10850, 3
        %s10853 = smul.addr %s10852, 3
        %s10854 = smul.addr %s10853, 8
        %s10855 = scalar_lea.vmem %s11, %s10854
        // Predicated region
        $region69: #{mixed_op.1} parent=63 // pred_check
          %p10856 = pneg %p277
        $region70: #{mixed_op.1} parent=63 // pred_check_branch
          %10858 = sbr.rel (%p10856) target = $region72
        $region71: #{mixed_op.1} parent=63 // pred_region
          %s10859 = smul.u32 2, %s23
        $region72: #{mixed_op.1} parent=63 // pred_fallthru
          _
      $region64: #{mixed_op.1} parent=5 // pred_fallthru
        _
      %p10860 = scmp.le.s32.totalorder 2, %s18
      // Predicated region
      $region73: #{mixed_op.1} parent=5 // pred_check
        %p10861 = pneg %p10860
      $region74: #{mixed_op.1} parent=5 // pred_check_branch
        %10863 = sbr.rel (%p10861) target = $region76
      $region75: #{mixed_op.1} parent=5 // pred_region
        %s10864 = ssub.s32 %s18, 2
        // Predicated region
        $region77: #{mixed_op.1} parent=75 // pred_check
          %p10865 = pneg %p283
        $region78: #{mixed_op.1} parent=75 // pred_check_branch
          %10867 = sbr.rel (%p10865) target = $region80
        $region79: #{mixed_op.1} parent=75 // pred_region
          %s10868 = smul.u32 2, %s24
          %p10869 = scmp.lt.s32.totalorder %s10868, 3
          %s10870 = scalar_select %p10869, %s10868, 3
          %s10871 = smul.addr %s10870, 3
          %s10872 = smul.addr %s10871, 8
          %s10873 = scalar_lea.vmem %s11, %s10872
        $region80: #{mixed_op.1} parent=75 // pred_fallthru
          _
      $region76: #{mixed_op.1} parent=5 // pred_fallthru
        _
    $region6: #{mixed_op.1} parent=1 // loop_footer
      %s22 = sadd.s32 1, %s18
    $region7: #{mixed_op.1} parent=1 // loop_footer_branch
      %17 = sbr.rel target = $region3
    $region8: #{mixed_op.1} parent=1 // loop_exit
      _
    %10874 = vsyncpa [#allocation4], 1
    %s10875 = scalar_lea.sflag [#allocation4], 1
    %10876 = vsyncpa %s10875, 1

</llo_original>
